<compile_context>
chip_gen: v6e
topology: v6e:2x2x1
jax: 0.10.0
libtpu: 0.0.40
codegen_flags: <defaults>
</compile_context>

<pallas_src>
import functools

import jax
import jax.numpy as jnp
from jax import lax
from jax.experimental import pallas as pl
from jax.experimental.pallas import tpu as pltpu

HIDDEN = 128                 # hidden width of each dueling stream (fixed by the module)
VA_WIDTH = 2 * HIDDEN        # fused value|advantage hidden width
CPAD = 128                   # lane-dense padded channel width for conv outputs / q block
MATMUL_DTYPE = jnp.float32   # set to jnp.bfloat16 on v6e/v7x (loosen the test tolerance)

# (out_channels, kernel, stride) for the three conv layers -- fixed by ConvDuelingDQN.
CONV_SPECS = ((32, 8, 4), (64, 4, 2), (64, 3, 1))

_VMEM = pl.BlockSpec(memory_space=pltpu.MemorySpace.VMEM)


def _conv_out(d, k, s):
    return (d - k) // s + 1


# --------------------------------------------------------------------------------------
# The single fused Pallas kernel: conv1 + conv2 + conv3 + dueling head
# --------------------------------------------------------------------------------------
def fused_dqn_kernel(p1_ref, w1_ref, b1_ref, w2_ref, b2_ref, w3_ref, b3_ref,
                     wva_ref, bva_ref, wh_ref, bh_ref, q_ref, h1_ref, h2_ref,
                     *, batch, num_actions, dims):
    (oh1, ow1), (k2, s2, oh2, ow2), (k3, s3, oh3, ow3) = dims

    # ---- conv1 (+bias+ReLU): one im2col matmul over all B*OH1*OW1 rows ----------------
    h1 = jnp.dot(p1_ref[...].astype(MATMUL_DTYPE), w1_ref[...],
                 preferred_element_type=jnp.float32) + b1_ref[...]
    h1 = jnp.maximum(h1, 0.0)                       # (B*OH1*OW1, CPAD); lanes [32,128) == 0
    h1_ref[...] = h1.reshape(batch, oh1, ow1, CPAD)  # NHWC activation, VMEM-resident

    # ---- conv2 (+bias+ReLU): per-tap matmuls over strided VMEM window gathers ---------
    m2 = batch * oh2 * ow2
    acc2 = None
    for kh in range(k2):
        for kw in range(k2):
            # all output positions for this (kh, kw) tap, gathered straight from VMEM
            slab = h1_ref[:, pl.ds(kh, oh2, s2), pl.ds(kw, ow2, s2), :]   # (B,OH2,OW2,CPAD)
            contrib = jnp.dot(slab.reshape(m2, CPAD).astype(MATMUL_DTYPE),
                              w2_ref[kh * k2 + kw],
                              preferred_element_type=jnp.float32)
            acc2 = contrib if acc2 is None else acc2 + contrib
    h2 = jnp.maximum(acc2 + b2_ref[...], 0.0)        # (B*OH2*OW2, CPAD); lanes [64,128) == 0
    h2_ref[...] = h2.reshape(batch, oh2, ow2, CPAD)

    # ---- conv3 (+bias+ReLU), directly producing the (padded) flattened head features --
    feats = []
    for i3 in range(oh3):
        for j3 in range(ow3):
            acc3 = None
            for kh in range(k3):
                for kw in range(k3):
                    contrib = jnp.dot(
                        h2_ref[:, i3 * s3 + kh, j3 * s3 + kw, :].astype(MATMUL_DTYPE),
                        w3_ref[kh * k3 + kw],
                        preferred_element_type=jnp.float32)
                    acc3 = contrib if acc3 is None else acc3 + contrib
            feats.append(jnp.maximum(acc3 + b3_ref[...], 0.0))            # (B, CPAD)
    feat = feats[0] if len(feats) == 1 else jnp.concatenate(feats, axis=1)

    # ---- fused dueling head ------------------------------------------------------------
    # layer 1: [Wv1 | Wa1] -> one (feat_dim, 256) matmul
    h = jnp.dot(feat.astype(MATMUL_DTYPE), wva_ref[...],
                preferred_element_type=jnp.float32) + bva_ref[...]
    h = jnp.maximum(h, 0.0)                                               # (B, 256)
    # layer 2: block-diagonal (256, 128); V -> lane 127, advantages -> lanes [0, A)
    out = jnp.dot(h.astype(MATMUL_DTYPE), wh_ref[...],
                  preferred_element_type=jnp.float32) + bh_ref[...]       # (B, 128)
    v = out[:, CPAD - 1:CPAD]                         # (B, 1) state value
    adv_sum = jnp.sum(out) - jnp.sum(v)               # lanes [A,127) are exactly zero
    adv_mean = adv_sum / (batch * num_actions)        # GLOBAL mean (batch AND actions)
    q_ref[...] = out + v - adv_mean                   # lane-dense store; lanes [0, A) = Q


# --------------------------------------------------------------------------------------
# Wrapper
# --------------------------------------------------------------------------------------
def _im2col_nhwc(x_nhwc, k, s):
    """(B,H,W,C) -> (B*OH*OW, k*k*C) patches with feature order (kh, kw, c)."""
    b, h, w, c = x_nhwc.shape
    oh, ow = _conv_out(h, k, s), _conv_out(w, k, s)
    cols = []
    for kh in range(k):
        for kw in range(k):
            cols.append(lax.slice(x_nhwc, (0, kh, kw, 0),
                                  (b, kh + (oh - 1) * s + 1, kw + (ow - 1) * s + 1, c),
                                  (1, s, s, 1)))              # (B, OH, OW, C)
    p = jnp.stack(cols, axis=3)                                # (B, OH, OW, k*k, C)
    return p.reshape(b * oh * ow, k * k * c)


def conv_dueling_dqn_forward(x, fp, *, num_actions):
    """x: (B, C, H, W) float32 NCHW, fp: prepared (fused) params. Returns (B, A) Q-values."""
    batch, c_in, hgt, wid = x.shape
    (c1, k1, s1), (c2, k2, s2), (c3, k3, s3) = CONV_SPECS
    oh1, ow1 = _conv_out(hgt, k1, s1), _conv_out(wid, k1, s1)
    oh2, ow2 = _conv_out(oh1, k2, s2), _conv_out(ow1, k2, s2)
    oh3, ow3 = _conv_out(oh2, k3, s3), _conv_out(ow2, k3, s3)

    # TODO(synk): replace this XLA-staged (zero-FLOP) conv1 patch gather with an in-kernel
    # / BlockSpec-index_map gather at production batch sizes to avoid the ~4x HBM expansion.
    x_nhwc = jnp.transpose(x, (0, 2, 3, 1))
    patches1 = _im2col_nhwc(x_nhwc, k1, s1)                    # (B*OH1*OW1, k1*k1*C)

    dims = ((oh1, ow1), (k2, s2, oh2, ow2), (k3, s3, oh3, ow3))
    kern = functools.partial(fused_dqn_kernel, batch=batch,
                             num_actions=num_actions, dims=dims)

    args = (patches1, fp["w1"], fp["b1"], fp["w2"], fp["b2"], fp["w3"], fp["b3"],
            fp["w_va1"], fp["b_va1"], fp["w_head"], fp["b_head"])
    flops = 2 * (patches1.shape[0] * patches1.shape[1] * CPAD           # conv1
                 + k2 * k2 * (batch * oh2 * ow2) * CPAD * CPAD          # conv2 taps
                 + k3 * k3 * (batch * oh3 * ow3) * CPAD * CPAD          # conv3 taps
                 + batch * (oh3 * ow3 * CPAD) * VA_WIDTH                # head layer 1
                 + batch * VA_WIDTH * CPAD)                             # head layer 2
    bytes_accessed = sum(int(a.size) * a.dtype.itemsize for a in args) + batch * CPAD * 4

    q_pad = pl.pallas_call(
        kern,
        out_shape=jax.ShapeDtypeStruct((batch, CPAD), jnp.float32),
        in_specs=[_VMEM] * len(args),
        out_specs=_VMEM,
        scratch_shapes=[pltpu.VMEM((batch, oh1, ow1, CPAD), jnp.float32),   # conv1 activation
                        pltpu.VMEM((batch, oh2, ow2, CPAD), jnp.float32)],  # conv2 activation
        cost_estimate=pl.CostEstimate(flops=flops, transcendentals=0,
                                      bytes_accessed=bytes_accessed),
    )(*args)
    return q_pad[:, :num_actions]                              # drop the lane padding


# --------------------------------------------------------------------------------------
# Parameters (PyTorch-layout init) and the fused / matmul-ready form
# --------------------------------------------------------------------------------------
def init_params(key, input_dim, num_actions):
    """PyTorch default init: U(-1/sqrt(fan_in), 1/sqrt(fan_in)) for weights and biases."""
    c_in, h, w = input_dim

    def conv_init(k, cin, cout, ksize):
        fan_in = cin * ksize * ksize
        bound = 1.0 / jnp.sqrt(fan_in)
        kw_, kb_ = jax.random.split(k)
        wgt = jax.random.uniform(kw_, (cout, cin, ksize, ksize), jnp.float32, -bound, bound)
        bia = jax.random.uniform(kb_, (cout,), jnp.float32, -bound, bound)
        return wgt, bia

    def lin_init(k, fin, fout):
        bound = 1.0 / jnp.sqrt(fin)
        kw_, kb_ = jax.random.split(k)
        wgt = jax.random.uniform(kw_, (fout, fin), jnp.float32, -bound, bound)
        bia = jax.random.uniform(kb_, (fout,), jnp.float32, -bound, bound)
        return wgt, bia

    keys = jax.random.split(key, 7)
    c1w, c1b = conv_init(keys[0], c_in, 32, 8)
    c2w, c2b = conv_init(keys[1], 32, 64, 4)
    c3w, c3b = conv_init(keys[2], 64, 64, 3)

    h1, w1 = _conv_out(h, 8, 4), _conv_out(w, 8, 4)
    h2, w2 = _conv_out(h1, 4, 2), _conv_out(w1, 4, 2)
    h3, w3 = _conv_out(h2, 3, 1), _conv_out(w2, 3, 1)
    fc_dim = 64 * h3 * w3                                      # == ConvDuelingDQN.feature_size()

    v1w, v1b = lin_init(keys[3], fc_dim, HIDDEN)
    v2w, v2b = lin_init(keys[4], HIDDEN, 1)
    a1w, a1b = lin_init(keys[5], fc_dim, HIDDEN)
    a2w, a2b = lin_init(keys[6], HIDDEN, num_actions)
    return dict(conv1_w=c1w, conv1_b=c1b, conv2_w=c2w, conv2_b=c2b, conv3_w=c3w, conv3_b=c3b,
                v1_w=v1w, v1_b=v1b, v2_w=v2w, v2_b=v2b,
                a1_w=a1w, a1_b=a1b, a2_w=a2w, a2_b=a2b)


def prepare_fast_params(p, input_dim, num_actions):
    """Fold the PyTorch-layout params into fused, lane-dense, matmul-ready matrices."""
    assert num_actions <= CPAD - 1, "lane 127 is reserved for the state value V"
    (c1, k1, s1), (c2, k2, s2), (c3, k3, s3) = CONV_SPECS
    c_in, hgt, wid = input_dim
    oh1, ow1 = _conv_out(hgt, k1, s1), _conv_out(wid, k1, s1)
    oh2, ow2 = _conv_out(oh1, k2, s2), _conv_out(ow1, k2, s2)
    oh3, ow3 = _conv_out(oh2, k3, s3), _conv_out(ow2, k3, s3)
    npos3 = oh3 * ow3

    # conv1: flat im2col weight, rows ordered (kh, kw, cin); Cout zero-padded to 128 lanes.
    w1 = jnp.zeros((k1 * k1 * c_in, CPAD), jnp.float32)
    w1 = w1.at[:, :c1].set(jnp.transpose(p["conv1_w"], (2, 3, 1, 0)).reshape(k1 * k1 * c_in, c1))
    b1 = jnp.zeros((1, CPAD), jnp.float32).at[0, :c1].set(p["conv1_b"])

    def taps(w, cin, cout, k):
        # (Cout, Cin, k, k) torch layout -> (k*k, CPAD, CPAD) per-tap matmul weights (NHWC).
        t = jnp.zeros((k * k, CPAD, CPAD), jnp.float32)
        return t.at[:, :cin, :cout].set(jnp.transpose(w, (2, 3, 1, 0)).reshape(k * k, cin, cout))

    w2 = taps(p["conv2_w"], c1, c2, k2)
    b2 = jnp.zeros((1, CPAD), jnp.float32).at[0, :c2].set(p["conv2_b"])
    w3 = taps(p["conv3_w"], c2, c3, k3)
    b3 = jnp.zeros((1, CPAD), jnp.float32).at[0, :c3].set(p["conv3_b"])

    # Head layer 1: kernel features are [pos3-major, CPAD-padded channel] lanes, while
    # PyTorch flattens NCHW (channel-major) -- fold that permutation into the weights.
    def permute_fc(w):                                 # w: (HIDDEN, c3*npos3) torch layout
        w = w.reshape(HIDDEN, c3, npos3)               # (out, c, pos)
        w = jnp.transpose(w, (2, 1, 0))                # (pos, c, out)
        full = jnp.zeros((npos3, CPAD, HIDDEN), jnp.float32).at[:, :c3, :].set(w)
        return full.reshape(npos3 * CPAD, HIDDEN)

    w_va1 = jnp.concatenate([permute_fc(p["v1_w"]), permute_fc(p["a1_w"])], axis=1)
    b_va1 = jnp.concatenate([p["v1_b"], p["a1_b"]])[None, :]

    # Head layer 2: block-diagonal (256, 128); V -> lane 127, advantages -> lanes [0, A).
    a = num_actions
    w_head = jnp.zeros((VA_WIDTH, CPAD), jnp.float32)
    w_head = w_head.at[:HIDDEN, CPAD - 1].set(p["v2_w"][0])
    w_head = w_head.at[HIDDEN:, :a].set(p["a2_w"].T)
    b_head = jnp.zeros((1, CPAD), jnp.float32)
    b_head = b_head.at[0, CPAD - 1].set(p["v2_b"][0])
    b_head = b_head.at[0, :a].set(p["a2_b"])

    cast = lambda t: t.astype(MATMUL_DTYPE)
    return dict(w1=cast(w1), b1=b1, w2=cast(w2), b2=b2, w3=cast(w3), b3=b3,
                w_va1=cast(w_va1), b_va1=b_va1.astype(jnp.float32),
                w_head=cast(w_head), b_head=b_head)


# --------------------------------------------------------------------------------------
# Pure-JAX reference mirroring the PyTorch forward exactly
# --------------------------------------------------------------------------------------
def conv_dueling_dqn_reference(x, p):
    hp = lax.Precision.HIGHEST
    h = x
    for name, s in (("conv1", 4), ("conv2", 2), ("conv3", 1)):
        h = lax.conv_general_dilated(h, p[f"{name}_w"], window_strides=(s, s),
                                     padding="VALID",
                                     dimension_numbers=("NCHW", "OIHW", "NCHW"),
                                     precision=hp)
        h = jax.nn.relu(h + p[f"{name}_b"][None, :, None, None])
    feat = h.reshape(h.shape[0], -1)
    v = jnp.dot(jax.nn.relu(jnp.dot(feat, p["v1_w"].T, precision=hp) + p["v1_b"]),
                p["v2_w"].T, precision=hp) + p["v2_b"]
    a = jnp.dot(jax.nn.relu(jnp.dot(feat, p["a1_w"].T, precision=hp) + p["a1_b"]),
                p["a2_w"].T, precision=hp) + p["a2_b"]
    return v + (a - jnp.mean(a))                               # global mean, as in the module


# --------------------------------------------------------------------------------------
if __name__ == "__main__":
    key = jax.random.PRNGKey(0)
    k_param, k_x = jax.random.split(key)

    batch = 2
    input_dim = (4, 36, 36)   # (C, H, W): 36x36 is the smallest square valid for the conv stack
    num_actions = 8

    params = init_params(k_param, input_dim, num_actions)
    fast = prepare_fast_params(params, input_dim, num_actions)
    x = jax.random.normal(k_x, (batch,) + input_dim, jnp.float32)

    fwd = jax.jit(functools.partial(conv_dueling_dqn_forward, num_actions=num_actions))
    q = jax.block_until_ready(fwd(x, fast))

    q_ref = conv_dueling_dqn_reference(x, params)
    assert q.shape == (batch, num_actions), q.shape
    assert jnp.allclose(q, q_ref, atol=1e-3, rtol=1e-3), float(jnp.max(jnp.abs(q - q_ref)))

    print("KERNEL_OK")
</pallas_src>

<mosaic_0001>
module attributes {stable_mosaic.version = 11 : i64} {
  func.func @fused_dqn_kernel(%arg0: memref<128x256xf32, #tpu.memory_space<vmem>>, %arg1: memref<256x128xf32, #tpu.memory_space<vmem>>, %arg2: memref<1x128xf32, #tpu.memory_space<vmem>>, %arg3: memref<16x128x128xf32, #tpu.memory_space<vmem>>, %arg4: memref<1x128xf32, #tpu.memory_space<vmem>>, %arg5: memref<9x128x128xf32, #tpu.memory_space<vmem>>, %arg6: memref<1x128xf32, #tpu.memory_space<vmem>>, %arg7: memref<128x256xf32, #tpu.memory_space<vmem>>, %arg8: memref<1x256xf32, #tpu.memory_space<vmem>>, %arg9: memref<256x128xf32, #tpu.memory_space<vmem>>, %arg10: memref<1x128xf32, #tpu.memory_space<vmem>>, %arg11: memref<2x128xf32, #tpu.memory_space<vmem>>, %arg12: memref<2x8x8x128xf32, #tpu.memory_space<vmem>>, %arg13: memref<2x3x3x128xf32, #tpu.memory_space<vmem>>) attributes {dimension_semantics = [], scalar_prefetch = 0 : i64, scratch_operands = 2 : i64, tpu.core_type = #tpu.core_type<tc>} {
    %c0 = arith.constant 0 : index
    %c0_0 = arith.constant 0 : index
    %0 = vector.load %arg0[%c0, %c0_0] : memref<128x256xf32, #tpu.memory_space<vmem>>, vector<128x256xf32>
    %c0_1 = arith.constant 0 : index
    %c0_2 = arith.constant 0 : index
    %1 = vector.load %arg1[%c0_1, %c0_2] : memref<256x128xf32, #tpu.memory_space<vmem>>, vector<256x128xf32>
    %cst = arith.constant dense<0.000000e+00> : vector<128x128xf32>
    %2 = tpu.matmul %0, %1, %cst {dimension_numbers = #tpu.dot_dimension_numbers<[1], [0], [0], [1], [0, 0, 1, 1], [], []>} : vector<128x256xf32>, vector<256x128xf32>, vector<128x128xf32> -> vector<128x128xf32>
    %c0_3 = arith.constant 0 : index
    %c0_4 = arith.constant 0 : index
    %3 = vector.load %arg2[%c0_3, %c0_4] : memref<1x128xf32, #tpu.memory_space<vmem>>, vector<1x128xf32>
    %4 = vector.broadcast %3 : vector<1x128xf32> to vector<128x128xf32>
    %5 = arith.addf %2, %4 : vector<128x128xf32>
    %cst_5 = arith.constant 0.000000e+00 : f32
    %6 = vector.broadcast %cst_5 : f32 to vector<128x128xf32>
    %7 = arith.maximumf %5, %6 : vector<128x128xf32>
    %8 = vector.shape_cast %7 : vector<128x128xf32> to vector<2x8x8x128xf32>
    %c0_6 = arith.constant 0 : index
    %c0_7 = arith.constant 0 : index
    %c0_8 = arith.constant 0 : index
    %c0_9 = arith.constant 0 : index
    %9 = vector.load %arg12[%c0_6, %c0_7, %c0_8, %c0_9] : memref<2x8x8x128xf32, #tpu.memory_space<vmem>>, vector<2x8x8x128xf32>
    tpu.vector_store %arg12[%c0_6, %c0_7, %c0_8, %c0_9], %8 {strides = array<i32>} : memref<2x8x8x128xf32, #tpu.memory_space<vmem>>, vector<2x8x8x128xf32>,
    %c0_10 = arith.constant 0 : index
    %c0_11 = arith.constant 0 : index
    %c0_12 = arith.constant 0 : index
    %c0_13 = arith.constant 0 : index
    %10 = tpu.strided_load %arg12[%c0_10, %c0_11, %c0_12, %c0_13] {strides = array<i32: 1, 2, 2, 1>} : memref<2x8x8x128xf32, #tpu.memory_space<vmem>>, vector<2x3x3x128xf32>
    %11 = vector.shape_cast %10 : vector<2x3x3x128xf32> to vector<18x128xf32>
    %c0_14 = arith.constant 0 : index
    %c0_15 = arith.constant 0 : index
    %c0_16 = arith.constant 0 : index
    %12 = vector.load %arg3[%c0_14, %c0_15, %c0_16] : memref<16x128x128xf32, #tpu.memory_space<vmem>>, vector<1x128x128xf32>
    %13 = vector.shape_cast %12 : vector<1x128x128xf32> to vector<128x128xf32>
    %cst_17 = arith.constant dense<0.000000e+00> : vector<18x128xf32>
    %14 = tpu.matmul %11, %13, %cst_17 {dimension_numbers = #tpu.dot_dimension_numbers<[1], [0], [0], [1], [0, 0, 1, 1], [], []>} : vector<18x128xf32>, vector<128x128xf32>, vector<18x128xf32> -> vector<18x128xf32>
    %c0_18 = arith.constant 0 : index
    %c0_19 = arith.constant 0 : index
    %c1 = arith.constant 1 : index
    %c0_20 = arith.constant 0 : index
    %15 = tpu.strided_load %arg12[%c0_18, %c0_19, %c1, %c0_20] {strides = array<i32: 1, 2, 2, 1>} : memref<2x8x8x128xf32, #tpu.memory_space<vmem>>, vector<2x3x3x128xf32>
    %16 = vector.shape_cast %15 : vector<2x3x3x128xf32> to vector<18x128xf32>
    %c1_21 = arith.constant 1 : index
    %c0_22 = arith.constant 0 : index
    %c0_23 = arith.constant 0 : index
    %17 = vector.load %arg3[%c1_21, %c0_22, %c0_23] : memref<16x128x128xf32, #tpu.memory_space<vmem>>, vector<1x128x128xf32>
    %18 = vector.shape_cast %17 : vector<1x128x128xf32> to vector<128x128xf32>
    %cst_24 = arith.constant dense<0.000000e+00> : vector<18x128xf32>
    %19 = tpu.matmul %16, %18, %cst_24 {dimension_numbers = #tpu.dot_dimension_numbers<[1], [0], [0], [1], [0, 0, 1, 1], [], []>} : vector<18x128xf32>, vector<128x128xf32>, vector<18x128xf32> -> vector<18x128xf32>
    %20 = arith.addf %14, %19 : vector<18x128xf32>
    %c0_25 = arith.constant 0 : index
    %c0_26 = arith.constant 0 : index
    %c2 = arith.constant 2 : index
    %c0_27 = arith.constant 0 : index
    %21 = tpu.strided_load %arg12[%c0_25, %c0_26, %c2, %c0_27] {strides = array<i32: 1, 2, 2, 1>} : memref<2x8x8x128xf32, #tpu.memory_space<vmem>>, vector<2x3x3x128xf32>
    %22 = vector.shape_cast %21 : vector<2x3x3x128xf32> to vector<18x128xf32>
    %c2_28 = arith.constant 2 : index
    %c0_29 = arith.constant 0 : index
    %c0_30 = arith.constant 0 : index
    %23 = vector.load %arg3[%c2_28, %c0_29, %c0_30] : memref<16x128x128xf32, #tpu.memory_space<vmem>>, vector<1x128x128xf32>
    %24 = vector.shape_cast %23 : vector<1x128x128xf32> to vector<128x128xf32>
    %cst_31 = arith.constant dense<0.000000e+00> : vector<18x128xf32>
    %25 = tpu.matmul %22, %24, %cst_31 {dimension_numbers = #tpu.dot_dimension_numbers<[1], [0], [0], [1], [0, 0, 1, 1], [], []>} : vector<18x128xf32>, vector<128x128xf32>, vector<18x128xf32> -> vector<18x128xf32>
    %26 = arith.addf %20, %25 : vector<18x128xf32>
    %c0_32 = arith.constant 0 : index
    %c0_33 = arith.constant 0 : index
    %c3 = arith.constant 3 : index
    %c0_34 = arith.constant 0 : index
    %27 = tpu.strided_load %arg12[%c0_32, %c0_33, %c3, %c0_34] {strides = array<i32: 1, 2, 2, 1>} : memref<2x8x8x128xf32, #tpu.memory_space<vmem>>, vector<2x3x3x128xf32>
    %28 = vector.shape_cast %27 : vector<2x3x3x128xf32> to vector<18x128xf32>
    %c3_35 = arith.constant 3 : index
    %c0_36 = arith.constant 0 : index
    %c0_37 = arith.constant 0 : index
    %29 = vector.load %arg3[%c3_35, %c0_36, %c0_37] : memref<16x128x128xf32, #tpu.memory_space<vmem>>, vector<1x128x128xf32>
    %30 = vector.shape_cast %29 : vector<1x128x128xf32> to vector<128x128xf32>
    %cst_38 = arith.constant dense<0.000000e+00> : vector<18x128xf32>
    %31 = tpu.matmul %28, %30, %cst_38 {dimension_numbers = #tpu.dot_dimension_numbers<[1], [0], [0], [1], [0, 0, 1, 1], [], []>} : vector<18x128xf32>, vector<128x128xf32>, vector<18x128xf32> -> vector<18x128xf32>
    %32 = arith.addf %26, %31 : vector<18x128xf32>
    %c0_39 = arith.constant 0 : index
    %c1_40 = arith.constant 1 : index
    %c0_41 = arith.constant 0 : index
    %c0_42 = arith.constant 0 : index
    %33 = tpu.strided_load %arg12[%c0_39, %c1_40, %c0_41, %c0_42] {strides = array<i32: 1, 2, 2, 1>} : memref<2x8x8x128xf32, #tpu.memory_space<vmem>>, vector<2x3x3x128xf32>
    %34 = vector.shape_cast %33 : vector<2x3x3x128xf32> to vector<18x128xf32>
    %c4 = arith.constant 4 : index
    %c0_43 = arith.constant 0 : index
    %c0_44 = arith.constant 0 : index
    %35 = vector.load %arg3[%c4, %c0_43, %c0_44] : memref<16x128x128xf32, #tpu.memory_space<vmem>>, vector<1x128x128xf32>
    %36 = vector.shape_cast %35 : vector<1x128x128xf32> to vector<128x128xf32>
    %cst_45 = arith.constant dense<0.000000e+00> : vector<18x128xf32>
    %37 = tpu.matmul %34, %36, %cst_45 {dimension_numbers = #tpu.dot_dimension_numbers<[1], [0], [0], [1], [0, 0, 1, 1], [], []>} : vector<18x128xf32>, vector<128x128xf32>, vector<18x128xf32> -> vector<18x128xf32>
    %38 = arith.addf %32, %37 : vector<18x128xf32>
    %c0_46 = arith.constant 0 : index
    %c1_47 = arith.constant 1 : index
    %c1_48 = arith.constant 1 : index
    %c0_49 = arith.constant 0 : index
    %39 = tpu.strided_load %arg12[%c0_46, %c1_47, %c1_48, %c0_49] {strides = array<i32: 1, 2, 2, 1>} : memref<2x8x8x128xf32, #tpu.memory_space<vmem>>, vector<2x3x3x128xf32>
    %40 = vector.shape_cast %39 : vector<2x3x3x128xf32> to vector<18x128xf32>
    %c5 = arith.constant 5 : index
    %c0_50 = arith.constant 0 : index
    %c0_51 = arith.constant 0 : index
    %41 = vector.load %arg3[%c5, %c0_50, %c0_51] : memref<16x128x128xf32, #tpu.memory_space<vmem>>, vector<1x128x128xf32>
    %42 = vector.shape_cast %41 : vector<1x128x128xf32> to vector<128x128xf32>
    %cst_52 = arith.constant dense<0.000000e+00> : vector<18x128xf32>
    %43 = tpu.matmul %40, %42, %cst_52 {dimension_numbers = #tpu.dot_dimension_numbers<[1], [0], [0], [1], [0, 0, 1, 1], [], []>} : vector<18x128xf32>, vector<128x128xf32>, vector<18x128xf32> -> vector<18x128xf32>
    %44 = arith.addf %38, %43 : vector<18x128xf32>
    %c0_53 = arith.constant 0 : index
    %c1_54 = arith.constant 1 : index
    %c2_55 = arith.constant 2 : index
    %c0_56 = arith.constant 0 : index
    %45 = tpu.strided_load %arg12[%c0_53, %c1_54, %c2_55, %c0_56] {strides = array<i32: 1, 2, 2, 1>} : memref<2x8x8x128xf32, #tpu.memory_space<vmem>>, vector<2x3x3x128xf32>
    %46 = vector.shape_cast %45 : vector<2x3x3x128xf32> to vector<18x128xf32>
    %c6 = arith.constant 6 : index
    %c0_57 = arith.constant 0 : index
    %c0_58 = arith.constant 0 : index
    %47 = vector.load %arg3[%c6, %c0_57, %c0_58] : memref<16x128x128xf32, #tpu.memory_space<vmem>>, vector<1x128x128xf32>
    %48 = vector.shape_cast %47 : vector<1x128x128xf32> to vector<128x128xf32>
    %cst_59 = arith.constant dense<0.000000e+00> : vector<18x128xf32>
    %49 = tpu.matmul %46, %48, %cst_59 {dimension_numbers = #tpu.dot_dimension_numbers<[1], [0], [0], [1], [0, 0, 1, 1], [], []>} : vector<18x128xf32>, vector<128x128xf32>, vector<18x128xf32> -> vector<18x128xf32>
    %50 = arith.addf %44, %49 : vector<18x128xf32>
    %c0_60 = arith.constant 0 : index
    %c1_61 = arith.constant 1 : index
    %c3_62 = arith.constant 3 : index
    %c0_63 = arith.constant 0 : index
    %51 = tpu.strided_load %arg12[%c0_60, %c1_61, %c3_62, %c0_63] {strides = array<i32: 1, 2, 2, 1>} : memref<2x8x8x128xf32, #tpu.memory_space<vmem>>, vector<2x3x3x128xf32>
    %52 = vector.shape_cast %51 : vector<2x3x3x128xf32> to vector<18x128xf32>
    %c7 = arith.constant 7 : index
    %c0_64 = arith.constant 0 : index
    %c0_65 = arith.constant 0 : index
    %53 = vector.load %arg3[%c7, %c0_64, %c0_65] : memref<16x128x128xf32, #tpu.memory_space<vmem>>, vector<1x128x128xf32>
    %54 = vector.shape_cast %53 : vector<1x128x128xf32> to vector<128x128xf32>
    %cst_66 = arith.constant dense<0.000000e+00> : vector<18x128xf32>
    %55 = tpu.matmul %52, %54, %cst_66 {dimension_numbers = #tpu.dot_dimension_numbers<[1], [0], [0], [1], [0, 0, 1, 1], [], []>} : vector<18x128xf32>, vector<128x128xf32>, vector<18x128xf32> -> vector<18x128xf32>
    %56 = arith.addf %50, %55 : vector<18x128xf32>
    %c0_67 = arith.constant 0 : index
    %c2_68 = arith.constant 2 : index
    %c0_69 = arith.constant 0 : index
    %c0_70 = arith.constant 0 : index
    %57 = tpu.strided_load %arg12[%c0_67, %c2_68, %c0_69, %c0_70] {strides = array<i32: 1, 2, 2, 1>} : memref<2x8x8x128xf32, #tpu.memory_space<vmem>>, vector<2x3x3x128xf32>
    %58 = vector.shape_cast %57 : vector<2x3x3x128xf32> to vector<18x128xf32>
    %c8 = arith.constant 8 : index
    %c0_71 = arith.constant 0 : index
    %c0_72 = arith.constant 0 : index
    %59 = vector.load %arg3[%c8, %c0_71, %c0_72] : memref<16x128x128xf32, #tpu.memory_space<vmem>>, vector<1x128x128xf32>
    %60 = vector.shape_cast %59 : vector<1x128x128xf32> to vector<128x128xf32>
    %cst_73 = arith.constant dense<0.000000e+00> : vector<18x128xf32>
    %61 = tpu.matmul %58, %60, %cst_73 {dimension_numbers = #tpu.dot_dimension_numbers<[1], [0], [0], [1], [0, 0, 1, 1], [], []>} : vector<18x128xf32>, vector<128x128xf32>, vector<18x128xf32> -> vector<18x128xf32>
    %62 = arith.addf %56, %61 : vector<18x128xf32>
    %c0_74 = arith.constant 0 : index
    %c2_75 = arith.constant 2 : index
    %c1_76 = arith.constant 1 : index
    %c0_77 = arith.constant 0 : index
    %63 = tpu.strided_load %arg12[%c0_74, %c2_75, %c1_76, %c0_77] {strides = array<i32: 1, 2, 2, 1>} : memref<2x8x8x128xf32, #tpu.memory_space<vmem>>, vector<2x3x3x128xf32>
    %64 = vector.shape_cast %63 : vector<2x3x3x128xf32> to vector<18x128xf32>
    %c9 = arith.constant 9 : index
    %c0_78 = arith.constant 0 : index
    %c0_79 = arith.constant 0 : index
    %65 = vector.load %arg3[%c9, %c0_78, %c0_79] : memref<16x128x128xf32, #tpu.memory_space<vmem>>, vector<1x128x128xf32>
    %66 = vector.shape_cast %65 : vector<1x128x128xf32> to vector<128x128xf32>
    %cst_80 = arith.constant dense<0.000000e+00> : vector<18x128xf32>
    %67 = tpu.matmul %64, %66, %cst_80 {dimension_numbers = #tpu.dot_dimension_numbers<[1], [0], [0], [1], [0, 0, 1, 1], [], []>} : vector<18x128xf32>, vector<128x128xf32>, vector<18x128xf32> -> vector<18x128xf32>
    %68 = arith.addf %62, %67 : vector<18x128xf32>
    %c0_81 = arith.constant 0 : index
    %c2_82 = arith.constant 2 : index
    %c2_83 = arith.constant 2 : index
    %c0_84 = arith.constant 0 : index
    %69 = tpu.strided_load %arg12[%c0_81, %c2_82, %c2_83, %c0_84] {strides = array<i32: 1, 2, 2, 1>} : memref<2x8x8x128xf32, #tpu.memory_space<vmem>>, vector<2x3x3x128xf32>
    %70 = vector.shape_cast %69 : vector<2x3x3x128xf32> to vector<18x128xf32>
    %c10 = arith.constant 10 : index
    %c0_85 = arith.constant 0 : index
    %c0_86 = arith.constant 0 : index
    %71 = vector.load %arg3[%c10, %c0_85, %c0_86] : memref<16x128x128xf32, #tpu.memory_space<vmem>>, vector<1x128x128xf32>
    %72 = vector.shape_cast %71 : vector<1x128x128xf32> to vector<128x128xf32>
    %cst_87 = arith.constant dense<0.000000e+00> : vector<18x128xf32>
    %73 = tpu.matmul %70, %72, %cst_87 {dimension_numbers = #tpu.dot_dimension_numbers<[1], [0], [0], [1], [0, 0, 1, 1], [], []>} : vector<18x128xf32>, vector<128x128xf32>, vector<18x128xf32> -> vector<18x128xf32>
    %74 = arith.addf %68, %73 : vector<18x128xf32>
    %c0_88 = arith.constant 0 : index
    %c2_89 = arith.constant 2 : index
    %c3_90 = arith.constant 3 : index
    %c0_91 = arith.constant 0 : index
    %75 = tpu.strided_load %arg12[%c0_88, %c2_89, %c3_90, %c0_91] {strides = array<i32: 1, 2, 2, 1>} : memref<2x8x8x128xf32, #tpu.memory_space<vmem>>, vector<2x3x3x128xf32>
    %76 = vector.shape_cast %75 : vector<2x3x3x128xf32> to vector<18x128xf32>
    %c11 = arith.constant 11 : index
    %c0_92 = arith.constant 0 : index
    %c0_93 = arith.constant 0 : index
    %77 = vector.load %arg3[%c11, %c0_92, %c0_93] : memref<16x128x128xf32, #tpu.memory_space<vmem>>, vector<1x128x128xf32>
    %78 = vector.shape_cast %77 : vector<1x128x128xf32> to vector<128x128xf32>
    %cst_94 = arith.constant dense<0.000000e+00> : vector<18x128xf32>
    %79 = tpu.matmul %76, %78, %cst_94 {dimension_numbers = #tpu.dot_dimension_numbers<[1], [0], [0], [1], [0, 0, 1, 1], [], []>} : vector<18x128xf32>, vector<128x128xf32>, vector<18x128xf32> -> vector<18x128xf32>
    %80 = arith.addf %74, %79 : vector<18x128xf32>
    %c0_95 = arith.constant 0 : index
    %c3_96 = arith.constant 3 : index
    %c0_97 = arith.constant 0 : index
    %c0_98 = arith.constant 0 : index
    %81 = tpu.strided_load %arg12[%c0_95, %c3_96, %c0_97, %c0_98] {strides = array<i32: 1, 2, 2, 1>} : memref<2x8x8x128xf32, #tpu.memory_space<vmem>>, vector<2x3x3x128xf32>
    %82 = vector.shape_cast %81 : vector<2x3x3x128xf32> to vector<18x128xf32>
    %c12 = arith.constant 12 : index
    %c0_99 = arith.constant 0 : index
    %c0_100 = arith.constant 0 : index
    %83 = vector.load %arg3[%c12, %c0_99, %c0_100] : memref<16x128x128xf32, #tpu.memory_space<vmem>>, vector<1x128x128xf32>
    %84 = vector.shape_cast %83 : vector<1x128x128xf32> to vector<128x128xf32>
    %cst_101 = arith.constant dense<0.000000e+00> : vector<18x128xf32>
    %85 = tpu.matmul %82, %84, %cst_101 {dimension_numbers = #tpu.dot_dimension_numbers<[1], [0], [0], [1], [0, 0, 1, 1], [], []>} : vector<18x128xf32>, vector<128x128xf32>, vector<18x128xf32> -> vector<18x128xf32>
    %86 = arith.addf %80, %85 : vector<18x128xf32>
    %c0_102 = arith.constant 0 : index
    %c3_103 = arith.constant 3 : index
    %c1_104 = arith.constant 1 : index
    %c0_105 = arith.constant 0 : index
    %87 = tpu.strided_load %arg12[%c0_102, %c3_103, %c1_104, %c0_105] {strides = array<i32: 1, 2, 2, 1>} : memref<2x8x8x128xf32, #tpu.memory_space<vmem>>, vector<2x3x3x128xf32>
    %88 = vector.shape_cast %87 : vector<2x3x3x128xf32> to vector<18x128xf32>
    %c13 = arith.constant 13 : index
    %c0_106 = arith.constant 0 : index
    %c0_107 = arith.constant 0 : index
    %89 = vector.load %arg3[%c13, %c0_106, %c0_107] : memref<16x128x128xf32, #tpu.memory_space<vmem>>, vector<1x128x128xf32>
    %90 = vector.shape_cast %89 : vector<1x128x128xf32> to vector<128x128xf32>
    %cst_108 = arith.constant dense<0.000000e+00> : vector<18x128xf32>
    %91 = tpu.matmul %88, %90, %cst_108 {dimension_numbers = #tpu.dot_dimension_numbers<[1], [0], [0], [1], [0, 0, 1, 1], [], []>} : vector<18x128xf32>, vector<128x128xf32>, vector<18x128xf32> -> vector<18x128xf32>
    %92 = arith.addf %86, %91 : vector<18x128xf32>
    %c0_109 = arith.constant 0 : index
    %c3_110 = arith.constant 3 : index
    %c2_111 = arith.constant 2 : index
    %c0_112 = arith.constant 0 : index
    %93 = tpu.strided_load %arg12[%c0_109, %c3_110, %c2_111, %c0_112] {strides = array<i32: 1, 2, 2, 1>} : memref<2x8x8x128xf32, #tpu.memory_space<vmem>>, vector<2x3x3x128xf32>
    %94 = vector.shape_cast %93 : vector<2x3x3x128xf32> to vector<18x128xf32>
    %c14 = arith.constant 14 : index
    %c0_113 = arith.constant 0 : index
    %c0_114 = arith.constant 0 : index
    %95 = vector.load %arg3[%c14, %c0_113, %c0_114] : memref<16x128x128xf32, #tpu.memory_space<vmem>>, vector<1x128x128xf32>
    %96 = vector.shape_cast %95 : vector<1x128x128xf32> to vector<128x128xf32>
    %cst_115 = arith.constant dense<0.000000e+00> : vector<18x128xf32>
    %97 = tpu.matmul %94, %96, %cst_115 {dimension_numbers = #tpu.dot_dimension_numbers<[1], [0], [0], [1], [0, 0, 1, 1], [], []>} : vector<18x128xf32>, vector<128x128xf32>, vector<18x128xf32> -> vector<18x128xf32>
    %98 = arith.addf %92, %97 : vector<18x128xf32>
    %c0_116 = arith.constant 0 : index
    %c3_117 = arith.constant 3 : index
    %c3_118 = arith.constant 3 : index
    %c0_119 = arith.constant 0 : index
    %99 = tpu.strided_load %arg12[%c0_116, %c3_117, %c3_118, %c0_119] {strides = array<i32: 1, 2, 2, 1>} : memref<2x8x8x128xf32, #tpu.memory_space<vmem>>, vector<2x3x3x128xf32>
    %100 = vector.shape_cast %99 : vector<2x3x3x128xf32> to vector<18x128xf32>
    %c15 = arith.constant 15 : index
    %c0_120 = arith.constant 0 : index
    %c0_121 = arith.constant 0 : index
    %101 = vector.load %arg3[%c15, %c0_120, %c0_121] : memref<16x128x128xf32, #tpu.memory_space<vmem>>, vector<1x128x128xf32>
    %102 = vector.shape_cast %101 : vector<1x128x128xf32> to vector<128x128xf32>
    %cst_122 = arith.constant dense<0.000000e+00> : vector<18x128xf32>
    %103 = tpu.matmul %100, %102, %cst_122 {dimension_numbers = #tpu.dot_dimension_numbers<[1], [0], [0], [1], [0, 0, 1, 1], [], []>} : vector<18x128xf32>, vector<128x128xf32>, vector<18x128xf32> -> vector<18x128xf32>
    %104 = arith.addf %98, %103 : vector<18x128xf32>
    %c0_123 = arith.constant 0 : index
    %c0_124 = arith.constant 0 : index
    %105 = vector.load %arg4[%c0_123, %c0_124] : memref<1x128xf32, #tpu.memory_space<vmem>>, vector<1x128xf32>
    %106 = vector.broadcast %105 : vector<1x128xf32> to vector<18x128xf32>
    %107 = arith.addf %104, %106 : vector<18x128xf32>
    %cst_125 = arith.constant 0.000000e+00 : f32
    %108 = vector.broadcast %cst_125 : f32 to vector<18x128xf32>
    %109 = arith.maximumf %107, %108 : vector<18x128xf32>
    %110 = vector.shape_cast %109 : vector<18x128xf32> to vector<2x3x3x128xf32>
    %c0_126 = arith.constant 0 : index
    %c0_127 = arith.constant 0 : index
    %c0_128 = arith.constant 0 : index
    %c0_129 = arith.constant 0 : index
    %111 = vector.load %arg13[%c0_126, %c0_127, %c0_128, %c0_129] : memref<2x3x3x128xf32, #tpu.memory_space<vmem>>, vector<2x3x3x128xf32>
    tpu.vector_store %arg13[%c0_126, %c0_127, %c0_128, %c0_129], %110 {strides = array<i32>} : memref<2x3x3x128xf32, #tpu.memory_space<vmem>>, vector<2x3x3x128xf32>,
    %c0_130 = arith.constant 0 : index
    %c0_131 = arith.constant 0 : index
    %c0_132 = arith.constant 0 : index
    %c0_133 = arith.constant 0 : index
    %112 = vector.load %arg13[%c0_130, %c0_131, %c0_132, %c0_133] : memref<2x3x3x128xf32, #tpu.memory_space<vmem>>, vector<2x1x1x128xf32>
    %113 = vector.shape_cast %112 : vector<2x1x1x128xf32> to vector<2x128xf32>
    %c0_134 = arith.constant 0 : index
    %c0_135 = arith.constant 0 : index
    %c0_136 = arith.constant 0 : index
    %114 = vector.load %arg5[%c0_134, %c0_135, %c0_136] : memref<9x128x128xf32, #tpu.memory_space<vmem>>, vector<1x128x128xf32>
    %115 = vector.shape_cast %114 : vector<1x128x128xf32> to vector<128x128xf32>
    %cst_137 = arith.constant dense<0.000000e+00> : vector<2x128xf32>
    %116 = tpu.matmul %113, %115, %cst_137 {dimension_numbers = #tpu.dot_dimension_numbers<[1], [0], [0], [1], [0, 0, 1, 1], [], []>} : vector<2x128xf32>, vector<128x128xf32>, vector<2x128xf32> -> vector<2x128xf32>
    %c0_138 = arith.constant 0 : index
    %c0_139 = arith.constant 0 : index
    %c1_140 = arith.constant 1 : index
    %c0_141 = arith.constant 0 : index
    %117 = vector.load %arg13[%c0_138, %c0_139, %c1_140, %c0_141] : memref<2x3x3x128xf32, #tpu.memory_space<vmem>>, vector<2x1x1x128xf32>
    %118 = vector.shape_cast %117 : vector<2x1x1x128xf32> to vector<2x128xf32>
    %c1_142 = arith.constant 1 : index
    %c0_143 = arith.constant 0 : index
    %c0_144 = arith.constant 0 : index
    %119 = vector.load %arg5[%c1_142, %c0_143, %c0_144] : memref<9x128x128xf32, #tpu.memory_space<vmem>>, vector<1x128x128xf32>
    %120 = vector.shape_cast %119 : vector<1x128x128xf32> to vector<128x128xf32>
    %cst_145 = arith.constant dense<0.000000e+00> : vector<2x128xf32>
    %121 = tpu.matmul %118, %120, %cst_145 {dimension_numbers = #tpu.dot_dimension_numbers<[1], [0], [0], [1], [0, 0, 1, 1], [], []>} : vector<2x128xf32>, vector<128x128xf32>, vector<2x128xf32> -> vector<2x128xf32>
    %122 = arith.addf %116, %121 : vector<2x128xf32>
    %c0_146 = arith.constant 0 : index
    %c0_147 = arith.constant 0 : index
    %c2_148 = arith.constant 2 : index
    %c0_149 = arith.constant 0 : index
    %123 = vector.load %arg13[%c0_146, %c0_147, %c2_148, %c0_149] : memref<2x3x3x128xf32, #tpu.memory_space<vmem>>, vector<2x1x1x128xf32>
    %124 = vector.shape_cast %123 : vector<2x1x1x128xf32> to vector<2x128xf32>
    %c2_150 = arith.constant 2 : index
    %c0_151 = arith.constant 0 : index
    %c0_152 = arith.constant 0 : index
    %125 = vector.load %arg5[%c2_150, %c0_151, %c0_152] : memref<9x128x128xf32, #tpu.memory_space<vmem>>, vector<1x128x128xf32>
    %126 = vector.shape_cast %125 : vector<1x128x128xf32> to vector<128x128xf32>
    %cst_153 = arith.constant dense<0.000000e+00> : vector<2x128xf32>
    %127 = tpu.matmul %124, %126, %cst_153 {dimension_numbers = #tpu.dot_dimension_numbers<[1], [0], [0], [1], [0, 0, 1, 1], [], []>} : vector<2x128xf32>, vector<128x128xf32>, vector<2x128xf32> -> vector<2x128xf32>
    %128 = arith.addf %122, %127 : vector<2x128xf32>
    %c0_154 = arith.constant 0 : index
    %c1_155 = arith.constant 1 : index
    %c0_156 = arith.constant 0 : index
    %c0_157 = arith.constant 0 : index
    %129 = vector.load %arg13[%c0_154, %c1_155, %c0_156, %c0_157] : memref<2x3x3x128xf32, #tpu.memory_space<vmem>>, vector<2x1x1x128xf32>
    %130 = vector.shape_cast %129 : vector<2x1x1x128xf32> to vector<2x128xf32>
    %c3_158 = arith.constant 3 : index
    %c0_159 = arith.constant 0 : index
    %c0_160 = arith.constant 0 : index
    %131 = vector.load %arg5[%c3_158, %c0_159, %c0_160] : memref<9x128x128xf32, #tpu.memory_space<vmem>>, vector<1x128x128xf32>
    %132 = vector.shape_cast %131 : vector<1x128x128xf32> to vector<128x128xf32>
    %cst_161 = arith.constant dense<0.000000e+00> : vector<2x128xf32>
    %133 = tpu.matmul %130, %132, %cst_161 {dimension_numbers = #tpu.dot_dimension_numbers<[1], [0], [0], [1], [0, 0, 1, 1], [], []>} : vector<2x128xf32>, vector<128x128xf32>, vector<2x128xf32> -> vector<2x128xf32>
    %134 = arith.addf %128, %133 : vector<2x128xf32>
    %c0_162 = arith.constant 0 : index
    %c1_163 = arith.constant 1 : index
    %c1_164 = arith.constant 1 : index
    %c0_165 = arith.constant 0 : index
    %135 = vector.load %arg13[%c0_162, %c1_163, %c1_164, %c0_165] : memref<2x3x3x128xf32, #tpu.memory_space<vmem>>, vector<2x1x1x128xf32>
    %136 = vector.shape_cast %135 : vector<2x1x1x128xf32> to vector<2x128xf32>
    %c4_166 = arith.constant 4 : index
    %c0_167 = arith.constant 0 : index
    %c0_168 = arith.constant 0 : index
    %137 = vector.load %arg5[%c4_166, %c0_167, %c0_168] : memref<9x128x128xf32, #tpu.memory_space<vmem>>, vector<1x128x128xf32>
    %138 = vector.shape_cast %137 : vector<1x128x128xf32> to vector<128x128xf32>
    %cst_169 = arith.constant dense<0.000000e+00> : vector<2x128xf32>
    %139 = tpu.matmul %136, %138, %cst_169 {dimension_numbers = #tpu.dot_dimension_numbers<[1], [0], [0], [1], [0, 0, 1, 1], [], []>} : vector<2x128xf32>, vector<128x128xf32>, vector<2x128xf32> -> vector<2x128xf32>
    %140 = arith.addf %134, %139 : vector<2x128xf32>
    %c0_170 = arith.constant 0 : index
    %c1_171 = arith.constant 1 : index
    %c2_172 = arith.constant 2 : index
    %c0_173 = arith.constant 0 : index
    %141 = vector.load %arg13[%c0_170, %c1_171, %c2_172, %c0_173] : memref<2x3x3x128xf32, #tpu.memory_space<vmem>>, vector<2x1x1x128xf32>
    %142 = vector.shape_cast %141 : vector<2x1x1x128xf32> to vector<2x128xf32>
    %c5_174 = arith.constant 5 : index
    %c0_175 = arith.constant 0 : index
    %c0_176 = arith.constant 0 : index
    %143 = vector.load %arg5[%c5_174, %c0_175, %c0_176] : memref<9x128x128xf32, #tpu.memory_space<vmem>>, vector<1x128x128xf32>
    %144 = vector.shape_cast %143 : vector<1x128x128xf32> to vector<128x128xf32>
    %cst_177 = arith.constant dense<0.000000e+00> : vector<2x128xf32>
    %145 = tpu.matmul %142, %144, %cst_177 {dimension_numbers = #tpu.dot_dimension_numbers<[1], [0], [0], [1], [0, 0, 1, 1], [], []>} : vector<2x128xf32>, vector<128x128xf32>, vector<2x128xf32> -> vector<2x128xf32>
    %146 = arith.addf %140, %145 : vector<2x128xf32>
    %c0_178 = arith.constant 0 : index
    %c2_179 = arith.constant 2 : index
    %c0_180 = arith.constant 0 : index
    %c0_181 = arith.constant 0 : index
    %147 = vector.load %arg13[%c0_178, %c2_179, %c0_180, %c0_181] : memref<2x3x3x128xf32, #tpu.memory_space<vmem>>, vector<2x1x1x128xf32>
    %148 = vector.shape_cast %147 : vector<2x1x1x128xf32> to vector<2x128xf32>
    %c6_182 = arith.constant 6 : index
    %c0_183 = arith.constant 0 : index
    %c0_184 = arith.constant 0 : index
    %149 = vector.load %arg5[%c6_182, %c0_183, %c0_184] : memref<9x128x128xf32, #tpu.memory_space<vmem>>, vector<1x128x128xf32>
    %150 = vector.shape_cast %149 : vector<1x128x128xf32> to vector<128x128xf32>
    %cst_185 = arith.constant dense<0.000000e+00> : vector<2x128xf32>
    %151 = tpu.matmul %148, %150, %cst_185 {dimension_numbers = #tpu.dot_dimension_numbers<[1], [0], [0], [1], [0, 0, 1, 1], [], []>} : vector<2x128xf32>, vector<128x128xf32>, vector<2x128xf32> -> vector<2x128xf32>
    %152 = arith.addf %146, %151 : vector<2x128xf32>
    %c0_186 = arith.constant 0 : index
    %c2_187 = arith.constant 2 : index
    %c1_188 = arith.constant 1 : index
    %c0_189 = arith.constant 0 : index
    %153 = vector.load %arg13[%c0_186, %c2_187, %c1_188, %c0_189] : memref<2x3x3x128xf32, #tpu.memory_space<vmem>>, vector<2x1x1x128xf32>
    %154 = vector.shape_cast %153 : vector<2x1x1x128xf32> to vector<2x128xf32>
    %c7_190 = arith.constant 7 : index
    %c0_191 = arith.constant 0 : index
    %c0_192 = arith.constant 0 : index
    %155 = vector.load %arg5[%c7_190, %c0_191, %c0_192] : memref<9x128x128xf32, #tpu.memory_space<vmem>>, vector<1x128x128xf32>
    %156 = vector.shape_cast %155 : vector<1x128x128xf32> to vector<128x128xf32>
    %cst_193 = arith.constant dense<0.000000e+00> : vector<2x128xf32>
    %157 = tpu.matmul %154, %156, %cst_193 {dimension_numbers = #tpu.dot_dimension_numbers<[1], [0], [0], [1], [0, 0, 1, 1], [], []>} : vector<2x128xf32>, vector<128x128xf32>, vector<2x128xf32> -> vector<2x128xf32>
    %158 = arith.addf %152, %157 : vector<2x128xf32>
    %c0_194 = arith.constant 0 : index
    %c2_195 = arith.constant 2 : index
    %c2_196 = arith.constant 2 : index
    %c0_197 = arith.constant 0 : index
    %159 = vector.load %arg13[%c0_194, %c2_195, %c2_196, %c0_197] : memref<2x3x3x128xf32, #tpu.memory_space<vmem>>, vector<2x1x1x128xf32>
    %160 = vector.shape_cast %159 : vector<2x1x1x128xf32> to vector<2x128xf32>
    %c8_198 = arith.constant 8 : index
    %c0_199 = arith.constant 0 : index
    %c0_200 = arith.constant 0 : index
    %161 = vector.load %arg5[%c8_198, %c0_199, %c0_200] : memref<9x128x128xf32, #tpu.memory_space<vmem>>, vector<1x128x128xf32>
    %162 = vector.shape_cast %161 : vector<1x128x128xf32> to vector<128x128xf32>
    %cst_201 = arith.constant dense<0.000000e+00> : vector<2x128xf32>
    %163 = tpu.matmul %160, %162, %cst_201 {dimension_numbers = #tpu.dot_dimension_numbers<[1], [0], [0], [1], [0, 0, 1, 1], [], []>} : vector<2x128xf32>, vector<128x128xf32>, vector<2x128xf32> -> vector<2x128xf32>
    %164 = arith.addf %158, %163 : vector<2x128xf32>
    %c0_202 = arith.constant 0 : index
    %c0_203 = arith.constant 0 : index
    %165 = vector.load %arg6[%c0_202, %c0_203] : memref<1x128xf32, #tpu.memory_space<vmem>>, vector<1x128xf32>
    %166 = vector.broadcast %165 : vector<1x128xf32> to vector<2x128xf32>
    %167 = arith.addf %164, %166 : vector<2x128xf32>
    %cst_204 = arith.constant 0.000000e+00 : f32
    %168 = vector.broadcast %cst_204 : f32 to vector<2x128xf32>
    %169 = arith.maximumf %167, %168 : vector<2x128xf32>
    %c0_205 = arith.constant 0 : index
    %c0_206 = arith.constant 0 : index
    %170 = vector.load %arg7[%c0_205, %c0_206] : memref<128x256xf32, #tpu.memory_space<vmem>>, vector<128x256xf32>
    %cst_207 = arith.constant dense<0.000000e+00> : vector<2x256xf32>
    %171 = tpu.matmul %169, %170, %cst_207 {dimension_numbers = #tpu.dot_dimension_numbers<[1], [0], [0], [1], [0, 0, 1, 1], [], []>} : vector<2x128xf32>, vector<128x256xf32>, vector<2x256xf32> -> vector<2x256xf32>
    %c0_208 = arith.constant 0 : index
    %c0_209 = arith.constant 0 : index
    %172 = vector.load %arg8[%c0_208, %c0_209] : memref<1x256xf32, #tpu.memory_space<vmem>>, vector<1x256xf32>
    %173 = vector.broadcast %172 : vector<1x256xf32> to vector<2x256xf32>
    %174 = arith.addf %171, %173 : vector<2x256xf32>
    %cst_210 = arith.constant 0.000000e+00 : f32
    %175 = vector.broadcast %cst_210 : f32 to vector<2x256xf32>
    %176 = arith.maximumf %174, %175 : vector<2x256xf32>
    %c0_211 = arith.constant 0 : index
    %c0_212 = arith.constant 0 : index
    %177 = vector.load %arg9[%c0_211, %c0_212] : memref<256x128xf32, #tpu.memory_space<vmem>>, vector<256x128xf32>
    %cst_213 = arith.constant dense<0.000000e+00> : vector<2x128xf32>
    %178 = tpu.matmul %176, %177, %cst_213 {dimension_numbers = #tpu.dot_dimension_numbers<[1], [0], [0], [1], [0, 0, 1, 1], [], []>} : vector<2x256xf32>, vector<256x128xf32>, vector<2x128xf32> -> vector<2x128xf32>
    %c0_214 = arith.constant 0 : index
    %c0_215 = arith.constant 0 : index
    %179 = vector.load %arg10[%c0_214, %c0_215] : memref<1x128xf32, #tpu.memory_space<vmem>>, vector<1x128xf32>
    %180 = vector.broadcast %179 : vector<1x128xf32> to vector<2x128xf32>
    %181 = arith.addf %178, %180 : vector<2x128xf32>
    %182 = vector.extract_strided_slice %181 {offsets = [0, 127], sizes = [2, 1], strides = [1, 1]} : vector<2x128xf32> to vector<2x1xf32>
    %183 = vector.shape_cast %181 : vector<2x128xf32> to vector<1x2x128xf32>
    %cst_216 = arith.constant dense<0.000000e+00> : vector<1xf32>
    %184 = vector.multi_reduction <add>, %183, %cst_216 [1, 2] : vector<1x2x128xf32> to vector<1xf32>
    %185 = vector.shape_cast %184 : vector<1xf32> to vector<1x1x1xf32>
    %186 = vector.extract %185[0, 0, 0] : f32 from vector<1x1x1xf32>
    %187 = vector.shape_cast %182 : vector<2x1xf32> to vector<1x2x1xf32>
    %cst_217 = arith.constant dense<0.000000e+00> : vector<1xf32>
    %188 = vector.multi_reduction <add>, %187, %cst_217 [1, 2] : vector<1x2x1xf32> to vector<1xf32>
    %189 = vector.shape_cast %188 : vector<1xf32> to vector<1x1x1xf32>
    %190 = vector.extract %189[0, 0, 0] : f32 from vector<1x1x1xf32>
    %191 = arith.subf %186, %190 : f32
    %cst_218 = arith.constant 1.600000e+01 : f32
    %192 = arith.divf %191, %cst_218 : f32
    %193 = vector.broadcast %182 : vector<2x1xf32> to vector<2x128xf32>
    %194 = arith.addf %181, %193 : vector<2x128xf32>
    %195 = vector.broadcast %192 : f32 to vector<2x128xf32>
    %196 = arith.subf %194, %195 : vector<2x128xf32>
    %c0_219 = arith.constant 0 : index
    %c0_220 = arith.constant 0 : index
    %197 = vector.load %arg11[%c0_219, %c0_220] : memref<2x128xf32, #tpu.memory_space<vmem>>, vector<2x128xf32>
    tpu.vector_store %arg11[%c0_219, %c0_220], %196 {strides = array<i32>} : memref<2x128xf32, #tpu.memory_space<vmem>>, vector<2x128xf32>,
    return
  }
}

</mosaic_0001>

<llo_original>
// kernel: conv_dueling_dqn_forward.1
$region0: #{conv_dueling_dqn_forward.1}
  #allocation0 [shape = 'u32[]', space=smem, size = 0x4, offset = 0x4, fixed_abs, tag = 'smem constant byte address 0x4 - core index']
  #allocation1 [shape = 'u32[144,128]{1,0:T(1,128)}', space=vmem, size = 0x12000, scoped, tag = 'internal scratch']
  #allocation2 [shape = 'f32[2,8,8,128]{3,2,1,0:T(8,128)}', space=vmem, size = 0x10000, scoped, tag = 'scratch operand']
  #allocation3 [shape = 'f32[2,3,3,128]{3,2,1,0:T(4,128)}', space=vmem, size = 0x3000, scoped, tag = 'scratch operand']
  %s0 = inlined_call_operand.vmem [shape: f32[128,256], index: 0, kind: input, shape index: {}]
  %s1 = inlined_call_operand.vmem [shape: f32[256,128], index: 1, kind: input, shape index: {}]
  %s2 = inlined_call_operand.vmem [shape: f32[1,128], index: 2, kind: input, shape index: {}]
  %s3 = inlined_call_operand.vmem [shape: f32[16,128,128], index: 3, kind: input, shape index: {}]
  %s4 = inlined_call_operand.vmem [shape: f32[1,128], index: 4, kind: input, shape index: {}]
  %s5 = inlined_call_operand.vmem [shape: f32[9,128,128], index: 5, kind: input, shape index: {}]
  %s6 = inlined_call_operand.vmem [shape: f32[1,128], index: 6, kind: input, shape index: {}]
  %s7 = inlined_call_operand.vmem [shape: f32[128,256], index: 7, kind: input, shape index: {}]
  %s8 = inlined_call_operand.vmem [shape: f32[1,256], index: 8, kind: input, shape index: {}]
  %s9 = inlined_call_operand.vmem [shape: f32[256,128], index: 9, kind: input, shape index: {}]
  %s10 = inlined_call_operand.vmem [shape: f32[1,128], index: 10, kind: input, shape index: {}]
  %s11 = inlined_call_operand.hbm [shape: f32[2,128], index: 11, kind: output, shape index: {}]
  %s12 = sld [smem:[#allocation0]]
  $region54: #{conv_dueling_dqn_forward.1} parent=0
    _
  %s14 = ssub.s32 1, %s12
  %s15 = scalar_select 0, %s14, %s12
  $region1: #{conv_dueling_dqn_forward.1} parent=0
    #allocation4 [shape = 'u8[1024]{0}', space=vmem, size = 0x400, scoped, tag = 'output window, operand 0, single buffered']
    #allocation5 [shape = 's32[1]{0}', space=sflag, size = 0x4, scoped, tag = 'scoped memory for conv_dueling_dqn_forward.1']
    %16 = vsyncpa [#allocation5], 0
    // Predicated region
    $region2: #{conv_dueling_dqn_forward.1} parent=1 // pred_check
      _
    $region3: #{conv_dueling_dqn_forward.1} parent=1 // pred_check_branch
      %18 = sbr.rel (0) target = $region5
    $region4: #{conv_dueling_dqn_forward.1} parent=1 // pred_region
      _
    $region5: #{conv_dueling_dqn_forward.1} parent=1 // pred_fallthru
      _
    // Predicated region
    $region6: #{conv_dueling_dqn_forward.1} parent=1 // pred_check
      _
    $region7: #{conv_dueling_dqn_forward.1} parent=1 // pred_check_branch
      %20 = sbr.rel (0) target = $region9
    $region8: #{conv_dueling_dqn_forward.1} parent=1 // pred_region
      _
    $region9: #{conv_dueling_dqn_forward.1} parent=1 // pred_fallthru
      _
    // Predicated region
    $region10: #{conv_dueling_dqn_forward.1} parent=1 // pred_check
      _
    $region11: #{conv_dueling_dqn_forward.1} parent=1 // pred_check_branch
      %22 = sbr.rel (0) target = $region13
    $region12: #{conv_dueling_dqn_forward.1} parent=1 // pred_region
      _
    $region13: #{conv_dueling_dqn_forward.1} parent=1 // pred_fallthru
      _
    // Predicated region
    $region14: #{conv_dueling_dqn_forward.1} parent=1 // pred_check
      _
    $region15: #{conv_dueling_dqn_forward.1} parent=1 // pred_check_branch
      %24 = sbr.rel (0) target = $region17
    $region16: #{conv_dueling_dqn_forward.1} parent=1 // pred_region
      _
    $region17: #{conv_dueling_dqn_forward.1} parent=1 // pred_fallthru
      _
    // Predicated region
    $region18: #{conv_dueling_dqn_forward.1} parent=1 // pred_check
      _
    $region19: #{conv_dueling_dqn_forward.1} parent=1 // pred_check_branch
      %26 = sbr.rel (0) target = $region21
    $region20: #{conv_dueling_dqn_forward.1} parent=1 // pred_region
      _
    $region21: #{conv_dueling_dqn_forward.1} parent=1 // pred_fallthru
      _
    // Predicated region
    $region22: #{conv_dueling_dqn_forward.1} parent=1 // pred_check
      _
    $region23: #{conv_dueling_dqn_forward.1} parent=1 // pred_check_branch
      %28 = sbr.rel (0) target = $region25
    $region24: #{conv_dueling_dqn_forward.1} parent=1 // pred_region
      _
    $region25: #{conv_dueling_dqn_forward.1} parent=1 // pred_fallthru
      _
    // Predicated region
    $region26: #{conv_dueling_dqn_forward.1} parent=1 // pred_check
      _
    $region27: #{conv_dueling_dqn_forward.1} parent=1 // pred_check_branch
      %30 = sbr.rel (0) target = $region29
    $region28: #{conv_dueling_dqn_forward.1} parent=1 // pred_region
      _
    $region29: #{conv_dueling_dqn_forward.1} parent=1 // pred_fallthru
      _
    // Predicated region
    $region30: #{conv_dueling_dqn_forward.1} parent=1 // pred_check
      _
    $region31: #{conv_dueling_dqn_forward.1} parent=1 // pred_check_branch
      %32 = sbr.rel (0) target = $region33
    $region32: #{conv_dueling_dqn_forward.1} parent=1 // pred_region
      _
    $region33: #{conv_dueling_dqn_forward.1} parent=1 // pred_fallthru
      _
    // Predicated region
    $region34: #{conv_dueling_dqn_forward.1} parent=1 // pred_check
      _
    $region35: #{conv_dueling_dqn_forward.1} parent=1 // pred_check_branch
      %34 = sbr.rel (0) target = $region37
    $region36: #{conv_dueling_dqn_forward.1} parent=1 // pred_region
      _
    $region37: #{conv_dueling_dqn_forward.1} parent=1 // pred_fallthru
      _
    // Predicated region
    $region38: #{conv_dueling_dqn_forward.1} parent=1 // pred_check
      _
    $region39: #{conv_dueling_dqn_forward.1} parent=1 // pred_check_branch
      %36 = sbr.rel (0) target = $region41
    $region40: #{conv_dueling_dqn_forward.1} parent=1 // pred_region
      _
    $region41: #{conv_dueling_dqn_forward.1} parent=1 // pred_fallthru
      _
    // Predicated region
    $region42: #{conv_dueling_dqn_forward.1} parent=1 // pred_check
      _
    $region43: #{conv_dueling_dqn_forward.1} parent=1 // pred_check_branch
      %38 = sbr.rel (0) target = $region45
    $region44: #{conv_dueling_dqn_forward.1} parent=1 // pred_region
      _
    $region45: #{conv_dueling_dqn_forward.1} parent=1 // pred_fallthru
      _
    %v39 = vld [vmem:[%s0] sm:$0xff]
    %v40 = vld [vmem:[%s0 + $0x8] sm:$0xff]
    %v41 = vld [vmem:[%s0 + $0x10] sm:$0xff]
    %v42 = vld [vmem:[%s0 + $0x18] sm:$0xff]
    %v43 = vld [vmem:[%s0 + $0x20] sm:$0xff]
    %v44 = vld [vmem:[%s0 + $0x28] sm:$0xff]
    %v45 = vld [vmem:[%s0 + $0x30] sm:$0xff]
    %v46 = vld [vmem:[%s0 + $0x38] sm:$0xff]
    %v47 = vld [vmem:[%s0 + $0x40] sm:$0xff]
    %v48 = vld [vmem:[%s0 + $0x48] sm:$0xff]
    %v49 = vld [vmem:[%s0 + $0x50] sm:$0xff]
    %v50 = vld [vmem:[%s0 + $0x58] sm:$0xff]
    %v51 = vld [vmem:[%s0 + $0x60] sm:$0xff]
    %v52 = vld [vmem:[%s0 + $0x68] sm:$0xff]
    %v53 = vld [vmem:[%s0 + $0x70] sm:$0xff]
    %v54 = vld [vmem:[%s0 + $0x78] sm:$0xff]
    %v55 = vld [vmem:[%s0 + $0x80] sm:$0xff]
    %v56 = vld [vmem:[%s0 + $0x88] sm:$0xff]
    %v57 = vld [vmem:[%s0 + $0x90] sm:$0xff]
    %v58 = vld [vmem:[%s0 + $0x98] sm:$0xff]
    %v59 = vld [vmem:[%s0 + $0xa0] sm:$0xff]
    %v60 = vld [vmem:[%s0 + $0xa8] sm:$0xff]
    %v61 = vld [vmem:[%s0 + $0xb0] sm:$0xff]
    %v62 = vld [vmem:[%s0 + $0xb8] sm:$0xff]
    %v63 = vld [vmem:[%s0 + $0xc0] sm:$0xff]
    %v64 = vld [vmem:[%s0 + $0xc8] sm:$0xff]
    %v65 = vld [vmem:[%s0 + $0xd0] sm:$0xff]
    %v66 = vld [vmem:[%s0 + $0xd8] sm:$0xff]
    %v67 = vld [vmem:[%s0 + $0xe0] sm:$0xff]
    %v68 = vld [vmem:[%s0 + $0xe8] sm:$0xff]
    %v69 = vld [vmem:[%s0 + $0xf0] sm:$0xff]
    %v70 = vld [vmem:[%s0 + $0xf8] sm:$0xff]
    %v71 = vld [vmem:[%s1] sm:$0xff]
    %v72 = vld [vmem:[%s1 + $0x8] sm:$0xff]
    %v73 = vld [vmem:[%s1 + $0x10] sm:$0xff]
    %v74 = vld [vmem:[%s1 + $0x18] sm:$0xff]
    %v75 = vld [vmem:[%s1 + $0x20] sm:$0xff]
    %v76 = vld [vmem:[%s1 + $0x28] sm:$0xff]
    %v77 = vld [vmem:[%s1 + $0x30] sm:$0xff]
    %v78 = vld [vmem:[%s1 + $0x38] sm:$0xff]
    %v79 = vld [vmem:[%s1 + $0x40] sm:$0xff]
    %v80 = vld [vmem:[%s1 + $0x48] sm:$0xff]
    %v81 = vld [vmem:[%s1 + $0x50] sm:$0xff]
    %v82 = vld [vmem:[%s1 + $0x58] sm:$0xff]
    %v83 = vld [vmem:[%s1 + $0x60] sm:$0xff]
    %v84 = vld [vmem:[%s1 + $0x68] sm:$0xff]
    %v85 = vld [vmem:[%s1 + $0x70] sm:$0xff]
    %v86 = vld [vmem:[%s1 + $0x78] sm:$0xff]
    %v87 = vld [vmem:[%s1 + $0x80] sm:$0xff]
    %v88 = vld [vmem:[%s1 + $0x88] sm:$0xff]
    %v89 = vld [vmem:[%s1 + $0x90] sm:$0xff]
    %v90 = vld [vmem:[%s1 + $0x98] sm:$0xff]
    %v91 = vld [vmem:[%s1 + $0xa0] sm:$0xff]
    %v92 = vld [vmem:[%s1 + $0xa8] sm:$0xff]
    %v93 = vld [vmem:[%s1 + $0xb0] sm:$0xff]
    %v94 = vld [vmem:[%s1 + $0xb8] sm:$0xff]
    %v95 = vld [vmem:[%s1 + $0xc0] sm:$0xff]
    %v96 = vld [vmem:[%s1 + $0xc8] sm:$0xff]
    %v97 = vld [vmem:[%s1 + $0xd0] sm:$0xff]
    %v98 = vld [vmem:[%s1 + $0xd8] sm:$0xff]
    %v99 = vld [vmem:[%s1 + $0xe0] sm:$0xff]
    %v100 = vld [vmem:[%s1 + $0xe8] sm:$0xff]
    %v101 = vld [vmem:[%s1 + $0xf0] sm:$0xff]
    %v102 = vld [vmem:[%s1 + $0xf8] sm:$0xff]
    %v103 = vld [vmem:[%s2] sm:$0x1]
    %v105 = vlaneseq
    %v106 = vshrl.u32 %v105, 7
    %v107 = vsub.s32 0, %v106
    %v108 = vrot.slane %v103, %v107
    %110 = vmatprep.subr.mxu0 0.0
    %111 = vmatpush1.msra.mxu0 %v86
    %112 = vmatprep.subr.mxu0 0.0
    %113 = vmatpush1.msra.mxu0 %v85
    %114 = vmatprep.subr.mxu0 0.0
    %115 = vmatpush1.msra.mxu0 %v84
    %116 = vmatprep.subr.mxu0 0.0
    %117 = vmatpush1.msra.mxu0 %v83
    %118 = vmatprep.subr.mxu0 0.0
    %119 = vmatpush1.msra.mxu0 %v82
    %120 = vmatprep.subr.mxu0 0.0
    %121 = vmatpush1.msra.mxu0 %v81
    %122 = vmatprep.subr.mxu0 0.0
    %123 = vmatpush1.msra.mxu0 %v80
    %124 = vmatprep.subr.mxu0 0.0
    %125 = vmatpush1.msra.mxu0 %v79
    %126 = vmatprep.subr.mxu0 0.0
    %127 = vmatpush1.msra.mxu0 %v78
    %128 = vmatprep.subr.mxu0 0.0
    %129 = vmatpush1.msra.mxu0 %v77
    %130 = vmatprep.subr.mxu0 0.0
    %131 = vmatpush1.msra.mxu0 %v76
    %132 = vmatprep.subr.mxu0 0.0
    %133 = vmatpush1.msra.mxu0 %v75
    %134 = vmatprep.subr.mxu0 0.0
    %135 = vmatpush1.msra.mxu0 %v74
    %136 = vmatprep.subr.mxu0 0.0
    %137 = vmatpush1.msra.mxu0 %v73
    %138 = vmatprep.subr.mxu0 0.0
    %139 = vmatpush1.msra.mxu0 %v72
    %140 = vmatprep.subr.mxu0 0.0
    %141 = vmatpush1.msra.mxu0 %v71
    %142 = vmatprep.subr.mxu0 0.0
    %143 = vmatpush2.msra.mxu0 %v102
    %144 = vmatprep.subr.mxu0 0.0
    %145 = vmatpush2.msra.mxu0 %v101
    %146 = vmatprep.subr.mxu0 0.0
    %147 = vmatpush2.msra.mxu0 %v100
    %148 = vmatprep.subr.mxu0 0.0
    %149 = vmatpush2.msra.mxu0 %v99
    %150 = vmatprep.subr.mxu0 0.0
    %151 = vmatpush2.msra.mxu0 %v98
    %152 = vmatprep.subr.mxu0 0.0
    %153 = vmatpush2.msra.mxu0 %v97
    %154 = vmatprep.subr.mxu0 0.0
    %155 = vmatpush2.msra.mxu0 %v96
    %156 = vmatprep.subr.mxu0 0.0
    %157 = vmatpush2.msra.mxu0 %v95
    %158 = vmatprep.subr.mxu0 0.0
    %159 = vmatpush2.msra.mxu0 %v94
    %160 = vmatprep.subr.mxu0 0.0
    %161 = vmatpush2.msra.mxu0 %v93
    %162 = vmatprep.subr.mxu0 0.0
    %163 = vmatpush2.msra.mxu0 %v92
    %164 = vmatprep.subr.mxu0 0.0
    %165 = vmatpush2.msra.mxu0 %v91
    %166 = vmatprep.subr.mxu0 0.0
    %167 = vmatpush2.msra.mxu0 %v90
    %168 = vmatprep.subr.mxu0 0.0
    %169 = vmatpush2.msra.mxu0 %v89
    %170 = vmatprep.subr.mxu0 0.0
    %171 = vmatpush2.msra.mxu0 %v88
    %172 = vmatprep.subr.mxu0 0.0
    %173 = vmatpush2.msra.mxu0 %v87
    %174 = vmatprep.mubr.f32.mxu0 %v40
    %175 = vmatmul.mubr.f32.gmra.mxu0 %v39
    %v176 = vpop.f32.mrf.mxu0
    %v177 = vadd.f32 %v108, %v176
    %v178 = vpop.f32.mrf.mxu0
    %179 = vmatprep.mubr.f32.mxu0 %v42
    %180 = vmatmul.mubr.f32.gmra.mxu0 %v41
    %v181 = vpop.f32.mrf.mxu0
    %v182 = vadd.f32 %v108, %v181
    %v183 = vpop.f32.mrf.mxu0
    %184 = vmatprep.mubr.f32.mxu0 %v44
    %185 = vmatmul.mubr.f32.gmra.mxu0 %v43
    %v186 = vpop.f32.mrf.mxu0
    %v187 = vadd.f32 %v108, %v186
    %v188 = vpop.f32.mrf.mxu0
    %189 = vmatprep.mubr.f32.mxu0 %v46
    %190 = vmatmul.mubr.f32.gmra.mxu0 %v45
    %v191 = vpop.f32.mrf.mxu0
    %v192 = vadd.f32 %v108, %v191
    %v193 = vpop.f32.mrf.mxu0
    %194 = vmatprep.mubr.f32.mxu0 %v48
    %195 = vmatmul.mubr.f32.gmra.mxu0 %v47
    %v196 = vpop.f32.mrf.mxu0
    %v197 = vadd.f32 %v108, %v196
    %v198 = vpop.f32.mrf.mxu0
    %199 = vmatprep.mubr.f32.mxu0 %v50
    %200 = vmatmul.mubr.f32.gmra.mxu0 %v49
    %v201 = vpop.f32.mrf.mxu0
    %v202 = vadd.f32 %v108, %v201
    %v203 = vpop.f32.mrf.mxu0
    %204 = vmatprep.mubr.f32.mxu0 %v52
    %205 = vmatmul.mubr.f32.gmra.mxu0 %v51
    %v206 = vpop.f32.mrf.mxu0
    %v207 = vadd.f32 %v108, %v206
    %v208 = vpop.f32.mrf.mxu0
    %209 = vmatprep.mubr.f32.mxu0 %v54
    %210 = vmatmul.mubr.f32.gmra.mxu0 %v53
    %v211 = vpop.f32.mrf.mxu0
    %v212 = vadd.f32 %v108, %v211
    %v213 = vpop.f32.mrf.mxu0
    %214 = vmatprep.mubr.f32.mxu0 %v56
    %215 = vmatmul.mubr.f32.gmra.mxu0 %v55
    %v216 = vpop.f32.mrf.mxu0
    %v217 = vadd.f32 %v108, %v216
    %v218 = vpop.f32.mrf.mxu0
    %219 = vmatprep.mubr.f32.mxu0 %v58
    %220 = vmatmul.mubr.f32.gmra.mxu0 %v57
    %v221 = vpop.f32.mrf.mxu0
    %v222 = vadd.f32 %v108, %v221
    %v223 = vpop.f32.mrf.mxu0
    %224 = vmatprep.mubr.f32.mxu0 %v60
    %225 = vmatmul.mubr.f32.gmra.mxu0 %v59
    %v226 = vpop.f32.mrf.mxu0
    %v227 = vadd.f32 %v108, %v226
    %v228 = vpop.f32.mrf.mxu0
    %229 = vmatprep.mubr.f32.mxu0 %v62
    %230 = vmatmul.mubr.f32.gmra.mxu0 %v61
    %v231 = vpop.f32.mrf.mxu0
    %v232 = vadd.f32 %v108, %v231
    %v233 = vpop.f32.mrf.mxu0
    %234 = vmatprep.mubr.f32.mxu0 %v64
    %235 = vmatmul.mubr.f32.gmra.mxu0 %v63
    %v236 = vpop.f32.mrf.mxu0
    %v237 = vadd.f32 %v108, %v236
    %v238 = vpop.f32.mrf.mxu0
    %239 = vmatprep.mubr.f32.mxu0 %v66
    %240 = vmatmul.mubr.f32.gmra.mxu0 %v65
    %v241 = vpop.f32.mrf.mxu0
    %v242 = vadd.f32 %v108, %v241
    %v243 = vpop.f32.mrf.mxu0
    %244 = vmatprep.mubr.f32.mxu0 %v68
    %245 = vmatmul.mubr.f32.gmra.mxu0 %v67
    %v246 = vpop.f32.mrf.mxu0
    %v247 = vadd.f32 %v108, %v246
    %v248 = vpop.f32.mrf.mxu0
    %249 = vmatprep.mubr.f32.mxu0 %v70
    %250 = vmatmul.mubr.f32.gmra.mxu0 %v69
    %v251 = vpop.f32.mrf.mxu0
    %v252 = vadd.f32 %v108, %v251
    %v253 = vpop.f32.mrf.mxu0
    %254 = vdwg.mxu0
    %v255 = vmax.f32 %v177, 0.0
    %v256 = vmax.f32 %v182, 0.0
    %v257 = vmax.f32 %v187, 0.0
    %v258 = vmax.f32 %v192, 0.0
    %v259 = vmax.f32 %v197, 0.0
    %v260 = vmax.f32 %v202, 0.0
    %v261 = vmax.f32 %v207, 0.0
    %v262 = vmax.f32 %v212, 0.0
    %v263 = vmax.f32 %v217, 0.0
    %v264 = vmax.f32 %v222, 0.0
    %v265 = vmax.f32 %v227, 0.0
    %v266 = vmax.f32 %v232, 0.0
    %v267 = vmax.f32 %v237, 0.0
    %v268 = vmax.f32 %v242, 0.0
    %v269 = vmax.f32 %v247, 0.0
    %v270 = vmax.f32 %v252, 0.0
    %271 = vst [vmem:[#allocation2] sm:$0xff] %v255
    %272 = vst [vmem:[#allocation2 + $0x8] sm:$0xff] %v256
    %273 = vst [vmem:[#allocation2 + $0x10] sm:$0xff] %v257
    %274 = vst [vmem:[#allocation2 + $0x18] sm:$0xff] %v258
    %275 = vst [vmem:[#allocation2 + $0x20] sm:$0xff] %v259
    %276 = vst [vmem:[#allocation2 + $0x28] sm:$0xff] %v260
    %277 = vst [vmem:[#allocation2 + $0x30] sm:$0xff] %v261
    %278 = vst [vmem:[#allocation2 + $0x38] sm:$0xff] %v262
    %279 = vst [vmem:[#allocation2 + $0x40] sm:$0xff] %v263
    %280 = vst [vmem:[#allocation2 + $0x48] sm:$0xff] %v264
    %281 = vst [vmem:[#allocation2 + $0x50] sm:$0xff] %v265
    %282 = vst [vmem:[#allocation2 + $0x58] sm:$0xff] %v266
    %283 = vst [vmem:[#allocation2 + $0x60] sm:$0xff] %v267
    %284 = vst [vmem:[#allocation2 + $0x68] sm:$0xff] %v268
    %285 = vst [vmem:[#allocation2 + $0x70] sm:$0xff] %v269
    %286 = vst [vmem:[#allocation2 + $0x78] sm:$0xff] %v270
    %v287 = vld [vmem:[#allocation2] ss:$2 sm:$0x7]
    %s288 = scalar_lea.vmem [#allocation2], 16
    %v289 = vld [vmem:[%s288] ss:$2 sm:$0x7]
    %s290 = scalar_lea.vmem [#allocation2], 32
    %v291 = vld [vmem:[%s290] ss:$2 sm:$0x7]
    %s292 = scalar_lea.vmem [#allocation2], 64
    %v293 = vld [vmem:[%s292] ss:$2 sm:$0x7]
    %s294 = scalar_lea.vmem [#allocation2], 80
    %v295 = vld [vmem:[%s294] ss:$2 sm:$0x7]
    %s296 = scalar_lea.vmem [#allocation2], 96
    %v297 = vld [vmem:[%s296] ss:$2 sm:$0x7]
    %v305 = vunpack.c.l.s4 1966171168
    %v306 = vunpack.c.0.s8 %v305
    %v307 = vlaneseq
    %v308 = vshrl.u32 %v307, 7
    %v309 = vsub.s32 %v306, %v308
    %v310 = vrot.slane %v287, %v309
    %v311 = vcombine.high %v310, %v310
    %v313 = vunpack.c.l.s4 1966171168
    %v314 = vunpack.c.0.s8 %v313
    %v315 = vlaneseq
    %v316 = vshrl.u32 %v315, 7
    %v317 = vsub.s32 %v314, %v316
    %v318 = vrot.slane %v310, %v317
    %v320 = vunpack.c.l.s4 1966171168
    %v321 = vunpack.c.0.s8 %v320
    %v322 = vlaneseq
    %v323 = vshrl.u32 %v322, 7
    %v324 = vsub.s32 %v321, %v323
    %v325 = vrot.slane %v311, %v324
    %v326 = vcombine.high %v318, %v318
    %v328 = vunpack.c.l.s4 1966171168
    %v329 = vunpack.c.0.s8 %v328
    %v330 = vlaneseq
    %v331 = vshrl.u32 %v330, 7
    %v332 = vsub.s32 %v329, %v331
    %v333 = vrot.slane %v289, %v332
    %v334 = vcombine.high %v333, %v333
    %v336 = vunpack.c.l.s4 1966171168
    %v337 = vunpack.c.0.s8 %v336
    %v338 = vlaneseq
    %v339 = vshrl.u32 %v338, 7
    %v340 = vsub.s32 %v337, %v339
    %v341 = vrot.slane %v333, %v340
    %v343 = vunpack.c.l.s4 1966171168
    %v344 = vunpack.c.0.s8 %v343
    %v345 = vlaneseq
    %v346 = vshrl.u32 %v345, 7
    %v347 = vsub.s32 %v344, %v346
    %v348 = vrot.slane %v334, %v347
    %v349 = vcombine.high %v341, %v341
    %v351 = vunpack.c.l.s4 1966171168
    %v352 = vunpack.c.0.s8 %v351
    %v353 = vlaneseq
    %v354 = vshrl.u32 %v353, 7
    %v355 = vsub.s32 %v352, %v354
    %v356 = vrot.slane %v291, %v355
    %v357 = vcombine.high %v356, %v356
    %v359 = vunpack.c.l.s4 1966171168
    %v360 = vunpack.c.0.s8 %v359
    %v361 = vlaneseq
    %v362 = vshrl.u32 %v361, 7
    %v363 = vsub.s32 %v360, %v362
    %v364 = vrot.slane %v356, %v363
    %v366 = vunpack.c.l.s4 1966171168
    %v367 = vunpack.c.0.s8 %v366
    %v368 = vlaneseq
    %v369 = vshrl.u32 %v368, 7
    %v370 = vsub.s32 %v367, %v369
    %v371 = vrot.slane %v357, %v370
    %v372 = vcombine.high %v364, %v364
    %v374 = vunpack.c.l.s4 1966171168
    %v375 = vunpack.c.0.s8 %v374
    %v376 = vlaneseq
    %v377 = vshrl.u32 %v376, 7
    %v378 = vsub.s32 %v375, %v377
    %v379 = vrot.slane %v293, %v378
    %v380 = vcombine.high %v379, %v379
    %v382 = vunpack.c.l.s4 1966171168
    %v383 = vunpack.c.0.s8 %v382
    %v384 = vlaneseq
    %v385 = vshrl.u32 %v384, 7
    %v386 = vsub.s32 %v383, %v385
    %v387 = vrot.slane %v379, %v386
    %v389 = vunpack.c.l.s4 1966171168
    %v390 = vunpack.c.0.s8 %v389
    %v391 = vlaneseq
    %v392 = vshrl.u32 %v391, 7
    %v393 = vsub.s32 %v390, %v392
    %v394 = vrot.slane %v380, %v393
    %v395 = vcombine.high %v387, %v387
    %v397 = vunpack.c.l.s4 1966171168
    %v398 = vunpack.c.0.s8 %v397
    %v399 = vlaneseq
    %v400 = vshrl.u32 %v399, 7
    %v401 = vsub.s32 %v398, %v400
    %v402 = vrot.slane %v295, %v401
    %v403 = vcombine.high %v402, %v402
    %v405 = vunpack.c.l.s4 1966171168
    %v406 = vunpack.c.0.s8 %v405
    %v407 = vlaneseq
    %v408 = vshrl.u32 %v407, 7
    %v409 = vsub.s32 %v406, %v408
    %v410 = vrot.slane %v402, %v409
    %v412 = vunpack.c.l.s4 1966171168
    %v413 = vunpack.c.0.s8 %v412
    %v414 = vlaneseq
    %v415 = vshrl.u32 %v414, 7
    %v416 = vsub.s32 %v413, %v415
    %v417 = vrot.slane %v403, %v416
    %v418 = vcombine.high %v410, %v410
    %v420 = vunpack.c.l.s4 1966171168
    %v421 = vunpack.c.0.s8 %v420
    %v422 = vlaneseq
    %v423 = vshrl.u32 %v422, 7
    %v424 = vsub.s32 %v421, %v423
    %v425 = vrot.slane %v297, %v424
    %v426 = vcombine.high %v425, %v425
    %v428 = vunpack.c.l.s4 1966171168
    %v429 = vunpack.c.0.s8 %v428
    %v430 = vlaneseq
    %v431 = vshrl.u32 %v430, 7
    %v432 = vsub.s32 %v429, %v431
    %v433 = vrot.slane %v425, %v432
    %v435 = vunpack.c.l.s4 1966171168
    %v436 = vunpack.c.0.s8 %v435
    %v437 = vlaneseq
    %v438 = vshrl.u32 %v437, 7
    %v439 = vsub.s32 %v436, %v438
    %v440 = vrot.slane %v426, %v439
    %v441 = vcombine.high %v433, %v433
    %v442 = vld [vmem:[%s3] sm:$0xff]
    %v443 = vld [vmem:[%s3 + $0x8] sm:$0xff]
    %v444 = vld [vmem:[%s3 + $0x10] sm:$0xff]
    %v445 = vld [vmem:[%s3 + $0x18] sm:$0xff]
    %v446 = vld [vmem:[%s3 + $0x20] sm:$0xff]
    %v447 = vld [vmem:[%s3 + $0x28] sm:$0xff]
    %v448 = vld [vmem:[%s3 + $0x30] sm:$0xff]
    %v449 = vld [vmem:[%s3 + $0x38] sm:$0xff]
    %v450 = vld [vmem:[%s3 + $0x40] sm:$0xff]
    %v451 = vld [vmem:[%s3 + $0x48] sm:$0xff]
    %v452 = vld [vmem:[%s3 + $0x50] sm:$0xff]
    %v453 = vld [vmem:[%s3 + $0x58] sm:$0xff]
    %v454 = vld [vmem:[%s3 + $0x60] sm:$0xff]
    %v455 = vld [vmem:[%s3 + $0x68] sm:$0xff]
    %v456 = vld [vmem:[%s3 + $0x70] sm:$0xff]
    %v457 = vld [vmem:[%s3 + $0x78] sm:$0xff]
    %s458 = scalar_lea.vmem [#allocation2], 1
    %v459 = vld [vmem:[%s458] ss:$2 sm:$0x7]
    %s460 = scalar_lea.vmem [#allocation2], 17
    %v461 = vld [vmem:[%s460] ss:$2 sm:$0x7]
    %s462 = scalar_lea.vmem [#allocation2], 33
    %v463 = vld [vmem:[%s462] ss:$2 sm:$0x7]
    %s464 = scalar_lea.vmem [#allocation2], 65
    %v465 = vld [vmem:[%s464] ss:$2 sm:$0x7]
    %s466 = scalar_lea.vmem [#allocation2], 81
    %v467 = vld [vmem:[%s466] ss:$2 sm:$0x7]
    %s468 = scalar_lea.vmem [#allocation2], 97
    %v469 = vld [vmem:[%s468] ss:$2 sm:$0x7]
    %v477 = vunpack.c.l.s4 1966171168
    %v478 = vunpack.c.0.s8 %v477
    %v479 = vlaneseq
    %v480 = vshrl.u32 %v479, 7
    %v481 = vsub.s32 %v478, %v480
    %v482 = vrot.slane %v459, %v481
    %v483 = vcombine.high %v482, %v482
    %v485 = vunpack.c.l.s4 1966171168
    %v486 = vunpack.c.0.s8 %v485
    %v487 = vlaneseq
    %v488 = vshrl.u32 %v487, 7
    %v489 = vsub.s32 %v486, %v488
    %v490 = vrot.slane %v482, %v489
    %v492 = vunpack.c.l.s4 1966171168
    %v493 = vunpack.c.0.s8 %v492
    %v494 = vlaneseq
    %v495 = vshrl.u32 %v494, 7
    %v496 = vsub.s32 %v493, %v495
    %v497 = vrot.slane %v483, %v496
    %v498 = vcombine.high %v490, %v490
    %v500 = vunpack.c.l.s4 1966171168
    %v501 = vunpack.c.0.s8 %v500
    %v502 = vlaneseq
    %v503 = vshrl.u32 %v502, 7
    %v504 = vsub.s32 %v501, %v503
    %v505 = vrot.slane %v461, %v504
    %v506 = vcombine.high %v505, %v505
    %v508 = vunpack.c.l.s4 1966171168
    %v509 = vunpack.c.0.s8 %v508
    %v510 = vlaneseq
    %v511 = vshrl.u32 %v510, 7
    %v512 = vsub.s32 %v509, %v511
    %v513 = vrot.slane %v505, %v512
    %v515 = vunpack.c.l.s4 1966171168
    %v516 = vunpack.c.0.s8 %v515
    %v517 = vlaneseq
    %v518 = vshrl.u32 %v517, 7
    %v519 = vsub.s32 %v516, %v518
    %v520 = vrot.slane %v506, %v519
    %v521 = vcombine.high %v513, %v513
    %v523 = vunpack.c.l.s4 1966171168
    %v524 = vunpack.c.0.s8 %v523
    %v525 = vlaneseq
    %v526 = vshrl.u32 %v525, 7
    %v527 = vsub.s32 %v524, %v526
    %v528 = vrot.slane %v463, %v527
    %v529 = vcombine.high %v528, %v528
    %v531 = vunpack.c.l.s4 1966171168
    %v532 = vunpack.c.0.s8 %v531
    %v533 = vlaneseq
    %v534 = vshrl.u32 %v533, 7
    %v535 = vsub.s32 %v532, %v534
    %v536 = vrot.slane %v528, %v535
    %v538 = vunpack.c.l.s4 1966171168
    %v539 = vunpack.c.0.s8 %v538
    %v540 = vlaneseq
    %v541 = vshrl.u32 %v540, 7
    %v542 = vsub.s32 %v539, %v541
    %v543 = vrot.slane %v529, %v542
    %v544 = vcombine.high %v536, %v536
    %v546 = vunpack.c.l.s4 1966171168
    %v547 = vunpack.c.0.s8 %v546
    %v548 = vlaneseq
    %v549 = vshrl.u32 %v548, 7
    %v550 = vsub.s32 %v547, %v549
    %v551 = vrot.slane %v465, %v550
    %v552 = vcombine.high %v551, %v551
    %v554 = vunpack.c.l.s4 1966171168
    %v555 = vunpack.c.0.s8 %v554
    %v556 = vlaneseq
    %v557 = vshrl.u32 %v556, 7
    %v558 = vsub.s32 %v555, %v557
    %v559 = vrot.slane %v551, %v558
    %v561 = vunpack.c.l.s4 1966171168
    %v562 = vunpack.c.0.s8 %v561
    %v563 = vlaneseq
    %v564 = vshrl.u32 %v563, 7
    %v565 = vsub.s32 %v562, %v564
    %v566 = vrot.slane %v552, %v565
    %v567 = vcombine.high %v559, %v559
    %v569 = vunpack.c.l.s4 1966171168
    %v570 = vunpack.c.0.s8 %v569
    %v571 = vlaneseq
    %v572 = vshrl.u32 %v571, 7
    %v573 = vsub.s32 %v570, %v572
    %v574 = vrot.slane %v467, %v573
    %v575 = vcombine.high %v574, %v574
    %v577 = vunpack.c.l.s4 1966171168
    %v578 = vunpack.c.0.s8 %v577
    %v579 = vlaneseq
    %v580 = vshrl.u32 %v579, 7
    %v581 = vsub.s32 %v578, %v580
    %v582 = vrot.slane %v574, %v581
    %v584 = vunpack.c.l.s4 1966171168
    %v585 = vunpack.c.0.s8 %v584
    %v586 = vlaneseq
    %v587 = vshrl.u32 %v586, 7
    %v588 = vsub.s32 %v585, %v587
    %v589 = vrot.slane %v575, %v588
    %v590 = vcombine.high %v582, %v582
    %v592 = vunpack.c.l.s4 1966171168
    %v593 = vunpack.c.0.s8 %v592
    %v594 = vlaneseq
    %v595 = vshrl.u32 %v594, 7
    %v596 = vsub.s32 %v593, %v595
    %v597 = vrot.slane %v469, %v596
    %v598 = vcombine.high %v597, %v597
    %v600 = vunpack.c.l.s4 1966171168
    %v601 = vunpack.c.0.s8 %v600
    %v602 = vlaneseq
    %v603 = vshrl.u32 %v602, 7
    %v604 = vsub.s32 %v601, %v603
    %v605 = vrot.slane %v597, %v604
    %v607 = vunpack.c.l.s4 1966171168
    %v608 = vunpack.c.0.s8 %v607
    %v609 = vlaneseq
    %v610 = vshrl.u32 %v609, 7
    %v611 = vsub.s32 %v608, %v610
    %v612 = vrot.slane %v598, %v611
    %v613 = vcombine.high %v605, %v605
    %s614 = scalar_lea.vmem %s3, 128
    %v615 = vld [vmem:[%s614] sm:$0xff]
    %v616 = vld [vmem:[%s614 + $0x8] sm:$0xff]
    %v617 = vld [vmem:[%s614 + $0x10] sm:$0xff]
    %v618 = vld [vmem:[%s614 + $0x18] sm:$0xff]
    %v619 = vld [vmem:[%s614 + $0x20] sm:$0xff]
    %v620 = vld [vmem:[%s614 + $0x28] sm:$0xff]
    %v621 = vld [vmem:[%s614 + $0x30] sm:$0xff]
    %v622 = vld [vmem:[%s614 + $0x38] sm:$0xff]
    %v623 = vld [vmem:[%s614 + $0x40] sm:$0xff]
    %v624 = vld [vmem:[%s614 + $0x48] sm:$0xff]
    %v625 = vld [vmem:[%s614 + $0x50] sm:$0xff]
    %v626 = vld [vmem:[%s614 + $0x58] sm:$0xff]
    %v627 = vld [vmem:[%s614 + $0x60] sm:$0xff]
    %v628 = vld [vmem:[%s614 + $0x68] sm:$0xff]
    %v629 = vld [vmem:[%s614 + $0x70] sm:$0xff]
    %v630 = vld [vmem:[%s614 + $0x78] sm:$0xff]
    %v631 = vcombine.low %v490, %v497
    %v632 = vcombine.low %v498, %v513
    %v633 = vcombine.low %v520, %v521
    %v634 = vcombine.low %v536, %v543
    %v636 = vunpack.c.l.s4 1966171168
    %v637 = vunpack.c.0.s8 %v636
    %v638 = vlaneseq
    %v639 = vshrl.u32 %v638, 7
    %v640 = vsub.s32 %v637, %v639
    %v641 = vrot.slane %v631, %v640
    %v643 = vunpack.c.l.s4 1966171168
    %v644 = vunpack.c.0.s8 %v643
    %v645 = vlaneseq
    %v646 = vshrl.u32 %v645, 7
    %v647 = vsub.s32 %v644, %v646
    %v648 = vrot.slane %v632, %v647
    %v650 = vunpack.c.l.s4 1966171168
    %v651 = vunpack.c.0.s8 %v650
    %v652 = vlaneseq
    %v653 = vshrl.u32 %v652, 7
    %v654 = vsub.s32 %v651, %v653
    %v655 = vrot.slane %v633, %v654
    %v657 = vunpack.c.l.s4 1966171168
    %v658 = vunpack.c.0.s8 %v657
    %v659 = vlaneseq
    %v660 = vshrl.u32 %v659, 7
    %v661 = vsub.s32 %v658, %v660
    %v662 = vrot.slane %v634, %v661
    %v663 = vcombine.low %v641, %v648
    %v664 = vcombine.low %v655, %v662
    %v666 = vunpack.c.l.s4 1966171168
    %v667 = vunpack.c.0.s8 %v666
    %v668 = vlaneseq
    %v669 = vshrl.u32 %v668, 7
    %v670 = vsub.s32 %v667, %v669
    %v671 = vrot.slane %v663, %v670
    %v673 = vunpack.c.l.s4 1966171168
    %v674 = vunpack.c.0.s8 %v673
    %v675 = vlaneseq
    %v676 = vshrl.u32 %v675, 7
    %v677 = vsub.s32 %v674, %v676
    %v678 = vrot.slane %v664, %v677
    %v679 = vcombine.low %v671, %v678
    %v680 = vcombine.low %v544, %v559
    %v681 = vcombine.low %v566, %v567
    %v682 = vcombine.low %v582, %v589
    %v683 = vcombine.low %v590, %v605
    %v685 = vunpack.c.l.s4 1966171168
    %v686 = vunpack.c.0.s8 %v685
    %v687 = vlaneseq
    %v688 = vshrl.u32 %v687, 7
    %v689 = vsub.s32 %v686, %v688
    %v690 = vrot.slane %v680, %v689
    %v692 = vunpack.c.l.s4 1966171168
    %v693 = vunpack.c.0.s8 %v692
    %v694 = vlaneseq
    %v695 = vshrl.u32 %v694, 7
    %v696 = vsub.s32 %v693, %v695
    %v697 = vrot.slane %v681, %v696
    %v699 = vunpack.c.l.s4 1966171168
    %v700 = vunpack.c.0.s8 %v699
    %v701 = vlaneseq
    %v702 = vshrl.u32 %v701, 7
    %v703 = vsub.s32 %v700, %v702
    %v704 = vrot.slane %v682, %v703
    %v706 = vunpack.c.l.s4 1966171168
    %v707 = vunpack.c.0.s8 %v706
    %v708 = vlaneseq
    %v709 = vshrl.u32 %v708, 7
    %v710 = vsub.s32 %v707, %v709
    %v711 = vrot.slane %v683, %v710
    %v712 = vcombine.low %v690, %v697
    %v713 = vcombine.low %v704, %v711
    %v715 = vunpack.c.l.s4 1966171168
    %v716 = vunpack.c.0.s8 %v715
    %v717 = vlaneseq
    %v718 = vshrl.u32 %v717, 7
    %v719 = vsub.s32 %v716, %v718
    %v720 = vrot.slane %v712, %v719
    %v722 = vunpack.c.l.s4 1966171168
    %v723 = vunpack.c.0.s8 %v722
    %v724 = vlaneseq
    %v725 = vshrl.u32 %v724, 7
    %v726 = vsub.s32 %v723, %v725
    %v727 = vrot.slane %v713, %v726
    %v728 = vcombine.low %v720, %v727
    %v729 = vcombine.low %v612, %v613
    %v731 = vunpack.c.l.s4 1966171168
    %v732 = vunpack.c.0.s8 %v731
    %v733 = vlaneseq
    %v734 = vshrl.u32 %v733, 7
    %v735 = vsub.s32 %v732, %v734
    %v736 = vrot.slane %v729, %v735
    %v738 = vunpack.c.l.s4 1966171168
    %v739 = vunpack.c.0.s8 %v738
    %v740 = vlaneseq
    %v741 = vshrl.u32 %v740, 7
    %v742 = vsub.s32 %v739, %v741
    %v743 = vrot.slane %v736, %v742
    %747 = vmatprep.subr.mxu0 0.0
    %748 = vmatpush1.msra.mxu0 %v630
    %749 = vmatprep.subr.mxu0 0.0
    %750 = vmatpush1.msra.mxu0 %v629
    %751 = vmatprep.subr.mxu0 0.0
    %752 = vmatpush1.msra.mxu0 %v628
    %753 = vmatprep.subr.mxu0 0.0
    %754 = vmatpush1.msra.mxu0 %v627
    %755 = vmatprep.subr.mxu0 0.0
    %756 = vmatpush1.msra.mxu0 %v626
    %757 = vmatprep.subr.mxu0 0.0
    %758 = vmatpush1.msra.mxu0 %v625
    %759 = vmatprep.subr.mxu0 0.0
    %760 = vmatpush1.msra.mxu0 %v624
    %761 = vmatprep.subr.mxu0 0.0
    %762 = vmatpush1.msra.mxu0 %v623
    %763 = vmatprep.subr.mxu0 0.0
    %764 = vmatpush1.msra.mxu0 %v622
    %765 = vmatprep.subr.mxu0 0.0
    %766 = vmatpush1.msra.mxu0 %v621
    %767 = vmatprep.subr.mxu0 0.0
    %768 = vmatpush1.msra.mxu0 %v620
    %769 = vmatprep.subr.mxu0 0.0
    %770 = vmatpush1.msra.mxu0 %v619
    %771 = vmatprep.subr.mxu0 0.0
    %772 = vmatpush1.msra.mxu0 %v618
    %773 = vmatprep.subr.mxu0 0.0
    %774 = vmatpush1.msra.mxu0 %v617
    %775 = vmatprep.subr.mxu0 0.0
    %776 = vmatpush1.msra.mxu0 %v616
    %777 = vmatprep.subr.mxu0 0.0
    %778 = vmatpush1.msra.mxu0 %v615
    %779 = vmatprep.subr.mxu0 0.0
    %780 = vmatpush2.msra.mxu0 0.0
    %781 = vmatprep.subr.mxu0 0.0
    %782 = vmatpush2.msra.mxu0 0.0
    %783 = vmatprep.subr.mxu0 0.0
    %784 = vmatpush2.msra.mxu0 0.0
    %785 = vmatprep.subr.mxu0 0.0
    %786 = vmatpush2.msra.mxu0 0.0
    %787 = vmatprep.subr.mxu0 0.0
    %788 = vmatpush2.msra.mxu0 0.0
    %789 = vmatprep.subr.mxu0 0.0
    %790 = vmatpush2.msra.mxu0 0.0
    %791 = vmatprep.subr.mxu0 0.0
    %792 = vmatpush2.msra.mxu0 0.0
    %793 = vmatprep.subr.mxu0 0.0
    %794 = vmatpush2.msra.mxu0 0.0
    %795 = vmatprep.subr.mxu0 0.0
    %796 = vmatpush2.msra.mxu0 0.0
    %797 = vmatprep.subr.mxu0 0.0
    %798 = vmatpush2.msra.mxu0 0.0
    %799 = vmatprep.subr.mxu0 0.0
    %800 = vmatpush2.msra.mxu0 0.0
    %801 = vmatprep.subr.mxu0 0.0
    %802 = vmatpush2.msra.mxu0 0.0
    %803 = vmatprep.subr.mxu0 0.0
    %804 = vmatpush2.msra.mxu0 0.0
    %805 = vmatprep.subr.mxu0 0.0
    %806 = vmatpush2.msra.mxu0 0.0
    %807 = vmatprep.subr.mxu0 0.0
    %808 = vmatpush2.msra.mxu0 0.0
    %809 = vmatprep.subr.mxu0 0.0
    %810 = vmatpush2.msra.mxu0 0.0
    %811 = vmatprep.mubr.f32.mxu0 0.0
    %812 = vmatmul.mubr.f32.gmra.mxu0 %v679
    %v813 = vpop.f32.mrf.mxu0
    %v814 = vadd.f32 0.0, %v813
    %v815 = vpop.f32.mrf.mxu0
    %816 = vmatprep.mubr.f32.mxu0 0.0
    %817 = vmatmul.mubr.f32.gmra.mxu0 %v728
    %v818 = vpop.f32.mrf.mxu0
    %v819 = vadd.f32 0.0, %v818
    %v820 = vpop.f32.mrf.mxu0
    %821 = vmatprep.mubr.f32.mxu0 0.0
    %822 = vmatmul.mubr.f32.gmra.mxu0 %v743
    %v823 = vpop.f32.mrf.mxu0
    %v824 = vadd.f32 0.0, %v823
    %v825 = vpop.f32.mrf.mxu0
    %826 = vdwg.mxu0
    %v827 = vcombine.low %v318, %v325
    %v828 = vcombine.low %v326, %v341
    %v829 = vcombine.low %v348, %v349
    %v830 = vcombine.low %v364, %v371
    %v832 = vunpack.c.l.s4 1966171168
    %v833 = vunpack.c.0.s8 %v832
    %v834 = vlaneseq
    %v835 = vshrl.u32 %v834, 7
    %v836 = vsub.s32 %v833, %v835
    %v837 = vrot.slane %v827, %v836
    %v839 = vunpack.c.l.s4 1966171168
    %v840 = vunpack.c.0.s8 %v839
    %v841 = vlaneseq
    %v842 = vshrl.u32 %v841, 7
    %v843 = vsub.s32 %v840, %v842
    %v844 = vrot.slane %v828, %v843
    %v846 = vunpack.c.l.s4 1966171168
    %v847 = vunpack.c.0.s8 %v846
    %v848 = vlaneseq
    %v849 = vshrl.u32 %v848, 7
    %v850 = vsub.s32 %v847, %v849
    %v851 = vrot.slane %v829, %v850
    %v853 = vunpack.c.l.s4 1966171168
    %v854 = vunpack.c.0.s8 %v853
    %v855 = vlaneseq
    %v856 = vshrl.u32 %v855, 7
    %v857 = vsub.s32 %v854, %v856
    %v858 = vrot.slane %v830, %v857
    %v859 = vcombine.low %v837, %v844
    %v860 = vcombine.low %v851, %v858
    %v862 = vunpack.c.l.s4 1966171168
    %v863 = vunpack.c.0.s8 %v862
    %v864 = vlaneseq
    %v865 = vshrl.u32 %v864, 7
    %v866 = vsub.s32 %v863, %v865
    %v867 = vrot.slane %v859, %v866
    %v869 = vunpack.c.l.s4 1966171168
    %v870 = vunpack.c.0.s8 %v869
    %v871 = vlaneseq
    %v872 = vshrl.u32 %v871, 7
    %v873 = vsub.s32 %v870, %v872
    %v874 = vrot.slane %v860, %v873
    %v875 = vcombine.low %v867, %v874
    %v876 = vcombine.low %v372, %v387
    %v877 = vcombine.low %v394, %v395
    %v878 = vcombine.low %v410, %v417
    %v879 = vcombine.low %v418, %v433
    %v881 = vunpack.c.l.s4 1966171168
    %v882 = vunpack.c.0.s8 %v881
    %v883 = vlaneseq
    %v884 = vshrl.u32 %v883, 7
    %v885 = vsub.s32 %v882, %v884
    %v886 = vrot.slane %v876, %v885
    %v888 = vunpack.c.l.s4 1966171168
    %v889 = vunpack.c.0.s8 %v888
    %v890 = vlaneseq
    %v891 = vshrl.u32 %v890, 7
    %v892 = vsub.s32 %v889, %v891
    %v893 = vrot.slane %v877, %v892
    %v895 = vunpack.c.l.s4 1966171168
    %v896 = vunpack.c.0.s8 %v895
    %v897 = vlaneseq
    %v898 = vshrl.u32 %v897, 7
    %v899 = vsub.s32 %v896, %v898
    %v900 = vrot.slane %v878, %v899
    %v902 = vunpack.c.l.s4 1966171168
    %v903 = vunpack.c.0.s8 %v902
    %v904 = vlaneseq
    %v905 = vshrl.u32 %v904, 7
    %v906 = vsub.s32 %v903, %v905
    %v907 = vrot.slane %v879, %v906
    %v908 = vcombine.low %v886, %v893
    %v909 = vcombine.low %v900, %v907
    %v911 = vunpack.c.l.s4 1966171168
    %v912 = vunpack.c.0.s8 %v911
    %v913 = vlaneseq
    %v914 = vshrl.u32 %v913, 7
    %v915 = vsub.s32 %v912, %v914
    %v916 = vrot.slane %v908, %v915
    %v918 = vunpack.c.l.s4 1966171168
    %v919 = vunpack.c.0.s8 %v918
    %v920 = vlaneseq
    %v921 = vshrl.u32 %v920, 7
    %v922 = vsub.s32 %v919, %v921
    %v923 = vrot.slane %v909, %v922
    %v924 = vcombine.low %v916, %v923
    %v925 = vcombine.low %v440, %v441
    %v927 = vunpack.c.l.s4 1966171168
    %v928 = vunpack.c.0.s8 %v927
    %v929 = vlaneseq
    %v930 = vshrl.u32 %v929, 7
    %v931 = vsub.s32 %v928, %v930
    %v932 = vrot.slane %v925, %v931
    %v934 = vunpack.c.l.s4 1966171168
    %v935 = vunpack.c.0.s8 %v934
    %v936 = vlaneseq
    %v937 = vshrl.u32 %v936, 7
    %v938 = vsub.s32 %v935, %v937
    %v939 = vrot.slane %v932, %v938
    %943 = vmatprep.subr.mxu0 0.0
    %944 = vmatpush1.msra.mxu0 %v457
    %945 = vmatprep.subr.mxu0 0.0
    %946 = vmatpush1.msra.mxu0 %v456
    %947 = vmatprep.subr.mxu0 0.0
    %948 = vmatpush1.msra.mxu0 %v455
    %949 = vmatprep.subr.mxu0 0.0
    %950 = vmatpush1.msra.mxu0 %v454
    %951 = vmatprep.subr.mxu0 0.0
    %952 = vmatpush1.msra.mxu0 %v453
    %953 = vmatprep.subr.mxu0 0.0
    %954 = vmatpush1.msra.mxu0 %v452
    %955 = vmatprep.subr.mxu0 0.0
    %956 = vmatpush1.msra.mxu0 %v451
    %957 = vmatprep.subr.mxu0 0.0
    %958 = vmatpush1.msra.mxu0 %v450
    %959 = vmatprep.subr.mxu0 0.0
    %960 = vmatpush1.msra.mxu0 %v449
    %961 = vmatprep.subr.mxu0 0.0
    %962 = vmatpush1.msra.mxu0 %v448
    %963 = vmatprep.subr.mxu0 0.0
    %964 = vmatpush1.msra.mxu0 %v447
    %965 = vmatprep.subr.mxu0 0.0
    %966 = vmatpush1.msra.mxu0 %v446
    %967 = vmatprep.subr.mxu0 0.0
    %968 = vmatpush1.msra.mxu0 %v445
    %969 = vmatprep.subr.mxu0 0.0
    %970 = vmatpush1.msra.mxu0 %v444
    %971 = vmatprep.subr.mxu0 0.0
    %972 = vmatpush1.msra.mxu0 %v443
    %973 = vmatprep.subr.mxu0 0.0
    %974 = vmatpush1.msra.mxu0 %v442
    %975 = vmatprep.subr.mxu0 0.0
    %976 = vmatpush2.msra.mxu0 0.0
    %977 = vmatprep.subr.mxu0 0.0
    %978 = vmatpush2.msra.mxu0 0.0
    %979 = vmatprep.subr.mxu0 0.0
    %980 = vmatpush2.msra.mxu0 0.0
    %981 = vmatprep.subr.mxu0 0.0
    %982 = vmatpush2.msra.mxu0 0.0
    %983 = vmatprep.subr.mxu0 0.0
    %984 = vmatpush2.msra.mxu0 0.0
    %985 = vmatprep.subr.mxu0 0.0
    %986 = vmatpush2.msra.mxu0 0.0
    %987 = vmatprep.subr.mxu0 0.0
    %988 = vmatpush2.msra.mxu0 0.0
    %989 = vmatprep.subr.mxu0 0.0
    %990 = vmatpush2.msra.mxu0 0.0
    %991 = vmatprep.subr.mxu0 0.0
    %992 = vmatpush2.msra.mxu0 0.0
    %993 = vmatprep.subr.mxu0 0.0
    %994 = vmatpush2.msra.mxu0 0.0
    %995 = vmatprep.subr.mxu0 0.0
    %996 = vmatpush2.msra.mxu0 0.0
    %997 = vmatprep.subr.mxu0 0.0
    %998 = vmatpush2.msra.mxu0 0.0
    %999 = vmatprep.subr.mxu0 0.0
    %1000 = vmatpush2.msra.mxu0 0.0
    %1001 = vmatprep.subr.mxu0 0.0
    %1002 = vmatpush2.msra.mxu0 0.0
    %1003 = vmatprep.subr.mxu0 0.0
    %1004 = vmatpush2.msra.mxu0 0.0
    %1005 = vmatprep.subr.mxu0 0.0
    %1006 = vmatpush2.msra.mxu0 0.0
    %1007 = vmatprep.mubr.f32.mxu0 0.0
    %1008 = vmatmul.mubr.f32.gmra.mxu0 %v875
    %v1009 = vpop.f32.mrf.mxu0
    %v1010 = vadd.f32 %v814, %v1009
    %v1011 = vpop.f32.mrf.mxu0
    %1012 = vmatprep.mubr.f32.mxu0 0.0
    %1013 = vmatmul.mubr.f32.gmra.mxu0 %v924
    %v1014 = vpop.f32.mrf.mxu0
    %v1015 = vadd.f32 %v819, %v1014
    %v1016 = vpop.f32.mrf.mxu0
    %1017 = vmatprep.mubr.f32.mxu0 0.0
    %1018 = vmatmul.mubr.f32.gmra.mxu0 %v939
    %v1019 = vpop.f32.mrf.mxu0
    %v1020 = vadd.f32 %v824, %v1019
    %v1021 = vpop.f32.mrf.mxu0
    %1022 = vdwg.mxu0
    %s1023 = scalar_lea.vmem [#allocation2], 2
    %v1024 = vld [vmem:[%s1023] ss:$2 sm:$0x7]
    %s1025 = scalar_lea.vmem [#allocation2], 18
    %v1026 = vld [vmem:[%s1025] ss:$2 sm:$0x7]
    %s1027 = scalar_lea.vmem [#allocation2], 34
    %v1028 = vld [vmem:[%s1027] ss:$2 sm:$0x7]
    %s1029 = scalar_lea.vmem [#allocation2], 66
    %v1030 = vld [vmem:[%s1029] ss:$2 sm:$0x7]
    %s1031 = scalar_lea.vmem [#allocation2], 82
    %v1032 = vld [vmem:[%s1031] ss:$2 sm:$0x7]
    %s1033 = scalar_lea.vmem [#allocation2], 98
    %v1034 = vld [vmem:[%s1033] ss:$2 sm:$0x7]
    %v1042 = vunpack.c.l.s4 1966171168
    %v1043 = vunpack.c.0.s8 %v1042
    %v1044 = vlaneseq
    %v1045 = vshrl.u32 %v1044, 7
    %v1046 = vsub.s32 %v1043, %v1045
    %v1047 = vrot.slane %v1024, %v1046
    %v1048 = vcombine.high %v1047, %v1047
    %v1050 = vunpack.c.l.s4 1966171168
    %v1051 = vunpack.c.0.s8 %v1050
    %v1052 = vlaneseq
    %v1053 = vshrl.u32 %v1052, 7
    %v1054 = vsub.s32 %v1051, %v1053
    %v1055 = vrot.slane %v1047, %v1054
    %v1057 = vunpack.c.l.s4 1966171168
    %v1058 = vunpack.c.0.s8 %v1057
    %v1059 = vlaneseq
    %v1060 = vshrl.u32 %v1059, 7
    %v1061 = vsub.s32 %v1058, %v1060
    %v1062 = vrot.slane %v1048, %v1061
    %v1063 = vcombine.high %v1055, %v1055
    %v1065 = vunpack.c.l.s4 1966171168
    %v1066 = vunpack.c.0.s8 %v1065
    %v1067 = vlaneseq
    %v1068 = vshrl.u32 %v1067, 7
    %v1069 = vsub.s32 %v1066, %v1068
    %v1070 = vrot.slane %v1026, %v1069
    %v1071 = vcombine.high %v1070, %v1070
    %v1073 = vunpack.c.l.s4 1966171168
    %v1074 = vunpack.c.0.s8 %v1073
    %v1075 = vlaneseq
    %v1076 = vshrl.u32 %v1075, 7
    %v1077 = vsub.s32 %v1074, %v1076
    %v1078 = vrot.slane %v1070, %v1077
    %v1080 = vunpack.c.l.s4 1966171168
    %v1081 = vunpack.c.0.s8 %v1080
    %v1082 = vlaneseq
    %v1083 = vshrl.u32 %v1082, 7
    %v1084 = vsub.s32 %v1081, %v1083
    %v1085 = vrot.slane %v1071, %v1084
    %v1086 = vcombine.high %v1078, %v1078
    %v1088 = vunpack.c.l.s4 1966171168
    %v1089 = vunpack.c.0.s8 %v1088
    %v1090 = vlaneseq
    %v1091 = vshrl.u32 %v1090, 7
    %v1092 = vsub.s32 %v1089, %v1091
    %v1093 = vrot.slane %v1028, %v1092
    %v1094 = vcombine.high %v1093, %v1093
    %v1096 = vunpack.c.l.s4 1966171168
    %v1097 = vunpack.c.0.s8 %v1096
    %v1098 = vlaneseq
    %v1099 = vshrl.u32 %v1098, 7
    %v1100 = vsub.s32 %v1097, %v1099
    %v1101 = vrot.slane %v1093, %v1100
    %v1103 = vunpack.c.l.s4 1966171168
    %v1104 = vunpack.c.0.s8 %v1103
    %v1105 = vlaneseq
    %v1106 = vshrl.u32 %v1105, 7
    %v1107 = vsub.s32 %v1104, %v1106
    %v1108 = vrot.slane %v1094, %v1107
    %v1109 = vcombine.high %v1101, %v1101
    %v1111 = vunpack.c.l.s4 1966171168
    %v1112 = vunpack.c.0.s8 %v1111
    %v1113 = vlaneseq
    %v1114 = vshrl.u32 %v1113, 7
    %v1115 = vsub.s32 %v1112, %v1114
    %v1116 = vrot.slane %v1030, %v1115
    %v1117 = vcombine.high %v1116, %v1116
    %v1119 = vunpack.c.l.s4 1966171168
    %v1120 = vunpack.c.0.s8 %v1119
    %v1121 = vlaneseq
    %v1122 = vshrl.u32 %v1121, 7
    %v1123 = vsub.s32 %v1120, %v1122
    %v1124 = vrot.slane %v1116, %v1123
    %v1126 = vunpack.c.l.s4 1966171168
    %v1127 = vunpack.c.0.s8 %v1126
    %v1128 = vlaneseq
    %v1129 = vshrl.u32 %v1128, 7
    %v1130 = vsub.s32 %v1127, %v1129
    %v1131 = vrot.slane %v1117, %v1130
    %v1132 = vcombine.high %v1124, %v1124
    %v1134 = vunpack.c.l.s4 1966171168
    %v1135 = vunpack.c.0.s8 %v1134
    %v1136 = vlaneseq
    %v1137 = vshrl.u32 %v1136, 7
    %v1138 = vsub.s32 %v1135, %v1137
    %v1139 = vrot.slane %v1032, %v1138
    %v1140 = vcombine.high %v1139, %v1139
    %v1142 = vunpack.c.l.s4 1966171168
    %v1143 = vunpack.c.0.s8 %v1142
    %v1144 = vlaneseq
    %v1145 = vshrl.u32 %v1144, 7
    %v1146 = vsub.s32 %v1143, %v1145
    %v1147 = vrot.slane %v1139, %v1146
    %v1149 = vunpack.c.l.s4 1966171168
    %v1150 = vunpack.c.0.s8 %v1149
    %v1151 = vlaneseq
    %v1152 = vshrl.u32 %v1151, 7
    %v1153 = vsub.s32 %v1150, %v1152
    %v1154 = vrot.slane %v1140, %v1153
    %v1155 = vcombine.high %v1147, %v1147
    %v1157 = vunpack.c.l.s4 1966171168
    %v1158 = vunpack.c.0.s8 %v1157
    %v1159 = vlaneseq
    %v1160 = vshrl.u32 %v1159, 7
    %v1161 = vsub.s32 %v1158, %v1160
    %v1162 = vrot.slane %v1034, %v1161
    %v1163 = vcombine.high %v1162, %v1162
    %v1165 = vunpack.c.l.s4 1966171168
    %v1166 = vunpack.c.0.s8 %v1165
    %v1167 = vlaneseq
    %v1168 = vshrl.u32 %v1167, 7
    %v1169 = vsub.s32 %v1166, %v1168
    %v1170 = vrot.slane %v1162, %v1169
    %v1172 = vunpack.c.l.s4 1966171168
    %v1173 = vunpack.c.0.s8 %v1172
    %v1174 = vlaneseq
    %v1175 = vshrl.u32 %v1174, 7
    %v1176 = vsub.s32 %v1173, %v1175
    %v1177 = vrot.slane %v1163, %v1176
    %v1178 = vcombine.high %v1170, %v1170
    %s1179 = scalar_lea.vmem %s3, 256
    %v1180 = vld [vmem:[%s1179] sm:$0xff]
    %v1181 = vld [vmem:[%s1179 + $0x8] sm:$0xff]
    %v1182 = vld [vmem:[%s1179 + $0x10] sm:$0xff]
    %v1183 = vld [vmem:[%s1179 + $0x18] sm:$0xff]
    %v1184 = vld [vmem:[%s1179 + $0x20] sm:$0xff]
    %v1185 = vld [vmem:[%s1179 + $0x28] sm:$0xff]
    %v1186 = vld [vmem:[%s1179 + $0x30] sm:$0xff]
    %v1187 = vld [vmem:[%s1179 + $0x38] sm:$0xff]
    %v1188 = vld [vmem:[%s1179 + $0x40] sm:$0xff]
    %v1189 = vld [vmem:[%s1179 + $0x48] sm:$0xff]
    %v1190 = vld [vmem:[%s1179 + $0x50] sm:$0xff]
    %v1191 = vld [vmem:[%s1179 + $0x58] sm:$0xff]
    %v1192 = vld [vmem:[%s1179 + $0x60] sm:$0xff]
    %v1193 = vld [vmem:[%s1179 + $0x68] sm:$0xff]
    %v1194 = vld [vmem:[%s1179 + $0x70] sm:$0xff]
    %v1195 = vld [vmem:[%s1179 + $0x78] sm:$0xff]
    %v1196 = vcombine.low %v1055, %v1062
    %v1197 = vcombine.low %v1063, %v1078
    %v1198 = vcombine.low %v1085, %v1086
    %v1199 = vcombine.low %v1101, %v1108
    %v1201 = vunpack.c.l.s4 1966171168
    %v1202 = vunpack.c.0.s8 %v1201
    %v1203 = vlaneseq
    %v1204 = vshrl.u32 %v1203, 7
    %v1205 = vsub.s32 %v1202, %v1204
    %v1206 = vrot.slane %v1196, %v1205
    %v1208 = vunpack.c.l.s4 1966171168
    %v1209 = vunpack.c.0.s8 %v1208
    %v1210 = vlaneseq
    %v1211 = vshrl.u32 %v1210, 7
    %v1212 = vsub.s32 %v1209, %v1211
    %v1213 = vrot.slane %v1197, %v1212
    %v1215 = vunpack.c.l.s4 1966171168
    %v1216 = vunpack.c.0.s8 %v1215
    %v1217 = vlaneseq
    %v1218 = vshrl.u32 %v1217, 7
    %v1219 = vsub.s32 %v1216, %v1218
    %v1220 = vrot.slane %v1198, %v1219
    %v1222 = vunpack.c.l.s4 1966171168
    %v1223 = vunpack.c.0.s8 %v1222
    %v1224 = vlaneseq
    %v1225 = vshrl.u32 %v1224, 7
    %v1226 = vsub.s32 %v1223, %v1225
    %v1227 = vrot.slane %v1199, %v1226
    %v1228 = vcombine.low %v1206, %v1213
    %v1229 = vcombine.low %v1220, %v1227
    %v1231 = vunpack.c.l.s4 1966171168
    %v1232 = vunpack.c.0.s8 %v1231
    %v1233 = vlaneseq
    %v1234 = vshrl.u32 %v1233, 7
    %v1235 = vsub.s32 %v1232, %v1234
    %v1236 = vrot.slane %v1228, %v1235
    %v1238 = vunpack.c.l.s4 1966171168
    %v1239 = vunpack.c.0.s8 %v1238
    %v1240 = vlaneseq
    %v1241 = vshrl.u32 %v1240, 7
    %v1242 = vsub.s32 %v1239, %v1241
    %v1243 = vrot.slane %v1229, %v1242
    %v1244 = vcombine.low %v1236, %v1243
    %v1245 = vcombine.low %v1109, %v1124
    %v1246 = vcombine.low %v1131, %v1132
    %v1247 = vcombine.low %v1147, %v1154
    %v1248 = vcombine.low %v1155, %v1170
    %v1250 = vunpack.c.l.s4 1966171168
    %v1251 = vunpack.c.0.s8 %v1250
    %v1252 = vlaneseq
    %v1253 = vshrl.u32 %v1252, 7
    %v1254 = vsub.s32 %v1251, %v1253
    %v1255 = vrot.slane %v1245, %v1254
    %v1257 = vunpack.c.l.s4 1966171168
    %v1258 = vunpack.c.0.s8 %v1257
    %v1259 = vlaneseq
    %v1260 = vshrl.u32 %v1259, 7
    %v1261 = vsub.s32 %v1258, %v1260
    %v1262 = vrot.slane %v1246, %v1261
    %v1264 = vunpack.c.l.s4 1966171168
    %v1265 = vunpack.c.0.s8 %v1264
    %v1266 = vlaneseq
    %v1267 = vshrl.u32 %v1266, 7
    %v1268 = vsub.s32 %v1265, %v1267
    %v1269 = vrot.slane %v1247, %v1268
    %v1271 = vunpack.c.l.s4 1966171168
    %v1272 = vunpack.c.0.s8 %v1271
    %v1273 = vlaneseq
    %v1274 = vshrl.u32 %v1273, 7
    %v1275 = vsub.s32 %v1272, %v1274
    %v1276 = vrot.slane %v1248, %v1275
    %v1277 = vcombine.low %v1255, %v1262
    %v1278 = vcombine.low %v1269, %v1276
    %v1280 = vunpack.c.l.s4 1966171168
    %v1281 = vunpack.c.0.s8 %v1280
    %v1282 = vlaneseq
    %v1283 = vshrl.u32 %v1282, 7
    %v1284 = vsub.s32 %v1281, %v1283
    %v1285 = vrot.slane %v1277, %v1284
    %v1287 = vunpack.c.l.s4 1966171168
    %v1288 = vunpack.c.0.s8 %v1287
    %v1289 = vlaneseq
    %v1290 = vshrl.u32 %v1289, 7
    %v1291 = vsub.s32 %v1288, %v1290
    %v1292 = vrot.slane %v1278, %v1291
    %v1293 = vcombine.low %v1285, %v1292
    %v1294 = vcombine.low %v1177, %v1178
    %v1296 = vunpack.c.l.s4 1966171168
    %v1297 = vunpack.c.0.s8 %v1296
    %v1298 = vlaneseq
    %v1299 = vshrl.u32 %v1298, 7
    %v1300 = vsub.s32 %v1297, %v1299
    %v1301 = vrot.slane %v1294, %v1300
    %v1303 = vunpack.c.l.s4 1966171168
    %v1304 = vunpack.c.0.s8 %v1303
    %v1305 = vlaneseq
    %v1306 = vshrl.u32 %v1305, 7
    %v1307 = vsub.s32 %v1304, %v1306
    %v1308 = vrot.slane %v1301, %v1307
    %1312 = vmatprep.subr.mxu0 0.0
    %1313 = vmatpush1.msra.mxu0 %v1195
    %1314 = vmatprep.subr.mxu0 0.0
    %1315 = vmatpush1.msra.mxu0 %v1194
    %1316 = vmatprep.subr.mxu0 0.0
    %1317 = vmatpush1.msra.mxu0 %v1193
    %1318 = vmatprep.subr.mxu0 0.0
    %1319 = vmatpush1.msra.mxu0 %v1192
    %1320 = vmatprep.subr.mxu0 0.0
    %1321 = vmatpush1.msra.mxu0 %v1191
    %1322 = vmatprep.subr.mxu0 0.0
    %1323 = vmatpush1.msra.mxu0 %v1190
    %1324 = vmatprep.subr.mxu0 0.0
    %1325 = vmatpush1.msra.mxu0 %v1189
    %1326 = vmatprep.subr.mxu0 0.0
    %1327 = vmatpush1.msra.mxu0 %v1188
    %1328 = vmatprep.subr.mxu0 0.0
    %1329 = vmatpush1.msra.mxu0 %v1187
    %1330 = vmatprep.subr.mxu0 0.0
    %1331 = vmatpush1.msra.mxu0 %v1186
    %1332 = vmatprep.subr.mxu0 0.0
    %1333 = vmatpush1.msra.mxu0 %v1185
    %1334 = vmatprep.subr.mxu0 0.0
    %1335 = vmatpush1.msra.mxu0 %v1184
    %1336 = vmatprep.subr.mxu0 0.0
    %1337 = vmatpush1.msra.mxu0 %v1183
    %1338 = vmatprep.subr.mxu0 0.0
    %1339 = vmatpush1.msra.mxu0 %v1182
    %1340 = vmatprep.subr.mxu0 0.0
    %1341 = vmatpush1.msra.mxu0 %v1181
    %1342 = vmatprep.subr.mxu0 0.0
    %1343 = vmatpush1.msra.mxu0 %v1180
    %1344 = vmatprep.subr.mxu0 0.0
    %1345 = vmatpush2.msra.mxu0 0.0
    %1346 = vmatprep.subr.mxu0 0.0
    %1347 = vmatpush2.msra.mxu0 0.0
    %1348 = vmatprep.subr.mxu0 0.0
    %1349 = vmatpush2.msra.mxu0 0.0
    %1350 = vmatprep.subr.mxu0 0.0
    %1351 = vmatpush2.msra.mxu0 0.0
    %1352 = vmatprep.subr.mxu0 0.0
    %1353 = vmatpush2.msra.mxu0 0.0
    %1354 = vmatprep.subr.mxu0 0.0
    %1355 = vmatpush2.msra.mxu0 0.0
    %1356 = vmatprep.subr.mxu0 0.0
    %1357 = vmatpush2.msra.mxu0 0.0
    %1358 = vmatprep.subr.mxu0 0.0
    %1359 = vmatpush2.msra.mxu0 0.0
    %1360 = vmatprep.subr.mxu0 0.0
    %1361 = vmatpush2.msra.mxu0 0.0
    %1362 = vmatprep.subr.mxu0 0.0
    %1363 = vmatpush2.msra.mxu0 0.0
    %1364 = vmatprep.subr.mxu0 0.0
    %1365 = vmatpush2.msra.mxu0 0.0
    %1366 = vmatprep.subr.mxu0 0.0
    %1367 = vmatpush2.msra.mxu0 0.0
    %1368 = vmatprep.subr.mxu0 0.0
    %1369 = vmatpush2.msra.mxu0 0.0
    %1370 = vmatprep.subr.mxu0 0.0
    %1371 = vmatpush2.msra.mxu0 0.0
    %1372 = vmatprep.subr.mxu0 0.0
    %1373 = vmatpush2.msra.mxu0 0.0
    %1374 = vmatprep.subr.mxu0 0.0
    %1375 = vmatpush2.msra.mxu0 0.0
    %1376 = vmatprep.mubr.f32.mxu0 0.0
    %1377 = vmatmul.mubr.f32.gmra.mxu0 %v1244
    %v1378 = vpop.f32.mrf.mxu0
    %v1379 = vadd.f32 0.0, %v1378
    %v1380 = vpop.f32.mrf.mxu0
    %1381 = vmatprep.mubr.f32.mxu0 0.0
    %1382 = vmatmul.mubr.f32.gmra.mxu0 %v1293
    %v1383 = vpop.f32.mrf.mxu0
    %v1384 = vadd.f32 0.0, %v1383
    %v1385 = vpop.f32.mrf.mxu0
    %1386 = vmatprep.mubr.f32.mxu0 0.0
    %1387 = vmatmul.mubr.f32.gmra.mxu0 %v1308
    %v1388 = vpop.f32.mrf.mxu0
    %v1389 = vadd.f32 0.0, %v1388
    %v1390 = vpop.f32.mrf.mxu0
    %1391 = vdwg.mxu0
    %v1392 = vadd.f32 %v1010, %v1379
    %v1393 = vadd.f32 %v1015, %v1384
    %v1394 = vadd.f32 %v1020, %v1389
    %s1395 = scalar_lea.vmem [#allocation2], 3
    %v1396 = vld [vmem:[%s1395] ss:$2 sm:$0x7]
    %s1397 = scalar_lea.vmem [#allocation2], 19
    %v1398 = vld [vmem:[%s1397] ss:$2 sm:$0x7]
    %s1399 = scalar_lea.vmem [#allocation2], 35
    %v1400 = vld [vmem:[%s1399] ss:$2 sm:$0x7]
    %s1401 = scalar_lea.vmem [#allocation2], 67
    %v1402 = vld [vmem:[%s1401] ss:$2 sm:$0x7]
    %s1403 = scalar_lea.vmem [#allocation2], 83
    %v1404 = vld [vmem:[%s1403] ss:$2 sm:$0x7]
    %s1405 = scalar_lea.vmem [#allocation2], 99
    %v1406 = vld [vmem:[%s1405] ss:$2 sm:$0x7]
    %v1414 = vunpack.c.l.s4 1966171168
    %v1415 = vunpack.c.0.s8 %v1414
    %v1416 = vlaneseq
    %v1417 = vshrl.u32 %v1416, 7
    %v1418 = vsub.s32 %v1415, %v1417
    %v1419 = vrot.slane %v1396, %v1418
    %v1420 = vcombine.high %v1419, %v1419
    %v1422 = vunpack.c.l.s4 1966171168
    %v1423 = vunpack.c.0.s8 %v1422
    %v1424 = vlaneseq
    %v1425 = vshrl.u32 %v1424, 7
    %v1426 = vsub.s32 %v1423, %v1425
    %v1427 = vrot.slane %v1419, %v1426
    %v1429 = vunpack.c.l.s4 1966171168
    %v1430 = vunpack.c.0.s8 %v1429
    %v1431 = vlaneseq
    %v1432 = vshrl.u32 %v1431, 7
    %v1433 = vsub.s32 %v1430, %v1432
    %v1434 = vrot.slane %v1420, %v1433
    %v1435 = vcombine.high %v1427, %v1427
    %v1437 = vunpack.c.l.s4 1966171168
    %v1438 = vunpack.c.0.s8 %v1437
    %v1439 = vlaneseq
    %v1440 = vshrl.u32 %v1439, 7
    %v1441 = vsub.s32 %v1438, %v1440
    %v1442 = vrot.slane %v1398, %v1441
    %v1443 = vcombine.high %v1442, %v1442
    %v1445 = vunpack.c.l.s4 1966171168
    %v1446 = vunpack.c.0.s8 %v1445
    %v1447 = vlaneseq
    %v1448 = vshrl.u32 %v1447, 7
    %v1449 = vsub.s32 %v1446, %v1448
    %v1450 = vrot.slane %v1442, %v1449
    %v1452 = vunpack.c.l.s4 1966171168
    %v1453 = vunpack.c.0.s8 %v1452
    %v1454 = vlaneseq
    %v1455 = vshrl.u32 %v1454, 7
    %v1456 = vsub.s32 %v1453, %v1455
    %v1457 = vrot.slane %v1443, %v1456
    %v1458 = vcombine.high %v1450, %v1450
    %v1460 = vunpack.c.l.s4 1966171168
    %v1461 = vunpack.c.0.s8 %v1460
    %v1462 = vlaneseq
    %v1463 = vshrl.u32 %v1462, 7
    %v1464 = vsub.s32 %v1461, %v1463
    %v1465 = vrot.slane %v1400, %v1464
    %v1466 = vcombine.high %v1465, %v1465
    %v1468 = vunpack.c.l.s4 1966171168
    %v1469 = vunpack.c.0.s8 %v1468
    %v1470 = vlaneseq
    %v1471 = vshrl.u32 %v1470, 7
    %v1472 = vsub.s32 %v1469, %v1471
    %v1473 = vrot.slane %v1465, %v1472
    %v1475 = vunpack.c.l.s4 1966171168
    %v1476 = vunpack.c.0.s8 %v1475
    %v1477 = vlaneseq
    %v1478 = vshrl.u32 %v1477, 7
    %v1479 = vsub.s32 %v1476, %v1478
    %v1480 = vrot.slane %v1466, %v1479
    %v1481 = vcombine.high %v1473, %v1473
    %v1483 = vunpack.c.l.s4 1966171168
    %v1484 = vunpack.c.0.s8 %v1483
    %v1485 = vlaneseq
    %v1486 = vshrl.u32 %v1485, 7
    %v1487 = vsub.s32 %v1484, %v1486
    %v1488 = vrot.slane %v1402, %v1487
    %v1489 = vcombine.high %v1488, %v1488
    %v1491 = vunpack.c.l.s4 1966171168
    %v1492 = vunpack.c.0.s8 %v1491
    %v1493 = vlaneseq
    %v1494 = vshrl.u32 %v1493, 7
    %v1495 = vsub.s32 %v1492, %v1494
    %v1496 = vrot.slane %v1488, %v1495
    %v1498 = vunpack.c.l.s4 1966171168
    %v1499 = vunpack.c.0.s8 %v1498
    %v1500 = vlaneseq
    %v1501 = vshrl.u32 %v1500, 7
    %v1502 = vsub.s32 %v1499, %v1501
    %v1503 = vrot.slane %v1489, %v1502
    %v1504 = vcombine.high %v1496, %v1496
    %v1506 = vunpack.c.l.s4 1966171168
    %v1507 = vunpack.c.0.s8 %v1506
    %v1508 = vlaneseq
    %v1509 = vshrl.u32 %v1508, 7
    %v1510 = vsub.s32 %v1507, %v1509
    %v1511 = vrot.slane %v1404, %v1510
    %v1512 = vcombine.high %v1511, %v1511
    %v1514 = vunpack.c.l.s4 1966171168
    %v1515 = vunpack.c.0.s8 %v1514
    %v1516 = vlaneseq
    %v1517 = vshrl.u32 %v1516, 7
    %v1518 = vsub.s32 %v1515, %v1517
    %v1519 = vrot.slane %v1511, %v1518
    %v1521 = vunpack.c.l.s4 1966171168
    %v1522 = vunpack.c.0.s8 %v1521
    %v1523 = vlaneseq
    %v1524 = vshrl.u32 %v1523, 7
    %v1525 = vsub.s32 %v1522, %v1524
    %v1526 = vrot.slane %v1512, %v1525
    %v1527 = vcombine.high %v1519, %v1519
    %v1529 = vunpack.c.l.s4 1966171168
    %v1530 = vunpack.c.0.s8 %v1529
    %v1531 = vlaneseq
    %v1532 = vshrl.u32 %v1531, 7
    %v1533 = vsub.s32 %v1530, %v1532
    %v1534 = vrot.slane %v1406, %v1533
    %v1535 = vcombine.high %v1534, %v1534
    %v1537 = vunpack.c.l.s4 1966171168
    %v1538 = vunpack.c.0.s8 %v1537
    %v1539 = vlaneseq
    %v1540 = vshrl.u32 %v1539, 7
    %v1541 = vsub.s32 %v1538, %v1540
    %v1542 = vrot.slane %v1534, %v1541
    %v1544 = vunpack.c.l.s4 1966171168
    %v1545 = vunpack.c.0.s8 %v1544
    %v1546 = vlaneseq
    %v1547 = vshrl.u32 %v1546, 7
    %v1548 = vsub.s32 %v1545, %v1547
    %v1549 = vrot.slane %v1535, %v1548
    %v1550 = vcombine.high %v1542, %v1542
    %s1551 = scalar_lea.vmem %s3, 384
    %v1552 = vld [vmem:[%s1551] sm:$0xff]
    %v1553 = vld [vmem:[%s1551 + $0x8] sm:$0xff]
    %v1554 = vld [vmem:[%s1551 + $0x10] sm:$0xff]
    %v1555 = vld [vmem:[%s1551 + $0x18] sm:$0xff]
    %v1556 = vld [vmem:[%s1551 + $0x20] sm:$0xff]
    %v1557 = vld [vmem:[%s1551 + $0x28] sm:$0xff]
    %v1558 = vld [vmem:[%s1551 + $0x30] sm:$0xff]
    %v1559 = vld [vmem:[%s1551 + $0x38] sm:$0xff]
    %v1560 = vld [vmem:[%s1551 + $0x40] sm:$0xff]
    %v1561 = vld [vmem:[%s1551 + $0x48] sm:$0xff]
    %v1562 = vld [vmem:[%s1551 + $0x50] sm:$0xff]
    %v1563 = vld [vmem:[%s1551 + $0x58] sm:$0xff]
    %v1564 = vld [vmem:[%s1551 + $0x60] sm:$0xff]
    %v1565 = vld [vmem:[%s1551 + $0x68] sm:$0xff]
    %v1566 = vld [vmem:[%s1551 + $0x70] sm:$0xff]
    %v1567 = vld [vmem:[%s1551 + $0x78] sm:$0xff]
    %v1568 = vcombine.low %v1427, %v1434
    %v1569 = vcombine.low %v1435, %v1450
    %v1570 = vcombine.low %v1457, %v1458
    %v1571 = vcombine.low %v1473, %v1480
    %v1573 = vunpack.c.l.s4 1966171168
    %v1574 = vunpack.c.0.s8 %v1573
    %v1575 = vlaneseq
    %v1576 = vshrl.u32 %v1575, 7
    %v1577 = vsub.s32 %v1574, %v1576
    %v1578 = vrot.slane %v1568, %v1577
    %v1580 = vunpack.c.l.s4 1966171168
    %v1581 = vunpack.c.0.s8 %v1580
    %v1582 = vlaneseq
    %v1583 = vshrl.u32 %v1582, 7
    %v1584 = vsub.s32 %v1581, %v1583
    %v1585 = vrot.slane %v1569, %v1584
    %v1587 = vunpack.c.l.s4 1966171168
    %v1588 = vunpack.c.0.s8 %v1587
    %v1589 = vlaneseq
    %v1590 = vshrl.u32 %v1589, 7
    %v1591 = vsub.s32 %v1588, %v1590
    %v1592 = vrot.slane %v1570, %v1591
    %v1594 = vunpack.c.l.s4 1966171168
    %v1595 = vunpack.c.0.s8 %v1594
    %v1596 = vlaneseq
    %v1597 = vshrl.u32 %v1596, 7
    %v1598 = vsub.s32 %v1595, %v1597
    %v1599 = vrot.slane %v1571, %v1598
    %v1600 = vcombine.low %v1578, %v1585
    %v1601 = vcombine.low %v1592, %v1599
    %v1603 = vunpack.c.l.s4 1966171168
    %v1604 = vunpack.c.0.s8 %v1603
    %v1605 = vlaneseq
    %v1606 = vshrl.u32 %v1605, 7
    %v1607 = vsub.s32 %v1604, %v1606
    %v1608 = vrot.slane %v1600, %v1607
    %v1610 = vunpack.c.l.s4 1966171168
    %v1611 = vunpack.c.0.s8 %v1610
    %v1612 = vlaneseq
    %v1613 = vshrl.u32 %v1612, 7
    %v1614 = vsub.s32 %v1611, %v1613
    %v1615 = vrot.slane %v1601, %v1614
    %v1616 = vcombine.low %v1608, %v1615
    %v1617 = vcombine.low %v1481, %v1496
    %v1618 = vcombine.low %v1503, %v1504
    %v1619 = vcombine.low %v1519, %v1526
    %v1620 = vcombine.low %v1527, %v1542
    %v1622 = vunpack.c.l.s4 1966171168
    %v1623 = vunpack.c.0.s8 %v1622
    %v1624 = vlaneseq
    %v1625 = vshrl.u32 %v1624, 7
    %v1626 = vsub.s32 %v1623, %v1625
    %v1627 = vrot.slane %v1617, %v1626
    %v1629 = vunpack.c.l.s4 1966171168
    %v1630 = vunpack.c.0.s8 %v1629
    %v1631 = vlaneseq
    %v1632 = vshrl.u32 %v1631, 7
    %v1633 = vsub.s32 %v1630, %v1632
    %v1634 = vrot.slane %v1618, %v1633
    %v1636 = vunpack.c.l.s4 1966171168
    %v1637 = vunpack.c.0.s8 %v1636
    %v1638 = vlaneseq
    %v1639 = vshrl.u32 %v1638, 7
    %v1640 = vsub.s32 %v1637, %v1639
    %v1641 = vrot.slane %v1619, %v1640
    %v1643 = vunpack.c.l.s4 1966171168
    %v1644 = vunpack.c.0.s8 %v1643
    %v1645 = vlaneseq
    %v1646 = vshrl.u32 %v1645, 7
    %v1647 = vsub.s32 %v1644, %v1646
    %v1648 = vrot.slane %v1620, %v1647
    %v1649 = vcombine.low %v1627, %v1634
    %v1650 = vcombine.low %v1641, %v1648
    %v1652 = vunpack.c.l.s4 1966171168
    %v1653 = vunpack.c.0.s8 %v1652
    %v1654 = vlaneseq
    %v1655 = vshrl.u32 %v1654, 7
    %v1656 = vsub.s32 %v1653, %v1655
    %v1657 = vrot.slane %v1649, %v1656
    %v1659 = vunpack.c.l.s4 1966171168
    %v1660 = vunpack.c.0.s8 %v1659
    %v1661 = vlaneseq
    %v1662 = vshrl.u32 %v1661, 7
    %v1663 = vsub.s32 %v1660, %v1662
    %v1664 = vrot.slane %v1650, %v1663
    %v1665 = vcombine.low %v1657, %v1664
    %v1666 = vcombine.low %v1549, %v1550
    %v1668 = vunpack.c.l.s4 1966171168
    %v1669 = vunpack.c.0.s8 %v1668
    %v1670 = vlaneseq
    %v1671 = vshrl.u32 %v1670, 7
    %v1672 = vsub.s32 %v1669, %v1671
    %v1673 = vrot.slane %v1666, %v1672
    %v1675 = vunpack.c.l.s4 1966171168
    %v1676 = vunpack.c.0.s8 %v1675
    %v1677 = vlaneseq
    %v1678 = vshrl.u32 %v1677, 7
    %v1679 = vsub.s32 %v1676, %v1678
    %v1680 = vrot.slane %v1673, %v1679
    %1684 = vmatprep.subr.mxu0 0.0
    %1685 = vmatpush1.msra.mxu0 %v1567
    %1686 = vmatprep.subr.mxu0 0.0
    %1687 = vmatpush1.msra.mxu0 %v1566
    %1688 = vmatprep.subr.mxu0 0.0
    %1689 = vmatpush1.msra.mxu0 %v1565
    %1690 = vmatprep.subr.mxu0 0.0
    %1691 = vmatpush1.msra.mxu0 %v1564
    %1692 = vmatprep.subr.mxu0 0.0
    %1693 = vmatpush1.msra.mxu0 %v1563
    %1694 = vmatprep.subr.mxu0 0.0
    %1695 = vmatpush1.msra.mxu0 %v1562
    %1696 = vmatprep.subr.mxu0 0.0
    %1697 = vmatpush1.msra.mxu0 %v1561
    %1698 = vmatprep.subr.mxu0 0.0
    %1699 = vmatpush1.msra.mxu0 %v1560
    %1700 = vmatprep.subr.mxu0 0.0
    %1701 = vmatpush1.msra.mxu0 %v1559
    %1702 = vmatprep.subr.mxu0 0.0
    %1703 = vmatpush1.msra.mxu0 %v1558
    %1704 = vmatprep.subr.mxu0 0.0
    %1705 = vmatpush1.msra.mxu0 %v1557
    %1706 = vmatprep.subr.mxu0 0.0
    %1707 = vmatpush1.msra.mxu0 %v1556
    %1708 = vmatprep.subr.mxu0 0.0
    %1709 = vmatpush1.msra.mxu0 %v1555
    %1710 = vmatprep.subr.mxu0 0.0
    %1711 = vmatpush1.msra.mxu0 %v1554
    %1712 = vmatprep.subr.mxu0 0.0
    %1713 = vmatpush1.msra.mxu0 %v1553
    %1714 = vmatprep.subr.mxu0 0.0
    %1715 = vmatpush1.msra.mxu0 %v1552
    %1716 = vmatprep.subr.mxu0 0.0
    %1717 = vmatpush2.msra.mxu0 0.0
    %1718 = vmatprep.subr.mxu0 0.0
    %1719 = vmatpush2.msra.mxu0 0.0
    %1720 = vmatprep.subr.mxu0 0.0
    %1721 = vmatpush2.msra.mxu0 0.0
    %1722 = vmatprep.subr.mxu0 0.0
    %1723 = vmatpush2.msra.mxu0 0.0
    %1724 = vmatprep.subr.mxu0 0.0
    %1725 = vmatpush2.msra.mxu0 0.0
    %1726 = vmatprep.subr.mxu0 0.0
    %1727 = vmatpush2.msra.mxu0 0.0
    %1728 = vmatprep.subr.mxu0 0.0
    %1729 = vmatpush2.msra.mxu0 0.0
    %1730 = vmatprep.subr.mxu0 0.0
    %1731 = vmatpush2.msra.mxu0 0.0
    %1732 = vmatprep.subr.mxu0 0.0
    %1733 = vmatpush2.msra.mxu0 0.0
    %1734 = vmatprep.subr.mxu0 0.0
    %1735 = vmatpush2.msra.mxu0 0.0
    %1736 = vmatprep.subr.mxu0 0.0
    %1737 = vmatpush2.msra.mxu0 0.0
    %1738 = vmatprep.subr.mxu0 0.0
    %1739 = vmatpush2.msra.mxu0 0.0
    %1740 = vmatprep.subr.mxu0 0.0
    %1741 = vmatpush2.msra.mxu0 0.0
    %1742 = vmatprep.subr.mxu0 0.0
    %1743 = vmatpush2.msra.mxu0 0.0
    %1744 = vmatprep.subr.mxu0 0.0
    %1745 = vmatpush2.msra.mxu0 0.0
    %1746 = vmatprep.subr.mxu0 0.0
    %1747 = vmatpush2.msra.mxu0 0.0
    %1748 = vmatprep.mubr.f32.mxu0 0.0
    %1749 = vmatmul.mubr.f32.gmra.mxu0 %v1616
    %v1750 = vpop.f32.mrf.mxu0
    %v1751 = vadd.f32 0.0, %v1750
    %v1752 = vpop.f32.mrf.mxu0
    %1753 = vmatprep.mubr.f32.mxu0 0.0
    %1754 = vmatmul.mubr.f32.gmra.mxu0 %v1665
    %v1755 = vpop.f32.mrf.mxu0
    %v1756 = vadd.f32 0.0, %v1755
    %v1757 = vpop.f32.mrf.mxu0
    %1758 = vmatprep.mubr.f32.mxu0 0.0
    %1759 = vmatmul.mubr.f32.gmra.mxu0 %v1680
    %v1760 = vpop.f32.mrf.mxu0
    %v1761 = vadd.f32 0.0, %v1760
    %v1762 = vpop.f32.mrf.mxu0
    %1763 = vdwg.mxu0
    %v1764 = vadd.f32 %v1392, %v1751
    %v1765 = vadd.f32 %v1393, %v1756
    %v1766 = vadd.f32 %v1394, %v1761
    %s1767 = scalar_lea.vmem [#allocation2], 8
    %v1768 = vld [vmem:[%s1767] ss:$2 sm:$0x7]
    %s1769 = scalar_lea.vmem %s1767, 16 [#allocation2]
    %v1770 = vld [vmem:[%s1769] ss:$2 sm:$0x7]
    %s1771 = scalar_lea.vmem %s1767, 32 [#allocation2]
    %v1772 = vld [vmem:[%s1771] ss:$2 sm:$0x7]
    %s1773 = scalar_lea.vmem %s1767, 64 [#allocation2]
    %v1774 = vld [vmem:[%s1773] ss:$2 sm:$0x7]
    %s1775 = scalar_lea.vmem %s1767, 80 [#allocation2]
    %v1776 = vld [vmem:[%s1775] ss:$2 sm:$0x7]
    %s1777 = scalar_lea.vmem %s1767, 96 [#allocation2]
    %v1778 = vld [vmem:[%s1777] ss:$2 sm:$0x7]
    %v1786 = vunpack.c.l.s4 1966171168
    %v1787 = vunpack.c.0.s8 %v1786
    %v1788 = vlaneseq
    %v1789 = vshrl.u32 %v1788, 7
    %v1790 = vsub.s32 %v1787, %v1789
    %v1791 = vrot.slane %v1768, %v1790
    %v1792 = vcombine.high %v1791, %v1791
    %v1794 = vunpack.c.l.s4 1966171168
    %v1795 = vunpack.c.0.s8 %v1794
    %v1796 = vlaneseq
    %v1797 = vshrl.u32 %v1796, 7
    %v1798 = vsub.s32 %v1795, %v1797
    %v1799 = vrot.slane %v1791, %v1798
    %v1801 = vunpack.c.l.s4 1966171168
    %v1802 = vunpack.c.0.s8 %v1801
    %v1803 = vlaneseq
    %v1804 = vshrl.u32 %v1803, 7
    %v1805 = vsub.s32 %v1802, %v1804
    %v1806 = vrot.slane %v1792, %v1805
    %v1807 = vcombine.high %v1799, %v1799
    %v1809 = vunpack.c.l.s4 1966171168
    %v1810 = vunpack.c.0.s8 %v1809
    %v1811 = vlaneseq
    %v1812 = vshrl.u32 %v1811, 7
    %v1813 = vsub.s32 %v1810, %v1812
    %v1814 = vrot.slane %v1770, %v1813
    %v1815 = vcombine.high %v1814, %v1814
    %v1817 = vunpack.c.l.s4 1966171168
    %v1818 = vunpack.c.0.s8 %v1817
    %v1819 = vlaneseq
    %v1820 = vshrl.u32 %v1819, 7
    %v1821 = vsub.s32 %v1818, %v1820
    %v1822 = vrot.slane %v1814, %v1821
    %v1824 = vunpack.c.l.s4 1966171168
    %v1825 = vunpack.c.0.s8 %v1824
    %v1826 = vlaneseq
    %v1827 = vshrl.u32 %v1826, 7
    %v1828 = vsub.s32 %v1825, %v1827
    %v1829 = vrot.slane %v1815, %v1828
    %v1830 = vcombine.high %v1822, %v1822
    %v1832 = vunpack.c.l.s4 1966171168
    %v1833 = vunpack.c.0.s8 %v1832
    %v1834 = vlaneseq
    %v1835 = vshrl.u32 %v1834, 7
    %v1836 = vsub.s32 %v1833, %v1835
    %v1837 = vrot.slane %v1772, %v1836
    %v1838 = vcombine.high %v1837, %v1837
    %v1840 = vunpack.c.l.s4 1966171168
    %v1841 = vunpack.c.0.s8 %v1840
    %v1842 = vlaneseq
    %v1843 = vshrl.u32 %v1842, 7
    %v1844 = vsub.s32 %v1841, %v1843
    %v1845 = vrot.slane %v1837, %v1844
    %v1847 = vunpack.c.l.s4 1966171168
    %v1848 = vunpack.c.0.s8 %v1847
    %v1849 = vlaneseq
    %v1850 = vshrl.u32 %v1849, 7
    %v1851 = vsub.s32 %v1848, %v1850
    %v1852 = vrot.slane %v1838, %v1851
    %v1853 = vcombine.high %v1845, %v1845
    %v1855 = vunpack.c.l.s4 1966171168
    %v1856 = vunpack.c.0.s8 %v1855
    %v1857 = vlaneseq
    %v1858 = vshrl.u32 %v1857, 7
    %v1859 = vsub.s32 %v1856, %v1858
    %v1860 = vrot.slane %v1774, %v1859
    %v1861 = vcombine.high %v1860, %v1860
    %v1863 = vunpack.c.l.s4 1966171168
    %v1864 = vunpack.c.0.s8 %v1863
    %v1865 = vlaneseq
    %v1866 = vshrl.u32 %v1865, 7
    %v1867 = vsub.s32 %v1864, %v1866
    %v1868 = vrot.slane %v1860, %v1867
    %v1870 = vunpack.c.l.s4 1966171168
    %v1871 = vunpack.c.0.s8 %v1870
    %v1872 = vlaneseq
    %v1873 = vshrl.u32 %v1872, 7
    %v1874 = vsub.s32 %v1871, %v1873
    %v1875 = vrot.slane %v1861, %v1874
    %v1876 = vcombine.high %v1868, %v1868
    %v1878 = vunpack.c.l.s4 1966171168
    %v1879 = vunpack.c.0.s8 %v1878
    %v1880 = vlaneseq
    %v1881 = vshrl.u32 %v1880, 7
    %v1882 = vsub.s32 %v1879, %v1881
    %v1883 = vrot.slane %v1776, %v1882
    %v1884 = vcombine.high %v1883, %v1883
    %v1886 = vunpack.c.l.s4 1966171168
    %v1887 = vunpack.c.0.s8 %v1886
    %v1888 = vlaneseq
    %v1889 = vshrl.u32 %v1888, 7
    %v1890 = vsub.s32 %v1887, %v1889
    %v1891 = vrot.slane %v1883, %v1890
    %v1893 = vunpack.c.l.s4 1966171168
    %v1894 = vunpack.c.0.s8 %v1893
    %v1895 = vlaneseq
    %v1896 = vshrl.u32 %v1895, 7
    %v1897 = vsub.s32 %v1894, %v1896
    %v1898 = vrot.slane %v1884, %v1897
    %v1899 = vcombine.high %v1891, %v1891
    %v1901 = vunpack.c.l.s4 1966171168
    %v1902 = vunpack.c.0.s8 %v1901
    %v1903 = vlaneseq
    %v1904 = vshrl.u32 %v1903, 7
    %v1905 = vsub.s32 %v1902, %v1904
    %v1906 = vrot.slane %v1778, %v1905
    %v1907 = vcombine.high %v1906, %v1906
    %v1909 = vunpack.c.l.s4 1966171168
    %v1910 = vunpack.c.0.s8 %v1909
    %v1911 = vlaneseq
    %v1912 = vshrl.u32 %v1911, 7
    %v1913 = vsub.s32 %v1910, %v1912
    %v1914 = vrot.slane %v1906, %v1913
    %v1916 = vunpack.c.l.s4 1966171168
    %v1917 = vunpack.c.0.s8 %v1916
    %v1918 = vlaneseq
    %v1919 = vshrl.u32 %v1918, 7
    %v1920 = vsub.s32 %v1917, %v1919
    %v1921 = vrot.slane %v1907, %v1920
    %v1922 = vcombine.high %v1914, %v1914
    %s1923 = scalar_lea.vmem %s3, 512
    %v1924 = vld [vmem:[%s1923] sm:$0xff]
    %v1925 = vld [vmem:[%s1923 + $0x8] sm:$0xff]
    %v1926 = vld [vmem:[%s1923 + $0x10] sm:$0xff]
    %v1927 = vld [vmem:[%s1923 + $0x18] sm:$0xff]
    %v1928 = vld [vmem:[%s1923 + $0x20] sm:$0xff]
    %v1929 = vld [vmem:[%s1923 + $0x28] sm:$0xff]
    %v1930 = vld [vmem:[%s1923 + $0x30] sm:$0xff]
    %v1931 = vld [vmem:[%s1923 + $0x38] sm:$0xff]
    %v1932 = vld [vmem:[%s1923 + $0x40] sm:$0xff]
    %v1933 = vld [vmem:[%s1923 + $0x48] sm:$0xff]
    %v1934 = vld [vmem:[%s1923 + $0x50] sm:$0xff]
    %v1935 = vld [vmem:[%s1923 + $0x58] sm:$0xff]
    %v1936 = vld [vmem:[%s1923 + $0x60] sm:$0xff]
    %v1937 = vld [vmem:[%s1923 + $0x68] sm:$0xff]
    %v1938 = vld [vmem:[%s1923 + $0x70] sm:$0xff]
    %v1939 = vld [vmem:[%s1923 + $0x78] sm:$0xff]
    %v1940 = vcombine.low %v1799, %v1806
    %v1941 = vcombine.low %v1807, %v1822
    %v1942 = vcombine.low %v1829, %v1830
    %v1943 = vcombine.low %v1845, %v1852
    %v1945 = vunpack.c.l.s4 1966171168
    %v1946 = vunpack.c.0.s8 %v1945
    %v1947 = vlaneseq
    %v1948 = vshrl.u32 %v1947, 7
    %v1949 = vsub.s32 %v1946, %v1948
    %v1950 = vrot.slane %v1940, %v1949
    %v1952 = vunpack.c.l.s4 1966171168
    %v1953 = vunpack.c.0.s8 %v1952
    %v1954 = vlaneseq
    %v1955 = vshrl.u32 %v1954, 7
    %v1956 = vsub.s32 %v1953, %v1955
    %v1957 = vrot.slane %v1941, %v1956
    %v1959 = vunpack.c.l.s4 1966171168
    %v1960 = vunpack.c.0.s8 %v1959
    %v1961 = vlaneseq
    %v1962 = vshrl.u32 %v1961, 7
    %v1963 = vsub.s32 %v1960, %v1962
    %v1964 = vrot.slane %v1942, %v1963
    %v1966 = vunpack.c.l.s4 1966171168
    %v1967 = vunpack.c.0.s8 %v1966
    %v1968 = vlaneseq
    %v1969 = vshrl.u32 %v1968, 7
    %v1970 = vsub.s32 %v1967, %v1969
    %v1971 = vrot.slane %v1943, %v1970
    %v1972 = vcombine.low %v1950, %v1957
    %v1973 = vcombine.low %v1964, %v1971
    %v1975 = vunpack.c.l.s4 1966171168
    %v1976 = vunpack.c.0.s8 %v1975
    %v1977 = vlaneseq
    %v1978 = vshrl.u32 %v1977, 7
    %v1979 = vsub.s32 %v1976, %v1978
    %v1980 = vrot.slane %v1972, %v1979
    %v1982 = vunpack.c.l.s4 1966171168
    %v1983 = vunpack.c.0.s8 %v1982
    %v1984 = vlaneseq
    %v1985 = vshrl.u32 %v1984, 7
    %v1986 = vsub.s32 %v1983, %v1985
    %v1987 = vrot.slane %v1973, %v1986
    %v1988 = vcombine.low %v1980, %v1987
    %v1989 = vcombine.low %v1853, %v1868
    %v1990 = vcombine.low %v1875, %v1876
    %v1991 = vcombine.low %v1891, %v1898
    %v1992 = vcombine.low %v1899, %v1914
    %v1994 = vunpack.c.l.s4 1966171168
    %v1995 = vunpack.c.0.s8 %v1994
    %v1996 = vlaneseq
    %v1997 = vshrl.u32 %v1996, 7
    %v1998 = vsub.s32 %v1995, %v1997
    %v1999 = vrot.slane %v1989, %v1998
    %v2001 = vunpack.c.l.s4 1966171168
    %v2002 = vunpack.c.0.s8 %v2001
    %v2003 = vlaneseq
    %v2004 = vshrl.u32 %v2003, 7
    %v2005 = vsub.s32 %v2002, %v2004
    %v2006 = vrot.slane %v1990, %v2005
    %v2008 = vunpack.c.l.s4 1966171168
    %v2009 = vunpack.c.0.s8 %v2008
    %v2010 = vlaneseq
    %v2011 = vshrl.u32 %v2010, 7
    %v2012 = vsub.s32 %v2009, %v2011
    %v2013 = vrot.slane %v1991, %v2012
    %v2015 = vunpack.c.l.s4 1966171168
    %v2016 = vunpack.c.0.s8 %v2015
    %v2017 = vlaneseq
    %v2018 = vshrl.u32 %v2017, 7
    %v2019 = vsub.s32 %v2016, %v2018
    %v2020 = vrot.slane %v1992, %v2019
    %v2021 = vcombine.low %v1999, %v2006
    %v2022 = vcombine.low %v2013, %v2020
    %v2024 = vunpack.c.l.s4 1966171168
    %v2025 = vunpack.c.0.s8 %v2024
    %v2026 = vlaneseq
    %v2027 = vshrl.u32 %v2026, 7
    %v2028 = vsub.s32 %v2025, %v2027
    %v2029 = vrot.slane %v2021, %v2028
    %v2031 = vunpack.c.l.s4 1966171168
    %v2032 = vunpack.c.0.s8 %v2031
    %v2033 = vlaneseq
    %v2034 = vshrl.u32 %v2033, 7
    %v2035 = vsub.s32 %v2032, %v2034
    %v2036 = vrot.slane %v2022, %v2035
    %v2037 = vcombine.low %v2029, %v2036
    %v2038 = vcombine.low %v1921, %v1922
    %v2040 = vunpack.c.l.s4 1966171168
    %v2041 = vunpack.c.0.s8 %v2040
    %v2042 = vlaneseq
    %v2043 = vshrl.u32 %v2042, 7
    %v2044 = vsub.s32 %v2041, %v2043
    %v2045 = vrot.slane %v2038, %v2044
    %v2047 = vunpack.c.l.s4 1966171168
    %v2048 = vunpack.c.0.s8 %v2047
    %v2049 = vlaneseq
    %v2050 = vshrl.u32 %v2049, 7
    %v2051 = vsub.s32 %v2048, %v2050
    %v2052 = vrot.slane %v2045, %v2051
    %2056 = vmatprep.subr.mxu0 0.0
    %2057 = vmatpush1.msra.mxu0 %v1939
    %2058 = vmatprep.subr.mxu0 0.0
    %2059 = vmatpush1.msra.mxu0 %v1938
    %2060 = vmatprep.subr.mxu0 0.0
    %2061 = vmatpush1.msra.mxu0 %v1937
    %2062 = vmatprep.subr.mxu0 0.0
    %2063 = vmatpush1.msra.mxu0 %v1936
    %2064 = vmatprep.subr.mxu0 0.0
    %2065 = vmatpush1.msra.mxu0 %v1935
    %2066 = vmatprep.subr.mxu0 0.0
    %2067 = vmatpush1.msra.mxu0 %v1934
    %2068 = vmatprep.subr.mxu0 0.0
    %2069 = vmatpush1.msra.mxu0 %v1933
    %2070 = vmatprep.subr.mxu0 0.0
    %2071 = vmatpush1.msra.mxu0 %v1932
    %2072 = vmatprep.subr.mxu0 0.0
    %2073 = vmatpush1.msra.mxu0 %v1931
    %2074 = vmatprep.subr.mxu0 0.0
    %2075 = vmatpush1.msra.mxu0 %v1930
    %2076 = vmatprep.subr.mxu0 0.0
    %2077 = vmatpush1.msra.mxu0 %v1929
    %2078 = vmatprep.subr.mxu0 0.0
    %2079 = vmatpush1.msra.mxu0 %v1928
    %2080 = vmatprep.subr.mxu0 0.0
    %2081 = vmatpush1.msra.mxu0 %v1927
    %2082 = vmatprep.subr.mxu0 0.0
    %2083 = vmatpush1.msra.mxu0 %v1926
    %2084 = vmatprep.subr.mxu0 0.0
    %2085 = vmatpush1.msra.mxu0 %v1925
    %2086 = vmatprep.subr.mxu0 0.0
    %2087 = vmatpush1.msra.mxu0 %v1924
    %2088 = vmatprep.subr.mxu0 0.0
    %2089 = vmatpush2.msra.mxu0 0.0
    %2090 = vmatprep.subr.mxu0 0.0
    %2091 = vmatpush2.msra.mxu0 0.0
    %2092 = vmatprep.subr.mxu0 0.0
    %2093 = vmatpush2.msra.mxu0 0.0
    %2094 = vmatprep.subr.mxu0 0.0
    %2095 = vmatpush2.msra.mxu0 0.0
    %2096 = vmatprep.subr.mxu0 0.0
    %2097 = vmatpush2.msra.mxu0 0.0
    %2098 = vmatprep.subr.mxu0 0.0
    %2099 = vmatpush2.msra.mxu0 0.0
    %2100 = vmatprep.subr.mxu0 0.0
    %2101 = vmatpush2.msra.mxu0 0.0
    %2102 = vmatprep.subr.mxu0 0.0
    %2103 = vmatpush2.msra.mxu0 0.0
    %2104 = vmatprep.subr.mxu0 0.0
    %2105 = vmatpush2.msra.mxu0 0.0
    %2106 = vmatprep.subr.mxu0 0.0
    %2107 = vmatpush2.msra.mxu0 0.0
    %2108 = vmatprep.subr.mxu0 0.0
    %2109 = vmatpush2.msra.mxu0 0.0
    %2110 = vmatprep.subr.mxu0 0.0
    %2111 = vmatpush2.msra.mxu0 0.0
    %2112 = vmatprep.subr.mxu0 0.0
    %2113 = vmatpush2.msra.mxu0 0.0
    %2114 = vmatprep.subr.mxu0 0.0
    %2115 = vmatpush2.msra.mxu0 0.0
    %2116 = vmatprep.subr.mxu0 0.0
    %2117 = vmatpush2.msra.mxu0 0.0
    %2118 = vmatprep.subr.mxu0 0.0
    %2119 = vmatpush2.msra.mxu0 0.0
    %2120 = vmatprep.mubr.f32.mxu0 0.0
    %2121 = vmatmul.mubr.f32.gmra.mxu0 %v1988
    %v2122 = vpop.f32.mrf.mxu0
    %v2123 = vadd.f32 0.0, %v2122
    %v2124 = vpop.f32.mrf.mxu0
    %2125 = vmatprep.mubr.f32.mxu0 0.0
    %2126 = vmatmul.mubr.f32.gmra.mxu0 %v2037
    %v2127 = vpop.f32.mrf.mxu0
    %v2128 = vadd.f32 0.0, %v2127
    %v2129 = vpop.f32.mrf.mxu0
    %2130 = vmatprep.mubr.f32.mxu0 0.0
    %2131 = vmatmul.mubr.f32.gmra.mxu0 %v2052
    %v2132 = vpop.f32.mrf.mxu0
    %v2133 = vadd.f32 0.0, %v2132
    %v2134 = vpop.f32.mrf.mxu0
    %2135 = vdwg.mxu0
    %v2136 = vadd.f32 %v1764, %v2123
    %v2137 = vadd.f32 %v1765, %v2128
    %v2138 = vadd.f32 %v1766, %v2133
    %s2139 = scalar_lea.vmem %s1767, 1 [#allocation2]
    %v2140 = vld [vmem:[%s2139] ss:$2 sm:$0x7]
    %s2141 = scalar_lea.vmem %s1767, 17 [#allocation2]
    %v2142 = vld [vmem:[%s2141] ss:$2 sm:$0x7]
    %s2143 = scalar_lea.vmem %s1767, 33 [#allocation2]
    %v2144 = vld [vmem:[%s2143] ss:$2 sm:$0x7]
    %s2145 = scalar_lea.vmem %s1767, 65 [#allocation2]
    %v2146 = vld [vmem:[%s2145] ss:$2 sm:$0x7]
    %s2147 = scalar_lea.vmem %s1767, 81 [#allocation2]
    %v2148 = vld [vmem:[%s2147] ss:$2 sm:$0x7]
    %s2149 = scalar_lea.vmem %s1767, 97 [#allocation2]
    %v2150 = vld [vmem:[%s2149] ss:$2 sm:$0x7]
    %v2158 = vunpack.c.l.s4 1966171168
    %v2159 = vunpack.c.0.s8 %v2158
    %v2160 = vlaneseq
    %v2161 = vshrl.u32 %v2160, 7
    %v2162 = vsub.s32 %v2159, %v2161
    %v2163 = vrot.slane %v2140, %v2162
    %v2164 = vcombine.high %v2163, %v2163
    %v2166 = vunpack.c.l.s4 1966171168
    %v2167 = vunpack.c.0.s8 %v2166
    %v2168 = vlaneseq
    %v2169 = vshrl.u32 %v2168, 7
    %v2170 = vsub.s32 %v2167, %v2169
    %v2171 = vrot.slane %v2163, %v2170
    %v2173 = vunpack.c.l.s4 1966171168
    %v2174 = vunpack.c.0.s8 %v2173
    %v2175 = vlaneseq
    %v2176 = vshrl.u32 %v2175, 7
    %v2177 = vsub.s32 %v2174, %v2176
    %v2178 = vrot.slane %v2164, %v2177
    %v2179 = vcombine.high %v2171, %v2171
    %v2181 = vunpack.c.l.s4 1966171168
    %v2182 = vunpack.c.0.s8 %v2181
    %v2183 = vlaneseq
    %v2184 = vshrl.u32 %v2183, 7
    %v2185 = vsub.s32 %v2182, %v2184
    %v2186 = vrot.slane %v2142, %v2185
    %v2187 = vcombine.high %v2186, %v2186
    %v2189 = vunpack.c.l.s4 1966171168
    %v2190 = vunpack.c.0.s8 %v2189
    %v2191 = vlaneseq
    %v2192 = vshrl.u32 %v2191, 7
    %v2193 = vsub.s32 %v2190, %v2192
    %v2194 = vrot.slane %v2186, %v2193
    %v2196 = vunpack.c.l.s4 1966171168
    %v2197 = vunpack.c.0.s8 %v2196
    %v2198 = vlaneseq
    %v2199 = vshrl.u32 %v2198, 7
    %v2200 = vsub.s32 %v2197, %v2199
    %v2201 = vrot.slane %v2187, %v2200
    %v2202 = vcombine.high %v2194, %v2194
    %v2204 = vunpack.c.l.s4 1966171168
    %v2205 = vunpack.c.0.s8 %v2204
    %v2206 = vlaneseq
    %v2207 = vshrl.u32 %v2206, 7
    %v2208 = vsub.s32 %v2205, %v2207
    %v2209 = vrot.slane %v2144, %v2208
    %v2210 = vcombine.high %v2209, %v2209
    %v2212 = vunpack.c.l.s4 1966171168
    %v2213 = vunpack.c.0.s8 %v2212
    %v2214 = vlaneseq
    %v2215 = vshrl.u32 %v2214, 7
    %v2216 = vsub.s32 %v2213, %v2215
    %v2217 = vrot.slane %v2209, %v2216
    %v2219 = vunpack.c.l.s4 1966171168
    %v2220 = vunpack.c.0.s8 %v2219
    %v2221 = vlaneseq
    %v2222 = vshrl.u32 %v2221, 7
    %v2223 = vsub.s32 %v2220, %v2222
    %v2224 = vrot.slane %v2210, %v2223
    %v2225 = vcombine.high %v2217, %v2217
    %v2227 = vunpack.c.l.s4 1966171168
    %v2228 = vunpack.c.0.s8 %v2227
    %v2229 = vlaneseq
    %v2230 = vshrl.u32 %v2229, 7
    %v2231 = vsub.s32 %v2228, %v2230
    %v2232 = vrot.slane %v2146, %v2231
    %v2233 = vcombine.high %v2232, %v2232
    %v2235 = vunpack.c.l.s4 1966171168
    %v2236 = vunpack.c.0.s8 %v2235
    %v2237 = vlaneseq
    %v2238 = vshrl.u32 %v2237, 7
    %v2239 = vsub.s32 %v2236, %v2238
    %v2240 = vrot.slane %v2232, %v2239
    %v2242 = vunpack.c.l.s4 1966171168
    %v2243 = vunpack.c.0.s8 %v2242
    %v2244 = vlaneseq
    %v2245 = vshrl.u32 %v2244, 7
    %v2246 = vsub.s32 %v2243, %v2245
    %v2247 = vrot.slane %v2233, %v2246
    %v2248 = vcombine.high %v2240, %v2240
    %v2250 = vunpack.c.l.s4 1966171168
    %v2251 = vunpack.c.0.s8 %v2250
    %v2252 = vlaneseq
    %v2253 = vshrl.u32 %v2252, 7
    %v2254 = vsub.s32 %v2251, %v2253
    %v2255 = vrot.slane %v2148, %v2254
    %v2256 = vcombine.high %v2255, %v2255
    %v2258 = vunpack.c.l.s4 1966171168
    %v2259 = vunpack.c.0.s8 %v2258
    %v2260 = vlaneseq
    %v2261 = vshrl.u32 %v2260, 7
    %v2262 = vsub.s32 %v2259, %v2261
    %v2263 = vrot.slane %v2255, %v2262
    %v2265 = vunpack.c.l.s4 1966171168
    %v2266 = vunpack.c.0.s8 %v2265
    %v2267 = vlaneseq
    %v2268 = vshrl.u32 %v2267, 7
    %v2269 = vsub.s32 %v2266, %v2268
    %v2270 = vrot.slane %v2256, %v2269
    %v2271 = vcombine.high %v2263, %v2263
    %v2273 = vunpack.c.l.s4 1966171168
    %v2274 = vunpack.c.0.s8 %v2273
    %v2275 = vlaneseq
    %v2276 = vshrl.u32 %v2275, 7
    %v2277 = vsub.s32 %v2274, %v2276
    %v2278 = vrot.slane %v2150, %v2277
    %v2279 = vcombine.high %v2278, %v2278
    %v2281 = vunpack.c.l.s4 1966171168
    %v2282 = vunpack.c.0.s8 %v2281
    %v2283 = vlaneseq
    %v2284 = vshrl.u32 %v2283, 7
    %v2285 = vsub.s32 %v2282, %v2284
    %v2286 = vrot.slane %v2278, %v2285
    %v2288 = vunpack.c.l.s4 1966171168
    %v2289 = vunpack.c.0.s8 %v2288
    %v2290 = vlaneseq
    %v2291 = vshrl.u32 %v2290, 7
    %v2292 = vsub.s32 %v2289, %v2291
    %v2293 = vrot.slane %v2279, %v2292
    %v2294 = vcombine.high %v2286, %v2286
    %s2295 = scalar_lea.vmem %s3, 640
    %v2296 = vld [vmem:[%s2295] sm:$0xff]
    %v2297 = vld [vmem:[%s2295 + $0x8] sm:$0xff]
    %v2298 = vld [vmem:[%s2295 + $0x10] sm:$0xff]
    %v2299 = vld [vmem:[%s2295 + $0x18] sm:$0xff]
    %v2300 = vld [vmem:[%s2295 + $0x20] sm:$0xff]
    %v2301 = vld [vmem:[%s2295 + $0x28] sm:$0xff]
    %v2302 = vld [vmem:[%s2295 + $0x30] sm:$0xff]
    %v2303 = vld [vmem:[%s2295 + $0x38] sm:$0xff]
    %v2304 = vld [vmem:[%s2295 + $0x40] sm:$0xff]
    %v2305 = vld [vmem:[%s2295 + $0x48] sm:$0xff]
    %v2306 = vld [vmem:[%s2295 + $0x50] sm:$0xff]
    %v2307 = vld [vmem:[%s2295 + $0x58] sm:$0xff]
    %v2308 = vld [vmem:[%s2295 + $0x60] sm:$0xff]
    %v2309 = vld [vmem:[%s2295 + $0x68] sm:$0xff]
    %v2310 = vld [vmem:[%s2295 + $0x70] sm:$0xff]
    %v2311 = vld [vmem:[%s2295 + $0x78] sm:$0xff]
    %v2312 = vcombine.low %v2171, %v2178
    %v2313 = vcombine.low %v2179, %v2194
    %v2314 = vcombine.low %v2201, %v2202
    %v2315 = vcombine.low %v2217, %v2224
    %v2317 = vunpack.c.l.s4 1966171168
    %v2318 = vunpack.c.0.s8 %v2317
    %v2319 = vlaneseq
    %v2320 = vshrl.u32 %v2319, 7
    %v2321 = vsub.s32 %v2318, %v2320
    %v2322 = vrot.slane %v2312, %v2321
    %v2324 = vunpack.c.l.s4 1966171168
    %v2325 = vunpack.c.0.s8 %v2324
    %v2326 = vlaneseq
    %v2327 = vshrl.u32 %v2326, 7
    %v2328 = vsub.s32 %v2325, %v2327
    %v2329 = vrot.slane %v2313, %v2328
    %v2331 = vunpack.c.l.s4 1966171168
    %v2332 = vunpack.c.0.s8 %v2331
    %v2333 = vlaneseq
    %v2334 = vshrl.u32 %v2333, 7
    %v2335 = vsub.s32 %v2332, %v2334
    %v2336 = vrot.slane %v2314, %v2335
    %v2338 = vunpack.c.l.s4 1966171168
    %v2339 = vunpack.c.0.s8 %v2338
    %v2340 = vlaneseq
    %v2341 = vshrl.u32 %v2340, 7
    %v2342 = vsub.s32 %v2339, %v2341
    %v2343 = vrot.slane %v2315, %v2342
    %v2344 = vcombine.low %v2322, %v2329
    %v2345 = vcombine.low %v2336, %v2343
    %v2347 = vunpack.c.l.s4 1966171168
    %v2348 = vunpack.c.0.s8 %v2347
    %v2349 = vlaneseq
    %v2350 = vshrl.u32 %v2349, 7
    %v2351 = vsub.s32 %v2348, %v2350
    %v2352 = vrot.slane %v2344, %v2351
    %v2354 = vunpack.c.l.s4 1966171168
    %v2355 = vunpack.c.0.s8 %v2354
    %v2356 = vlaneseq
    %v2357 = vshrl.u32 %v2356, 7
    %v2358 = vsub.s32 %v2355, %v2357
    %v2359 = vrot.slane %v2345, %v2358
    %v2360 = vcombine.low %v2352, %v2359
    %v2361 = vcombine.low %v2225, %v2240
    %v2362 = vcombine.low %v2247, %v2248
    %v2363 = vcombine.low %v2263, %v2270
    %v2364 = vcombine.low %v2271, %v2286
    %v2366 = vunpack.c.l.s4 1966171168
    %v2367 = vunpack.c.0.s8 %v2366
    %v2368 = vlaneseq
    %v2369 = vshrl.u32 %v2368, 7
    %v2370 = vsub.s32 %v2367, %v2369
    %v2371 = vrot.slane %v2361, %v2370
    %v2373 = vunpack.c.l.s4 1966171168
    %v2374 = vunpack.c.0.s8 %v2373
    %v2375 = vlaneseq
    %v2376 = vshrl.u32 %v2375, 7
    %v2377 = vsub.s32 %v2374, %v2376
    %v2378 = vrot.slane %v2362, %v2377
    %v2380 = vunpack.c.l.s4 1966171168
    %v2381 = vunpack.c.0.s8 %v2380
    %v2382 = vlaneseq
    %v2383 = vshrl.u32 %v2382, 7
    %v2384 = vsub.s32 %v2381, %v2383
    %v2385 = vrot.slane %v2363, %v2384
    %v2387 = vunpack.c.l.s4 1966171168
    %v2388 = vunpack.c.0.s8 %v2387
    %v2389 = vlaneseq
    %v2390 = vshrl.u32 %v2389, 7
    %v2391 = vsub.s32 %v2388, %v2390
    %v2392 = vrot.slane %v2364, %v2391
    %v2393 = vcombine.low %v2371, %v2378
    %v2394 = vcombine.low %v2385, %v2392
    %v2396 = vunpack.c.l.s4 1966171168
    %v2397 = vunpack.c.0.s8 %v2396
    %v2398 = vlaneseq
    %v2399 = vshrl.u32 %v2398, 7
    %v2400 = vsub.s32 %v2397, %v2399
    %v2401 = vrot.slane %v2393, %v2400
    %v2403 = vunpack.c.l.s4 1966171168
    %v2404 = vunpack.c.0.s8 %v2403
    %v2405 = vlaneseq
    %v2406 = vshrl.u32 %v2405, 7
    %v2407 = vsub.s32 %v2404, %v2406
    %v2408 = vrot.slane %v2394, %v2407
    %v2409 = vcombine.low %v2401, %v2408
    %v2410 = vcombine.low %v2293, %v2294
    %v2412 = vunpack.c.l.s4 1966171168
    %v2413 = vunpack.c.0.s8 %v2412
    %v2414 = vlaneseq
    %v2415 = vshrl.u32 %v2414, 7
    %v2416 = vsub.s32 %v2413, %v2415
    %v2417 = vrot.slane %v2410, %v2416
    %v2419 = vunpack.c.l.s4 1966171168
    %v2420 = vunpack.c.0.s8 %v2419
    %v2421 = vlaneseq
    %v2422 = vshrl.u32 %v2421, 7
    %v2423 = vsub.s32 %v2420, %v2422
    %v2424 = vrot.slane %v2417, %v2423
    %2428 = vmatprep.subr.mxu0 0.0
    %2429 = vmatpush1.msra.mxu0 %v2311
    %2430 = vmatprep.subr.mxu0 0.0
    %2431 = vmatpush1.msra.mxu0 %v2310
    %2432 = vmatprep.subr.mxu0 0.0
    %2433 = vmatpush1.msra.mxu0 %v2309
    %2434 = vmatprep.subr.mxu0 0.0
    %2435 = vmatpush1.msra.mxu0 %v2308
    %2436 = vmatprep.subr.mxu0 0.0
    %2437 = vmatpush1.msra.mxu0 %v2307
    %2438 = vmatprep.subr.mxu0 0.0
    %2439 = vmatpush1.msra.mxu0 %v2306
    %2440 = vmatprep.subr.mxu0 0.0
    %2441 = vmatpush1.msra.mxu0 %v2305
    %2442 = vmatprep.subr.mxu0 0.0
    %2443 = vmatpush1.msra.mxu0 %v2304
    %2444 = vmatprep.subr.mxu0 0.0
    %2445 = vmatpush1.msra.mxu0 %v2303
    %2446 = vmatprep.subr.mxu0 0.0
    %2447 = vmatpush1.msra.mxu0 %v2302
    %2448 = vmatprep.subr.mxu0 0.0
    %2449 = vmatpush1.msra.mxu0 %v2301
    %2450 = vmatprep.subr.mxu0 0.0
    %2451 = vmatpush1.msra.mxu0 %v2300
    %2452 = vmatprep.subr.mxu0 0.0
    %2453 = vmatpush1.msra.mxu0 %v2299
    %2454 = vmatprep.subr.mxu0 0.0
    %2455 = vmatpush1.msra.mxu0 %v2298
    %2456 = vmatprep.subr.mxu0 0.0
    %2457 = vmatpush1.msra.mxu0 %v2297
    %2458 = vmatprep.subr.mxu0 0.0
    %2459 = vmatpush1.msra.mxu0 %v2296
    %2460 = vmatprep.subr.mxu0 0.0
    %2461 = vmatpush2.msra.mxu0 0.0
    %2462 = vmatprep.subr.mxu0 0.0
    %2463 = vmatpush2.msra.mxu0 0.0
    %2464 = vmatprep.subr.mxu0 0.0
    %2465 = vmatpush2.msra.mxu0 0.0
    %2466 = vmatprep.subr.mxu0 0.0
    %2467 = vmatpush2.msra.mxu0 0.0
    %2468 = vmatprep.subr.mxu0 0.0
    %2469 = vmatpush2.msra.mxu0 0.0
    %2470 = vmatprep.subr.mxu0 0.0
    %2471 = vmatpush2.msra.mxu0 0.0
    %2472 = vmatprep.subr.mxu0 0.0
    %2473 = vmatpush2.msra.mxu0 0.0
    %2474 = vmatprep.subr.mxu0 0.0
    %2475 = vmatpush2.msra.mxu0 0.0
    %2476 = vmatprep.subr.mxu0 0.0
    %2477 = vmatpush2.msra.mxu0 0.0
    %2478 = vmatprep.subr.mxu0 0.0
    %2479 = vmatpush2.msra.mxu0 0.0
    %2480 = vmatprep.subr.mxu0 0.0
    %2481 = vmatpush2.msra.mxu0 0.0
    %2482 = vmatprep.subr.mxu0 0.0
    %2483 = vmatpush2.msra.mxu0 0.0
    %2484 = vmatprep.subr.mxu0 0.0
    %2485 = vmatpush2.msra.mxu0 0.0
    %2486 = vmatprep.subr.mxu0 0.0
    %2487 = vmatpush2.msra.mxu0 0.0
    %2488 = vmatprep.subr.mxu0 0.0
    %2489 = vmatpush2.msra.mxu0 0.0
    %2490 = vmatprep.subr.mxu0 0.0
    %2491 = vmatpush2.msra.mxu0 0.0
    %2492 = vmatprep.mubr.f32.mxu0 0.0
    %2493 = vmatmul.mubr.f32.gmra.mxu0 %v2360
    %v2494 = vpop.f32.mrf.mxu0
    %v2495 = vadd.f32 0.0, %v2494
    %v2496 = vpop.f32.mrf.mxu0
    %2497 = vmatprep.mubr.f32.mxu0 0.0
    %2498 = vmatmul.mubr.f32.gmra.mxu0 %v2409
    %v2499 = vpop.f32.mrf.mxu0
    %v2500 = vadd.f32 0.0, %v2499
    %v2501 = vpop.f32.mrf.mxu0
    %2502 = vmatprep.mubr.f32.mxu0 0.0
    %2503 = vmatmul.mubr.f32.gmra.mxu0 %v2424
    %v2504 = vpop.f32.mrf.mxu0
    %v2505 = vadd.f32 0.0, %v2504
    %v2506 = vpop.f32.mrf.mxu0
    %2507 = vdwg.mxu0
    %v2508 = vadd.f32 %v2136, %v2495
    %v2509 = vadd.f32 %v2137, %v2500
    %v2510 = vadd.f32 %v2138, %v2505
    %s2511 = scalar_lea.vmem %s1767, 2 [#allocation2]
    %v2512 = vld [vmem:[%s2511] ss:$2 sm:$0x7]
    %s2513 = scalar_lea.vmem %s1767, 18 [#allocation2]
    %v2514 = vld [vmem:[%s2513] ss:$2 sm:$0x7]
    %s2515 = scalar_lea.vmem %s1767, 34 [#allocation2]
    %v2516 = vld [vmem:[%s2515] ss:$2 sm:$0x7]
    %s2517 = scalar_lea.vmem %s1767, 66 [#allocation2]
    %v2518 = vld [vmem:[%s2517] ss:$2 sm:$0x7]
    %s2519 = scalar_lea.vmem %s1767, 82 [#allocation2]
    %v2520 = vld [vmem:[%s2519] ss:$2 sm:$0x7]
    %s2521 = scalar_lea.vmem %s1767, 98 [#allocation2]
    %v2522 = vld [vmem:[%s2521] ss:$2 sm:$0x7]
    %v2530 = vunpack.c.l.s4 1966171168
    %v2531 = vunpack.c.0.s8 %v2530
    %v2532 = vlaneseq
    %v2533 = vshrl.u32 %v2532, 7
    %v2534 = vsub.s32 %v2531, %v2533
    %v2535 = vrot.slane %v2512, %v2534
    %v2536 = vcombine.high %v2535, %v2535
    %v2538 = vunpack.c.l.s4 1966171168
    %v2539 = vunpack.c.0.s8 %v2538
    %v2540 = vlaneseq
    %v2541 = vshrl.u32 %v2540, 7
    %v2542 = vsub.s32 %v2539, %v2541
    %v2543 = vrot.slane %v2535, %v2542
    %v2545 = vunpack.c.l.s4 1966171168
    %v2546 = vunpack.c.0.s8 %v2545
    %v2547 = vlaneseq
    %v2548 = vshrl.u32 %v2547, 7
    %v2549 = vsub.s32 %v2546, %v2548
    %v2550 = vrot.slane %v2536, %v2549
    %v2551 = vcombine.high %v2543, %v2543
    %v2553 = vunpack.c.l.s4 1966171168
    %v2554 = vunpack.c.0.s8 %v2553
    %v2555 = vlaneseq
    %v2556 = vshrl.u32 %v2555, 7
    %v2557 = vsub.s32 %v2554, %v2556
    %v2558 = vrot.slane %v2514, %v2557
    %v2559 = vcombine.high %v2558, %v2558
    %v2561 = vunpack.c.l.s4 1966171168
    %v2562 = vunpack.c.0.s8 %v2561
    %v2563 = vlaneseq
    %v2564 = vshrl.u32 %v2563, 7
    %v2565 = vsub.s32 %v2562, %v2564
    %v2566 = vrot.slane %v2558, %v2565
    %v2568 = vunpack.c.l.s4 1966171168
    %v2569 = vunpack.c.0.s8 %v2568
    %v2570 = vlaneseq
    %v2571 = vshrl.u32 %v2570, 7
    %v2572 = vsub.s32 %v2569, %v2571
    %v2573 = vrot.slane %v2559, %v2572
    %v2574 = vcombine.high %v2566, %v2566
    %v2576 = vunpack.c.l.s4 1966171168
    %v2577 = vunpack.c.0.s8 %v2576
    %v2578 = vlaneseq
    %v2579 = vshrl.u32 %v2578, 7
    %v2580 = vsub.s32 %v2577, %v2579
    %v2581 = vrot.slane %v2516, %v2580
    %v2582 = vcombine.high %v2581, %v2581
    %v2584 = vunpack.c.l.s4 1966171168
    %v2585 = vunpack.c.0.s8 %v2584
    %v2586 = vlaneseq
    %v2587 = vshrl.u32 %v2586, 7
    %v2588 = vsub.s32 %v2585, %v2587
    %v2589 = vrot.slane %v2581, %v2588
    %v2591 = vunpack.c.l.s4 1966171168
    %v2592 = vunpack.c.0.s8 %v2591
    %v2593 = vlaneseq
    %v2594 = vshrl.u32 %v2593, 7
    %v2595 = vsub.s32 %v2592, %v2594
    %v2596 = vrot.slane %v2582, %v2595
    %v2597 = vcombine.high %v2589, %v2589
    %v2599 = vunpack.c.l.s4 1966171168
    %v2600 = vunpack.c.0.s8 %v2599
    %v2601 = vlaneseq
    %v2602 = vshrl.u32 %v2601, 7
    %v2603 = vsub.s32 %v2600, %v2602
    %v2604 = vrot.slane %v2518, %v2603
    %v2605 = vcombine.high %v2604, %v2604
    %v2607 = vunpack.c.l.s4 1966171168
    %v2608 = vunpack.c.0.s8 %v2607
    %v2609 = vlaneseq
    %v2610 = vshrl.u32 %v2609, 7
    %v2611 = vsub.s32 %v2608, %v2610
    %v2612 = vrot.slane %v2604, %v2611
    %v2614 = vunpack.c.l.s4 1966171168
    %v2615 = vunpack.c.0.s8 %v2614
    %v2616 = vlaneseq
    %v2617 = vshrl.u32 %v2616, 7
    %v2618 = vsub.s32 %v2615, %v2617
    %v2619 = vrot.slane %v2605, %v2618
    %v2620 = vcombine.high %v2612, %v2612
    %v2622 = vunpack.c.l.s4 1966171168
    %v2623 = vunpack.c.0.s8 %v2622
    %v2624 = vlaneseq
    %v2625 = vshrl.u32 %v2624, 7
    %v2626 = vsub.s32 %v2623, %v2625
    %v2627 = vrot.slane %v2520, %v2626
    %v2628 = vcombine.high %v2627, %v2627
    %v2630 = vunpack.c.l.s4 1966171168
    %v2631 = vunpack.c.0.s8 %v2630
    %v2632 = vlaneseq
    %v2633 = vshrl.u32 %v2632, 7
    %v2634 = vsub.s32 %v2631, %v2633
    %v2635 = vrot.slane %v2627, %v2634
    %v2637 = vunpack.c.l.s4 1966171168
    %v2638 = vunpack.c.0.s8 %v2637
    %v2639 = vlaneseq
    %v2640 = vshrl.u32 %v2639, 7
    %v2641 = vsub.s32 %v2638, %v2640
    %v2642 = vrot.slane %v2628, %v2641
    %v2643 = vcombine.high %v2635, %v2635
    %v2645 = vunpack.c.l.s4 1966171168
    %v2646 = vunpack.c.0.s8 %v2645
    %v2647 = vlaneseq
    %v2648 = vshrl.u32 %v2647, 7
    %v2649 = vsub.s32 %v2646, %v2648
    %v2650 = vrot.slane %v2522, %v2649
    %v2651 = vcombine.high %v2650, %v2650
    %v2653 = vunpack.c.l.s4 1966171168
    %v2654 = vunpack.c.0.s8 %v2653
    %v2655 = vlaneseq
    %v2656 = vshrl.u32 %v2655, 7
    %v2657 = vsub.s32 %v2654, %v2656
    %v2658 = vrot.slane %v2650, %v2657
    %v2660 = vunpack.c.l.s4 1966171168
    %v2661 = vunpack.c.0.s8 %v2660
    %v2662 = vlaneseq
    %v2663 = vshrl.u32 %v2662, 7
    %v2664 = vsub.s32 %v2661, %v2663
    %v2665 = vrot.slane %v2651, %v2664
    %v2666 = vcombine.high %v2658, %v2658
    %s2667 = scalar_lea.vmem %s3, 768
    %v2668 = vld [vmem:[%s2667] sm:$0xff]
    %v2669 = vld [vmem:[%s2667 + $0x8] sm:$0xff]
    %v2670 = vld [vmem:[%s2667 + $0x10] sm:$0xff]
    %v2671 = vld [vmem:[%s2667 + $0x18] sm:$0xff]
    %v2672 = vld [vmem:[%s2667 + $0x20] sm:$0xff]
    %v2673 = vld [vmem:[%s2667 + $0x28] sm:$0xff]
    %v2674 = vld [vmem:[%s2667 + $0x30] sm:$0xff]
    %v2675 = vld [vmem:[%s2667 + $0x38] sm:$0xff]
    %v2676 = vld [vmem:[%s2667 + $0x40] sm:$0xff]
    %v2677 = vld [vmem:[%s2667 + $0x48] sm:$0xff]
    %v2678 = vld [vmem:[%s2667 + $0x50] sm:$0xff]
    %v2679 = vld [vmem:[%s2667 + $0x58] sm:$0xff]
    %v2680 = vld [vmem:[%s2667 + $0x60] sm:$0xff]
    %v2681 = vld [vmem:[%s2667 + $0x68] sm:$0xff]
    %v2682 = vld [vmem:[%s2667 + $0x70] sm:$0xff]
    %v2683 = vld [vmem:[%s2667 + $0x78] sm:$0xff]
    %v2684 = vcombine.low %v2543, %v2550
    %v2685 = vcombine.low %v2551, %v2566
    %v2686 = vcombine.low %v2573, %v2574
    %v2687 = vcombine.low %v2589, %v2596
    %v2689 = vunpack.c.l.s4 1966171168
    %v2690 = vunpack.c.0.s8 %v2689
    %v2691 = vlaneseq
    %v2692 = vshrl.u32 %v2691, 7
    %v2693 = vsub.s32 %v2690, %v2692
    %v2694 = vrot.slane %v2684, %v2693
    %v2696 = vunpack.c.l.s4 1966171168
    %v2697 = vunpack.c.0.s8 %v2696
    %v2698 = vlaneseq
    %v2699 = vshrl.u32 %v2698, 7
    %v2700 = vsub.s32 %v2697, %v2699
    %v2701 = vrot.slane %v2685, %v2700
    %v2703 = vunpack.c.l.s4 1966171168
    %v2704 = vunpack.c.0.s8 %v2703
    %v2705 = vlaneseq
    %v2706 = vshrl.u32 %v2705, 7
    %v2707 = vsub.s32 %v2704, %v2706
    %v2708 = vrot.slane %v2686, %v2707
    %v2710 = vunpack.c.l.s4 1966171168
    %v2711 = vunpack.c.0.s8 %v2710
    %v2712 = vlaneseq
    %v2713 = vshrl.u32 %v2712, 7
    %v2714 = vsub.s32 %v2711, %v2713
    %v2715 = vrot.slane %v2687, %v2714
    %v2716 = vcombine.low %v2694, %v2701
    %v2717 = vcombine.low %v2708, %v2715
    %v2719 = vunpack.c.l.s4 1966171168
    %v2720 = vunpack.c.0.s8 %v2719
    %v2721 = vlaneseq
    %v2722 = vshrl.u32 %v2721, 7
    %v2723 = vsub.s32 %v2720, %v2722
    %v2724 = vrot.slane %v2716, %v2723
    %v2726 = vunpack.c.l.s4 1966171168
    %v2727 = vunpack.c.0.s8 %v2726
    %v2728 = vlaneseq
    %v2729 = vshrl.u32 %v2728, 7
    %v2730 = vsub.s32 %v2727, %v2729
    %v2731 = vrot.slane %v2717, %v2730
    %v2732 = vcombine.low %v2724, %v2731
    %v2733 = vcombine.low %v2597, %v2612
    %v2734 = vcombine.low %v2619, %v2620
    %v2735 = vcombine.low %v2635, %v2642
    %v2736 = vcombine.low %v2643, %v2658
    %v2738 = vunpack.c.l.s4 1966171168
    %v2739 = vunpack.c.0.s8 %v2738
    %v2740 = vlaneseq
    %v2741 = vshrl.u32 %v2740, 7
    %v2742 = vsub.s32 %v2739, %v2741
    %v2743 = vrot.slane %v2733, %v2742
    %v2745 = vunpack.c.l.s4 1966171168
    %v2746 = vunpack.c.0.s8 %v2745
    %v2747 = vlaneseq
    %v2748 = vshrl.u32 %v2747, 7
    %v2749 = vsub.s32 %v2746, %v2748
    %v2750 = vrot.slane %v2734, %v2749
    %v2752 = vunpack.c.l.s4 1966171168
    %v2753 = vunpack.c.0.s8 %v2752
    %v2754 = vlaneseq
    %v2755 = vshrl.u32 %v2754, 7
    %v2756 = vsub.s32 %v2753, %v2755
    %v2757 = vrot.slane %v2735, %v2756
    %v2759 = vunpack.c.l.s4 1966171168
    %v2760 = vunpack.c.0.s8 %v2759
    %v2761 = vlaneseq
    %v2762 = vshrl.u32 %v2761, 7
    %v2763 = vsub.s32 %v2760, %v2762
    %v2764 = vrot.slane %v2736, %v2763
    %v2765 = vcombine.low %v2743, %v2750
    %v2766 = vcombine.low %v2757, %v2764
    %v2768 = vunpack.c.l.s4 1966171168
    %v2769 = vunpack.c.0.s8 %v2768
    %v2770 = vlaneseq
    %v2771 = vshrl.u32 %v2770, 7
    %v2772 = vsub.s32 %v2769, %v2771
    %v2773 = vrot.slane %v2765, %v2772
    %v2775 = vunpack.c.l.s4 1966171168
    %v2776 = vunpack.c.0.s8 %v2775
    %v2777 = vlaneseq
    %v2778 = vshrl.u32 %v2777, 7
    %v2779 = vsub.s32 %v2776, %v2778
    %v2780 = vrot.slane %v2766, %v2779
    %v2781 = vcombine.low %v2773, %v2780
    %v2782 = vcombine.low %v2665, %v2666
    %v2784 = vunpack.c.l.s4 1966171168
    %v2785 = vunpack.c.0.s8 %v2784
    %v2786 = vlaneseq
    %v2787 = vshrl.u32 %v2786, 7
    %v2788 = vsub.s32 %v2785, %v2787
    %v2789 = vrot.slane %v2782, %v2788
    %v2791 = vunpack.c.l.s4 1966171168
    %v2792 = vunpack.c.0.s8 %v2791
    %v2793 = vlaneseq
    %v2794 = vshrl.u32 %v2793, 7
    %v2795 = vsub.s32 %v2792, %v2794
    %v2796 = vrot.slane %v2789, %v2795
    %2800 = vmatprep.subr.mxu0 0.0
    %2801 = vmatpush1.msra.mxu0 %v2683
    %2802 = vmatprep.subr.mxu0 0.0
    %2803 = vmatpush1.msra.mxu0 %v2682
    %2804 = vmatprep.subr.mxu0 0.0
    %2805 = vmatpush1.msra.mxu0 %v2681
    %2806 = vmatprep.subr.mxu0 0.0
    %2807 = vmatpush1.msra.mxu0 %v2680
    %2808 = vmatprep.subr.mxu0 0.0
    %2809 = vmatpush1.msra.mxu0 %v2679
    %2810 = vmatprep.subr.mxu0 0.0
    %2811 = vmatpush1.msra.mxu0 %v2678
    %2812 = vmatprep.subr.mxu0 0.0
    %2813 = vmatpush1.msra.mxu0 %v2677
    %2814 = vmatprep.subr.mxu0 0.0
    %2815 = vmatpush1.msra.mxu0 %v2676
    %2816 = vmatprep.subr.mxu0 0.0
    %2817 = vmatpush1.msra.mxu0 %v2675
    %2818 = vmatprep.subr.mxu0 0.0
    %2819 = vmatpush1.msra.mxu0 %v2674
    %2820 = vmatprep.subr.mxu0 0.0
    %2821 = vmatpush1.msra.mxu0 %v2673
    %2822 = vmatprep.subr.mxu0 0.0
    %2823 = vmatpush1.msra.mxu0 %v2672
    %2824 = vmatprep.subr.mxu0 0.0
    %2825 = vmatpush1.msra.mxu0 %v2671
    %2826 = vmatprep.subr.mxu0 0.0
    %2827 = vmatpush1.msra.mxu0 %v2670
    %2828 = vmatprep.subr.mxu0 0.0
    %2829 = vmatpush1.msra.mxu0 %v2669
    %2830 = vmatprep.subr.mxu0 0.0
    %2831 = vmatpush1.msra.mxu0 %v2668
    %2832 = vmatprep.subr.mxu0 0.0
    %2833 = vmatpush2.msra.mxu0 0.0
    %2834 = vmatprep.subr.mxu0 0.0
    %2835 = vmatpush2.msra.mxu0 0.0
    %2836 = vmatprep.subr.mxu0 0.0
    %2837 = vmatpush2.msra.mxu0 0.0
    %2838 = vmatprep.subr.mxu0 0.0
    %2839 = vmatpush2.msra.mxu0 0.0
    %2840 = vmatprep.subr.mxu0 0.0
    %2841 = vmatpush2.msra.mxu0 0.0
    %2842 = vmatprep.subr.mxu0 0.0
    %2843 = vmatpush2.msra.mxu0 0.0
    %2844 = vmatprep.subr.mxu0 0.0
    %2845 = vmatpush2.msra.mxu0 0.0
    %2846 = vmatprep.subr.mxu0 0.0
    %2847 = vmatpush2.msra.mxu0 0.0
    %2848 = vmatprep.subr.mxu0 0.0
    %2849 = vmatpush2.msra.mxu0 0.0
    %2850 = vmatprep.subr.mxu0 0.0
    %2851 = vmatpush2.msra.mxu0 0.0
    %2852 = vmatprep.subr.mxu0 0.0
    %2853 = vmatpush2.msra.mxu0 0.0
    %2854 = vmatprep.subr.mxu0 0.0
    %2855 = vmatpush2.msra.mxu0 0.0
    %2856 = vmatprep.subr.mxu0 0.0
    %2857 = vmatpush2.msra.mxu0 0.0
    %2858 = vmatprep.subr.mxu0 0.0
    %2859 = vmatpush2.msra.mxu0 0.0
    %2860 = vmatprep.subr.mxu0 0.0
    %2861 = vmatpush2.msra.mxu0 0.0
    %2862 = vmatprep.subr.mxu0 0.0
    %2863 = vmatpush2.msra.mxu0 0.0
    %2864 = vmatprep.mubr.f32.mxu0 0.0
    %2865 = vmatmul.mubr.f32.gmra.mxu0 %v2732
    %v2866 = vpop.f32.mrf.mxu0
    %v2867 = vadd.f32 0.0, %v2866
    %v2868 = vpop.f32.mrf.mxu0
    %2869 = vmatprep.mubr.f32.mxu0 0.0
    %2870 = vmatmul.mubr.f32.gmra.mxu0 %v2781
    %v2871 = vpop.f32.mrf.mxu0
    %v2872 = vadd.f32 0.0, %v2871
    %v2873 = vpop.f32.mrf.mxu0
    %2874 = vmatprep.mubr.f32.mxu0 0.0
    %2875 = vmatmul.mubr.f32.gmra.mxu0 %v2796
    %v2876 = vpop.f32.mrf.mxu0
    %v2877 = vadd.f32 0.0, %v2876
    %v2878 = vpop.f32.mrf.mxu0
    %2879 = vdwg.mxu0
    %v2880 = vadd.f32 %v2508, %v2867
    %v2881 = vadd.f32 %v2509, %v2872
    %v2882 = vadd.f32 %v2510, %v2877
    %s2883 = scalar_lea.vmem %s1767, 3 [#allocation2]
    %v2884 = vld [vmem:[%s2883] ss:$2 sm:$0x7]
    %s2885 = scalar_lea.vmem %s1767, 19 [#allocation2]
    %v2886 = vld [vmem:[%s2885] ss:$2 sm:$0x7]
    %s2887 = scalar_lea.vmem %s1767, 35 [#allocation2]
    %v2888 = vld [vmem:[%s2887] ss:$2 sm:$0x7]
    %s2889 = scalar_lea.vmem %s1767, 67 [#allocation2]
    %v2890 = vld [vmem:[%s2889] ss:$2 sm:$0x7]
    %s2891 = scalar_lea.vmem %s1767, 83 [#allocation2]
    %v2892 = vld [vmem:[%s2891] ss:$2 sm:$0x7]
    %s2893 = scalar_lea.vmem %s1767, 99 [#allocation2]
    %v2894 = vld [vmem:[%s2893] ss:$2 sm:$0x7]
    %v2902 = vunpack.c.l.s4 1966171168
    %v2903 = vunpack.c.0.s8 %v2902
    %v2904 = vlaneseq
    %v2905 = vshrl.u32 %v2904, 7
    %v2906 = vsub.s32 %v2903, %v2905
    %v2907 = vrot.slane %v2884, %v2906
    %v2908 = vcombine.high %v2907, %v2907
    %v2910 = vunpack.c.l.s4 1966171168
    %v2911 = vunpack.c.0.s8 %v2910
    %v2912 = vlaneseq
    %v2913 = vshrl.u32 %v2912, 7
    %v2914 = vsub.s32 %v2911, %v2913
    %v2915 = vrot.slane %v2907, %v2914
    %v2917 = vunpack.c.l.s4 1966171168
    %v2918 = vunpack.c.0.s8 %v2917
    %v2919 = vlaneseq
    %v2920 = vshrl.u32 %v2919, 7
    %v2921 = vsub.s32 %v2918, %v2920
    %v2922 = vrot.slane %v2908, %v2921
    %v2923 = vcombine.high %v2915, %v2915
    %v2925 = vunpack.c.l.s4 1966171168
    %v2926 = vunpack.c.0.s8 %v2925
    %v2927 = vlaneseq
    %v2928 = vshrl.u32 %v2927, 7
    %v2929 = vsub.s32 %v2926, %v2928
    %v2930 = vrot.slane %v2886, %v2929
    %v2931 = vcombine.high %v2930, %v2930
    %v2933 = vunpack.c.l.s4 1966171168
    %v2934 = vunpack.c.0.s8 %v2933
    %v2935 = vlaneseq
    %v2936 = vshrl.u32 %v2935, 7
    %v2937 = vsub.s32 %v2934, %v2936
    %v2938 = vrot.slane %v2930, %v2937
    %v2940 = vunpack.c.l.s4 1966171168
    %v2941 = vunpack.c.0.s8 %v2940
    %v2942 = vlaneseq
    %v2943 = vshrl.u32 %v2942, 7
    %v2944 = vsub.s32 %v2941, %v2943
    %v2945 = vrot.slane %v2931, %v2944
    %v2946 = vcombine.high %v2938, %v2938
    %v2948 = vunpack.c.l.s4 1966171168
    %v2949 = vunpack.c.0.s8 %v2948
    %v2950 = vlaneseq
    %v2951 = vshrl.u32 %v2950, 7
    %v2952 = vsub.s32 %v2949, %v2951
    %v2953 = vrot.slane %v2888, %v2952
    %v2954 = vcombine.high %v2953, %v2953
    %v2956 = vunpack.c.l.s4 1966171168
    %v2957 = vunpack.c.0.s8 %v2956
    %v2958 = vlaneseq
    %v2959 = vshrl.u32 %v2958, 7
    %v2960 = vsub.s32 %v2957, %v2959
    %v2961 = vrot.slane %v2953, %v2960
    %v2963 = vunpack.c.l.s4 1966171168
    %v2964 = vunpack.c.0.s8 %v2963
    %v2965 = vlaneseq
    %v2966 = vshrl.u32 %v2965, 7
    %v2967 = vsub.s32 %v2964, %v2966
    %v2968 = vrot.slane %v2954, %v2967
    %v2969 = vcombine.high %v2961, %v2961
    %v2971 = vunpack.c.l.s4 1966171168
    %v2972 = vunpack.c.0.s8 %v2971
    %v2973 = vlaneseq
    %v2974 = vshrl.u32 %v2973, 7
    %v2975 = vsub.s32 %v2972, %v2974
    %v2976 = vrot.slane %v2890, %v2975
    %v2977 = vcombine.high %v2976, %v2976
    %v2979 = vunpack.c.l.s4 1966171168
    %v2980 = vunpack.c.0.s8 %v2979
    %v2981 = vlaneseq
    %v2982 = vshrl.u32 %v2981, 7
    %v2983 = vsub.s32 %v2980, %v2982
    %v2984 = vrot.slane %v2976, %v2983
    %v2986 = vunpack.c.l.s4 1966171168
    %v2987 = vunpack.c.0.s8 %v2986
    %v2988 = vlaneseq
    %v2989 = vshrl.u32 %v2988, 7
    %v2990 = vsub.s32 %v2987, %v2989
    %v2991 = vrot.slane %v2977, %v2990
    %v2992 = vcombine.high %v2984, %v2984
    %v2994 = vunpack.c.l.s4 1966171168
    %v2995 = vunpack.c.0.s8 %v2994
    %v2996 = vlaneseq
    %v2997 = vshrl.u32 %v2996, 7
    %v2998 = vsub.s32 %v2995, %v2997
    %v2999 = vrot.slane %v2892, %v2998
    %v3000 = vcombine.high %v2999, %v2999
    %v3002 = vunpack.c.l.s4 1966171168
    %v3003 = vunpack.c.0.s8 %v3002
    %v3004 = vlaneseq
    %v3005 = vshrl.u32 %v3004, 7
    %v3006 = vsub.s32 %v3003, %v3005
    %v3007 = vrot.slane %v2999, %v3006
    %v3009 = vunpack.c.l.s4 1966171168
    %v3010 = vunpack.c.0.s8 %v3009
    %v3011 = vlaneseq
    %v3012 = vshrl.u32 %v3011, 7
    %v3013 = vsub.s32 %v3010, %v3012
    %v3014 = vrot.slane %v3000, %v3013
    %v3015 = vcombine.high %v3007, %v3007
    %v3017 = vunpack.c.l.s4 1966171168
    %v3018 = vunpack.c.0.s8 %v3017
    %v3019 = vlaneseq
    %v3020 = vshrl.u32 %v3019, 7
    %v3021 = vsub.s32 %v3018, %v3020
    %v3022 = vrot.slane %v2894, %v3021
    %v3023 = vcombine.high %v3022, %v3022
    %v3025 = vunpack.c.l.s4 1966171168
    %v3026 = vunpack.c.0.s8 %v3025
    %v3027 = vlaneseq
    %v3028 = vshrl.u32 %v3027, 7
    %v3029 = vsub.s32 %v3026, %v3028
    %v3030 = vrot.slane %v3022, %v3029
    %v3032 = vunpack.c.l.s4 1966171168
    %v3033 = vunpack.c.0.s8 %v3032
    %v3034 = vlaneseq
    %v3035 = vshrl.u32 %v3034, 7
    %v3036 = vsub.s32 %v3033, %v3035
    %v3037 = vrot.slane %v3023, %v3036
    %v3038 = vcombine.high %v3030, %v3030
    %s3039 = scalar_lea.vmem %s3, 896
    %v3040 = vld [vmem:[%s3039] sm:$0xff]
    %v3041 = vld [vmem:[%s3039 + $0x8] sm:$0xff]
    %v3042 = vld [vmem:[%s3039 + $0x10] sm:$0xff]
    %v3043 = vld [vmem:[%s3039 + $0x18] sm:$0xff]
    %v3044 = vld [vmem:[%s3039 + $0x20] sm:$0xff]
    %v3045 = vld [vmem:[%s3039 + $0x28] sm:$0xff]
    %v3046 = vld [vmem:[%s3039 + $0x30] sm:$0xff]
    %v3047 = vld [vmem:[%s3039 + $0x38] sm:$0xff]
    %v3048 = vld [vmem:[%s3039 + $0x40] sm:$0xff]
    %v3049 = vld [vmem:[%s3039 + $0x48] sm:$0xff]
    %v3050 = vld [vmem:[%s3039 + $0x50] sm:$0xff]
    %v3051 = vld [vmem:[%s3039 + $0x58] sm:$0xff]
    %v3052 = vld [vmem:[%s3039 + $0x60] sm:$0xff]
    %v3053 = vld [vmem:[%s3039 + $0x68] sm:$0xff]
    %v3054 = vld [vmem:[%s3039 + $0x70] sm:$0xff]
    %v3055 = vld [vmem:[%s3039 + $0x78] sm:$0xff]
    %v3056 = vcombine.low %v2915, %v2922
    %v3057 = vcombine.low %v2923, %v2938
    %v3058 = vcombine.low %v2945, %v2946
    %v3059 = vcombine.low %v2961, %v2968
    %v3061 = vunpack.c.l.s4 1966171168
    %v3062 = vunpack.c.0.s8 %v3061
    %v3063 = vlaneseq
    %v3064 = vshrl.u32 %v3063, 7
    %v3065 = vsub.s32 %v3062, %v3064
    %v3066 = vrot.slane %v3056, %v3065
    %v3068 = vunpack.c.l.s4 1966171168
    %v3069 = vunpack.c.0.s8 %v3068
    %v3070 = vlaneseq
    %v3071 = vshrl.u32 %v3070, 7
    %v3072 = vsub.s32 %v3069, %v3071
    %v3073 = vrot.slane %v3057, %v3072
    %v3075 = vunpack.c.l.s4 1966171168
    %v3076 = vunpack.c.0.s8 %v3075
    %v3077 = vlaneseq
    %v3078 = vshrl.u32 %v3077, 7
    %v3079 = vsub.s32 %v3076, %v3078
    %v3080 = vrot.slane %v3058, %v3079
    %v3082 = vunpack.c.l.s4 1966171168
    %v3083 = vunpack.c.0.s8 %v3082
    %v3084 = vlaneseq
    %v3085 = vshrl.u32 %v3084, 7
    %v3086 = vsub.s32 %v3083, %v3085
    %v3087 = vrot.slane %v3059, %v3086
    %v3088 = vcombine.low %v3066, %v3073
    %v3089 = vcombine.low %v3080, %v3087
    %v3091 = vunpack.c.l.s4 1966171168
    %v3092 = vunpack.c.0.s8 %v3091
    %v3093 = vlaneseq
    %v3094 = vshrl.u32 %v3093, 7
    %v3095 = vsub.s32 %v3092, %v3094
    %v3096 = vrot.slane %v3088, %v3095
    %v3098 = vunpack.c.l.s4 1966171168
    %v3099 = vunpack.c.0.s8 %v3098
    %v3100 = vlaneseq
    %v3101 = vshrl.u32 %v3100, 7
    %v3102 = vsub.s32 %v3099, %v3101
    %v3103 = vrot.slane %v3089, %v3102
    %v3104 = vcombine.low %v3096, %v3103
    %v3105 = vcombine.low %v2969, %v2984
    %v3106 = vcombine.low %v2991, %v2992
    %v3107 = vcombine.low %v3007, %v3014
    %v3108 = vcombine.low %v3015, %v3030
    %v3110 = vunpack.c.l.s4 1966171168
    %v3111 = vunpack.c.0.s8 %v3110
    %v3112 = vlaneseq
    %v3113 = vshrl.u32 %v3112, 7
    %v3114 = vsub.s32 %v3111, %v3113
    %v3115 = vrot.slane %v3105, %v3114
    %v3117 = vunpack.c.l.s4 1966171168
    %v3118 = vunpack.c.0.s8 %v3117
    %v3119 = vlaneseq
    %v3120 = vshrl.u32 %v3119, 7
    %v3121 = vsub.s32 %v3118, %v3120
    %v3122 = vrot.slane %v3106, %v3121
    %v3124 = vunpack.c.l.s4 1966171168
    %v3125 = vunpack.c.0.s8 %v3124
    %v3126 = vlaneseq
    %v3127 = vshrl.u32 %v3126, 7
    %v3128 = vsub.s32 %v3125, %v3127
    %v3129 = vrot.slane %v3107, %v3128
    %v3131 = vunpack.c.l.s4 1966171168
    %v3132 = vunpack.c.0.s8 %v3131
    %v3133 = vlaneseq
    %v3134 = vshrl.u32 %v3133, 7
    %v3135 = vsub.s32 %v3132, %v3134
    %v3136 = vrot.slane %v3108, %v3135
    %v3137 = vcombine.low %v3115, %v3122
    %v3138 = vcombine.low %v3129, %v3136
    %v3140 = vunpack.c.l.s4 1966171168
    %v3141 = vunpack.c.0.s8 %v3140
    %v3142 = vlaneseq
    %v3143 = vshrl.u32 %v3142, 7
    %v3144 = vsub.s32 %v3141, %v3143
    %v3145 = vrot.slane %v3137, %v3144
    %v3147 = vunpack.c.l.s4 1966171168
    %v3148 = vunpack.c.0.s8 %v3147
    %v3149 = vlaneseq
    %v3150 = vshrl.u32 %v3149, 7
    %v3151 = vsub.s32 %v3148, %v3150
    %v3152 = vrot.slane %v3138, %v3151
    %v3153 = vcombine.low %v3145, %v3152
    %v3154 = vcombine.low %v3037, %v3038
    %v3156 = vunpack.c.l.s4 1966171168
    %v3157 = vunpack.c.0.s8 %v3156
    %v3158 = vlaneseq
    %v3159 = vshrl.u32 %v3158, 7
    %v3160 = vsub.s32 %v3157, %v3159
    %v3161 = vrot.slane %v3154, %v3160
    %v3163 = vunpack.c.l.s4 1966171168
    %v3164 = vunpack.c.0.s8 %v3163
    %v3165 = vlaneseq
    %v3166 = vshrl.u32 %v3165, 7
    %v3167 = vsub.s32 %v3164, %v3166
    %v3168 = vrot.slane %v3161, %v3167
    %3172 = vmatprep.subr.mxu0 0.0
    %3173 = vmatpush1.msra.mxu0 %v3055
    %3174 = vmatprep.subr.mxu0 0.0
    %3175 = vmatpush1.msra.mxu0 %v3054
    %3176 = vmatprep.subr.mxu0 0.0
    %3177 = vmatpush1.msra.mxu0 %v3053
    %3178 = vmatprep.subr.mxu0 0.0
    %3179 = vmatpush1.msra.mxu0 %v3052
    %3180 = vmatprep.subr.mxu0 0.0
    %3181 = vmatpush1.msra.mxu0 %v3051
    %3182 = vmatprep.subr.mxu0 0.0
    %3183 = vmatpush1.msra.mxu0 %v3050
    %3184 = vmatprep.subr.mxu0 0.0
    %3185 = vmatpush1.msra.mxu0 %v3049
    %3186 = vmatprep.subr.mxu0 0.0
    %3187 = vmatpush1.msra.mxu0 %v3048
    %3188 = vmatprep.subr.mxu0 0.0
    %3189 = vmatpush1.msra.mxu0 %v3047
    %3190 = vmatprep.subr.mxu0 0.0
    %3191 = vmatpush1.msra.mxu0 %v3046
    %3192 = vmatprep.subr.mxu0 0.0
    %3193 = vmatpush1.msra.mxu0 %v3045
    %3194 = vmatprep.subr.mxu0 0.0
    %3195 = vmatpush1.msra.mxu0 %v3044
    %3196 = vmatprep.subr.mxu0 0.0
    %3197 = vmatpush1.msra.mxu0 %v3043
    %3198 = vmatprep.subr.mxu0 0.0
    %3199 = vmatpush1.msra.mxu0 %v3042
    %3200 = vmatprep.subr.mxu0 0.0
    %3201 = vmatpush1.msra.mxu0 %v3041
    %3202 = vmatprep.subr.mxu0 0.0
    %3203 = vmatpush1.msra.mxu0 %v3040
    %3204 = vmatprep.subr.mxu0 0.0
    %3205 = vmatpush2.msra.mxu0 0.0
    %3206 = vmatprep.subr.mxu0 0.0
    %3207 = vmatpush2.msra.mxu0 0.0
    %3208 = vmatprep.subr.mxu0 0.0
    %3209 = vmatpush2.msra.mxu0 0.0
    %3210 = vmatprep.subr.mxu0 0.0
    %3211 = vmatpush2.msra.mxu0 0.0
    %3212 = vmatprep.subr.mxu0 0.0
    %3213 = vmatpush2.msra.mxu0 0.0
    %3214 = vmatprep.subr.mxu0 0.0
    %3215 = vmatpush2.msra.mxu0 0.0
    %3216 = vmatprep.subr.mxu0 0.0
    %3217 = vmatpush2.msra.mxu0 0.0
    %3218 = vmatprep.subr.mxu0 0.0
    %3219 = vmatpush2.msra.mxu0 0.0
    %3220 = vmatprep.subr.mxu0 0.0
    %3221 = vmatpush2.msra.mxu0 0.0
    %3222 = vmatprep.subr.mxu0 0.0
    %3223 = vmatpush2.msra.mxu0 0.0
    %3224 = vmatprep.subr.mxu0 0.0
    %3225 = vmatpush2.msra.mxu0 0.0
    %3226 = vmatprep.subr.mxu0 0.0
    %3227 = vmatpush2.msra.mxu0 0.0
    %3228 = vmatprep.subr.mxu0 0.0
    %3229 = vmatpush2.msra.mxu0 0.0
    %3230 = vmatprep.subr.mxu0 0.0
    %3231 = vmatpush2.msra.mxu0 0.0
    %3232 = vmatprep.subr.mxu0 0.0
    %3233 = vmatpush2.msra.mxu0 0.0
    %3234 = vmatprep.subr.mxu0 0.0
    %3235 = vmatpush2.msra.mxu0 0.0
    %3236 = vmatprep.mubr.f32.mxu0 0.0
    %3237 = vmatmul.mubr.f32.gmra.mxu0 %v3104
    %v3238 = vpop.f32.mrf.mxu0
    %v3239 = vadd.f32 0.0, %v3238
    %v3240 = vpop.f32.mrf.mxu0
    %3241 = vmatprep.mubr.f32.mxu0 0.0
    %3242 = vmatmul.mubr.f32.gmra.mxu0 %v3153
    %v3243 = vpop.f32.mrf.mxu0
    %v3244 = vadd.f32 0.0, %v3243
    %v3245 = vpop.f32.mrf.mxu0
    %3246 = vmatprep.mubr.f32.mxu0 0.0
    %3247 = vmatmul.mubr.f32.gmra.mxu0 %v3168
    %v3248 = vpop.f32.mrf.mxu0
    %v3249 = vadd.f32 0.0, %v3248
    %v3250 = vpop.f32.mrf.mxu0
    %3251 = vdwg.mxu0
    %v3252 = vadd.f32 %v2880, %v3239
    %v3253 = vadd.f32 %v2881, %v3244
    %v3254 = vadd.f32 %v2882, %v3249
    %s3255 = scalar_lea.vmem [#allocation2], 16
    %v3256 = vld [vmem:[%s3255] ss:$2 sm:$0x7]
    %s3257 = scalar_lea.vmem %s3255, 16 [#allocation2]
    %v3258 = vld [vmem:[%s3257] ss:$2 sm:$0x7]
    %s3259 = scalar_lea.vmem %s3255, 32 [#allocation2]
    %v3260 = vld [vmem:[%s3259] ss:$2 sm:$0x7]
    %s3261 = scalar_lea.vmem %s3255, 64 [#allocation2]
    %v3262 = vld [vmem:[%s3261] ss:$2 sm:$0x7]
    %s3263 = scalar_lea.vmem %s3255, 80 [#allocation2]
    %v3264 = vld [vmem:[%s3263] ss:$2 sm:$0x7]
    %s3265 = scalar_lea.vmem %s3255, 96 [#allocation2]
    %v3266 = vld [vmem:[%s3265] ss:$2 sm:$0x7]
    %v3274 = vunpack.c.l.s4 1966171168
    %v3275 = vunpack.c.0.s8 %v3274
    %v3276 = vlaneseq
    %v3277 = vshrl.u32 %v3276, 7
    %v3278 = vsub.s32 %v3275, %v3277
    %v3279 = vrot.slane %v3256, %v3278
    %v3280 = vcombine.high %v3279, %v3279
    %v3282 = vunpack.c.l.s4 1966171168
    %v3283 = vunpack.c.0.s8 %v3282
    %v3284 = vlaneseq
    %v3285 = vshrl.u32 %v3284, 7
    %v3286 = vsub.s32 %v3283, %v3285
    %v3287 = vrot.slane %v3279, %v3286
    %v3289 = vunpack.c.l.s4 1966171168
    %v3290 = vunpack.c.0.s8 %v3289
    %v3291 = vlaneseq
    %v3292 = vshrl.u32 %v3291, 7
    %v3293 = vsub.s32 %v3290, %v3292
    %v3294 = vrot.slane %v3280, %v3293
    %v3295 = vcombine.high %v3287, %v3287
    %v3297 = vunpack.c.l.s4 1966171168
    %v3298 = vunpack.c.0.s8 %v3297
    %v3299 = vlaneseq
    %v3300 = vshrl.u32 %v3299, 7
    %v3301 = vsub.s32 %v3298, %v3300
    %v3302 = vrot.slane %v3258, %v3301
    %v3303 = vcombine.high %v3302, %v3302
    %v3305 = vunpack.c.l.s4 1966171168
    %v3306 = vunpack.c.0.s8 %v3305
    %v3307 = vlaneseq
    %v3308 = vshrl.u32 %v3307, 7
    %v3309 = vsub.s32 %v3306, %v3308
    %v3310 = vrot.slane %v3302, %v3309
    %v3312 = vunpack.c.l.s4 1966171168
    %v3313 = vunpack.c.0.s8 %v3312
    %v3314 = vlaneseq
    %v3315 = vshrl.u32 %v3314, 7
    %v3316 = vsub.s32 %v3313, %v3315
    %v3317 = vrot.slane %v3303, %v3316
    %v3318 = vcombine.high %v3310, %v3310
    %v3320 = vunpack.c.l.s4 1966171168
    %v3321 = vunpack.c.0.s8 %v3320
    %v3322 = vlaneseq
    %v3323 = vshrl.u32 %v3322, 7
    %v3324 = vsub.s32 %v3321, %v3323
    %v3325 = vrot.slane %v3260, %v3324
    %v3326 = vcombine.high %v3325, %v3325
    %v3328 = vunpack.c.l.s4 1966171168
    %v3329 = vunpack.c.0.s8 %v3328
    %v3330 = vlaneseq
    %v3331 = vshrl.u32 %v3330, 7
    %v3332 = vsub.s32 %v3329, %v3331
    %v3333 = vrot.slane %v3325, %v3332
    %v3335 = vunpack.c.l.s4 1966171168
    %v3336 = vunpack.c.0.s8 %v3335
    %v3337 = vlaneseq
    %v3338 = vshrl.u32 %v3337, 7
    %v3339 = vsub.s32 %v3336, %v3338
    %v3340 = vrot.slane %v3326, %v3339
    %v3341 = vcombine.high %v3333, %v3333
    %v3343 = vunpack.c.l.s4 1966171168
    %v3344 = vunpack.c.0.s8 %v3343
    %v3345 = vlaneseq
    %v3346 = vshrl.u32 %v3345, 7
    %v3347 = vsub.s32 %v3344, %v3346
    %v3348 = vrot.slane %v3262, %v3347
    %v3349 = vcombine.high %v3348, %v3348
    %v3351 = vunpack.c.l.s4 1966171168
    %v3352 = vunpack.c.0.s8 %v3351
    %v3353 = vlaneseq
    %v3354 = vshrl.u32 %v3353, 7
    %v3355 = vsub.s32 %v3352, %v3354
    %v3356 = vrot.slane %v3348, %v3355
    %v3358 = vunpack.c.l.s4 1966171168
    %v3359 = vunpack.c.0.s8 %v3358
    %v3360 = vlaneseq
    %v3361 = vshrl.u32 %v3360, 7
    %v3362 = vsub.s32 %v3359, %v3361
    %v3363 = vrot.slane %v3349, %v3362
    %v3364 = vcombine.high %v3356, %v3356
    %v3366 = vunpack.c.l.s4 1966171168
    %v3367 = vunpack.c.0.s8 %v3366
    %v3368 = vlaneseq
    %v3369 = vshrl.u32 %v3368, 7
    %v3370 = vsub.s32 %v3367, %v3369
    %v3371 = vrot.slane %v3264, %v3370
    %v3372 = vcombine.high %v3371, %v3371
    %v3374 = vunpack.c.l.s4 1966171168
    %v3375 = vunpack.c.0.s8 %v3374
    %v3376 = vlaneseq
    %v3377 = vshrl.u32 %v3376, 7
    %v3378 = vsub.s32 %v3375, %v3377
    %v3379 = vrot.slane %v3371, %v3378
    %v3381 = vunpack.c.l.s4 1966171168
    %v3382 = vunpack.c.0.s8 %v3381
    %v3383 = vlaneseq
    %v3384 = vshrl.u32 %v3383, 7
    %v3385 = vsub.s32 %v3382, %v3384
    %v3386 = vrot.slane %v3372, %v3385
    %v3387 = vcombine.high %v3379, %v3379
    %v3389 = vunpack.c.l.s4 1966171168
    %v3390 = vunpack.c.0.s8 %v3389
    %v3391 = vlaneseq
    %v3392 = vshrl.u32 %v3391, 7
    %v3393 = vsub.s32 %v3390, %v3392
    %v3394 = vrot.slane %v3266, %v3393
    %v3395 = vcombine.high %v3394, %v3394
    %v3397 = vunpack.c.l.s4 1966171168
    %v3398 = vunpack.c.0.s8 %v3397
    %v3399 = vlaneseq
    %v3400 = vshrl.u32 %v3399, 7
    %v3401 = vsub.s32 %v3398, %v3400
    %v3402 = vrot.slane %v3394, %v3401
    %v3404 = vunpack.c.l.s4 1966171168
    %v3405 = vunpack.c.0.s8 %v3404
    %v3406 = vlaneseq
    %v3407 = vshrl.u32 %v3406, 7
    %v3408 = vsub.s32 %v3405, %v3407
    %v3409 = vrot.slane %v3395, %v3408
    %v3410 = vcombine.high %v3402, %v3402
    %s3411 = scalar_lea.vmem %s3, 1024
    %v3412 = vld [vmem:[%s3411] sm:$0xff]
    %v3413 = vld [vmem:[%s3411 + $0x8] sm:$0xff]
    %v3414 = vld [vmem:[%s3411 + $0x10] sm:$0xff]
    %v3415 = vld [vmem:[%s3411 + $0x18] sm:$0xff]
    %v3416 = vld [vmem:[%s3411 + $0x20] sm:$0xff]
    %v3417 = vld [vmem:[%s3411 + $0x28] sm:$0xff]
    %v3418 = vld [vmem:[%s3411 + $0x30] sm:$0xff]
    %v3419 = vld [vmem:[%s3411 + $0x38] sm:$0xff]
    %v3420 = vld [vmem:[%s3411 + $0x40] sm:$0xff]
    %v3421 = vld [vmem:[%s3411 + $0x48] sm:$0xff]
    %v3422 = vld [vmem:[%s3411 + $0x50] sm:$0xff]
    %v3423 = vld [vmem:[%s3411 + $0x58] sm:$0xff]
    %v3424 = vld [vmem:[%s3411 + $0x60] sm:$0xff]
    %v3425 = vld [vmem:[%s3411 + $0x68] sm:$0xff]
    %v3426 = vld [vmem:[%s3411 + $0x70] sm:$0xff]
    %v3427 = vld [vmem:[%s3411 + $0x78] sm:$0xff]
    %v3428 = vcombine.low %v3287, %v3294
    %v3429 = vcombine.low %v3295, %v3310
    %v3430 = vcombine.low %v3317, %v3318
    %v3431 = vcombine.low %v3333, %v3340
    %v3433 = vunpack.c.l.s4 1966171168
    %v3434 = vunpack.c.0.s8 %v3433
    %v3435 = vlaneseq
    %v3436 = vshrl.u32 %v3435, 7
    %v3437 = vsub.s32 %v3434, %v3436
    %v3438 = vrot.slane %v3428, %v3437
    %v3440 = vunpack.c.l.s4 1966171168
    %v3441 = vunpack.c.0.s8 %v3440
    %v3442 = vlaneseq
    %v3443 = vshrl.u32 %v3442, 7
    %v3444 = vsub.s32 %v3441, %v3443
    %v3445 = vrot.slane %v3429, %v3444
    %v3447 = vunpack.c.l.s4 1966171168
    %v3448 = vunpack.c.0.s8 %v3447
    %v3449 = vlaneseq
    %v3450 = vshrl.u32 %v3449, 7
    %v3451 = vsub.s32 %v3448, %v3450
    %v3452 = vrot.slane %v3430, %v3451
    %v3454 = vunpack.c.l.s4 1966171168
    %v3455 = vunpack.c.0.s8 %v3454
    %v3456 = vlaneseq
    %v3457 = vshrl.u32 %v3456, 7
    %v3458 = vsub.s32 %v3455, %v3457
    %v3459 = vrot.slane %v3431, %v3458
    %v3460 = vcombine.low %v3438, %v3445
    %v3461 = vcombine.low %v3452, %v3459
    %v3463 = vunpack.c.l.s4 1966171168
    %v3464 = vunpack.c.0.s8 %v3463
    %v3465 = vlaneseq
    %v3466 = vshrl.u32 %v3465, 7
    %v3467 = vsub.s32 %v3464, %v3466
    %v3468 = vrot.slane %v3460, %v3467
    %v3470 = vunpack.c.l.s4 1966171168
    %v3471 = vunpack.c.0.s8 %v3470
    %v3472 = vlaneseq
    %v3473 = vshrl.u32 %v3472, 7
    %v3474 = vsub.s32 %v3471, %v3473
    %v3475 = vrot.slane %v3461, %v3474
    %v3476 = vcombine.low %v3468, %v3475
    %v3477 = vcombine.low %v3341, %v3356
    %v3478 = vcombine.low %v3363, %v3364
    %v3479 = vcombine.low %v3379, %v3386
    %v3480 = vcombine.low %v3387, %v3402
    %v3482 = vunpack.c.l.s4 1966171168
    %v3483 = vunpack.c.0.s8 %v3482
    %v3484 = vlaneseq
    %v3485 = vshrl.u32 %v3484, 7
    %v3486 = vsub.s32 %v3483, %v3485
    %v3487 = vrot.slane %v3477, %v3486
    %v3489 = vunpack.c.l.s4 1966171168
    %v3490 = vunpack.c.0.s8 %v3489
    %v3491 = vlaneseq
    %v3492 = vshrl.u32 %v3491, 7
    %v3493 = vsub.s32 %v3490, %v3492
    %v3494 = vrot.slane %v3478, %v3493
    %v3496 = vunpack.c.l.s4 1966171168
    %v3497 = vunpack.c.0.s8 %v3496
    %v3498 = vlaneseq
    %v3499 = vshrl.u32 %v3498, 7
    %v3500 = vsub.s32 %v3497, %v3499
    %v3501 = vrot.slane %v3479, %v3500
    %v3503 = vunpack.c.l.s4 1966171168
    %v3504 = vunpack.c.0.s8 %v3503
    %v3505 = vlaneseq
    %v3506 = vshrl.u32 %v3505, 7
    %v3507 = vsub.s32 %v3504, %v3506
    %v3508 = vrot.slane %v3480, %v3507
    %v3509 = vcombine.low %v3487, %v3494
    %v3510 = vcombine.low %v3501, %v3508
    %v3512 = vunpack.c.l.s4 1966171168
    %v3513 = vunpack.c.0.s8 %v3512
    %v3514 = vlaneseq
    %v3515 = vshrl.u32 %v3514, 7
    %v3516 = vsub.s32 %v3513, %v3515
    %v3517 = vrot.slane %v3509, %v3516
    %v3519 = vunpack.c.l.s4 1966171168
    %v3520 = vunpack.c.0.s8 %v3519
    %v3521 = vlaneseq
    %v3522 = vshrl.u32 %v3521, 7
    %v3523 = vsub.s32 %v3520, %v3522
    %v3524 = vrot.slane %v3510, %v3523
    %v3525 = vcombine.low %v3517, %v3524
    %v3526 = vcombine.low %v3409, %v3410
    %v3528 = vunpack.c.l.s4 1966171168
    %v3529 = vunpack.c.0.s8 %v3528
    %v3530 = vlaneseq
    %v3531 = vshrl.u32 %v3530, 7
    %v3532 = vsub.s32 %v3529, %v3531
    %v3533 = vrot.slane %v3526, %v3532
    %v3535 = vunpack.c.l.s4 1966171168
    %v3536 = vunpack.c.0.s8 %v3535
    %v3537 = vlaneseq
    %v3538 = vshrl.u32 %v3537, 7
    %v3539 = vsub.s32 %v3536, %v3538
    %v3540 = vrot.slane %v3533, %v3539
    %3544 = vmatprep.subr.mxu0 0.0
    %3545 = vmatpush1.msra.mxu0 %v3427
    %3546 = vmatprep.subr.mxu0 0.0
    %3547 = vmatpush1.msra.mxu0 %v3426
    %3548 = vmatprep.subr.mxu0 0.0
    %3549 = vmatpush1.msra.mxu0 %v3425
    %3550 = vmatprep.subr.mxu0 0.0
    %3551 = vmatpush1.msra.mxu0 %v3424
    %3552 = vmatprep.subr.mxu0 0.0
    %3553 = vmatpush1.msra.mxu0 %v3423
    %3554 = vmatprep.subr.mxu0 0.0
    %3555 = vmatpush1.msra.mxu0 %v3422
    %3556 = vmatprep.subr.mxu0 0.0
    %3557 = vmatpush1.msra.mxu0 %v3421
    %3558 = vmatprep.subr.mxu0 0.0
    %3559 = vmatpush1.msra.mxu0 %v3420
    %3560 = vmatprep.subr.mxu0 0.0
    %3561 = vmatpush1.msra.mxu0 %v3419
    %3562 = vmatprep.subr.mxu0 0.0
    %3563 = vmatpush1.msra.mxu0 %v3418
    %3564 = vmatprep.subr.mxu0 0.0
    %3565 = vmatpush1.msra.mxu0 %v3417
    %3566 = vmatprep.subr.mxu0 0.0
    %3567 = vmatpush1.msra.mxu0 %v3416
    %3568 = vmatprep.subr.mxu0 0.0
    %3569 = vmatpush1.msra.mxu0 %v3415
    %3570 = vmatprep.subr.mxu0 0.0
    %3571 = vmatpush1.msra.mxu0 %v3414
    %3572 = vmatprep.subr.mxu0 0.0
    %3573 = vmatpush1.msra.mxu0 %v3413
    %3574 = vmatprep.subr.mxu0 0.0
    %3575 = vmatpush1.msra.mxu0 %v3412
    %3576 = vmatprep.subr.mxu0 0.0
    %3577 = vmatpush2.msra.mxu0 0.0
    %3578 = vmatprep.subr.mxu0 0.0
    %3579 = vmatpush2.msra.mxu0 0.0
    %3580 = vmatprep.subr.mxu0 0.0
    %3581 = vmatpush2.msra.mxu0 0.0
    %3582 = vmatprep.subr.mxu0 0.0
    %3583 = vmatpush2.msra.mxu0 0.0
    %3584 = vmatprep.subr.mxu0 0.0
    %3585 = vmatpush2.msra.mxu0 0.0
    %3586 = vmatprep.subr.mxu0 0.0
    %3587 = vmatpush2.msra.mxu0 0.0
    %3588 = vmatprep.subr.mxu0 0.0
    %3589 = vmatpush2.msra.mxu0 0.0
    %3590 = vmatprep.subr.mxu0 0.0
    %3591 = vmatpush2.msra.mxu0 0.0
    %3592 = vmatprep.subr.mxu0 0.0
    %3593 = vmatpush2.msra.mxu0 0.0
    %3594 = vmatprep.subr.mxu0 0.0
    %3595 = vmatpush2.msra.mxu0 0.0
    %3596 = vmatprep.subr.mxu0 0.0
    %3597 = vmatpush2.msra.mxu0 0.0
    %3598 = vmatprep.subr.mxu0 0.0
    %3599 = vmatpush2.msra.mxu0 0.0
    %3600 = vmatprep.subr.mxu0 0.0
    %3601 = vmatpush2.msra.mxu0 0.0
    %3602 = vmatprep.subr.mxu0 0.0
    %3603 = vmatpush2.msra.mxu0 0.0
    %3604 = vmatprep.subr.mxu0 0.0
    %3605 = vmatpush2.msra.mxu0 0.0
    %3606 = vmatprep.subr.mxu0 0.0
    %3607 = vmatpush2.msra.mxu0 0.0
    %3608 = vmatprep.mubr.f32.mxu0 0.0
    %3609 = vmatmul.mubr.f32.gmra.mxu0 %v3476
    %v3610 = vpop.f32.mrf.mxu0
    %v3611 = vadd.f32 0.0, %v3610
    %v3612 = vpop.f32.mrf.mxu0
    %3613 = vmatprep.mubr.f32.mxu0 0.0
    %3614 = vmatmul.mubr.f32.gmra.mxu0 %v3525
    %v3615 = vpop.f32.mrf.mxu0
    %v3616 = vadd.f32 0.0, %v3615
    %v3617 = vpop.f32.mrf.mxu0
    %3618 = vmatprep.mubr.f32.mxu0 0.0
    %3619 = vmatmul.mubr.f32.gmra.mxu0 %v3540
    %v3620 = vpop.f32.mrf.mxu0
    %v3621 = vadd.f32 0.0, %v3620
    %v3622 = vpop.f32.mrf.mxu0
    %3623 = vdwg.mxu0
    %v3624 = vadd.f32 %v3252, %v3611
    %v3625 = vadd.f32 %v3253, %v3616
    %v3626 = vadd.f32 %v3254, %v3621
    %s3627 = scalar_lea.vmem %s3255, 1 [#allocation2]
    %v3628 = vld [vmem:[%s3627] ss:$2 sm:$0x7]
    %s3629 = scalar_lea.vmem %s3255, 17 [#allocation2]
    %v3630 = vld [vmem:[%s3629] ss:$2 sm:$0x7]
    %s3631 = scalar_lea.vmem %s3255, 33 [#allocation2]
    %v3632 = vld [vmem:[%s3631] ss:$2 sm:$0x7]
    %s3633 = scalar_lea.vmem %s3255, 65 [#allocation2]
    %v3634 = vld [vmem:[%s3633] ss:$2 sm:$0x7]
    %s3635 = scalar_lea.vmem %s3255, 81 [#allocation2]
    %v3636 = vld [vmem:[%s3635] ss:$2 sm:$0x7]
    %s3637 = scalar_lea.vmem %s3255, 97 [#allocation2]
    %v3638 = vld [vmem:[%s3637] ss:$2 sm:$0x7]
    %v3646 = vunpack.c.l.s4 1966171168
    %v3647 = vunpack.c.0.s8 %v3646
    %v3648 = vlaneseq
    %v3649 = vshrl.u32 %v3648, 7
    %v3650 = vsub.s32 %v3647, %v3649
    %v3651 = vrot.slane %v3628, %v3650
    %v3652 = vcombine.high %v3651, %v3651
    %v3654 = vunpack.c.l.s4 1966171168
    %v3655 = vunpack.c.0.s8 %v3654
    %v3656 = vlaneseq
    %v3657 = vshrl.u32 %v3656, 7
    %v3658 = vsub.s32 %v3655, %v3657
    %v3659 = vrot.slane %v3651, %v3658
    %v3661 = vunpack.c.l.s4 1966171168
    %v3662 = vunpack.c.0.s8 %v3661
    %v3663 = vlaneseq
    %v3664 = vshrl.u32 %v3663, 7
    %v3665 = vsub.s32 %v3662, %v3664
    %v3666 = vrot.slane %v3652, %v3665
    %v3667 = vcombine.high %v3659, %v3659
    %v3669 = vunpack.c.l.s4 1966171168
    %v3670 = vunpack.c.0.s8 %v3669
    %v3671 = vlaneseq
    %v3672 = vshrl.u32 %v3671, 7
    %v3673 = vsub.s32 %v3670, %v3672
    %v3674 = vrot.slane %v3630, %v3673
    %v3675 = vcombine.high %v3674, %v3674
    %v3677 = vunpack.c.l.s4 1966171168
    %v3678 = vunpack.c.0.s8 %v3677
    %v3679 = vlaneseq
    %v3680 = vshrl.u32 %v3679, 7
    %v3681 = vsub.s32 %v3678, %v3680
    %v3682 = vrot.slane %v3674, %v3681
    %v3684 = vunpack.c.l.s4 1966171168
    %v3685 = vunpack.c.0.s8 %v3684
    %v3686 = vlaneseq
    %v3687 = vshrl.u32 %v3686, 7
    %v3688 = vsub.s32 %v3685, %v3687
    %v3689 = vrot.slane %v3675, %v3688
    %v3690 = vcombine.high %v3682, %v3682
    %v3692 = vunpack.c.l.s4 1966171168
    %v3693 = vunpack.c.0.s8 %v3692
    %v3694 = vlaneseq
    %v3695 = vshrl.u32 %v3694, 7
    %v3696 = vsub.s32 %v3693, %v3695
    %v3697 = vrot.slane %v3632, %v3696
    %v3698 = vcombine.high %v3697, %v3697
    %v3700 = vunpack.c.l.s4 1966171168
    %v3701 = vunpack.c.0.s8 %v3700
    %v3702 = vlaneseq
    %v3703 = vshrl.u32 %v3702, 7
    %v3704 = vsub.s32 %v3701, %v3703
    %v3705 = vrot.slane %v3697, %v3704
    %v3707 = vunpack.c.l.s4 1966171168
    %v3708 = vunpack.c.0.s8 %v3707
    %v3709 = vlaneseq
    %v3710 = vshrl.u32 %v3709, 7
    %v3711 = vsub.s32 %v3708, %v3710
    %v3712 = vrot.slane %v3698, %v3711
    %v3713 = vcombine.high %v3705, %v3705
    %v3715 = vunpack.c.l.s4 1966171168
    %v3716 = vunpack.c.0.s8 %v3715
    %v3717 = vlaneseq
    %v3718 = vshrl.u32 %v3717, 7
    %v3719 = vsub.s32 %v3716, %v3718
    %v3720 = vrot.slane %v3634, %v3719
    %v3721 = vcombine.high %v3720, %v3720
    %v3723 = vunpack.c.l.s4 1966171168
    %v3724 = vunpack.c.0.s8 %v3723
    %v3725 = vlaneseq
    %v3726 = vshrl.u32 %v3725, 7
    %v3727 = vsub.s32 %v3724, %v3726
    %v3728 = vrot.slane %v3720, %v3727
    %v3730 = vunpack.c.l.s4 1966171168
    %v3731 = vunpack.c.0.s8 %v3730
    %v3732 = vlaneseq
    %v3733 = vshrl.u32 %v3732, 7
    %v3734 = vsub.s32 %v3731, %v3733
    %v3735 = vrot.slane %v3721, %v3734
    %v3736 = vcombine.high %v3728, %v3728
    %v3738 = vunpack.c.l.s4 1966171168
    %v3739 = vunpack.c.0.s8 %v3738
    %v3740 = vlaneseq
    %v3741 = vshrl.u32 %v3740, 7
    %v3742 = vsub.s32 %v3739, %v3741
    %v3743 = vrot.slane %v3636, %v3742
    %v3744 = vcombine.high %v3743, %v3743
    %v3746 = vunpack.c.l.s4 1966171168
    %v3747 = vunpack.c.0.s8 %v3746
    %v3748 = vlaneseq
    %v3749 = vshrl.u32 %v3748, 7
    %v3750 = vsub.s32 %v3747, %v3749
    %v3751 = vrot.slane %v3743, %v3750
    %v3753 = vunpack.c.l.s4 1966171168
    %v3754 = vunpack.c.0.s8 %v3753
    %v3755 = vlaneseq
    %v3756 = vshrl.u32 %v3755, 7
    %v3757 = vsub.s32 %v3754, %v3756
    %v3758 = vrot.slane %v3744, %v3757
    %v3759 = vcombine.high %v3751, %v3751
    %v3761 = vunpack.c.l.s4 1966171168
    %v3762 = vunpack.c.0.s8 %v3761
    %v3763 = vlaneseq
    %v3764 = vshrl.u32 %v3763, 7
    %v3765 = vsub.s32 %v3762, %v3764
    %v3766 = vrot.slane %v3638, %v3765
    %v3767 = vcombine.high %v3766, %v3766
    %v3769 = vunpack.c.l.s4 1966171168
    %v3770 = vunpack.c.0.s8 %v3769
    %v3771 = vlaneseq
    %v3772 = vshrl.u32 %v3771, 7
    %v3773 = vsub.s32 %v3770, %v3772
    %v3774 = vrot.slane %v3766, %v3773
    %v3776 = vunpack.c.l.s4 1966171168
    %v3777 = vunpack.c.0.s8 %v3776
    %v3778 = vlaneseq
    %v3779 = vshrl.u32 %v3778, 7
    %v3780 = vsub.s32 %v3777, %v3779
    %v3781 = vrot.slane %v3767, %v3780
    %v3782 = vcombine.high %v3774, %v3774
    %s3783 = scalar_lea.vmem %s3, 1152
    %v3784 = vld [vmem:[%s3783] sm:$0xff]
    %v3785 = vld [vmem:[%s3783 + $0x8] sm:$0xff]
    %v3786 = vld [vmem:[%s3783 + $0x10] sm:$0xff]
    %v3787 = vld [vmem:[%s3783 + $0x18] sm:$0xff]
    %v3788 = vld [vmem:[%s3783 + $0x20] sm:$0xff]
    %v3789 = vld [vmem:[%s3783 + $0x28] sm:$0xff]
    %v3790 = vld [vmem:[%s3783 + $0x30] sm:$0xff]
    %v3791 = vld [vmem:[%s3783 + $0x38] sm:$0xff]
    %v3792 = vld [vmem:[%s3783 + $0x40] sm:$0xff]
    %v3793 = vld [vmem:[%s3783 + $0x48] sm:$0xff]
    %v3794 = vld [vmem:[%s3783 + $0x50] sm:$0xff]
    %v3795 = vld [vmem:[%s3783 + $0x58] sm:$0xff]
    %v3796 = vld [vmem:[%s3783 + $0x60] sm:$0xff]
    %v3797 = vld [vmem:[%s3783 + $0x68] sm:$0xff]
    %v3798 = vld [vmem:[%s3783 + $0x70] sm:$0xff]
    %v3799 = vld [vmem:[%s3783 + $0x78] sm:$0xff]
    %v3800 = vcombine.low %v3659, %v3666
    %v3801 = vcombine.low %v3667, %v3682
    %v3802 = vcombine.low %v3689, %v3690
    %v3803 = vcombine.low %v3705, %v3712
    %v3805 = vunpack.c.l.s4 1966171168
    %v3806 = vunpack.c.0.s8 %v3805
    %v3807 = vlaneseq
    %v3808 = vshrl.u32 %v3807, 7
    %v3809 = vsub.s32 %v3806, %v3808
    %v3810 = vrot.slane %v3800, %v3809
    %v3812 = vunpack.c.l.s4 1966171168
    %v3813 = vunpack.c.0.s8 %v3812
    %v3814 = vlaneseq
    %v3815 = vshrl.u32 %v3814, 7
    %v3816 = vsub.s32 %v3813, %v3815
    %v3817 = vrot.slane %v3801, %v3816
    %v3819 = vunpack.c.l.s4 1966171168
    %v3820 = vunpack.c.0.s8 %v3819
    %v3821 = vlaneseq
    %v3822 = vshrl.u32 %v3821, 7
    %v3823 = vsub.s32 %v3820, %v3822
    %v3824 = vrot.slane %v3802, %v3823
    %v3826 = vunpack.c.l.s4 1966171168
    %v3827 = vunpack.c.0.s8 %v3826
    %v3828 = vlaneseq
    %v3829 = vshrl.u32 %v3828, 7
    %v3830 = vsub.s32 %v3827, %v3829
    %v3831 = vrot.slane %v3803, %v3830
    %v3832 = vcombine.low %v3810, %v3817
    %v3833 = vcombine.low %v3824, %v3831
    %v3835 = vunpack.c.l.s4 1966171168
    %v3836 = vunpack.c.0.s8 %v3835
    %v3837 = vlaneseq
    %v3838 = vshrl.u32 %v3837, 7
    %v3839 = vsub.s32 %v3836, %v3838
    %v3840 = vrot.slane %v3832, %v3839
    %v3842 = vunpack.c.l.s4 1966171168
    %v3843 = vunpack.c.0.s8 %v3842
    %v3844 = vlaneseq
    %v3845 = vshrl.u32 %v3844, 7
    %v3846 = vsub.s32 %v3843, %v3845
    %v3847 = vrot.slane %v3833, %v3846
    %v3848 = vcombine.low %v3840, %v3847
    %v3849 = vcombine.low %v3713, %v3728
    %v3850 = vcombine.low %v3735, %v3736
    %v3851 = vcombine.low %v3751, %v3758
    %v3852 = vcombine.low %v3759, %v3774
    %v3854 = vunpack.c.l.s4 1966171168
    %v3855 = vunpack.c.0.s8 %v3854
    %v3856 = vlaneseq
    %v3857 = vshrl.u32 %v3856, 7
    %v3858 = vsub.s32 %v3855, %v3857
    %v3859 = vrot.slane %v3849, %v3858
    %v3861 = vunpack.c.l.s4 1966171168
    %v3862 = vunpack.c.0.s8 %v3861
    %v3863 = vlaneseq
    %v3864 = vshrl.u32 %v3863, 7
    %v3865 = vsub.s32 %v3862, %v3864
    %v3866 = vrot.slane %v3850, %v3865
    %v3868 = vunpack.c.l.s4 1966171168
    %v3869 = vunpack.c.0.s8 %v3868
    %v3870 = vlaneseq
    %v3871 = vshrl.u32 %v3870, 7
    %v3872 = vsub.s32 %v3869, %v3871
    %v3873 = vrot.slane %v3851, %v3872
    %v3875 = vunpack.c.l.s4 1966171168
    %v3876 = vunpack.c.0.s8 %v3875
    %v3877 = vlaneseq
    %v3878 = vshrl.u32 %v3877, 7
    %v3879 = vsub.s32 %v3876, %v3878
    %v3880 = vrot.slane %v3852, %v3879
    %v3881 = vcombine.low %v3859, %v3866
    %v3882 = vcombine.low %v3873, %v3880
    %v3884 = vunpack.c.l.s4 1966171168
    %v3885 = vunpack.c.0.s8 %v3884
    %v3886 = vlaneseq
    %v3887 = vshrl.u32 %v3886, 7
    %v3888 = vsub.s32 %v3885, %v3887
    %v3889 = vrot.slane %v3881, %v3888
    %v3891 = vunpack.c.l.s4 1966171168
    %v3892 = vunpack.c.0.s8 %v3891
    %v3893 = vlaneseq
    %v3894 = vshrl.u32 %v3893, 7
    %v3895 = vsub.s32 %v3892, %v3894
    %v3896 = vrot.slane %v3882, %v3895
    %v3897 = vcombine.low %v3889, %v3896
    %v3898 = vcombine.low %v3781, %v3782
    %v3900 = vunpack.c.l.s4 1966171168
    %v3901 = vunpack.c.0.s8 %v3900
    %v3902 = vlaneseq
    %v3903 = vshrl.u32 %v3902, 7
    %v3904 = vsub.s32 %v3901, %v3903
    %v3905 = vrot.slane %v3898, %v3904
    %v3907 = vunpack.c.l.s4 1966171168
    %v3908 = vunpack.c.0.s8 %v3907
    %v3909 = vlaneseq
    %v3910 = vshrl.u32 %v3909, 7
    %v3911 = vsub.s32 %v3908, %v3910
    %v3912 = vrot.slane %v3905, %v3911
    %3916 = vmatprep.subr.mxu0 0.0
    %3917 = vmatpush1.msra.mxu0 %v3799
    %3918 = vmatprep.subr.mxu0 0.0
    %3919 = vmatpush1.msra.mxu0 %v3798
    %3920 = vmatprep.subr.mxu0 0.0
    %3921 = vmatpush1.msra.mxu0 %v3797
    %3922 = vmatprep.subr.mxu0 0.0
    %3923 = vmatpush1.msra.mxu0 %v3796
    %3924 = vmatprep.subr.mxu0 0.0
    %3925 = vmatpush1.msra.mxu0 %v3795
    %3926 = vmatprep.subr.mxu0 0.0
    %3927 = vmatpush1.msra.mxu0 %v3794
    %3928 = vmatprep.subr.mxu0 0.0
    %3929 = vmatpush1.msra.mxu0 %v3793
    %3930 = vmatprep.subr.mxu0 0.0
    %3931 = vmatpush1.msra.mxu0 %v3792
    %3932 = vmatprep.subr.mxu0 0.0
    %3933 = vmatpush1.msra.mxu0 %v3791
    %3934 = vmatprep.subr.mxu0 0.0
    %3935 = vmatpush1.msra.mxu0 %v3790
    %3936 = vmatprep.subr.mxu0 0.0
    %3937 = vmatpush1.msra.mxu0 %v3789
    %3938 = vmatprep.subr.mxu0 0.0
    %3939 = vmatpush1.msra.mxu0 %v3788
    %3940 = vmatprep.subr.mxu0 0.0
    %3941 = vmatpush1.msra.mxu0 %v3787
    %3942 = vmatprep.subr.mxu0 0.0
    %3943 = vmatpush1.msra.mxu0 %v3786
    %3944 = vmatprep.subr.mxu0 0.0
    %3945 = vmatpush1.msra.mxu0 %v3785
    %3946 = vmatprep.subr.mxu0 0.0
    %3947 = vmatpush1.msra.mxu0 %v3784
    %3948 = vmatprep.subr.mxu0 0.0
    %3949 = vmatpush2.msra.mxu0 0.0
    %3950 = vmatprep.subr.mxu0 0.0
    %3951 = vmatpush2.msra.mxu0 0.0
    %3952 = vmatprep.subr.mxu0 0.0
    %3953 = vmatpush2.msra.mxu0 0.0
    %3954 = vmatprep.subr.mxu0 0.0
    %3955 = vmatpush2.msra.mxu0 0.0
    %3956 = vmatprep.subr.mxu0 0.0
    %3957 = vmatpush2.msra.mxu0 0.0
    %3958 = vmatprep.subr.mxu0 0.0
    %3959 = vmatpush2.msra.mxu0 0.0
    %3960 = vmatprep.subr.mxu0 0.0
    %3961 = vmatpush2.msra.mxu0 0.0
    %3962 = vmatprep.subr.mxu0 0.0
    %3963 = vmatpush2.msra.mxu0 0.0
    %3964 = vmatprep.subr.mxu0 0.0
    %3965 = vmatpush2.msra.mxu0 0.0
    %3966 = vmatprep.subr.mxu0 0.0
    %3967 = vmatpush2.msra.mxu0 0.0
    %3968 = vmatprep.subr.mxu0 0.0
    %3969 = vmatpush2.msra.mxu0 0.0
    %3970 = vmatprep.subr.mxu0 0.0
    %3971 = vmatpush2.msra.mxu0 0.0
    %3972 = vmatprep.subr.mxu0 0.0
    %3973 = vmatpush2.msra.mxu0 0.0
    %3974 = vmatprep.subr.mxu0 0.0
    %3975 = vmatpush2.msra.mxu0 0.0
    %3976 = vmatprep.subr.mxu0 0.0
    %3977 = vmatpush2.msra.mxu0 0.0
    %3978 = vmatprep.subr.mxu0 0.0
    %3979 = vmatpush2.msra.mxu0 0.0
    %3980 = vmatprep.mubr.f32.mxu0 0.0
    %3981 = vmatmul.mubr.f32.gmra.mxu0 %v3848
    %v3982 = vpop.f32.mrf.mxu0
    %v3983 = vadd.f32 0.0, %v3982
    %v3984 = vpop.f32.mrf.mxu0
    %3985 = vmatprep.mubr.f32.mxu0 0.0
    %3986 = vmatmul.mubr.f32.gmra.mxu0 %v3897
    %v3987 = vpop.f32.mrf.mxu0
    %v3988 = vadd.f32 0.0, %v3987
    %v3989 = vpop.f32.mrf.mxu0
    %3990 = vmatprep.mubr.f32.mxu0 0.0
    %3991 = vmatmul.mubr.f32.gmra.mxu0 %v3912
    %v3992 = vpop.f32.mrf.mxu0
    %v3993 = vadd.f32 0.0, %v3992
    %v3994 = vpop.f32.mrf.mxu0
    %3995 = vdwg.mxu0
    %v3996 = vadd.f32 %v3624, %v3983
    %v3997 = vadd.f32 %v3625, %v3988
    %v3998 = vadd.f32 %v3626, %v3993
    %s3999 = scalar_lea.vmem %s3255, 2 [#allocation2]
    %v4000 = vld [vmem:[%s3999] ss:$2 sm:$0x7]
    %s4001 = scalar_lea.vmem %s3255, 18 [#allocation2]
    %v4002 = vld [vmem:[%s4001] ss:$2 sm:$0x7]
    %s4003 = scalar_lea.vmem %s3255, 34 [#allocation2]
    %v4004 = vld [vmem:[%s4003] ss:$2 sm:$0x7]
    %s4005 = scalar_lea.vmem %s3255, 66 [#allocation2]
    %v4006 = vld [vmem:[%s4005] ss:$2 sm:$0x7]
    %s4007 = scalar_lea.vmem %s3255, 82 [#allocation2]
    %v4008 = vld [vmem:[%s4007] ss:$2 sm:$0x7]
    %s4009 = scalar_lea.vmem %s3255, 98 [#allocation2]
    %v4010 = vld [vmem:[%s4009] ss:$2 sm:$0x7]
    %v4018 = vunpack.c.l.s4 1966171168
    %v4019 = vunpack.c.0.s8 %v4018
    %v4020 = vlaneseq
    %v4021 = vshrl.u32 %v4020, 7
    %v4022 = vsub.s32 %v4019, %v4021
    %v4023 = vrot.slane %v4000, %v4022
    %v4024 = vcombine.high %v4023, %v4023
    %v4026 = vunpack.c.l.s4 1966171168
    %v4027 = vunpack.c.0.s8 %v4026
    %v4028 = vlaneseq
    %v4029 = vshrl.u32 %v4028, 7
    %v4030 = vsub.s32 %v4027, %v4029
    %v4031 = vrot.slane %v4023, %v4030
    %v4033 = vunpack.c.l.s4 1966171168
    %v4034 = vunpack.c.0.s8 %v4033
    %v4035 = vlaneseq
    %v4036 = vshrl.u32 %v4035, 7
    %v4037 = vsub.s32 %v4034, %v4036
    %v4038 = vrot.slane %v4024, %v4037
    %v4039 = vcombine.high %v4031, %v4031
    %v4041 = vunpack.c.l.s4 1966171168
    %v4042 = vunpack.c.0.s8 %v4041
    %v4043 = vlaneseq
    %v4044 = vshrl.u32 %v4043, 7
    %v4045 = vsub.s32 %v4042, %v4044
    %v4046 = vrot.slane %v4002, %v4045
    %v4047 = vcombine.high %v4046, %v4046
    %v4049 = vunpack.c.l.s4 1966171168
    %v4050 = vunpack.c.0.s8 %v4049
    %v4051 = vlaneseq
    %v4052 = vshrl.u32 %v4051, 7
    %v4053 = vsub.s32 %v4050, %v4052
    %v4054 = vrot.slane %v4046, %v4053
    %v4056 = vunpack.c.l.s4 1966171168
    %v4057 = vunpack.c.0.s8 %v4056
    %v4058 = vlaneseq
    %v4059 = vshrl.u32 %v4058, 7
    %v4060 = vsub.s32 %v4057, %v4059
    %v4061 = vrot.slane %v4047, %v4060
    %v4062 = vcombine.high %v4054, %v4054
    %v4064 = vunpack.c.l.s4 1966171168
    %v4065 = vunpack.c.0.s8 %v4064
    %v4066 = vlaneseq
    %v4067 = vshrl.u32 %v4066, 7
    %v4068 = vsub.s32 %v4065, %v4067
    %v4069 = vrot.slane %v4004, %v4068
    %v4070 = vcombine.high %v4069, %v4069
    %v4072 = vunpack.c.l.s4 1966171168
    %v4073 = vunpack.c.0.s8 %v4072
    %v4074 = vlaneseq
    %v4075 = vshrl.u32 %v4074, 7
    %v4076 = vsub.s32 %v4073, %v4075
    %v4077 = vrot.slane %v4069, %v4076
    %v4079 = vunpack.c.l.s4 1966171168
    %v4080 = vunpack.c.0.s8 %v4079
    %v4081 = vlaneseq
    %v4082 = vshrl.u32 %v4081, 7
    %v4083 = vsub.s32 %v4080, %v4082
    %v4084 = vrot.slane %v4070, %v4083
    %v4085 = vcombine.high %v4077, %v4077
    %v4087 = vunpack.c.l.s4 1966171168
    %v4088 = vunpack.c.0.s8 %v4087
    %v4089 = vlaneseq
    %v4090 = vshrl.u32 %v4089, 7
    %v4091 = vsub.s32 %v4088, %v4090
    %v4092 = vrot.slane %v4006, %v4091
    %v4093 = vcombine.high %v4092, %v4092
    %v4095 = vunpack.c.l.s4 1966171168
    %v4096 = vunpack.c.0.s8 %v4095
    %v4097 = vlaneseq
    %v4098 = vshrl.u32 %v4097, 7
    %v4099 = vsub.s32 %v4096, %v4098
    %v4100 = vrot.slane %v4092, %v4099
    %v4102 = vunpack.c.l.s4 1966171168
    %v4103 = vunpack.c.0.s8 %v4102
    %v4104 = vlaneseq
    %v4105 = vshrl.u32 %v4104, 7
    %v4106 = vsub.s32 %v4103, %v4105
    %v4107 = vrot.slane %v4093, %v4106
    %v4108 = vcombine.high %v4100, %v4100
    %v4110 = vunpack.c.l.s4 1966171168
    %v4111 = vunpack.c.0.s8 %v4110
    %v4112 = vlaneseq
    %v4113 = vshrl.u32 %v4112, 7
    %v4114 = vsub.s32 %v4111, %v4113
    %v4115 = vrot.slane %v4008, %v4114
    %v4116 = vcombine.high %v4115, %v4115
    %v4118 = vunpack.c.l.s4 1966171168
    %v4119 = vunpack.c.0.s8 %v4118
    %v4120 = vlaneseq
    %v4121 = vshrl.u32 %v4120, 7
    %v4122 = vsub.s32 %v4119, %v4121
    %v4123 = vrot.slane %v4115, %v4122
    %v4125 = vunpack.c.l.s4 1966171168
    %v4126 = vunpack.c.0.s8 %v4125
    %v4127 = vlaneseq
    %v4128 = vshrl.u32 %v4127, 7
    %v4129 = vsub.s32 %v4126, %v4128
    %v4130 = vrot.slane %v4116, %v4129
    %v4131 = vcombine.high %v4123, %v4123
    %v4133 = vunpack.c.l.s4 1966171168
    %v4134 = vunpack.c.0.s8 %v4133
    %v4135 = vlaneseq
    %v4136 = vshrl.u32 %v4135, 7
    %v4137 = vsub.s32 %v4134, %v4136
    %v4138 = vrot.slane %v4010, %v4137
    %v4139 = vcombine.high %v4138, %v4138
    %v4141 = vunpack.c.l.s4 1966171168
    %v4142 = vunpack.c.0.s8 %v4141
    %v4143 = vlaneseq
    %v4144 = vshrl.u32 %v4143, 7
    %v4145 = vsub.s32 %v4142, %v4144
    %v4146 = vrot.slane %v4138, %v4145
    %v4148 = vunpack.c.l.s4 1966171168
    %v4149 = vunpack.c.0.s8 %v4148
    %v4150 = vlaneseq
    %v4151 = vshrl.u32 %v4150, 7
    %v4152 = vsub.s32 %v4149, %v4151
    %v4153 = vrot.slane %v4139, %v4152
    %v4154 = vcombine.high %v4146, %v4146
    %s4155 = scalar_lea.vmem %s3, 1280
    %v4156 = vld [vmem:[%s4155] sm:$0xff]
    %v4157 = vld [vmem:[%s4155 + $0x8] sm:$0xff]
    %v4158 = vld [vmem:[%s4155 + $0x10] sm:$0xff]
    %v4159 = vld [vmem:[%s4155 + $0x18] sm:$0xff]
    %v4160 = vld [vmem:[%s4155 + $0x20] sm:$0xff]
    %v4161 = vld [vmem:[%s4155 + $0x28] sm:$0xff]
    %v4162 = vld [vmem:[%s4155 + $0x30] sm:$0xff]
    %v4163 = vld [vmem:[%s4155 + $0x38] sm:$0xff]
    %v4164 = vld [vmem:[%s4155 + $0x40] sm:$0xff]
    %v4165 = vld [vmem:[%s4155 + $0x48] sm:$0xff]
    %v4166 = vld [vmem:[%s4155 + $0x50] sm:$0xff]
    %v4167 = vld [vmem:[%s4155 + $0x58] sm:$0xff]
    %v4168 = vld [vmem:[%s4155 + $0x60] sm:$0xff]
    %v4169 = vld [vmem:[%s4155 + $0x68] sm:$0xff]
    %v4170 = vld [vmem:[%s4155 + $0x70] sm:$0xff]
    %v4171 = vld [vmem:[%s4155 + $0x78] sm:$0xff]
    %v4172 = vcombine.low %v4031, %v4038
    %v4173 = vcombine.low %v4039, %v4054
    %v4174 = vcombine.low %v4061, %v4062
    %v4175 = vcombine.low %v4077, %v4084
    %v4177 = vunpack.c.l.s4 1966171168
    %v4178 = vunpack.c.0.s8 %v4177
    %v4179 = vlaneseq
    %v4180 = vshrl.u32 %v4179, 7
    %v4181 = vsub.s32 %v4178, %v4180
    %v4182 = vrot.slane %v4172, %v4181
    %v4184 = vunpack.c.l.s4 1966171168
    %v4185 = vunpack.c.0.s8 %v4184
    %v4186 = vlaneseq
    %v4187 = vshrl.u32 %v4186, 7
    %v4188 = vsub.s32 %v4185, %v4187
    %v4189 = vrot.slane %v4173, %v4188
    %v4191 = vunpack.c.l.s4 1966171168
    %v4192 = vunpack.c.0.s8 %v4191
    %v4193 = vlaneseq
    %v4194 = vshrl.u32 %v4193, 7
    %v4195 = vsub.s32 %v4192, %v4194
    %v4196 = vrot.slane %v4174, %v4195
    %v4198 = vunpack.c.l.s4 1966171168
    %v4199 = vunpack.c.0.s8 %v4198
    %v4200 = vlaneseq
    %v4201 = vshrl.u32 %v4200, 7
    %v4202 = vsub.s32 %v4199, %v4201
    %v4203 = vrot.slane %v4175, %v4202
    %v4204 = vcombine.low %v4182, %v4189
    %v4205 = vcombine.low %v4196, %v4203
    %v4207 = vunpack.c.l.s4 1966171168
    %v4208 = vunpack.c.0.s8 %v4207
    %v4209 = vlaneseq
    %v4210 = vshrl.u32 %v4209, 7
    %v4211 = vsub.s32 %v4208, %v4210
    %v4212 = vrot.slane %v4204, %v4211
    %v4214 = vunpack.c.l.s4 1966171168
    %v4215 = vunpack.c.0.s8 %v4214
    %v4216 = vlaneseq
    %v4217 = vshrl.u32 %v4216, 7
    %v4218 = vsub.s32 %v4215, %v4217
    %v4219 = vrot.slane %v4205, %v4218
    %v4220 = vcombine.low %v4212, %v4219
    %v4221 = vcombine.low %v4085, %v4100
    %v4222 = vcombine.low %v4107, %v4108
    %v4223 = vcombine.low %v4123, %v4130
    %v4224 = vcombine.low %v4131, %v4146
    %v4226 = vunpack.c.l.s4 1966171168
    %v4227 = vunpack.c.0.s8 %v4226
    %v4228 = vlaneseq
    %v4229 = vshrl.u32 %v4228, 7
    %v4230 = vsub.s32 %v4227, %v4229
    %v4231 = vrot.slane %v4221, %v4230
    %v4233 = vunpack.c.l.s4 1966171168
    %v4234 = vunpack.c.0.s8 %v4233
    %v4235 = vlaneseq
    %v4236 = vshrl.u32 %v4235, 7
    %v4237 = vsub.s32 %v4234, %v4236
    %v4238 = vrot.slane %v4222, %v4237
    %v4240 = vunpack.c.l.s4 1966171168
    %v4241 = vunpack.c.0.s8 %v4240
    %v4242 = vlaneseq
    %v4243 = vshrl.u32 %v4242, 7
    %v4244 = vsub.s32 %v4241, %v4243
    %v4245 = vrot.slane %v4223, %v4244
    %v4247 = vunpack.c.l.s4 1966171168
    %v4248 = vunpack.c.0.s8 %v4247
    %v4249 = vlaneseq
    %v4250 = vshrl.u32 %v4249, 7
    %v4251 = vsub.s32 %v4248, %v4250
    %v4252 = vrot.slane %v4224, %v4251
    %v4253 = vcombine.low %v4231, %v4238
    %v4254 = vcombine.low %v4245, %v4252
    %v4256 = vunpack.c.l.s4 1966171168
    %v4257 = vunpack.c.0.s8 %v4256
    %v4258 = vlaneseq
    %v4259 = vshrl.u32 %v4258, 7
    %v4260 = vsub.s32 %v4257, %v4259
    %v4261 = vrot.slane %v4253, %v4260
    %v4263 = vunpack.c.l.s4 1966171168
    %v4264 = vunpack.c.0.s8 %v4263
    %v4265 = vlaneseq
    %v4266 = vshrl.u32 %v4265, 7
    %v4267 = vsub.s32 %v4264, %v4266
    %v4268 = vrot.slane %v4254, %v4267
    %v4269 = vcombine.low %v4261, %v4268
    %v4270 = vcombine.low %v4153, %v4154
    %v4272 = vunpack.c.l.s4 1966171168
    %v4273 = vunpack.c.0.s8 %v4272
    %v4274 = vlaneseq
    %v4275 = vshrl.u32 %v4274, 7
    %v4276 = vsub.s32 %v4273, %v4275
    %v4277 = vrot.slane %v4270, %v4276
    %v4279 = vunpack.c.l.s4 1966171168
    %v4280 = vunpack.c.0.s8 %v4279
    %v4281 = vlaneseq
    %v4282 = vshrl.u32 %v4281, 7
    %v4283 = vsub.s32 %v4280, %v4282
    %v4284 = vrot.slane %v4277, %v4283
    %4288 = vmatprep.subr.mxu0 0.0
    %4289 = vmatpush1.msra.mxu0 %v4171
    %4290 = vmatprep.subr.mxu0 0.0
    %4291 = vmatpush1.msra.mxu0 %v4170
    %4292 = vmatprep.subr.mxu0 0.0
    %4293 = vmatpush1.msra.mxu0 %v4169
    %4294 = vmatprep.subr.mxu0 0.0
    %4295 = vmatpush1.msra.mxu0 %v4168
    %4296 = vmatprep.subr.mxu0 0.0
    %4297 = vmatpush1.msra.mxu0 %v4167
    %4298 = vmatprep.subr.mxu0 0.0
    %4299 = vmatpush1.msra.mxu0 %v4166
    %4300 = vmatprep.subr.mxu0 0.0
    %4301 = vmatpush1.msra.mxu0 %v4165
    %4302 = vmatprep.subr.mxu0 0.0
    %4303 = vmatpush1.msra.mxu0 %v4164
    %4304 = vmatprep.subr.mxu0 0.0
    %4305 = vmatpush1.msra.mxu0 %v4163
    %4306 = vmatprep.subr.mxu0 0.0
    %4307 = vmatpush1.msra.mxu0 %v4162
    %4308 = vmatprep.subr.mxu0 0.0
    %4309 = vmatpush1.msra.mxu0 %v4161
    %4310 = vmatprep.subr.mxu0 0.0
    %4311 = vmatpush1.msra.mxu0 %v4160
    %4312 = vmatprep.subr.mxu0 0.0
    %4313 = vmatpush1.msra.mxu0 %v4159
    %4314 = vmatprep.subr.mxu0 0.0
    %4315 = vmatpush1.msra.mxu0 %v4158
    %4316 = vmatprep.subr.mxu0 0.0
    %4317 = vmatpush1.msra.mxu0 %v4157
    %4318 = vmatprep.subr.mxu0 0.0
    %4319 = vmatpush1.msra.mxu0 %v4156
    %4320 = vmatprep.subr.mxu0 0.0
    %4321 = vmatpush2.msra.mxu0 0.0
    %4322 = vmatprep.subr.mxu0 0.0
    %4323 = vmatpush2.msra.mxu0 0.0
    %4324 = vmatprep.subr.mxu0 0.0
    %4325 = vmatpush2.msra.mxu0 0.0
    %4326 = vmatprep.subr.mxu0 0.0
    %4327 = vmatpush2.msra.mxu0 0.0
    %4328 = vmatprep.subr.mxu0 0.0
    %4329 = vmatpush2.msra.mxu0 0.0
    %4330 = vmatprep.subr.mxu0 0.0
    %4331 = vmatpush2.msra.mxu0 0.0
    %4332 = vmatprep.subr.mxu0 0.0
    %4333 = vmatpush2.msra.mxu0 0.0
    %4334 = vmatprep.subr.mxu0 0.0
    %4335 = vmatpush2.msra.mxu0 0.0
    %4336 = vmatprep.subr.mxu0 0.0
    %4337 = vmatpush2.msra.mxu0 0.0
    %4338 = vmatprep.subr.mxu0 0.0
    %4339 = vmatpush2.msra.mxu0 0.0
    %4340 = vmatprep.subr.mxu0 0.0
    %4341 = vmatpush2.msra.mxu0 0.0
    %4342 = vmatprep.subr.mxu0 0.0
    %4343 = vmatpush2.msra.mxu0 0.0
    %4344 = vmatprep.subr.mxu0 0.0
    %4345 = vmatpush2.msra.mxu0 0.0
    %4346 = vmatprep.subr.mxu0 0.0
    %4347 = vmatpush2.msra.mxu0 0.0
    %4348 = vmatprep.subr.mxu0 0.0
    %4349 = vmatpush2.msra.mxu0 0.0
    %4350 = vmatprep.subr.mxu0 0.0
    %4351 = vmatpush2.msra.mxu0 0.0
    %4352 = vmatprep.mubr.f32.mxu0 0.0
    %4353 = vmatmul.mubr.f32.gmra.mxu0 %v4220
    %v4354 = vpop.f32.mrf.mxu0
    %v4355 = vadd.f32 0.0, %v4354
    %v4356 = vpop.f32.mrf.mxu0
    %4357 = vmatprep.mubr.f32.mxu0 0.0
    %4358 = vmatmul.mubr.f32.gmra.mxu0 %v4269
    %v4359 = vpop.f32.mrf.mxu0
    %v4360 = vadd.f32 0.0, %v4359
    %v4361 = vpop.f32.mrf.mxu0
    %4362 = vmatprep.mubr.f32.mxu0 0.0
    %4363 = vmatmul.mubr.f32.gmra.mxu0 %v4284
    %v4364 = vpop.f32.mrf.mxu0
    %v4365 = vadd.f32 0.0, %v4364
    %v4366 = vpop.f32.mrf.mxu0
    %4367 = vdwg.mxu0
    %v4368 = vadd.f32 %v3996, %v4355
    %v4369 = vadd.f32 %v3997, %v4360
    %v4370 = vadd.f32 %v3998, %v4365
    %s4371 = scalar_lea.vmem %s3255, 3 [#allocation2]
    %v4372 = vld [vmem:[%s4371] ss:$2 sm:$0x7]
    %s4373 = scalar_lea.vmem %s3255, 19 [#allocation2]
    %v4374 = vld [vmem:[%s4373] ss:$2 sm:$0x7]
    %s4375 = scalar_lea.vmem %s3255, 35 [#allocation2]
    %v4376 = vld [vmem:[%s4375] ss:$2 sm:$0x7]
    %s4377 = scalar_lea.vmem %s3255, 67 [#allocation2]
    %v4378 = vld [vmem:[%s4377] ss:$2 sm:$0x7]
    %s4379 = scalar_lea.vmem %s3255, 83 [#allocation2]
    %v4380 = vld [vmem:[%s4379] ss:$2 sm:$0x7]
    %s4381 = scalar_lea.vmem %s3255, 99 [#allocation2]
    %v4382 = vld [vmem:[%s4381] ss:$2 sm:$0x7]
    %v4390 = vunpack.c.l.s4 1966171168
    %v4391 = vunpack.c.0.s8 %v4390
    %v4392 = vlaneseq
    %v4393 = vshrl.u32 %v4392, 7
    %v4394 = vsub.s32 %v4391, %v4393
    %v4395 = vrot.slane %v4372, %v4394
    %v4396 = vcombine.high %v4395, %v4395
    %v4398 = vunpack.c.l.s4 1966171168
    %v4399 = vunpack.c.0.s8 %v4398
    %v4400 = vlaneseq
    %v4401 = vshrl.u32 %v4400, 7
    %v4402 = vsub.s32 %v4399, %v4401
    %v4403 = vrot.slane %v4395, %v4402
    %v4405 = vunpack.c.l.s4 1966171168
    %v4406 = vunpack.c.0.s8 %v4405
    %v4407 = vlaneseq
    %v4408 = vshrl.u32 %v4407, 7
    %v4409 = vsub.s32 %v4406, %v4408
    %v4410 = vrot.slane %v4396, %v4409
    %v4411 = vcombine.high %v4403, %v4403
    %v4413 = vunpack.c.l.s4 1966171168
    %v4414 = vunpack.c.0.s8 %v4413
    %v4415 = vlaneseq
    %v4416 = vshrl.u32 %v4415, 7
    %v4417 = vsub.s32 %v4414, %v4416
    %v4418 = vrot.slane %v4374, %v4417
    %v4419 = vcombine.high %v4418, %v4418
    %v4421 = vunpack.c.l.s4 1966171168
    %v4422 = vunpack.c.0.s8 %v4421
    %v4423 = vlaneseq
    %v4424 = vshrl.u32 %v4423, 7
    %v4425 = vsub.s32 %v4422, %v4424
    %v4426 = vrot.slane %v4418, %v4425
    %v4428 = vunpack.c.l.s4 1966171168
    %v4429 = vunpack.c.0.s8 %v4428
    %v4430 = vlaneseq
    %v4431 = vshrl.u32 %v4430, 7
    %v4432 = vsub.s32 %v4429, %v4431
    %v4433 = vrot.slane %v4419, %v4432
    %v4434 = vcombine.high %v4426, %v4426
    %v4436 = vunpack.c.l.s4 1966171168
    %v4437 = vunpack.c.0.s8 %v4436
    %v4438 = vlaneseq
    %v4439 = vshrl.u32 %v4438, 7
    %v4440 = vsub.s32 %v4437, %v4439
    %v4441 = vrot.slane %v4376, %v4440
    %v4442 = vcombine.high %v4441, %v4441
    %v4444 = vunpack.c.l.s4 1966171168
    %v4445 = vunpack.c.0.s8 %v4444
    %v4446 = vlaneseq
    %v4447 = vshrl.u32 %v4446, 7
    %v4448 = vsub.s32 %v4445, %v4447
    %v4449 = vrot.slane %v4441, %v4448
    %v4451 = vunpack.c.l.s4 1966171168
    %v4452 = vunpack.c.0.s8 %v4451
    %v4453 = vlaneseq
    %v4454 = vshrl.u32 %v4453, 7
    %v4455 = vsub.s32 %v4452, %v4454
    %v4456 = vrot.slane %v4442, %v4455
    %v4457 = vcombine.high %v4449, %v4449
    %v4459 = vunpack.c.l.s4 1966171168
    %v4460 = vunpack.c.0.s8 %v4459
    %v4461 = vlaneseq
    %v4462 = vshrl.u32 %v4461, 7
    %v4463 = vsub.s32 %v4460, %v4462
    %v4464 = vrot.slane %v4378, %v4463
    %v4465 = vcombine.high %v4464, %v4464
    %v4467 = vunpack.c.l.s4 1966171168
    %v4468 = vunpack.c.0.s8 %v4467
    %v4469 = vlaneseq
    %v4470 = vshrl.u32 %v4469, 7
    %v4471 = vsub.s32 %v4468, %v4470
    %v4472 = vrot.slane %v4464, %v4471
    %v4474 = vunpack.c.l.s4 1966171168
    %v4475 = vunpack.c.0.s8 %v4474
    %v4476 = vlaneseq
    %v4477 = vshrl.u32 %v4476, 7
    %v4478 = vsub.s32 %v4475, %v4477
    %v4479 = vrot.slane %v4465, %v4478
    %v4480 = vcombine.high %v4472, %v4472
    %v4482 = vunpack.c.l.s4 1966171168
    %v4483 = vunpack.c.0.s8 %v4482
    %v4484 = vlaneseq
    %v4485 = vshrl.u32 %v4484, 7
    %v4486 = vsub.s32 %v4483, %v4485
    %v4487 = vrot.slane %v4380, %v4486
    %v4488 = vcombine.high %v4487, %v4487
    %v4490 = vunpack.c.l.s4 1966171168
    %v4491 = vunpack.c.0.s8 %v4490
    %v4492 = vlaneseq
    %v4493 = vshrl.u32 %v4492, 7
    %v4494 = vsub.s32 %v4491, %v4493
    %v4495 = vrot.slane %v4487, %v4494
    %v4497 = vunpack.c.l.s4 1966171168
    %v4498 = vunpack.c.0.s8 %v4497
    %v4499 = vlaneseq
    %v4500 = vshrl.u32 %v4499, 7
    %v4501 = vsub.s32 %v4498, %v4500
    %v4502 = vrot.slane %v4488, %v4501
    %v4503 = vcombine.high %v4495, %v4495
    %v4505 = vunpack.c.l.s4 1966171168
    %v4506 = vunpack.c.0.s8 %v4505
    %v4507 = vlaneseq
    %v4508 = vshrl.u32 %v4507, 7
    %v4509 = vsub.s32 %v4506, %v4508
    %v4510 = vrot.slane %v4382, %v4509
    %v4511 = vcombine.high %v4510, %v4510
    %v4513 = vunpack.c.l.s4 1966171168
    %v4514 = vunpack.c.0.s8 %v4513
    %v4515 = vlaneseq
    %v4516 = vshrl.u32 %v4515, 7
    %v4517 = vsub.s32 %v4514, %v4516
    %v4518 = vrot.slane %v4510, %v4517
    %v4520 = vunpack.c.l.s4 1966171168
    %v4521 = vunpack.c.0.s8 %v4520
    %v4522 = vlaneseq
    %v4523 = vshrl.u32 %v4522, 7
    %v4524 = vsub.s32 %v4521, %v4523
    %v4525 = vrot.slane %v4511, %v4524
    %v4526 = vcombine.high %v4518, %v4518
    %s4527 = scalar_lea.vmem %s3, 1408
    %v4528 = vld [vmem:[%s4527] sm:$0xff]
    %v4529 = vld [vmem:[%s4527 + $0x8] sm:$0xff]
    %v4530 = vld [vmem:[%s4527 + $0x10] sm:$0xff]
    %v4531 = vld [vmem:[%s4527 + $0x18] sm:$0xff]
    %v4532 = vld [vmem:[%s4527 + $0x20] sm:$0xff]
    %v4533 = vld [vmem:[%s4527 + $0x28] sm:$0xff]
    %v4534 = vld [vmem:[%s4527 + $0x30] sm:$0xff]
    %v4535 = vld [vmem:[%s4527 + $0x38] sm:$0xff]
    %v4536 = vld [vmem:[%s4527 + $0x40] sm:$0xff]
    %v4537 = vld [vmem:[%s4527 + $0x48] sm:$0xff]
    %v4538 = vld [vmem:[%s4527 + $0x50] sm:$0xff]
    %v4539 = vld [vmem:[%s4527 + $0x58] sm:$0xff]
    %v4540 = vld [vmem:[%s4527 + $0x60] sm:$0xff]
    %v4541 = vld [vmem:[%s4527 + $0x68] sm:$0xff]
    %v4542 = vld [vmem:[%s4527 + $0x70] sm:$0xff]
    %v4543 = vld [vmem:[%s4527 + $0x78] sm:$0xff]
    %v4544 = vcombine.low %v4403, %v4410
    %v4545 = vcombine.low %v4411, %v4426
    %v4546 = vcombine.low %v4433, %v4434
    %v4547 = vcombine.low %v4449, %v4456
    %v4549 = vunpack.c.l.s4 1966171168
    %v4550 = vunpack.c.0.s8 %v4549
    %v4551 = vlaneseq
    %v4552 = vshrl.u32 %v4551, 7
    %v4553 = vsub.s32 %v4550, %v4552
    %v4554 = vrot.slane %v4544, %v4553
    %v4556 = vunpack.c.l.s4 1966171168
    %v4557 = vunpack.c.0.s8 %v4556
    %v4558 = vlaneseq
    %v4559 = vshrl.u32 %v4558, 7
    %v4560 = vsub.s32 %v4557, %v4559
    %v4561 = vrot.slane %v4545, %v4560
    %v4563 = vunpack.c.l.s4 1966171168
    %v4564 = vunpack.c.0.s8 %v4563
    %v4565 = vlaneseq
    %v4566 = vshrl.u32 %v4565, 7
    %v4567 = vsub.s32 %v4564, %v4566
    %v4568 = vrot.slane %v4546, %v4567
    %v4570 = vunpack.c.l.s4 1966171168
    %v4571 = vunpack.c.0.s8 %v4570
    %v4572 = vlaneseq
    %v4573 = vshrl.u32 %v4572, 7
    %v4574 = vsub.s32 %v4571, %v4573
    %v4575 = vrot.slane %v4547, %v4574
    %v4576 = vcombine.low %v4554, %v4561
    %v4577 = vcombine.low %v4568, %v4575
    %v4579 = vunpack.c.l.s4 1966171168
    %v4580 = vunpack.c.0.s8 %v4579
    %v4581 = vlaneseq
    %v4582 = vshrl.u32 %v4581, 7
    %v4583 = vsub.s32 %v4580, %v4582
    %v4584 = vrot.slane %v4576, %v4583
    %v4586 = vunpack.c.l.s4 1966171168
    %v4587 = vunpack.c.0.s8 %v4586
    %v4588 = vlaneseq
    %v4589 = vshrl.u32 %v4588, 7
    %v4590 = vsub.s32 %v4587, %v4589
    %v4591 = vrot.slane %v4577, %v4590
    %v4592 = vcombine.low %v4584, %v4591
    %v4593 = vcombine.low %v4457, %v4472
    %v4594 = vcombine.low %v4479, %v4480
    %v4595 = vcombine.low %v4495, %v4502
    %v4596 = vcombine.low %v4503, %v4518
    %v4598 = vunpack.c.l.s4 1966171168
    %v4599 = vunpack.c.0.s8 %v4598
    %v4600 = vlaneseq
    %v4601 = vshrl.u32 %v4600, 7
    %v4602 = vsub.s32 %v4599, %v4601
    %v4603 = vrot.slane %v4593, %v4602
    %v4605 = vunpack.c.l.s4 1966171168
    %v4606 = vunpack.c.0.s8 %v4605
    %v4607 = vlaneseq
    %v4608 = vshrl.u32 %v4607, 7
    %v4609 = vsub.s32 %v4606, %v4608
    %v4610 = vrot.slane %v4594, %v4609
    %v4612 = vunpack.c.l.s4 1966171168
    %v4613 = vunpack.c.0.s8 %v4612
    %v4614 = vlaneseq
    %v4615 = vshrl.u32 %v4614, 7
    %v4616 = vsub.s32 %v4613, %v4615
    %v4617 = vrot.slane %v4595, %v4616
    %v4619 = vunpack.c.l.s4 1966171168
    %v4620 = vunpack.c.0.s8 %v4619
    %v4621 = vlaneseq
    %v4622 = vshrl.u32 %v4621, 7
    %v4623 = vsub.s32 %v4620, %v4622
    %v4624 = vrot.slane %v4596, %v4623
    %v4625 = vcombine.low %v4603, %v4610
    %v4626 = vcombine.low %v4617, %v4624
    %v4628 = vunpack.c.l.s4 1966171168
    %v4629 = vunpack.c.0.s8 %v4628
    %v4630 = vlaneseq
    %v4631 = vshrl.u32 %v4630, 7
    %v4632 = vsub.s32 %v4629, %v4631
    %v4633 = vrot.slane %v4625, %v4632
    %v4635 = vunpack.c.l.s4 1966171168
    %v4636 = vunpack.c.0.s8 %v4635
    %v4637 = vlaneseq
    %v4638 = vshrl.u32 %v4637, 7
    %v4639 = vsub.s32 %v4636, %v4638
    %v4640 = vrot.slane %v4626, %v4639
    %v4641 = vcombine.low %v4633, %v4640
    %v4642 = vcombine.low %v4525, %v4526
    %v4644 = vunpack.c.l.s4 1966171168
    %v4645 = vunpack.c.0.s8 %v4644
    %v4646 = vlaneseq
    %v4647 = vshrl.u32 %v4646, 7
    %v4648 = vsub.s32 %v4645, %v4647
    %v4649 = vrot.slane %v4642, %v4648
    %v4651 = vunpack.c.l.s4 1966171168
    %v4652 = vunpack.c.0.s8 %v4651
    %v4653 = vlaneseq
    %v4654 = vshrl.u32 %v4653, 7
    %v4655 = vsub.s32 %v4652, %v4654
    %v4656 = vrot.slane %v4649, %v4655
    %4660 = vmatprep.subr.mxu0 0.0
    %4661 = vmatpush1.msra.mxu0 %v4543
    %4662 = vmatprep.subr.mxu0 0.0
    %4663 = vmatpush1.msra.mxu0 %v4542
    %4664 = vmatprep.subr.mxu0 0.0
    %4665 = vmatpush1.msra.mxu0 %v4541
    %4666 = vmatprep.subr.mxu0 0.0
    %4667 = vmatpush1.msra.mxu0 %v4540
    %4668 = vmatprep.subr.mxu0 0.0
    %4669 = vmatpush1.msra.mxu0 %v4539
    %4670 = vmatprep.subr.mxu0 0.0
    %4671 = vmatpush1.msra.mxu0 %v4538
    %4672 = vmatprep.subr.mxu0 0.0
    %4673 = vmatpush1.msra.mxu0 %v4537
    %4674 = vmatprep.subr.mxu0 0.0
    %4675 = vmatpush1.msra.mxu0 %v4536
    %4676 = vmatprep.subr.mxu0 0.0
    %4677 = vmatpush1.msra.mxu0 %v4535
    %4678 = vmatprep.subr.mxu0 0.0
    %4679 = vmatpush1.msra.mxu0 %v4534
    %4680 = vmatprep.subr.mxu0 0.0
    %4681 = vmatpush1.msra.mxu0 %v4533
    %4682 = vmatprep.subr.mxu0 0.0
    %4683 = vmatpush1.msra.mxu0 %v4532
    %4684 = vmatprep.subr.mxu0 0.0
    %4685 = vmatpush1.msra.mxu0 %v4531
    %4686 = vmatprep.subr.mxu0 0.0
    %4687 = vmatpush1.msra.mxu0 %v4530
    %4688 = vmatprep.subr.mxu0 0.0
    %4689 = vmatpush1.msra.mxu0 %v4529
    %4690 = vmatprep.subr.mxu0 0.0
    %4691 = vmatpush1.msra.mxu0 %v4528
    %4692 = vmatprep.subr.mxu0 0.0
    %4693 = vmatpush2.msra.mxu0 0.0
    %4694 = vmatprep.subr.mxu0 0.0
    %4695 = vmatpush2.msra.mxu0 0.0
    %4696 = vmatprep.subr.mxu0 0.0
    %4697 = vmatpush2.msra.mxu0 0.0
    %4698 = vmatprep.subr.mxu0 0.0
    %4699 = vmatpush2.msra.mxu0 0.0
    %4700 = vmatprep.subr.mxu0 0.0
    %4701 = vmatpush2.msra.mxu0 0.0
    %4702 = vmatprep.subr.mxu0 0.0
    %4703 = vmatpush2.msra.mxu0 0.0
    %4704 = vmatprep.subr.mxu0 0.0
    %4705 = vmatpush2.msra.mxu0 0.0
    %4706 = vmatprep.subr.mxu0 0.0
    %4707 = vmatpush2.msra.mxu0 0.0
    %4708 = vmatprep.subr.mxu0 0.0
    %4709 = vmatpush2.msra.mxu0 0.0
    %4710 = vmatprep.subr.mxu0 0.0
    %4711 = vmatpush2.msra.mxu0 0.0
    %4712 = vmatprep.subr.mxu0 0.0
    %4713 = vmatpush2.msra.mxu0 0.0
    %4714 = vmatprep.subr.mxu0 0.0
    %4715 = vmatpush2.msra.mxu0 0.0
    %4716 = vmatprep.subr.mxu0 0.0
    %4717 = vmatpush2.msra.mxu0 0.0
    %4718 = vmatprep.subr.mxu0 0.0
    %4719 = vmatpush2.msra.mxu0 0.0
    %4720 = vmatprep.subr.mxu0 0.0
    %4721 = vmatpush2.msra.mxu0 0.0
    %4722 = vmatprep.subr.mxu0 0.0
    %4723 = vmatpush2.msra.mxu0 0.0
    %4724 = vmatprep.mubr.f32.mxu0 0.0
    %4725 = vmatmul.mubr.f32.gmra.mxu0 %v4592
    %v4726 = vpop.f32.mrf.mxu0
    %v4727 = vadd.f32 0.0, %v4726
    %v4728 = vpop.f32.mrf.mxu0
    %4729 = vmatprep.mubr.f32.mxu0 0.0
    %4730 = vmatmul.mubr.f32.gmra.mxu0 %v4641
    %v4731 = vpop.f32.mrf.mxu0
    %v4732 = vadd.f32 0.0, %v4731
    %v4733 = vpop.f32.mrf.mxu0
    %4734 = vmatprep.mubr.f32.mxu0 0.0
    %4735 = vmatmul.mubr.f32.gmra.mxu0 %v4656
    %v4736 = vpop.f32.mrf.mxu0
    %v4737 = vadd.f32 0.0, %v4736
    %v4738 = vpop.f32.mrf.mxu0
    %4739 = vdwg.mxu0
    %v4740 = vadd.f32 %v4368, %v4727
    %v4741 = vadd.f32 %v4369, %v4732
    %v4742 = vadd.f32 %v4370, %v4737
    %s4743 = scalar_lea.vmem [#allocation2], 24
    %v4744 = vld [vmem:[%s4743] ss:$2 sm:$0x7]
    %s4745 = scalar_lea.vmem %s4743, 16 [#allocation2]
    %v4746 = vld [vmem:[%s4745] ss:$2 sm:$0x7]
    %s4747 = scalar_lea.vmem %s4743, 32 [#allocation2]
    %v4748 = vld [vmem:[%s4747] ss:$2 sm:$0x7]
    %s4749 = scalar_lea.vmem %s4743, 64 [#allocation2]
    %v4750 = vld [vmem:[%s4749] ss:$2 sm:$0x7]
    %s4751 = scalar_lea.vmem %s4743, 80 [#allocation2]
    %v4752 = vld [vmem:[%s4751] ss:$2 sm:$0x7]
    %s4753 = scalar_lea.vmem %s4743, 96 [#allocation2]
    %v4754 = vld [vmem:[%s4753] ss:$2 sm:$0x7]
    %v4762 = vunpack.c.l.s4 1966171168
    %v4763 = vunpack.c.0.s8 %v4762
    %v4764 = vlaneseq
    %v4765 = vshrl.u32 %v4764, 7
    %v4766 = vsub.s32 %v4763, %v4765
    %v4767 = vrot.slane %v4744, %v4766
    %v4768 = vcombine.high %v4767, %v4767
    %v4770 = vunpack.c.l.s4 1966171168
    %v4771 = vunpack.c.0.s8 %v4770
    %v4772 = vlaneseq
    %v4773 = vshrl.u32 %v4772, 7
    %v4774 = vsub.s32 %v4771, %v4773
    %v4775 = vrot.slane %v4767, %v4774
    %v4777 = vunpack.c.l.s4 1966171168
    %v4778 = vunpack.c.0.s8 %v4777
    %v4779 = vlaneseq
    %v4780 = vshrl.u32 %v4779, 7
    %v4781 = vsub.s32 %v4778, %v4780
    %v4782 = vrot.slane %v4768, %v4781
    %v4783 = vcombine.high %v4775, %v4775
    %v4785 = vunpack.c.l.s4 1966171168
    %v4786 = vunpack.c.0.s8 %v4785
    %v4787 = vlaneseq
    %v4788 = vshrl.u32 %v4787, 7
    %v4789 = vsub.s32 %v4786, %v4788
    %v4790 = vrot.slane %v4746, %v4789
    %v4791 = vcombine.high %v4790, %v4790
    %v4793 = vunpack.c.l.s4 1966171168
    %v4794 = vunpack.c.0.s8 %v4793
    %v4795 = vlaneseq
    %v4796 = vshrl.u32 %v4795, 7
    %v4797 = vsub.s32 %v4794, %v4796
    %v4798 = vrot.slane %v4790, %v4797
    %v4800 = vunpack.c.l.s4 1966171168
    %v4801 = vunpack.c.0.s8 %v4800
    %v4802 = vlaneseq
    %v4803 = vshrl.u32 %v4802, 7
    %v4804 = vsub.s32 %v4801, %v4803
    %v4805 = vrot.slane %v4791, %v4804
    %v4806 = vcombine.high %v4798, %v4798
    %v4808 = vunpack.c.l.s4 1966171168
    %v4809 = vunpack.c.0.s8 %v4808
    %v4810 = vlaneseq
    %v4811 = vshrl.u32 %v4810, 7
    %v4812 = vsub.s32 %v4809, %v4811
    %v4813 = vrot.slane %v4748, %v4812
    %v4814 = vcombine.high %v4813, %v4813
    %v4816 = vunpack.c.l.s4 1966171168
    %v4817 = vunpack.c.0.s8 %v4816
    %v4818 = vlaneseq
    %v4819 = vshrl.u32 %v4818, 7
    %v4820 = vsub.s32 %v4817, %v4819
    %v4821 = vrot.slane %v4813, %v4820
    %v4823 = vunpack.c.l.s4 1966171168
    %v4824 = vunpack.c.0.s8 %v4823
    %v4825 = vlaneseq
    %v4826 = vshrl.u32 %v4825, 7
    %v4827 = vsub.s32 %v4824, %v4826
    %v4828 = vrot.slane %v4814, %v4827
    %v4829 = vcombine.high %v4821, %v4821
    %v4831 = vunpack.c.l.s4 1966171168
    %v4832 = vunpack.c.0.s8 %v4831
    %v4833 = vlaneseq
    %v4834 = vshrl.u32 %v4833, 7
    %v4835 = vsub.s32 %v4832, %v4834
    %v4836 = vrot.slane %v4750, %v4835
    %v4837 = vcombine.high %v4836, %v4836
    %v4839 = vunpack.c.l.s4 1966171168
    %v4840 = vunpack.c.0.s8 %v4839
    %v4841 = vlaneseq
    %v4842 = vshrl.u32 %v4841, 7
    %v4843 = vsub.s32 %v4840, %v4842
    %v4844 = vrot.slane %v4836, %v4843
    %v4846 = vunpack.c.l.s4 1966171168
    %v4847 = vunpack.c.0.s8 %v4846
    %v4848 = vlaneseq
    %v4849 = vshrl.u32 %v4848, 7
    %v4850 = vsub.s32 %v4847, %v4849
    %v4851 = vrot.slane %v4837, %v4850
    %v4852 = vcombine.high %v4844, %v4844
    %v4854 = vunpack.c.l.s4 1966171168
    %v4855 = vunpack.c.0.s8 %v4854
    %v4856 = vlaneseq
    %v4857 = vshrl.u32 %v4856, 7
    %v4858 = vsub.s32 %v4855, %v4857
    %v4859 = vrot.slane %v4752, %v4858
    %v4860 = vcombine.high %v4859, %v4859
    %v4862 = vunpack.c.l.s4 1966171168
    %v4863 = vunpack.c.0.s8 %v4862
    %v4864 = vlaneseq
    %v4865 = vshrl.u32 %v4864, 7
    %v4866 = vsub.s32 %v4863, %v4865
    %v4867 = vrot.slane %v4859, %v4866
    %v4869 = vunpack.c.l.s4 1966171168
    %v4870 = vunpack.c.0.s8 %v4869
    %v4871 = vlaneseq
    %v4872 = vshrl.u32 %v4871, 7
    %v4873 = vsub.s32 %v4870, %v4872
    %v4874 = vrot.slane %v4860, %v4873
    %v4875 = vcombine.high %v4867, %v4867
    %v4877 = vunpack.c.l.s4 1966171168
    %v4878 = vunpack.c.0.s8 %v4877
    %v4879 = vlaneseq
    %v4880 = vshrl.u32 %v4879, 7
    %v4881 = vsub.s32 %v4878, %v4880
    %v4882 = vrot.slane %v4754, %v4881
    %v4883 = vcombine.high %v4882, %v4882
    %v4885 = vunpack.c.l.s4 1966171168
    %v4886 = vunpack.c.0.s8 %v4885
    %v4887 = vlaneseq
    %v4888 = vshrl.u32 %v4887, 7
    %v4889 = vsub.s32 %v4886, %v4888
    %v4890 = vrot.slane %v4882, %v4889
    %v4892 = vunpack.c.l.s4 1966171168
    %v4893 = vunpack.c.0.s8 %v4892
    %v4894 = vlaneseq
    %v4895 = vshrl.u32 %v4894, 7
    %v4896 = vsub.s32 %v4893, %v4895
    %v4897 = vrot.slane %v4883, %v4896
    %v4898 = vcombine.high %v4890, %v4890
    %s4899 = scalar_lea.vmem %s3, 1536
    %v4900 = vld [vmem:[%s4899] sm:$0xff]
    %v4901 = vld [vmem:[%s4899 + $0x8] sm:$0xff]
    %v4902 = vld [vmem:[%s4899 + $0x10] sm:$0xff]
    %v4903 = vld [vmem:[%s4899 + $0x18] sm:$0xff]
    %v4904 = vld [vmem:[%s4899 + $0x20] sm:$0xff]
    %v4905 = vld [vmem:[%s4899 + $0x28] sm:$0xff]
    %v4906 = vld [vmem:[%s4899 + $0x30] sm:$0xff]
    %v4907 = vld [vmem:[%s4899 + $0x38] sm:$0xff]
    %v4908 = vld [vmem:[%s4899 + $0x40] sm:$0xff]
    %v4909 = vld [vmem:[%s4899 + $0x48] sm:$0xff]
    %v4910 = vld [vmem:[%s4899 + $0x50] sm:$0xff]
    %v4911 = vld [vmem:[%s4899 + $0x58] sm:$0xff]
    %v4912 = vld [vmem:[%s4899 + $0x60] sm:$0xff]
    %v4913 = vld [vmem:[%s4899 + $0x68] sm:$0xff]
    %v4914 = vld [vmem:[%s4899 + $0x70] sm:$0xff]
    %v4915 = vld [vmem:[%s4899 + $0x78] sm:$0xff]
    %v4916 = vcombine.low %v4775, %v4782
    %v4917 = vcombine.low %v4783, %v4798
    %v4918 = vcombine.low %v4805, %v4806
    %v4919 = vcombine.low %v4821, %v4828
    %v4921 = vunpack.c.l.s4 1966171168
    %v4922 = vunpack.c.0.s8 %v4921
    %v4923 = vlaneseq
    %v4924 = vshrl.u32 %v4923, 7
    %v4925 = vsub.s32 %v4922, %v4924
    %v4926 = vrot.slane %v4916, %v4925
    %v4928 = vunpack.c.l.s4 1966171168
    %v4929 = vunpack.c.0.s8 %v4928
    %v4930 = vlaneseq
    %v4931 = vshrl.u32 %v4930, 7
    %v4932 = vsub.s32 %v4929, %v4931
    %v4933 = vrot.slane %v4917, %v4932
    %v4935 = vunpack.c.l.s4 1966171168
    %v4936 = vunpack.c.0.s8 %v4935
    %v4937 = vlaneseq
    %v4938 = vshrl.u32 %v4937, 7
    %v4939 = vsub.s32 %v4936, %v4938
    %v4940 = vrot.slane %v4918, %v4939
    %v4942 = vunpack.c.l.s4 1966171168
    %v4943 = vunpack.c.0.s8 %v4942
    %v4944 = vlaneseq
    %v4945 = vshrl.u32 %v4944, 7
    %v4946 = vsub.s32 %v4943, %v4945
    %v4947 = vrot.slane %v4919, %v4946
    %v4948 = vcombine.low %v4926, %v4933
    %v4949 = vcombine.low %v4940, %v4947
    %v4951 = vunpack.c.l.s4 1966171168
    %v4952 = vunpack.c.0.s8 %v4951
    %v4953 = vlaneseq
    %v4954 = vshrl.u32 %v4953, 7
    %v4955 = vsub.s32 %v4952, %v4954
    %v4956 = vrot.slane %v4948, %v4955
    %v4958 = vunpack.c.l.s4 1966171168
    %v4959 = vunpack.c.0.s8 %v4958
    %v4960 = vlaneseq
    %v4961 = vshrl.u32 %v4960, 7
    %v4962 = vsub.s32 %v4959, %v4961
    %v4963 = vrot.slane %v4949, %v4962
    %v4964 = vcombine.low %v4956, %v4963
    %v4965 = vcombine.low %v4829, %v4844
    %v4966 = vcombine.low %v4851, %v4852
    %v4967 = vcombine.low %v4867, %v4874
    %v4968 = vcombine.low %v4875, %v4890
    %v4970 = vunpack.c.l.s4 1966171168
    %v4971 = vunpack.c.0.s8 %v4970
    %v4972 = vlaneseq
    %v4973 = vshrl.u32 %v4972, 7
    %v4974 = vsub.s32 %v4971, %v4973
    %v4975 = vrot.slane %v4965, %v4974
    %v4977 = vunpack.c.l.s4 1966171168
    %v4978 = vunpack.c.0.s8 %v4977
    %v4979 = vlaneseq
    %v4980 = vshrl.u32 %v4979, 7
    %v4981 = vsub.s32 %v4978, %v4980
    %v4982 = vrot.slane %v4966, %v4981
    %v4984 = vunpack.c.l.s4 1966171168
    %v4985 = vunpack.c.0.s8 %v4984
    %v4986 = vlaneseq
    %v4987 = vshrl.u32 %v4986, 7
    %v4988 = vsub.s32 %v4985, %v4987
    %v4989 = vrot.slane %v4967, %v4988
    %v4991 = vunpack.c.l.s4 1966171168
    %v4992 = vunpack.c.0.s8 %v4991
    %v4993 = vlaneseq
    %v4994 = vshrl.u32 %v4993, 7
    %v4995 = vsub.s32 %v4992, %v4994
    %v4996 = vrot.slane %v4968, %v4995
    %v4997 = vcombine.low %v4975, %v4982
    %v4998 = vcombine.low %v4989, %v4996
    %v5000 = vunpack.c.l.s4 1966171168
    %v5001 = vunpack.c.0.s8 %v5000
    %v5002 = vlaneseq
    %v5003 = vshrl.u32 %v5002, 7
    %v5004 = vsub.s32 %v5001, %v5003
    %v5005 = vrot.slane %v4997, %v5004
    %v5007 = vunpack.c.l.s4 1966171168
    %v5008 = vunpack.c.0.s8 %v5007
    %v5009 = vlaneseq
    %v5010 = vshrl.u32 %v5009, 7
    %v5011 = vsub.s32 %v5008, %v5010
    %v5012 = vrot.slane %v4998, %v5011
    %v5013 = vcombine.low %v5005, %v5012
    %v5014 = vcombine.low %v4897, %v4898
    %v5016 = vunpack.c.l.s4 1966171168
    %v5017 = vunpack.c.0.s8 %v5016
    %v5018 = vlaneseq
    %v5019 = vshrl.u32 %v5018, 7
    %v5020 = vsub.s32 %v5017, %v5019
    %v5021 = vrot.slane %v5014, %v5020
    %v5023 = vunpack.c.l.s4 1966171168
    %v5024 = vunpack.c.0.s8 %v5023
    %v5025 = vlaneseq
    %v5026 = vshrl.u32 %v5025, 7
    %v5027 = vsub.s32 %v5024, %v5026
    %v5028 = vrot.slane %v5021, %v5027
    %5032 = vmatprep.subr.mxu0 0.0
    %5033 = vmatpush1.msra.mxu0 %v4915
    %5034 = vmatprep.subr.mxu0 0.0
    %5035 = vmatpush1.msra.mxu0 %v4914
    %5036 = vmatprep.subr.mxu0 0.0
    %5037 = vmatpush1.msra.mxu0 %v4913
    %5038 = vmatprep.subr.mxu0 0.0
    %5039 = vmatpush1.msra.mxu0 %v4912
    %5040 = vmatprep.subr.mxu0 0.0
    %5041 = vmatpush1.msra.mxu0 %v4911
    %5042 = vmatprep.subr.mxu0 0.0
    %5043 = vmatpush1.msra.mxu0 %v4910
    %5044 = vmatprep.subr.mxu0 0.0
    %5045 = vmatpush1.msra.mxu0 %v4909
    %5046 = vmatprep.subr.mxu0 0.0
    %5047 = vmatpush1.msra.mxu0 %v4908
    %5048 = vmatprep.subr.mxu0 0.0
    %5049 = vmatpush1.msra.mxu0 %v4907
    %5050 = vmatprep.subr.mxu0 0.0
    %5051 = vmatpush1.msra.mxu0 %v4906
    %5052 = vmatprep.subr.mxu0 0.0
    %5053 = vmatpush1.msra.mxu0 %v4905
    %5054 = vmatprep.subr.mxu0 0.0
    %5055 = vmatpush1.msra.mxu0 %v4904
    %5056 = vmatprep.subr.mxu0 0.0
    %5057 = vmatpush1.msra.mxu0 %v4903
    %5058 = vmatprep.subr.mxu0 0.0
    %5059 = vmatpush1.msra.mxu0 %v4902
    %5060 = vmatprep.subr.mxu0 0.0
    %5061 = vmatpush1.msra.mxu0 %v4901
    %5062 = vmatprep.subr.mxu0 0.0
    %5063 = vmatpush1.msra.mxu0 %v4900
    %5064 = vmatprep.subr.mxu0 0.0
    %5065 = vmatpush2.msra.mxu0 0.0
    %5066 = vmatprep.subr.mxu0 0.0
    %5067 = vmatpush2.msra.mxu0 0.0
    %5068 = vmatprep.subr.mxu0 0.0
    %5069 = vmatpush2.msra.mxu0 0.0
    %5070 = vmatprep.subr.mxu0 0.0
    %5071 = vmatpush2.msra.mxu0 0.0
    %5072 = vmatprep.subr.mxu0 0.0
    %5073 = vmatpush2.msra.mxu0 0.0
    %5074 = vmatprep.subr.mxu0 0.0
    %5075 = vmatpush2.msra.mxu0 0.0
    %5076 = vmatprep.subr.mxu0 0.0
    %5077 = vmatpush2.msra.mxu0 0.0
    %5078 = vmatprep.subr.mxu0 0.0
    %5079 = vmatpush2.msra.mxu0 0.0
    %5080 = vmatprep.subr.mxu0 0.0
    %5081 = vmatpush2.msra.mxu0 0.0
    %5082 = vmatprep.subr.mxu0 0.0
    %5083 = vmatpush2.msra.mxu0 0.0
    %5084 = vmatprep.subr.mxu0 0.0
    %5085 = vmatpush2.msra.mxu0 0.0
    %5086 = vmatprep.subr.mxu0 0.0
    %5087 = vmatpush2.msra.mxu0 0.0
    %5088 = vmatprep.subr.mxu0 0.0
    %5089 = vmatpush2.msra.mxu0 0.0
    %5090 = vmatprep.subr.mxu0 0.0
    %5091 = vmatpush2.msra.mxu0 0.0
    %5092 = vmatprep.subr.mxu0 0.0
    %5093 = vmatpush2.msra.mxu0 0.0
    %5094 = vmatprep.subr.mxu0 0.0
    %5095 = vmatpush2.msra.mxu0 0.0
    %5096 = vmatprep.mubr.f32.mxu0 0.0
    %5097 = vmatmul.mubr.f32.gmra.mxu0 %v4964
    %v5098 = vpop.f32.mrf.mxu0
    %v5099 = vadd.f32 0.0, %v5098
    %v5100 = vpop.f32.mrf.mxu0
    %5101 = vmatprep.mubr.f32.mxu0 0.0
    %5102 = vmatmul.mubr.f32.gmra.mxu0 %v5013
    %v5103 = vpop.f32.mrf.mxu0
    %v5104 = vadd.f32 0.0, %v5103
    %v5105 = vpop.f32.mrf.mxu0
    %5106 = vmatprep.mubr.f32.mxu0 0.0
    %5107 = vmatmul.mubr.f32.gmra.mxu0 %v5028
    %v5108 = vpop.f32.mrf.mxu0
    %v5109 = vadd.f32 0.0, %v5108
    %v5110 = vpop.f32.mrf.mxu0
    %5111 = vdwg.mxu0
    %v5112 = vadd.f32 %v4740, %v5099
    %v5113 = vadd.f32 %v4741, %v5104
    %v5114 = vadd.f32 %v4742, %v5109
    %s5115 = scalar_lea.vmem %s4743, 1 [#allocation2]
    %v5116 = vld [vmem:[%s5115] ss:$2 sm:$0x7]
    %s5117 = scalar_lea.vmem %s4743, 17 [#allocation2]
    %v5118 = vld [vmem:[%s5117] ss:$2 sm:$0x7]
    %s5119 = scalar_lea.vmem %s4743, 33 [#allocation2]
    %v5120 = vld [vmem:[%s5119] ss:$2 sm:$0x7]
    %s5121 = scalar_lea.vmem %s4743, 65 [#allocation2]
    %v5122 = vld [vmem:[%s5121] ss:$2 sm:$0x7]
    %s5123 = scalar_lea.vmem %s4743, 81 [#allocation2]
    %v5124 = vld [vmem:[%s5123] ss:$2 sm:$0x7]
    %s5125 = scalar_lea.vmem %s4743, 97 [#allocation2]
    %v5126 = vld [vmem:[%s5125] ss:$2 sm:$0x7]
    %v5134 = vunpack.c.l.s4 1966171168
    %v5135 = vunpack.c.0.s8 %v5134
    %v5136 = vlaneseq
    %v5137 = vshrl.u32 %v5136, 7
    %v5138 = vsub.s32 %v5135, %v5137
    %v5139 = vrot.slane %v5116, %v5138
    %v5140 = vcombine.high %v5139, %v5139
    %v5142 = vunpack.c.l.s4 1966171168
    %v5143 = vunpack.c.0.s8 %v5142
    %v5144 = vlaneseq
    %v5145 = vshrl.u32 %v5144, 7
    %v5146 = vsub.s32 %v5143, %v5145
    %v5147 = vrot.slane %v5139, %v5146
    %v5149 = vunpack.c.l.s4 1966171168
    %v5150 = vunpack.c.0.s8 %v5149
    %v5151 = vlaneseq
    %v5152 = vshrl.u32 %v5151, 7
    %v5153 = vsub.s32 %v5150, %v5152
    %v5154 = vrot.slane %v5140, %v5153
    %v5155 = vcombine.high %v5147, %v5147
    %v5157 = vunpack.c.l.s4 1966171168
    %v5158 = vunpack.c.0.s8 %v5157
    %v5159 = vlaneseq
    %v5160 = vshrl.u32 %v5159, 7
    %v5161 = vsub.s32 %v5158, %v5160
    %v5162 = vrot.slane %v5118, %v5161
    %v5163 = vcombine.high %v5162, %v5162
    %v5165 = vunpack.c.l.s4 1966171168
    %v5166 = vunpack.c.0.s8 %v5165
    %v5167 = vlaneseq
    %v5168 = vshrl.u32 %v5167, 7
    %v5169 = vsub.s32 %v5166, %v5168
    %v5170 = vrot.slane %v5162, %v5169
    %v5172 = vunpack.c.l.s4 1966171168
    %v5173 = vunpack.c.0.s8 %v5172
    %v5174 = vlaneseq
    %v5175 = vshrl.u32 %v5174, 7
    %v5176 = vsub.s32 %v5173, %v5175
    %v5177 = vrot.slane %v5163, %v5176
    %v5178 = vcombine.high %v5170, %v5170
    %v5180 = vunpack.c.l.s4 1966171168
    %v5181 = vunpack.c.0.s8 %v5180
    %v5182 = vlaneseq
    %v5183 = vshrl.u32 %v5182, 7
    %v5184 = vsub.s32 %v5181, %v5183
    %v5185 = vrot.slane %v5120, %v5184
    %v5186 = vcombine.high %v5185, %v5185
    %v5188 = vunpack.c.l.s4 1966171168
    %v5189 = vunpack.c.0.s8 %v5188
    %v5190 = vlaneseq
    %v5191 = vshrl.u32 %v5190, 7
    %v5192 = vsub.s32 %v5189, %v5191
    %v5193 = vrot.slane %v5185, %v5192
    %v5195 = vunpack.c.l.s4 1966171168
    %v5196 = vunpack.c.0.s8 %v5195
    %v5197 = vlaneseq
    %v5198 = vshrl.u32 %v5197, 7
    %v5199 = vsub.s32 %v5196, %v5198
    %v5200 = vrot.slane %v5186, %v5199
    %v5201 = vcombine.high %v5193, %v5193
    %v5203 = vunpack.c.l.s4 1966171168
    %v5204 = vunpack.c.0.s8 %v5203
    %v5205 = vlaneseq
    %v5206 = vshrl.u32 %v5205, 7
    %v5207 = vsub.s32 %v5204, %v5206
    %v5208 = vrot.slane %v5122, %v5207
    %v5209 = vcombine.high %v5208, %v5208
    %v5211 = vunpack.c.l.s4 1966171168
    %v5212 = vunpack.c.0.s8 %v5211
    %v5213 = vlaneseq
    %v5214 = vshrl.u32 %v5213, 7
    %v5215 = vsub.s32 %v5212, %v5214
    %v5216 = vrot.slane %v5208, %v5215
    %v5218 = vunpack.c.l.s4 1966171168
    %v5219 = vunpack.c.0.s8 %v5218
    %v5220 = vlaneseq
    %v5221 = vshrl.u32 %v5220, 7
    %v5222 = vsub.s32 %v5219, %v5221
    %v5223 = vrot.slane %v5209, %v5222
    %v5224 = vcombine.high %v5216, %v5216
    %v5226 = vunpack.c.l.s4 1966171168
    %v5227 = vunpack.c.0.s8 %v5226
    %v5228 = vlaneseq
    %v5229 = vshrl.u32 %v5228, 7
    %v5230 = vsub.s32 %v5227, %v5229
    %v5231 = vrot.slane %v5124, %v5230
    %v5232 = vcombine.high %v5231, %v5231
    %v5234 = vunpack.c.l.s4 1966171168
    %v5235 = vunpack.c.0.s8 %v5234
    %v5236 = vlaneseq
    %v5237 = vshrl.u32 %v5236, 7
    %v5238 = vsub.s32 %v5235, %v5237
    %v5239 = vrot.slane %v5231, %v5238
    %v5241 = vunpack.c.l.s4 1966171168
    %v5242 = vunpack.c.0.s8 %v5241
    %v5243 = vlaneseq
    %v5244 = vshrl.u32 %v5243, 7
    %v5245 = vsub.s32 %v5242, %v5244
    %v5246 = vrot.slane %v5232, %v5245
    %v5247 = vcombine.high %v5239, %v5239
    %v5249 = vunpack.c.l.s4 1966171168
    %v5250 = vunpack.c.0.s8 %v5249
    %v5251 = vlaneseq
    %v5252 = vshrl.u32 %v5251, 7
    %v5253 = vsub.s32 %v5250, %v5252
    %v5254 = vrot.slane %v5126, %v5253
    %v5255 = vcombine.high %v5254, %v5254
    %v5257 = vunpack.c.l.s4 1966171168
    %v5258 = vunpack.c.0.s8 %v5257
    %v5259 = vlaneseq
    %v5260 = vshrl.u32 %v5259, 7
    %v5261 = vsub.s32 %v5258, %v5260
    %v5262 = vrot.slane %v5254, %v5261
    %v5264 = vunpack.c.l.s4 1966171168
    %v5265 = vunpack.c.0.s8 %v5264
    %v5266 = vlaneseq
    %v5267 = vshrl.u32 %v5266, 7
    %v5268 = vsub.s32 %v5265, %v5267
    %v5269 = vrot.slane %v5255, %v5268
    %v5270 = vcombine.high %v5262, %v5262
    %s5271 = scalar_lea.vmem %s3, 1664
    %v5272 = vld [vmem:[%s5271] sm:$0xff]
    %v5273 = vld [vmem:[%s5271 + $0x8] sm:$0xff]
    %v5274 = vld [vmem:[%s5271 + $0x10] sm:$0xff]
    %v5275 = vld [vmem:[%s5271 + $0x18] sm:$0xff]
    %v5276 = vld [vmem:[%s5271 + $0x20] sm:$0xff]
    %v5277 = vld [vmem:[%s5271 + $0x28] sm:$0xff]
    %v5278 = vld [vmem:[%s5271 + $0x30] sm:$0xff]
    %v5279 = vld [vmem:[%s5271 + $0x38] sm:$0xff]
    %v5280 = vld [vmem:[%s5271 + $0x40] sm:$0xff]
    %v5281 = vld [vmem:[%s5271 + $0x48] sm:$0xff]
    %v5282 = vld [vmem:[%s5271 + $0x50] sm:$0xff]
    %v5283 = vld [vmem:[%s5271 + $0x58] sm:$0xff]
    %v5284 = vld [vmem:[%s5271 + $0x60] sm:$0xff]
    %v5285 = vld [vmem:[%s5271 + $0x68] sm:$0xff]
    %v5286 = vld [vmem:[%s5271 + $0x70] sm:$0xff]
    %v5287 = vld [vmem:[%s5271 + $0x78] sm:$0xff]
    %v5288 = vcombine.low %v5147, %v5154
    %v5289 = vcombine.low %v5155, %v5170
    %v5290 = vcombine.low %v5177, %v5178
    %v5291 = vcombine.low %v5193, %v5200
    %v5293 = vunpack.c.l.s4 1966171168
    %v5294 = vunpack.c.0.s8 %v5293
    %v5295 = vlaneseq
    %v5296 = vshrl.u32 %v5295, 7
    %v5297 = vsub.s32 %v5294, %v5296
    %v5298 = vrot.slane %v5288, %v5297
    %v5300 = vunpack.c.l.s4 1966171168
    %v5301 = vunpack.c.0.s8 %v5300
    %v5302 = vlaneseq
    %v5303 = vshrl.u32 %v5302, 7
    %v5304 = vsub.s32 %v5301, %v5303
    %v5305 = vrot.slane %v5289, %v5304
    %v5307 = vunpack.c.l.s4 1966171168
    %v5308 = vunpack.c.0.s8 %v5307
    %v5309 = vlaneseq
    %v5310 = vshrl.u32 %v5309, 7
    %v5311 = vsub.s32 %v5308, %v5310
    %v5312 = vrot.slane %v5290, %v5311
    %v5314 = vunpack.c.l.s4 1966171168
    %v5315 = vunpack.c.0.s8 %v5314
    %v5316 = vlaneseq
    %v5317 = vshrl.u32 %v5316, 7
    %v5318 = vsub.s32 %v5315, %v5317
    %v5319 = vrot.slane %v5291, %v5318
    %v5320 = vcombine.low %v5298, %v5305
    %v5321 = vcombine.low %v5312, %v5319
    %v5323 = vunpack.c.l.s4 1966171168
    %v5324 = vunpack.c.0.s8 %v5323
    %v5325 = vlaneseq
    %v5326 = vshrl.u32 %v5325, 7
    %v5327 = vsub.s32 %v5324, %v5326
    %v5328 = vrot.slane %v5320, %v5327
    %v5330 = vunpack.c.l.s4 1966171168
    %v5331 = vunpack.c.0.s8 %v5330
    %v5332 = vlaneseq
    %v5333 = vshrl.u32 %v5332, 7
    %v5334 = vsub.s32 %v5331, %v5333
    %v5335 = vrot.slane %v5321, %v5334
    %v5336 = vcombine.low %v5328, %v5335
    %v5337 = vcombine.low %v5201, %v5216
    %v5338 = vcombine.low %v5223, %v5224
    %v5339 = vcombine.low %v5239, %v5246
    %v5340 = vcombine.low %v5247, %v5262
    %v5342 = vunpack.c.l.s4 1966171168
    %v5343 = vunpack.c.0.s8 %v5342
    %v5344 = vlaneseq
    %v5345 = vshrl.u32 %v5344, 7
    %v5346 = vsub.s32 %v5343, %v5345
    %v5347 = vrot.slane %v5337, %v5346
    %v5349 = vunpack.c.l.s4 1966171168
    %v5350 = vunpack.c.0.s8 %v5349
    %v5351 = vlaneseq
    %v5352 = vshrl.u32 %v5351, 7
    %v5353 = vsub.s32 %v5350, %v5352
    %v5354 = vrot.slane %v5338, %v5353
    %v5356 = vunpack.c.l.s4 1966171168
    %v5357 = vunpack.c.0.s8 %v5356
    %v5358 = vlaneseq
    %v5359 = vshrl.u32 %v5358, 7
    %v5360 = vsub.s32 %v5357, %v5359
    %v5361 = vrot.slane %v5339, %v5360
    %v5363 = vunpack.c.l.s4 1966171168
    %v5364 = vunpack.c.0.s8 %v5363
    %v5365 = vlaneseq
    %v5366 = vshrl.u32 %v5365, 7
    %v5367 = vsub.s32 %v5364, %v5366
    %v5368 = vrot.slane %v5340, %v5367
    %v5369 = vcombine.low %v5347, %v5354
    %v5370 = vcombine.low %v5361, %v5368
    %v5372 = vunpack.c.l.s4 1966171168
    %v5373 = vunpack.c.0.s8 %v5372
    %v5374 = vlaneseq
    %v5375 = vshrl.u32 %v5374, 7
    %v5376 = vsub.s32 %v5373, %v5375
    %v5377 = vrot.slane %v5369, %v5376
    %v5379 = vunpack.c.l.s4 1966171168
    %v5380 = vunpack.c.0.s8 %v5379
    %v5381 = vlaneseq
    %v5382 = vshrl.u32 %v5381, 7
    %v5383 = vsub.s32 %v5380, %v5382
    %v5384 = vrot.slane %v5370, %v5383
    %v5385 = vcombine.low %v5377, %v5384
    %v5386 = vcombine.low %v5269, %v5270
    %v5388 = vunpack.c.l.s4 1966171168
    %v5389 = vunpack.c.0.s8 %v5388
    %v5390 = vlaneseq
    %v5391 = vshrl.u32 %v5390, 7
    %v5392 = vsub.s32 %v5389, %v5391
    %v5393 = vrot.slane %v5386, %v5392
    %v5395 = vunpack.c.l.s4 1966171168
    %v5396 = vunpack.c.0.s8 %v5395
    %v5397 = vlaneseq
    %v5398 = vshrl.u32 %v5397, 7
    %v5399 = vsub.s32 %v5396, %v5398
    %v5400 = vrot.slane %v5393, %v5399
    %5404 = vmatprep.subr.mxu0 0.0
    %5405 = vmatpush1.msra.mxu0 %v5287
    %5406 = vmatprep.subr.mxu0 0.0
    %5407 = vmatpush1.msra.mxu0 %v5286
    %5408 = vmatprep.subr.mxu0 0.0
    %5409 = vmatpush1.msra.mxu0 %v5285
    %5410 = vmatprep.subr.mxu0 0.0
    %5411 = vmatpush1.msra.mxu0 %v5284
    %5412 = vmatprep.subr.mxu0 0.0
    %5413 = vmatpush1.msra.mxu0 %v5283
    %5414 = vmatprep.subr.mxu0 0.0
    %5415 = vmatpush1.msra.mxu0 %v5282
    %5416 = vmatprep.subr.mxu0 0.0
    %5417 = vmatpush1.msra.mxu0 %v5281
    %5418 = vmatprep.subr.mxu0 0.0
    %5419 = vmatpush1.msra.mxu0 %v5280
    %5420 = vmatprep.subr.mxu0 0.0
    %5421 = vmatpush1.msra.mxu0 %v5279
    %5422 = vmatprep.subr.mxu0 0.0
    %5423 = vmatpush1.msra.mxu0 %v5278
    %5424 = vmatprep.subr.mxu0 0.0
    %5425 = vmatpush1.msra.mxu0 %v5277
    %5426 = vmatprep.subr.mxu0 0.0
    %5427 = vmatpush1.msra.mxu0 %v5276
    %5428 = vmatprep.subr.mxu0 0.0
    %5429 = vmatpush1.msra.mxu0 %v5275
    %5430 = vmatprep.subr.mxu0 0.0
    %5431 = vmatpush1.msra.mxu0 %v5274
    %5432 = vmatprep.subr.mxu0 0.0
    %5433 = vmatpush1.msra.mxu0 %v5273
    %5434 = vmatprep.subr.mxu0 0.0
    %5435 = vmatpush1.msra.mxu0 %v5272
    %5436 = vmatprep.subr.mxu0 0.0
    %5437 = vmatpush2.msra.mxu0 0.0
    %5438 = vmatprep.subr.mxu0 0.0
    %5439 = vmatpush2.msra.mxu0 0.0
    %5440 = vmatprep.subr.mxu0 0.0
    %5441 = vmatpush2.msra.mxu0 0.0
    %5442 = vmatprep.subr.mxu0 0.0
    %5443 = vmatpush2.msra.mxu0 0.0
    %5444 = vmatprep.subr.mxu0 0.0
    %5445 = vmatpush2.msra.mxu0 0.0
    %5446 = vmatprep.subr.mxu0 0.0
    %5447 = vmatpush2.msra.mxu0 0.0
    %5448 = vmatprep.subr.mxu0 0.0
    %5449 = vmatpush2.msra.mxu0 0.0
    %5450 = vmatprep.subr.mxu0 0.0
    %5451 = vmatpush2.msra.mxu0 0.0
    %5452 = vmatprep.subr.mxu0 0.0
    %5453 = vmatpush2.msra.mxu0 0.0
    %5454 = vmatprep.subr.mxu0 0.0
    %5455 = vmatpush2.msra.mxu0 0.0
    %5456 = vmatprep.subr.mxu0 0.0
    %5457 = vmatpush2.msra.mxu0 0.0
    %5458 = vmatprep.subr.mxu0 0.0
    %5459 = vmatpush2.msra.mxu0 0.0
    %5460 = vmatprep.subr.mxu0 0.0
    %5461 = vmatpush2.msra.mxu0 0.0
    %5462 = vmatprep.subr.mxu0 0.0
    %5463 = vmatpush2.msra.mxu0 0.0
    %5464 = vmatprep.subr.mxu0 0.0
    %5465 = vmatpush2.msra.mxu0 0.0
    %5466 = vmatprep.subr.mxu0 0.0
    %5467 = vmatpush2.msra.mxu0 0.0
    %5468 = vmatprep.mubr.f32.mxu0 0.0
    %5469 = vmatmul.mubr.f32.gmra.mxu0 %v5336
    %v5470 = vpop.f32.mrf.mxu0
    %v5471 = vadd.f32 0.0, %v5470
    %v5472 = vpop.f32.mrf.mxu0
    %5473 = vmatprep.mubr.f32.mxu0 0.0
    %5474 = vmatmul.mubr.f32.gmra.mxu0 %v5385
    %v5475 = vpop.f32.mrf.mxu0
    %v5476 = vadd.f32 0.0, %v5475
    %v5477 = vpop.f32.mrf.mxu0
    %5478 = vmatprep.mubr.f32.mxu0 0.0
    %5479 = vmatmul.mubr.f32.gmra.mxu0 %v5400
    %v5480 = vpop.f32.mrf.mxu0
    %v5481 = vadd.f32 0.0, %v5480
    %v5482 = vpop.f32.mrf.mxu0
    %5483 = vdwg.mxu0
    %v5484 = vadd.f32 %v5112, %v5471
    %v5485 = vadd.f32 %v5113, %v5476
    %v5486 = vadd.f32 %v5114, %v5481
    %s5487 = scalar_lea.vmem %s4743, 2 [#allocation2]
    %v5488 = vld [vmem:[%s5487] ss:$2 sm:$0x7]
    %s5489 = scalar_lea.vmem %s4743, 18 [#allocation2]
    %v5490 = vld [vmem:[%s5489] ss:$2 sm:$0x7]
    %s5491 = scalar_lea.vmem %s4743, 34 [#allocation2]
    %v5492 = vld [vmem:[%s5491] ss:$2 sm:$0x7]
    %s5493 = scalar_lea.vmem %s4743, 66 [#allocation2]
    %v5494 = vld [vmem:[%s5493] ss:$2 sm:$0x7]
    %s5495 = scalar_lea.vmem %s4743, 82 [#allocation2]
    %v5496 = vld [vmem:[%s5495] ss:$2 sm:$0x7]
    %s5497 = scalar_lea.vmem %s4743, 98 [#allocation2]
    %v5498 = vld [vmem:[%s5497] ss:$2 sm:$0x7]
    %v5506 = vunpack.c.l.s4 1966171168
    %v5507 = vunpack.c.0.s8 %v5506
    %v5508 = vlaneseq
    %v5509 = vshrl.u32 %v5508, 7
    %v5510 = vsub.s32 %v5507, %v5509
    %v5511 = vrot.slane %v5488, %v5510
    %v5512 = vcombine.high %v5511, %v5511
    %v5514 = vunpack.c.l.s4 1966171168
    %v5515 = vunpack.c.0.s8 %v5514
    %v5516 = vlaneseq
    %v5517 = vshrl.u32 %v5516, 7
    %v5518 = vsub.s32 %v5515, %v5517
    %v5519 = vrot.slane %v5511, %v5518
    %v5521 = vunpack.c.l.s4 1966171168
    %v5522 = vunpack.c.0.s8 %v5521
    %v5523 = vlaneseq
    %v5524 = vshrl.u32 %v5523, 7
    %v5525 = vsub.s32 %v5522, %v5524
    %v5526 = vrot.slane %v5512, %v5525
    %v5527 = vcombine.high %v5519, %v5519
    %v5529 = vunpack.c.l.s4 1966171168
    %v5530 = vunpack.c.0.s8 %v5529
    %v5531 = vlaneseq
    %v5532 = vshrl.u32 %v5531, 7
    %v5533 = vsub.s32 %v5530, %v5532
    %v5534 = vrot.slane %v5490, %v5533
    %v5535 = vcombine.high %v5534, %v5534
    %v5537 = vunpack.c.l.s4 1966171168
    %v5538 = vunpack.c.0.s8 %v5537
    %v5539 = vlaneseq
    %v5540 = vshrl.u32 %v5539, 7
    %v5541 = vsub.s32 %v5538, %v5540
    %v5542 = vrot.slane %v5534, %v5541
    %v5544 = vunpack.c.l.s4 1966171168
    %v5545 = vunpack.c.0.s8 %v5544
    %v5546 = vlaneseq
    %v5547 = vshrl.u32 %v5546, 7
    %v5548 = vsub.s32 %v5545, %v5547
    %v5549 = vrot.slane %v5535, %v5548
    %v5550 = vcombine.high %v5542, %v5542
    %v5552 = vunpack.c.l.s4 1966171168
    %v5553 = vunpack.c.0.s8 %v5552
    %v5554 = vlaneseq
    %v5555 = vshrl.u32 %v5554, 7
    %v5556 = vsub.s32 %v5553, %v5555
    %v5557 = vrot.slane %v5492, %v5556
    %v5558 = vcombine.high %v5557, %v5557
    %v5560 = vunpack.c.l.s4 1966171168
    %v5561 = vunpack.c.0.s8 %v5560
    %v5562 = vlaneseq
    %v5563 = vshrl.u32 %v5562, 7
    %v5564 = vsub.s32 %v5561, %v5563
    %v5565 = vrot.slane %v5557, %v5564
    %v5567 = vunpack.c.l.s4 1966171168
    %v5568 = vunpack.c.0.s8 %v5567
    %v5569 = vlaneseq
    %v5570 = vshrl.u32 %v5569, 7
    %v5571 = vsub.s32 %v5568, %v5570
    %v5572 = vrot.slane %v5558, %v5571
    %v5573 = vcombine.high %v5565, %v5565
    %v5575 = vunpack.c.l.s4 1966171168
    %v5576 = vunpack.c.0.s8 %v5575
    %v5577 = vlaneseq
    %v5578 = vshrl.u32 %v5577, 7
    %v5579 = vsub.s32 %v5576, %v5578
    %v5580 = vrot.slane %v5494, %v5579
    %v5581 = vcombine.high %v5580, %v5580
    %v5583 = vunpack.c.l.s4 1966171168
    %v5584 = vunpack.c.0.s8 %v5583
    %v5585 = vlaneseq
    %v5586 = vshrl.u32 %v5585, 7
    %v5587 = vsub.s32 %v5584, %v5586
    %v5588 = vrot.slane %v5580, %v5587
    %v5590 = vunpack.c.l.s4 1966171168
    %v5591 = vunpack.c.0.s8 %v5590
    %v5592 = vlaneseq
    %v5593 = vshrl.u32 %v5592, 7
    %v5594 = vsub.s32 %v5591, %v5593
    %v5595 = vrot.slane %v5581, %v5594
    %v5596 = vcombine.high %v5588, %v5588
    %v5598 = vunpack.c.l.s4 1966171168
    %v5599 = vunpack.c.0.s8 %v5598
    %v5600 = vlaneseq
    %v5601 = vshrl.u32 %v5600, 7
    %v5602 = vsub.s32 %v5599, %v5601
    %v5603 = vrot.slane %v5496, %v5602
    %v5604 = vcombine.high %v5603, %v5603
    %v5606 = vunpack.c.l.s4 1966171168
    %v5607 = vunpack.c.0.s8 %v5606
    %v5608 = vlaneseq
    %v5609 = vshrl.u32 %v5608, 7
    %v5610 = vsub.s32 %v5607, %v5609
    %v5611 = vrot.slane %v5603, %v5610
    %v5613 = vunpack.c.l.s4 1966171168
    %v5614 = vunpack.c.0.s8 %v5613
    %v5615 = vlaneseq
    %v5616 = vshrl.u32 %v5615, 7
    %v5617 = vsub.s32 %v5614, %v5616
    %v5618 = vrot.slane %v5604, %v5617
    %v5619 = vcombine.high %v5611, %v5611
    %v5621 = vunpack.c.l.s4 1966171168
    %v5622 = vunpack.c.0.s8 %v5621
    %v5623 = vlaneseq
    %v5624 = vshrl.u32 %v5623, 7
    %v5625 = vsub.s32 %v5622, %v5624
    %v5626 = vrot.slane %v5498, %v5625
    %v5627 = vcombine.high %v5626, %v5626
    %v5629 = vunpack.c.l.s4 1966171168
    %v5630 = vunpack.c.0.s8 %v5629
    %v5631 = vlaneseq
    %v5632 = vshrl.u32 %v5631, 7
    %v5633 = vsub.s32 %v5630, %v5632
    %v5634 = vrot.slane %v5626, %v5633
    %v5636 = vunpack.c.l.s4 1966171168
    %v5637 = vunpack.c.0.s8 %v5636
    %v5638 = vlaneseq
    %v5639 = vshrl.u32 %v5638, 7
    %v5640 = vsub.s32 %v5637, %v5639
    %v5641 = vrot.slane %v5627, %v5640
    %v5642 = vcombine.high %v5634, %v5634
    %s5643 = scalar_lea.vmem %s3, 1792
    %v5644 = vld [vmem:[%s5643] sm:$0xff]
    %v5645 = vld [vmem:[%s5643 + $0x8] sm:$0xff]
    %v5646 = vld [vmem:[%s5643 + $0x10] sm:$0xff]
    %v5647 = vld [vmem:[%s5643 + $0x18] sm:$0xff]
    %v5648 = vld [vmem:[%s5643 + $0x20] sm:$0xff]
    %v5649 = vld [vmem:[%s5643 + $0x28] sm:$0xff]
    %v5650 = vld [vmem:[%s5643 + $0x30] sm:$0xff]
    %v5651 = vld [vmem:[%s5643 + $0x38] sm:$0xff]
    %v5652 = vld [vmem:[%s5643 + $0x40] sm:$0xff]
    %v5653 = vld [vmem:[%s5643 + $0x48] sm:$0xff]
    %v5654 = vld [vmem:[%s5643 + $0x50] sm:$0xff]
    %v5655 = vld [vmem:[%s5643 + $0x58] sm:$0xff]
    %v5656 = vld [vmem:[%s5643 + $0x60] sm:$0xff]
    %v5657 = vld [vmem:[%s5643 + $0x68] sm:$0xff]
    %v5658 = vld [vmem:[%s5643 + $0x70] sm:$0xff]
    %v5659 = vld [vmem:[%s5643 + $0x78] sm:$0xff]
    %v5660 = vcombine.low %v5519, %v5526
    %v5661 = vcombine.low %v5527, %v5542
    %v5662 = vcombine.low %v5549, %v5550
    %v5663 = vcombine.low %v5565, %v5572
    %v5665 = vunpack.c.l.s4 1966171168
    %v5666 = vunpack.c.0.s8 %v5665
    %v5667 = vlaneseq
    %v5668 = vshrl.u32 %v5667, 7
    %v5669 = vsub.s32 %v5666, %v5668
    %v5670 = vrot.slane %v5660, %v5669
    %v5672 = vunpack.c.l.s4 1966171168
    %v5673 = vunpack.c.0.s8 %v5672
    %v5674 = vlaneseq
    %v5675 = vshrl.u32 %v5674, 7
    %v5676 = vsub.s32 %v5673, %v5675
    %v5677 = vrot.slane %v5661, %v5676
    %v5679 = vunpack.c.l.s4 1966171168
    %v5680 = vunpack.c.0.s8 %v5679
    %v5681 = vlaneseq
    %v5682 = vshrl.u32 %v5681, 7
    %v5683 = vsub.s32 %v5680, %v5682
    %v5684 = vrot.slane %v5662, %v5683
    %v5686 = vunpack.c.l.s4 1966171168
    %v5687 = vunpack.c.0.s8 %v5686
    %v5688 = vlaneseq
    %v5689 = vshrl.u32 %v5688, 7
    %v5690 = vsub.s32 %v5687, %v5689
    %v5691 = vrot.slane %v5663, %v5690
    %v5692 = vcombine.low %v5670, %v5677
    %v5693 = vcombine.low %v5684, %v5691
    %v5695 = vunpack.c.l.s4 1966171168
    %v5696 = vunpack.c.0.s8 %v5695
    %v5697 = vlaneseq
    %v5698 = vshrl.u32 %v5697, 7
    %v5699 = vsub.s32 %v5696, %v5698
    %v5700 = vrot.slane %v5692, %v5699
    %v5702 = vunpack.c.l.s4 1966171168
    %v5703 = vunpack.c.0.s8 %v5702
    %v5704 = vlaneseq
    %v5705 = vshrl.u32 %v5704, 7
    %v5706 = vsub.s32 %v5703, %v5705
    %v5707 = vrot.slane %v5693, %v5706
    %v5708 = vcombine.low %v5700, %v5707
    %v5709 = vcombine.low %v5573, %v5588
    %v5710 = vcombine.low %v5595, %v5596
    %v5711 = vcombine.low %v5611, %v5618
    %v5712 = vcombine.low %v5619, %v5634
    %v5714 = vunpack.c.l.s4 1966171168
    %v5715 = vunpack.c.0.s8 %v5714
    %v5716 = vlaneseq
    %v5717 = vshrl.u32 %v5716, 7
    %v5718 = vsub.s32 %v5715, %v5717
    %v5719 = vrot.slane %v5709, %v5718
    %v5721 = vunpack.c.l.s4 1966171168
    %v5722 = vunpack.c.0.s8 %v5721
    %v5723 = vlaneseq
    %v5724 = vshrl.u32 %v5723, 7
    %v5725 = vsub.s32 %v5722, %v5724
    %v5726 = vrot.slane %v5710, %v5725
    %v5728 = vunpack.c.l.s4 1966171168
    %v5729 = vunpack.c.0.s8 %v5728
    %v5730 = vlaneseq
    %v5731 = vshrl.u32 %v5730, 7
    %v5732 = vsub.s32 %v5729, %v5731
    %v5733 = vrot.slane %v5711, %v5732
    %v5735 = vunpack.c.l.s4 1966171168
    %v5736 = vunpack.c.0.s8 %v5735
    %v5737 = vlaneseq
    %v5738 = vshrl.u32 %v5737, 7
    %v5739 = vsub.s32 %v5736, %v5738
    %v5740 = vrot.slane %v5712, %v5739
    %v5741 = vcombine.low %v5719, %v5726
    %v5742 = vcombine.low %v5733, %v5740
    %v5744 = vunpack.c.l.s4 1966171168
    %v5745 = vunpack.c.0.s8 %v5744
    %v5746 = vlaneseq
    %v5747 = vshrl.u32 %v5746, 7
    %v5748 = vsub.s32 %v5745, %v5747
    %v5749 = vrot.slane %v5741, %v5748
    %v5751 = vunpack.c.l.s4 1966171168
    %v5752 = vunpack.c.0.s8 %v5751
    %v5753 = vlaneseq
    %v5754 = vshrl.u32 %v5753, 7
    %v5755 = vsub.s32 %v5752, %v5754
    %v5756 = vrot.slane %v5742, %v5755
    %v5757 = vcombine.low %v5749, %v5756
    %v5758 = vcombine.low %v5641, %v5642
    %v5760 = vunpack.c.l.s4 1966171168
    %v5761 = vunpack.c.0.s8 %v5760
    %v5762 = vlaneseq
    %v5763 = vshrl.u32 %v5762, 7
    %v5764 = vsub.s32 %v5761, %v5763
    %v5765 = vrot.slane %v5758, %v5764
    %v5767 = vunpack.c.l.s4 1966171168
    %v5768 = vunpack.c.0.s8 %v5767
    %v5769 = vlaneseq
    %v5770 = vshrl.u32 %v5769, 7
    %v5771 = vsub.s32 %v5768, %v5770
    %v5772 = vrot.slane %v5765, %v5771
    %5776 = vmatprep.subr.mxu0 0.0
    %5777 = vmatpush1.msra.mxu0 %v5659
    %5778 = vmatprep.subr.mxu0 0.0
    %5779 = vmatpush1.msra.mxu0 %v5658
    %5780 = vmatprep.subr.mxu0 0.0
    %5781 = vmatpush1.msra.mxu0 %v5657
    %5782 = vmatprep.subr.mxu0 0.0
    %5783 = vmatpush1.msra.mxu0 %v5656
    %5784 = vmatprep.subr.mxu0 0.0
    %5785 = vmatpush1.msra.mxu0 %v5655
    %5786 = vmatprep.subr.mxu0 0.0
    %5787 = vmatpush1.msra.mxu0 %v5654
    %5788 = vmatprep.subr.mxu0 0.0
    %5789 = vmatpush1.msra.mxu0 %v5653
    %5790 = vmatprep.subr.mxu0 0.0
    %5791 = vmatpush1.msra.mxu0 %v5652
    %5792 = vmatprep.subr.mxu0 0.0
    %5793 = vmatpush1.msra.mxu0 %v5651
    %5794 = vmatprep.subr.mxu0 0.0
    %5795 = vmatpush1.msra.mxu0 %v5650
    %5796 = vmatprep.subr.mxu0 0.0
    %5797 = vmatpush1.msra.mxu0 %v5649
    %5798 = vmatprep.subr.mxu0 0.0
    %5799 = vmatpush1.msra.mxu0 %v5648
    %5800 = vmatprep.subr.mxu0 0.0
    %5801 = vmatpush1.msra.mxu0 %v5647
    %5802 = vmatprep.subr.mxu0 0.0
    %5803 = vmatpush1.msra.mxu0 %v5646
    %5804 = vmatprep.subr.mxu0 0.0
    %5805 = vmatpush1.msra.mxu0 %v5645
    %5806 = vmatprep.subr.mxu0 0.0
    %5807 = vmatpush1.msra.mxu0 %v5644
    %5808 = vmatprep.subr.mxu0 0.0
    %5809 = vmatpush2.msra.mxu0 0.0
    %5810 = vmatprep.subr.mxu0 0.0
    %5811 = vmatpush2.msra.mxu0 0.0
    %5812 = vmatprep.subr.mxu0 0.0
    %5813 = vmatpush2.msra.mxu0 0.0
    %5814 = vmatprep.subr.mxu0 0.0
    %5815 = vmatpush2.msra.mxu0 0.0
    %5816 = vmatprep.subr.mxu0 0.0
    %5817 = vmatpush2.msra.mxu0 0.0
    %5818 = vmatprep.subr.mxu0 0.0
    %5819 = vmatpush2.msra.mxu0 0.0
    %5820 = vmatprep.subr.mxu0 0.0
    %5821 = vmatpush2.msra.mxu0 0.0
    %5822 = vmatprep.subr.mxu0 0.0
    %5823 = vmatpush2.msra.mxu0 0.0
    %5824 = vmatprep.subr.mxu0 0.0
    %5825 = vmatpush2.msra.mxu0 0.0
    %5826 = vmatprep.subr.mxu0 0.0
    %5827 = vmatpush2.msra.mxu0 0.0
    %5828 = vmatprep.subr.mxu0 0.0
    %5829 = vmatpush2.msra.mxu0 0.0
    %5830 = vmatprep.subr.mxu0 0.0
    %5831 = vmatpush2.msra.mxu0 0.0
    %5832 = vmatprep.subr.mxu0 0.0
    %5833 = vmatpush2.msra.mxu0 0.0
    %5834 = vmatprep.subr.mxu0 0.0
    %5835 = vmatpush2.msra.mxu0 0.0
    %5836 = vmatprep.subr.mxu0 0.0
    %5837 = vmatpush2.msra.mxu0 0.0
    %5838 = vmatprep.subr.mxu0 0.0
    %5839 = vmatpush2.msra.mxu0 0.0
    %5840 = vmatprep.mubr.f32.mxu0 0.0
    %5841 = vmatmul.mubr.f32.gmra.mxu0 %v5708
    %v5842 = vpop.f32.mrf.mxu0
    %v5843 = vadd.f32 0.0, %v5842
    %v5844 = vpop.f32.mrf.mxu0
    %5845 = vmatprep.mubr.f32.mxu0 0.0
    %5846 = vmatmul.mubr.f32.gmra.mxu0 %v5757
    %v5847 = vpop.f32.mrf.mxu0
    %v5848 = vadd.f32 0.0, %v5847
    %v5849 = vpop.f32.mrf.mxu0
    %5850 = vmatprep.mubr.f32.mxu0 0.0
    %5851 = vmatmul.mubr.f32.gmra.mxu0 %v5772
    %v5852 = vpop.f32.mrf.mxu0
    %v5853 = vadd.f32 0.0, %v5852
    %v5854 = vpop.f32.mrf.mxu0
    %5855 = vdwg.mxu0
    %v5856 = vadd.f32 %v5484, %v5843
    %v5857 = vadd.f32 %v5485, %v5848
    %v5858 = vadd.f32 %v5486, %v5853
    %s5859 = scalar_lea.vmem %s4743, 3 [#allocation2]
    %v5860 = vld [vmem:[%s5859] ss:$2 sm:$0x7]
    %s5861 = scalar_lea.vmem %s4743, 19 [#allocation2]
    %v5862 = vld [vmem:[%s5861] ss:$2 sm:$0x7]
    %s5863 = scalar_lea.vmem %s4743, 35 [#allocation2]
    %v5864 = vld [vmem:[%s5863] ss:$2 sm:$0x7]
    %s5865 = scalar_lea.vmem %s4743, 67 [#allocation2]
    %v5866 = vld [vmem:[%s5865] ss:$2 sm:$0x7]
    %s5867 = scalar_lea.vmem %s4743, 83 [#allocation2]
    %v5868 = vld [vmem:[%s5867] ss:$2 sm:$0x7]
    %s5869 = scalar_lea.vmem %s4743, 99 [#allocation2]
    %v5870 = vld [vmem:[%s5869] ss:$2 sm:$0x7]
    %v5878 = vunpack.c.l.s4 1966171168
    %v5879 = vunpack.c.0.s8 %v5878
    %v5880 = vlaneseq
    %v5881 = vshrl.u32 %v5880, 7
    %v5882 = vsub.s32 %v5879, %v5881
    %v5883 = vrot.slane %v5860, %v5882
    %v5884 = vcombine.high %v5883, %v5883
    %v5886 = vunpack.c.l.s4 1966171168
    %v5887 = vunpack.c.0.s8 %v5886
    %v5888 = vlaneseq
    %v5889 = vshrl.u32 %v5888, 7
    %v5890 = vsub.s32 %v5887, %v5889
    %v5891 = vrot.slane %v5883, %v5890
    %v5893 = vunpack.c.l.s4 1966171168
    %v5894 = vunpack.c.0.s8 %v5893
    %v5895 = vlaneseq
    %v5896 = vshrl.u32 %v5895, 7
    %v5897 = vsub.s32 %v5894, %v5896
    %v5898 = vrot.slane %v5884, %v5897
    %v5899 = vcombine.high %v5891, %v5891
    %v5901 = vunpack.c.l.s4 1966171168
    %v5902 = vunpack.c.0.s8 %v5901
    %v5903 = vlaneseq
    %v5904 = vshrl.u32 %v5903, 7
    %v5905 = vsub.s32 %v5902, %v5904
    %v5906 = vrot.slane %v5862, %v5905
    %v5907 = vcombine.high %v5906, %v5906
    %v5909 = vunpack.c.l.s4 1966171168
    %v5910 = vunpack.c.0.s8 %v5909
    %v5911 = vlaneseq
    %v5912 = vshrl.u32 %v5911, 7
    %v5913 = vsub.s32 %v5910, %v5912
    %v5914 = vrot.slane %v5906, %v5913
    %v5916 = vunpack.c.l.s4 1966171168
    %v5917 = vunpack.c.0.s8 %v5916
    %v5918 = vlaneseq
    %v5919 = vshrl.u32 %v5918, 7
    %v5920 = vsub.s32 %v5917, %v5919
    %v5921 = vrot.slane %v5907, %v5920
    %v5922 = vcombine.high %v5914, %v5914
    %v5924 = vunpack.c.l.s4 1966171168
    %v5925 = vunpack.c.0.s8 %v5924
    %v5926 = vlaneseq
    %v5927 = vshrl.u32 %v5926, 7
    %v5928 = vsub.s32 %v5925, %v5927
    %v5929 = vrot.slane %v5864, %v5928
    %v5930 = vcombine.high %v5929, %v5929
    %v5932 = vunpack.c.l.s4 1966171168
    %v5933 = vunpack.c.0.s8 %v5932
    %v5934 = vlaneseq
    %v5935 = vshrl.u32 %v5934, 7
    %v5936 = vsub.s32 %v5933, %v5935
    %v5937 = vrot.slane %v5929, %v5936
    %v5939 = vunpack.c.l.s4 1966171168
    %v5940 = vunpack.c.0.s8 %v5939
    %v5941 = vlaneseq
    %v5942 = vshrl.u32 %v5941, 7
    %v5943 = vsub.s32 %v5940, %v5942
    %v5944 = vrot.slane %v5930, %v5943
    %v5945 = vcombine.high %v5937, %v5937
    %v5947 = vunpack.c.l.s4 1966171168
    %v5948 = vunpack.c.0.s8 %v5947
    %v5949 = vlaneseq
    %v5950 = vshrl.u32 %v5949, 7
    %v5951 = vsub.s32 %v5948, %v5950
    %v5952 = vrot.slane %v5866, %v5951
    %v5953 = vcombine.high %v5952, %v5952
    %v5955 = vunpack.c.l.s4 1966171168
    %v5956 = vunpack.c.0.s8 %v5955
    %v5957 = vlaneseq
    %v5958 = vshrl.u32 %v5957, 7
    %v5959 = vsub.s32 %v5956, %v5958
    %v5960 = vrot.slane %v5952, %v5959
    %v5962 = vunpack.c.l.s4 1966171168
    %v5963 = vunpack.c.0.s8 %v5962
    %v5964 = vlaneseq
    %v5965 = vshrl.u32 %v5964, 7
    %v5966 = vsub.s32 %v5963, %v5965
    %v5967 = vrot.slane %v5953, %v5966
    %v5968 = vcombine.high %v5960, %v5960
    %v5970 = vunpack.c.l.s4 1966171168
    %v5971 = vunpack.c.0.s8 %v5970
    %v5972 = vlaneseq
    %v5973 = vshrl.u32 %v5972, 7
    %v5974 = vsub.s32 %v5971, %v5973
    %v5975 = vrot.slane %v5868, %v5974
    %v5976 = vcombine.high %v5975, %v5975
    %v5978 = vunpack.c.l.s4 1966171168
    %v5979 = vunpack.c.0.s8 %v5978
    %v5980 = vlaneseq
    %v5981 = vshrl.u32 %v5980, 7
    %v5982 = vsub.s32 %v5979, %v5981
    %v5983 = vrot.slane %v5975, %v5982
    %v5985 = vunpack.c.l.s4 1966171168
    %v5986 = vunpack.c.0.s8 %v5985
    %v5987 = vlaneseq
    %v5988 = vshrl.u32 %v5987, 7
    %v5989 = vsub.s32 %v5986, %v5988
    %v5990 = vrot.slane %v5976, %v5989
    %v5991 = vcombine.high %v5983, %v5983
    %v5993 = vunpack.c.l.s4 1966171168
    %v5994 = vunpack.c.0.s8 %v5993
    %v5995 = vlaneseq
    %v5996 = vshrl.u32 %v5995, 7
    %v5997 = vsub.s32 %v5994, %v5996
    %v5998 = vrot.slane %v5870, %v5997
    %v5999 = vcombine.high %v5998, %v5998
    %v6001 = vunpack.c.l.s4 1966171168
    %v6002 = vunpack.c.0.s8 %v6001
    %v6003 = vlaneseq
    %v6004 = vshrl.u32 %v6003, 7
    %v6005 = vsub.s32 %v6002, %v6004
    %v6006 = vrot.slane %v5998, %v6005
    %v6008 = vunpack.c.l.s4 1966171168
    %v6009 = vunpack.c.0.s8 %v6008
    %v6010 = vlaneseq
    %v6011 = vshrl.u32 %v6010, 7
    %v6012 = vsub.s32 %v6009, %v6011
    %v6013 = vrot.slane %v5999, %v6012
    %v6014 = vcombine.high %v6006, %v6006
    %s6015 = scalar_lea.vmem %s3, 1920
    %v6016 = vld [vmem:[%s6015] sm:$0xff]
    %v6017 = vld [vmem:[%s6015 + $0x8] sm:$0xff]
    %v6018 = vld [vmem:[%s6015 + $0x10] sm:$0xff]
    %v6019 = vld [vmem:[%s6015 + $0x18] sm:$0xff]
    %v6020 = vld [vmem:[%s6015 + $0x20] sm:$0xff]
    %v6021 = vld [vmem:[%s6015 + $0x28] sm:$0xff]
    %v6022 = vld [vmem:[%s6015 + $0x30] sm:$0xff]
    %v6023 = vld [vmem:[%s6015 + $0x38] sm:$0xff]
    %v6024 = vld [vmem:[%s6015 + $0x40] sm:$0xff]
    %v6025 = vld [vmem:[%s6015 + $0x48] sm:$0xff]
    %v6026 = vld [vmem:[%s6015 + $0x50] sm:$0xff]
    %v6027 = vld [vmem:[%s6015 + $0x58] sm:$0xff]
    %v6028 = vld [vmem:[%s6015 + $0x60] sm:$0xff]
    %v6029 = vld [vmem:[%s6015 + $0x68] sm:$0xff]
    %v6030 = vld [vmem:[%s6015 + $0x70] sm:$0xff]
    %v6031 = vld [vmem:[%s6015 + $0x78] sm:$0xff]
    %v6032 = vcombine.low %v5891, %v5898
    %v6033 = vcombine.low %v5899, %v5914
    %v6034 = vcombine.low %v5921, %v5922
    %v6035 = vcombine.low %v5937, %v5944
    %v6037 = vunpack.c.l.s4 1966171168
    %v6038 = vunpack.c.0.s8 %v6037
    %v6039 = vlaneseq
    %v6040 = vshrl.u32 %v6039, 7
    %v6041 = vsub.s32 %v6038, %v6040
    %v6042 = vrot.slane %v6032, %v6041
    %v6044 = vunpack.c.l.s4 1966171168
    %v6045 = vunpack.c.0.s8 %v6044
    %v6046 = vlaneseq
    %v6047 = vshrl.u32 %v6046, 7
    %v6048 = vsub.s32 %v6045, %v6047
    %v6049 = vrot.slane %v6033, %v6048
    %v6051 = vunpack.c.l.s4 1966171168
    %v6052 = vunpack.c.0.s8 %v6051
    %v6053 = vlaneseq
    %v6054 = vshrl.u32 %v6053, 7
    %v6055 = vsub.s32 %v6052, %v6054
    %v6056 = vrot.slane %v6034, %v6055
    %v6058 = vunpack.c.l.s4 1966171168
    %v6059 = vunpack.c.0.s8 %v6058
    %v6060 = vlaneseq
    %v6061 = vshrl.u32 %v6060, 7
    %v6062 = vsub.s32 %v6059, %v6061
    %v6063 = vrot.slane %v6035, %v6062
    %v6064 = vcombine.low %v6042, %v6049
    %v6065 = vcombine.low %v6056, %v6063
    %v6067 = vunpack.c.l.s4 1966171168
    %v6068 = vunpack.c.0.s8 %v6067
    %v6069 = vlaneseq
    %v6070 = vshrl.u32 %v6069, 7
    %v6071 = vsub.s32 %v6068, %v6070
    %v6072 = vrot.slane %v6064, %v6071
    %v6074 = vunpack.c.l.s4 1966171168
    %v6075 = vunpack.c.0.s8 %v6074
    %v6076 = vlaneseq
    %v6077 = vshrl.u32 %v6076, 7
    %v6078 = vsub.s32 %v6075, %v6077
    %v6079 = vrot.slane %v6065, %v6078
    %v6080 = vcombine.low %v6072, %v6079
    %v6081 = vcombine.low %v5945, %v5960
    %v6082 = vcombine.low %v5967, %v5968
    %v6083 = vcombine.low %v5983, %v5990
    %v6084 = vcombine.low %v5991, %v6006
    %v6086 = vunpack.c.l.s4 1966171168
    %v6087 = vunpack.c.0.s8 %v6086
    %v6088 = vlaneseq
    %v6089 = vshrl.u32 %v6088, 7
    %v6090 = vsub.s32 %v6087, %v6089
    %v6091 = vrot.slane %v6081, %v6090
    %v6093 = vunpack.c.l.s4 1966171168
    %v6094 = vunpack.c.0.s8 %v6093
    %v6095 = vlaneseq
    %v6096 = vshrl.u32 %v6095, 7
    %v6097 = vsub.s32 %v6094, %v6096
    %v6098 = vrot.slane %v6082, %v6097
    %v6100 = vunpack.c.l.s4 1966171168
    %v6101 = vunpack.c.0.s8 %v6100
    %v6102 = vlaneseq
    %v6103 = vshrl.u32 %v6102, 7
    %v6104 = vsub.s32 %v6101, %v6103
    %v6105 = vrot.slane %v6083, %v6104
    %v6107 = vunpack.c.l.s4 1966171168
    %v6108 = vunpack.c.0.s8 %v6107
    %v6109 = vlaneseq
    %v6110 = vshrl.u32 %v6109, 7
    %v6111 = vsub.s32 %v6108, %v6110
    %v6112 = vrot.slane %v6084, %v6111
    %v6113 = vcombine.low %v6091, %v6098
    %v6114 = vcombine.low %v6105, %v6112
    %v6116 = vunpack.c.l.s4 1966171168
    %v6117 = vunpack.c.0.s8 %v6116
    %v6118 = vlaneseq
    %v6119 = vshrl.u32 %v6118, 7
    %v6120 = vsub.s32 %v6117, %v6119
    %v6121 = vrot.slane %v6113, %v6120
    %v6123 = vunpack.c.l.s4 1966171168
    %v6124 = vunpack.c.0.s8 %v6123
    %v6125 = vlaneseq
    %v6126 = vshrl.u32 %v6125, 7
    %v6127 = vsub.s32 %v6124, %v6126
    %v6128 = vrot.slane %v6114, %v6127
    %v6129 = vcombine.low %v6121, %v6128
    %v6130 = vcombine.low %v6013, %v6014
    %v6132 = vunpack.c.l.s4 1966171168
    %v6133 = vunpack.c.0.s8 %v6132
    %v6134 = vlaneseq
    %v6135 = vshrl.u32 %v6134, 7
    %v6136 = vsub.s32 %v6133, %v6135
    %v6137 = vrot.slane %v6130, %v6136
    %v6139 = vunpack.c.l.s4 1966171168
    %v6140 = vunpack.c.0.s8 %v6139
    %v6141 = vlaneseq
    %v6142 = vshrl.u32 %v6141, 7
    %v6143 = vsub.s32 %v6140, %v6142
    %v6144 = vrot.slane %v6137, %v6143
    %6148 = vmatprep.subr.mxu0 0.0
    %6149 = vmatpush1.msra.mxu0 %v6031
    %6150 = vmatprep.subr.mxu0 0.0
    %6151 = vmatpush1.msra.mxu0 %v6030
    %6152 = vmatprep.subr.mxu0 0.0
    %6153 = vmatpush1.msra.mxu0 %v6029
    %6154 = vmatprep.subr.mxu0 0.0
    %6155 = vmatpush1.msra.mxu0 %v6028
    %6156 = vmatprep.subr.mxu0 0.0
    %6157 = vmatpush1.msra.mxu0 %v6027
    %6158 = vmatprep.subr.mxu0 0.0
    %6159 = vmatpush1.msra.mxu0 %v6026
    %6160 = vmatprep.subr.mxu0 0.0
    %6161 = vmatpush1.msra.mxu0 %v6025
    %6162 = vmatprep.subr.mxu0 0.0
    %6163 = vmatpush1.msra.mxu0 %v6024
    %6164 = vmatprep.subr.mxu0 0.0
    %6165 = vmatpush1.msra.mxu0 %v6023
    %6166 = vmatprep.subr.mxu0 0.0
    %6167 = vmatpush1.msra.mxu0 %v6022
    %6168 = vmatprep.subr.mxu0 0.0
    %6169 = vmatpush1.msra.mxu0 %v6021
    %6170 = vmatprep.subr.mxu0 0.0
    %6171 = vmatpush1.msra.mxu0 %v6020
    %6172 = vmatprep.subr.mxu0 0.0
    %6173 = vmatpush1.msra.mxu0 %v6019
    %6174 = vmatprep.subr.mxu0 0.0
    %6175 = vmatpush1.msra.mxu0 %v6018
    %6176 = vmatprep.subr.mxu0 0.0
    %6177 = vmatpush1.msra.mxu0 %v6017
    %6178 = vmatprep.subr.mxu0 0.0
    %6179 = vmatpush1.msra.mxu0 %v6016
    %6180 = vmatprep.subr.mxu0 0.0
    %6181 = vmatpush2.msra.mxu0 0.0
    %6182 = vmatprep.subr.mxu0 0.0
    %6183 = vmatpush2.msra.mxu0 0.0
    %6184 = vmatprep.subr.mxu0 0.0
    %6185 = vmatpush2.msra.mxu0 0.0
    %6186 = vmatprep.subr.mxu0 0.0
    %6187 = vmatpush2.msra.mxu0 0.0
    %6188 = vmatprep.subr.mxu0 0.0
    %6189 = vmatpush2.msra.mxu0 0.0
    %6190 = vmatprep.subr.mxu0 0.0
    %6191 = vmatpush2.msra.mxu0 0.0
    %6192 = vmatprep.subr.mxu0 0.0
    %6193 = vmatpush2.msra.mxu0 0.0
    %6194 = vmatprep.subr.mxu0 0.0
    %6195 = vmatpush2.msra.mxu0 0.0
    %6196 = vmatprep.subr.mxu0 0.0
    %6197 = vmatpush2.msra.mxu0 0.0
    %6198 = vmatprep.subr.mxu0 0.0
    %6199 = vmatpush2.msra.mxu0 0.0
    %6200 = vmatprep.subr.mxu0 0.0
    %6201 = vmatpush2.msra.mxu0 0.0
    %6202 = vmatprep.subr.mxu0 0.0
    %6203 = vmatpush2.msra.mxu0 0.0
    %6204 = vmatprep.subr.mxu0 0.0
    %6205 = vmatpush2.msra.mxu0 0.0
    %6206 = vmatprep.subr.mxu0 0.0
    %6207 = vmatpush2.msra.mxu0 0.0
    %6208 = vmatprep.subr.mxu0 0.0
    %6209 = vmatpush2.msra.mxu0 0.0
    %6210 = vmatprep.subr.mxu0 0.0
    %6211 = vmatpush2.msra.mxu0 0.0
    %6212 = vmatprep.mubr.f32.mxu0 0.0
    %6213 = vmatmul.mubr.f32.gmra.mxu0 %v6080
    %v6214 = vpop.f32.mrf.mxu0
    %v6215 = vadd.f32 0.0, %v6214
    %v6216 = vpop.f32.mrf.mxu0
    %6217 = vmatprep.mubr.f32.mxu0 0.0
    %6218 = vmatmul.mubr.f32.gmra.mxu0 %v6129
    %v6219 = vpop.f32.mrf.mxu0
    %v6220 = vadd.f32 0.0, %v6219
    %v6221 = vpop.f32.mrf.mxu0
    %6222 = vmatprep.mubr.f32.mxu0 0.0
    %6223 = vmatmul.mubr.f32.gmra.mxu0 %v6144
    %v6224 = vpop.f32.mrf.mxu0
    %v6225 = vadd.f32 0.0, %v6224
    %v6226 = vpop.f32.mrf.mxu0
    %6227 = vdwg.mxu0
    %v6228 = vadd.f32 %v5856, %v6215
    %v6229 = vadd.f32 %v5857, %v6220
    %v6230 = vadd.f32 %v5858, %v6225
    %v6231 = vld [vmem:[%s4] sm:$0x1]
    %v6233 = vlaneseq
    %v6234 = vshrl.u32 %v6233, 7
    %v6235 = vsub.s32 0, %v6234
    %v6236 = vrot.slane %v6231, %v6235
    %v6238 = vadd.f32 %v6228, %v6236
    %v6239 = vadd.f32 %v6229, %v6236
    %v6240 = vadd.f32 %v6230, %v6236
    %v6241 = vmax.f32 %v6238, 0.0
    %v6242 = vmax.f32 %v6239, 0.0
    %v6243 = vmax.f32 %v6240, 0.0
    %v6247 = vcombine.high %v6241, %v6241
    %v6249 = vunpack.c.l.s4 1966171168
    %v6250 = vunpack.c.0.s8 %v6249
    %v6251 = vlaneseq
    %v6252 = vshrl.u32 %v6251, 7
    %v6253 = vsub.s32 %v6250, %v6252
    %v6254 = vrot.slane %v6241, %v6253
    %v6256 = vunpack.c.l.s4 1966171168
    %v6257 = vunpack.c.0.s8 %v6256
    %v6258 = vlaneseq
    %v6259 = vshrl.u32 %v6258, 7
    %v6260 = vsub.s32 %v6257, %v6259
    %v6261 = vrot.slane %v6247, %v6260
    %v6262 = vcombine.high %v6254, %v6254
    %v6263 = vcombine.high %v6261, %v6261
    %v6265 = vunpack.c.l.s4 1966171168
    %v6266 = vunpack.c.0.s8 %v6265
    %v6267 = vlaneseq
    %v6268 = vshrl.u32 %v6267, 7
    %v6269 = vsub.s32 %v6266, %v6268
    %v6270 = vrot.slane %v6254, %v6269
    %v6272 = vunpack.c.l.s4 1966171168
    %v6273 = vunpack.c.0.s8 %v6272
    %v6274 = vlaneseq
    %v6275 = vshrl.u32 %v6274, 7
    %v6276 = vsub.s32 %v6273, %v6275
    %v6277 = vrot.slane %v6261, %v6276
    %v6279 = vunpack.c.l.s4 1966171168
    %v6280 = vunpack.c.0.s8 %v6279
    %v6281 = vlaneseq
    %v6282 = vshrl.u32 %v6281, 7
    %v6283 = vsub.s32 %v6280, %v6282
    %v6284 = vrot.slane %v6262, %v6283
    %v6286 = vunpack.c.l.s4 1966171168
    %v6287 = vunpack.c.0.s8 %v6286
    %v6288 = vlaneseq
    %v6289 = vshrl.u32 %v6288, 7
    %v6290 = vsub.s32 %v6287, %v6289
    %v6291 = vrot.slane %v6263, %v6290
    %v6292 = vcombine.high %v6270, %v6270
    %v6293 = vcombine.high %v6277, %v6277
    %v6294 = vcombine.high %v6284, %v6284
    %v6295 = vcombine.high %v6291, %v6291
    %v6296 = vcombine.high %v6242, %v6242
    %v6298 = vunpack.c.l.s4 1966171168
    %v6299 = vunpack.c.0.s8 %v6298
    %v6300 = vlaneseq
    %v6301 = vshrl.u32 %v6300, 7
    %v6302 = vsub.s32 %v6299, %v6301
    %v6303 = vrot.slane %v6242, %v6302
    %v6305 = vunpack.c.l.s4 1966171168
    %v6306 = vunpack.c.0.s8 %v6305
    %v6307 = vlaneseq
    %v6308 = vshrl.u32 %v6307, 7
    %v6309 = vsub.s32 %v6306, %v6308
    %v6310 = vrot.slane %v6296, %v6309
    %v6311 = vcombine.high %v6303, %v6303
    %v6312 = vcombine.high %v6310, %v6310
    %v6314 = vunpack.c.l.s4 1966171168
    %v6315 = vunpack.c.0.s8 %v6314
    %v6316 = vlaneseq
    %v6317 = vshrl.u32 %v6316, 7
    %v6318 = vsub.s32 %v6315, %v6317
    %v6319 = vrot.slane %v6303, %v6318
    %v6321 = vunpack.c.l.s4 1966171168
    %v6322 = vunpack.c.0.s8 %v6321
    %v6323 = vlaneseq
    %v6324 = vshrl.u32 %v6323, 7
    %v6325 = vsub.s32 %v6322, %v6324
    %v6326 = vrot.slane %v6310, %v6325
    %v6328 = vunpack.c.l.s4 1966171168
    %v6329 = vunpack.c.0.s8 %v6328
    %v6330 = vlaneseq
    %v6331 = vshrl.u32 %v6330, 7
    %v6332 = vsub.s32 %v6329, %v6331
    %v6333 = vrot.slane %v6311, %v6332
    %v6335 = vunpack.c.l.s4 1966171168
    %v6336 = vunpack.c.0.s8 %v6335
    %v6337 = vlaneseq
    %v6338 = vshrl.u32 %v6337, 7
    %v6339 = vsub.s32 %v6336, %v6338
    %v6340 = vrot.slane %v6312, %v6339
    %v6341 = vcombine.high %v6319, %v6319
    %v6342 = vcombine.high %v6326, %v6326
    %v6343 = vcombine.high %v6333, %v6333
    %v6344 = vcombine.high %v6340, %v6340
    %v6346 = vunpack.c.l.s4 1966171168
    %v6347 = vunpack.c.0.s8 %v6346
    %v6348 = vlaneseq
    %v6349 = vshrl.u32 %v6348, 7
    %v6350 = vsub.s32 %v6347, %v6349
    %v6351 = vrot.slane %v6243, %v6350
    %v6352 = vcombine.high %v6351, %v6351
    %v6354 = vunpack.c.l.s4 1966171168
    %v6355 = vunpack.c.0.s8 %v6354
    %v6356 = vlaneseq
    %v6357 = vshrl.u32 %v6356, 7
    %v6358 = vsub.s32 %v6355, %v6357
    %v6359 = vrot.slane %v6351, %v6358
    %v6361 = vunpack.c.l.s4 1966171168
    %v6362 = vunpack.c.0.s8 %v6361
    %v6363 = vlaneseq
    %v6364 = vshrl.u32 %v6363, 7
    %v6365 = vsub.s32 %v6362, %v6364
    %v6366 = vrot.slane %v6352, %v6365
    %v6367 = vcombine.low %v6270, %v6284
    %v6369 = vunpack.c.l.s4 1966171168
    %v6370 = vunpack.c.0.s8 %v6369
    %v6371 = vlaneseq
    %v6372 = vshrl.u32 %v6371, 7
    %v6373 = vsub.s32 %v6370, %v6372
    %v6374 = vrot.slane %v6367, %v6373
    %v6376 = vunpack.c.l.s4 1966171168
    %v6377 = vunpack.c.0.s8 %v6376
    %v6378 = vlaneseq
    %v6379 = vshrl.u32 %v6378, 7
    %v6380 = vsub.s32 %v6377, %v6379
    %v6381 = vrot.slane %v6292, %v6380
    %v6382 = vcombine.low %v6374, %v6381
    %v6384 = vunpack.c.l.s4 1966171168
    %v6385 = vunpack.c.0.s8 %v6384
    %v6386 = vlaneseq
    %v6387 = vshrl.u32 %v6386, 7
    %v6388 = vsub.s32 %v6385, %v6387
    %v6389 = vrot.slane %v6382, %v6388
    %v6390 = vcombine.low %v6294, %v6277
    %v6392 = vunpack.c.l.s4 1966171168
    %v6393 = vunpack.c.0.s8 %v6392
    %v6394 = vlaneseq
    %v6395 = vshrl.u32 %v6394, 7
    %v6396 = vsub.s32 %v6393, %v6395
    %v6397 = vrot.slane %v6390, %v6396
    %v6399 = vunpack.c.l.s4 1966171168
    %v6400 = vunpack.c.0.s8 %v6399
    %v6401 = vlaneseq
    %v6402 = vshrl.u32 %v6401, 7
    %v6403 = vsub.s32 %v6400, %v6402
    %v6404 = vrot.slane %v6291, %v6403
    %v6405 = vcombine.low %v6397, %v6404
    %v6407 = vunpack.c.l.s4 1966171168
    %v6408 = vunpack.c.0.s8 %v6407
    %v6409 = vlaneseq
    %v6410 = vshrl.u32 %v6409, 7
    %v6411 = vsub.s32 %v6408, %v6410
    %v6412 = vrot.slane %v6405, %v6411
    %v6413 = vcombine.low %v6293, %v6295
    %v6415 = vunpack.c.l.s4 1966171168
    %v6416 = vunpack.c.0.s8 %v6415
    %v6417 = vlaneseq
    %v6418 = vshrl.u32 %v6417, 7
    %v6419 = vsub.s32 %v6416, %v6418
    %v6420 = vrot.slane %v6413, %v6419
    %v6422 = vunpack.c.l.s4 1966171168
    %v6423 = vunpack.c.0.s8 %v6422
    %v6424 = vlaneseq
    %v6425 = vshrl.u32 %v6424, 7
    %v6426 = vsub.s32 %v6423, %v6425
    %v6427 = vrot.slane %v6319, %v6426
    %v6428 = vcombine.low %v6420, %v6427
    %v6430 = vunpack.c.l.s4 1966171168
    %v6431 = vunpack.c.0.s8 %v6430
    %v6432 = vlaneseq
    %v6433 = vshrl.u32 %v6432, 7
    %v6434 = vsub.s32 %v6431, %v6433
    %v6435 = vrot.slane %v6428, %v6434
    %v6436 = vcombine.low %v6333, %v6341
    %v6438 = vunpack.c.l.s4 1966171168
    %v6439 = vunpack.c.0.s8 %v6438
    %v6440 = vlaneseq
    %v6441 = vshrl.u32 %v6440, 7
    %v6442 = vsub.s32 %v6439, %v6441
    %v6443 = vrot.slane %v6436, %v6442
    %v6445 = vunpack.c.l.s4 1966171168
    %v6446 = vunpack.c.0.s8 %v6445
    %v6447 = vlaneseq
    %v6448 = vshrl.u32 %v6447, 7
    %v6449 = vsub.s32 %v6446, %v6448
    %v6450 = vrot.slane %v6343, %v6449
    %v6451 = vcombine.low %v6443, %v6450
    %v6453 = vunpack.c.l.s4 1966171168
    %v6454 = vunpack.c.0.s8 %v6453
    %v6455 = vlaneseq
    %v6456 = vshrl.u32 %v6455, 7
    %v6457 = vsub.s32 %v6454, %v6456
    %v6458 = vrot.slane %v6451, %v6457
    %v6459 = vcombine.low %v6326, %v6340
    %v6461 = vunpack.c.l.s4 1966171168
    %v6462 = vunpack.c.0.s8 %v6461
    %v6463 = vlaneseq
    %v6464 = vshrl.u32 %v6463, 7
    %v6465 = vsub.s32 %v6462, %v6464
    %v6466 = vrot.slane %v6459, %v6465
    %v6468 = vunpack.c.l.s4 1966171168
    %v6469 = vunpack.c.0.s8 %v6468
    %v6470 = vlaneseq
    %v6471 = vshrl.u32 %v6470, 7
    %v6472 = vsub.s32 %v6469, %v6471
    %v6473 = vrot.slane %v6342, %v6472
    %v6474 = vcombine.low %v6466, %v6473
    %v6476 = vunpack.c.l.s4 1966171168
    %v6477 = vunpack.c.0.s8 %v6476
    %v6478 = vlaneseq
    %v6479 = vshrl.u32 %v6478, 7
    %v6480 = vsub.s32 %v6477, %v6479
    %v6481 = vrot.slane %v6474, %v6480
    %v6482 = vcombine.low %v6344, %v6359
    %v6484 = vunpack.c.l.s4 1966171168
    %v6485 = vunpack.c.0.s8 %v6484
    %v6486 = vlaneseq
    %v6487 = vshrl.u32 %v6486, 7
    %v6488 = vsub.s32 %v6485, %v6487
    %v6489 = vrot.slane %v6482, %v6488
    %v6491 = vunpack.c.l.s4 1966171168
    %v6492 = vunpack.c.0.s8 %v6491
    %v6493 = vlaneseq
    %v6494 = vshrl.u32 %v6493, 7
    %v6495 = vsub.s32 %v6492, %v6494
    %v6496 = vrot.slane %v6366, %v6495
    %v6497 = vcombine.low %v6489, %v6496
    %v6499 = vunpack.c.l.s4 1966171168
    %v6500 = vunpack.c.0.s8 %v6499
    %v6501 = vlaneseq
    %v6502 = vshrl.u32 %v6501, 7
    %v6503 = vsub.s32 %v6500, %v6502
    %v6504 = vrot.slane %v6497, %v6503
    %6511 = vst [vmem:[#allocation3] sm:$0x7] %v6389
    %6512 = vst [vmem:[#allocation3 + $0x4] sm:$0x7] %v6412
    %6513 = vst [vmem:[#allocation3 + $0x8] sm:$0x7] %v6435
    %6514 = vst [vmem:[#allocation3 + $0xc] sm:$0x7] %v6458
    %6515 = vst [vmem:[#allocation3 + $0x10] sm:$0x7] %v6481
    %6516 = vst [vmem:[#allocation3 + $0x14] sm:$0x7] %v6504
    %v6517 = vld [vmem:[#allocation3] sm:$0x1]
    %v6518 = vld [vmem:[#allocation3 + $0xc] sm:$0x1]
    %v6519 = vld [vmem:[%s5] sm:$0xff]
    %v6520 = vld [vmem:[%s5 + $0x8] sm:$0xff]
    %v6521 = vld [vmem:[%s5 + $0x10] sm:$0xff]
    %v6522 = vld [vmem:[%s5 + $0x18] sm:$0xff]
    %v6523 = vld [vmem:[%s5 + $0x20] sm:$0xff]
    %v6524 = vld [vmem:[%s5 + $0x28] sm:$0xff]
    %v6525 = vld [vmem:[%s5 + $0x30] sm:$0xff]
    %v6526 = vld [vmem:[%s5 + $0x38] sm:$0xff]
    %v6527 = vld [vmem:[%s5 + $0x40] sm:$0xff]
    %v6528 = vld [vmem:[%s5 + $0x48] sm:$0xff]
    %v6529 = vld [vmem:[%s5 + $0x50] sm:$0xff]
    %v6530 = vld [vmem:[%s5 + $0x58] sm:$0xff]
    %v6531 = vld [vmem:[%s5 + $0x60] sm:$0xff]
    %v6532 = vld [vmem:[%s5 + $0x68] sm:$0xff]
    %v6533 = vld [vmem:[%s5 + $0x70] sm:$0xff]
    %v6534 = vld [vmem:[%s5 + $0x78] sm:$0xff]
    %v6535 = vld [vmem:[#allocation3 + $0x1] sm:$0x1]
    %v6536 = vld [vmem:[#allocation3 + $0xd] sm:$0x1]
    %s6537 = scalar_lea.vmem %s5, 128
    %v6538 = vld [vmem:[%s6537] sm:$0xff]
    %v6539 = vld [vmem:[%s6537 + $0x8] sm:$0xff]
    %v6540 = vld [vmem:[%s6537 + $0x10] sm:$0xff]
    %v6541 = vld [vmem:[%s6537 + $0x18] sm:$0xff]
    %v6542 = vld [vmem:[%s6537 + $0x20] sm:$0xff]
    %v6543 = vld [vmem:[%s6537 + $0x28] sm:$0xff]
    %v6544 = vld [vmem:[%s6537 + $0x30] sm:$0xff]
    %v6545 = vld [vmem:[%s6537 + $0x38] sm:$0xff]
    %v6546 = vld [vmem:[%s6537 + $0x40] sm:$0xff]
    %v6547 = vld [vmem:[%s6537 + $0x48] sm:$0xff]
    %v6548 = vld [vmem:[%s6537 + $0x50] sm:$0xff]
    %v6549 = vld [vmem:[%s6537 + $0x58] sm:$0xff]
    %v6550 = vld [vmem:[%s6537 + $0x60] sm:$0xff]
    %v6551 = vld [vmem:[%s6537 + $0x68] sm:$0xff]
    %v6552 = vld [vmem:[%s6537 + $0x70] sm:$0xff]
    %v6553 = vld [vmem:[%s6537 + $0x78] sm:$0xff]
    %v6556 = vrot.slane %v6536, 7
    %vm6557 = vcmask 1041409
    %v6558 = vsel %vm6557, %v6556, %v6535
    %6560 = vmatprep.subr.mxu0 0.0
    %6561 = vmatpush1.msra.mxu0 %v6553
    %6562 = vmatprep.subr.mxu0 0.0
    %6563 = vmatpush1.msra.mxu0 %v6552
    %6564 = vmatprep.subr.mxu0 0.0
    %6565 = vmatpush1.msra.mxu0 %v6551
    %6566 = vmatprep.subr.mxu0 0.0
    %6567 = vmatpush1.msra.mxu0 %v6550
    %6568 = vmatprep.subr.mxu0 0.0
    %6569 = vmatpush1.msra.mxu0 %v6549
    %6570 = vmatprep.subr.mxu0 0.0
    %6571 = vmatpush1.msra.mxu0 %v6548
    %6572 = vmatprep.subr.mxu0 0.0
    %6573 = vmatpush1.msra.mxu0 %v6547
    %6574 = vmatprep.subr.mxu0 0.0
    %6575 = vmatpush1.msra.mxu0 %v6546
    %6576 = vmatprep.subr.mxu0 0.0
    %6577 = vmatpush1.msra.mxu0 %v6545
    %6578 = vmatprep.subr.mxu0 0.0
    %6579 = vmatpush1.msra.mxu0 %v6544
    %6580 = vmatprep.subr.mxu0 0.0
    %6581 = vmatpush1.msra.mxu0 %v6543
    %6582 = vmatprep.subr.mxu0 0.0
    %6583 = vmatpush1.msra.mxu0 %v6542
    %6584 = vmatprep.subr.mxu0 0.0
    %6585 = vmatpush1.msra.mxu0 %v6541
    %6586 = vmatprep.subr.mxu0 0.0
    %6587 = vmatpush1.msra.mxu0 %v6540
    %6588 = vmatprep.subr.mxu0 0.0
    %6589 = vmatpush1.msra.mxu0 %v6539
    %6590 = vmatprep.subr.mxu0 0.0
    %6591 = vmatpush1.msra.mxu0 %v6538
    %6592 = vmatprep.subr.mxu0 0.0
    %6593 = vmatpush2.msra.mxu0 0.0
    %6594 = vmatprep.subr.mxu0 0.0
    %6595 = vmatpush2.msra.mxu0 0.0
    %6596 = vmatprep.subr.mxu0 0.0
    %6597 = vmatpush2.msra.mxu0 0.0
    %6598 = vmatprep.subr.mxu0 0.0
    %6599 = vmatpush2.msra.mxu0 0.0
    %6600 = vmatprep.subr.mxu0 0.0
    %6601 = vmatpush2.msra.mxu0 0.0
    %6602 = vmatprep.subr.mxu0 0.0
    %6603 = vmatpush2.msra.mxu0 0.0
    %6604 = vmatprep.subr.mxu0 0.0
    %6605 = vmatpush2.msra.mxu0 0.0
    %6606 = vmatprep.subr.mxu0 0.0
    %6607 = vmatpush2.msra.mxu0 0.0
    %6608 = vmatprep.subr.mxu0 0.0
    %6609 = vmatpush2.msra.mxu0 0.0
    %6610 = vmatprep.subr.mxu0 0.0
    %6611 = vmatpush2.msra.mxu0 0.0
    %6612 = vmatprep.subr.mxu0 0.0
    %6613 = vmatpush2.msra.mxu0 0.0
    %6614 = vmatprep.subr.mxu0 0.0
    %6615 = vmatpush2.msra.mxu0 0.0
    %6616 = vmatprep.subr.mxu0 0.0
    %6617 = vmatpush2.msra.mxu0 0.0
    %6618 = vmatprep.subr.mxu0 0.0
    %6619 = vmatpush2.msra.mxu0 0.0
    %6620 = vmatprep.subr.mxu0 0.0
    %6621 = vmatpush2.msra.mxu0 0.0
    %6622 = vmatprep.subr.mxu0 0.0
    %6623 = vmatpush2.msra.mxu0 0.0
    %6624 = vmatprep.mubr.f32.mxu0 0.0
    %6625 = vmatmul.mubr.f32.gmra.mxu0 %v6558
    %v6626 = vpop.f32.mrf.mxu0
    %v6627 = vadd.f32 0.0, %v6626
    %v6628 = vpop.f32.mrf.mxu0
    %6629 = vdwg.mxu0
    %v6632 = vrot.slane %v6518, 7
    %v6633 = vsel %vm6557, %v6632, %v6517
    %6635 = vmatprep.subr.mxu0 0.0
    %6636 = vmatpush1.msra.mxu0 %v6534
    %6637 = vmatprep.subr.mxu0 0.0
    %6638 = vmatpush1.msra.mxu0 %v6533
    %6639 = vmatprep.subr.mxu0 0.0
    %6640 = vmatpush1.msra.mxu0 %v6532
    %6641 = vmatprep.subr.mxu0 0.0
    %6642 = vmatpush1.msra.mxu0 %v6531
    %6643 = vmatprep.subr.mxu0 0.0
    %6644 = vmatpush1.msra.mxu0 %v6530
    %6645 = vmatprep.subr.mxu0 0.0
    %6646 = vmatpush1.msra.mxu0 %v6529
    %6647 = vmatprep.subr.mxu0 0.0
    %6648 = vmatpush1.msra.mxu0 %v6528
    %6649 = vmatprep.subr.mxu0 0.0
    %6650 = vmatpush1.msra.mxu0 %v6527
    %6651 = vmatprep.subr.mxu0 0.0
    %6652 = vmatpush1.msra.mxu0 %v6526
    %6653 = vmatprep.subr.mxu0 0.0
    %6654 = vmatpush1.msra.mxu0 %v6525
    %6655 = vmatprep.subr.mxu0 0.0
    %6656 = vmatpush1.msra.mxu0 %v6524
    %6657 = vmatprep.subr.mxu0 0.0
    %6658 = vmatpush1.msra.mxu0 %v6523
    %6659 = vmatprep.subr.mxu0 0.0
    %6660 = vmatpush1.msra.mxu0 %v6522
    %6661 = vmatprep.subr.mxu0 0.0
    %6662 = vmatpush1.msra.mxu0 %v6521
    %6663 = vmatprep.subr.mxu0 0.0
    %6664 = vmatpush1.msra.mxu0 %v6520
    %6665 = vmatprep.subr.mxu0 0.0
    %6666 = vmatpush1.msra.mxu0 %v6519
    %6667 = vmatprep.subr.mxu0 0.0
    %6668 = vmatpush2.msra.mxu0 0.0
    %6669 = vmatprep.subr.mxu0 0.0
    %6670 = vmatpush2.msra.mxu0 0.0
    %6671 = vmatprep.subr.mxu0 0.0
    %6672 = vmatpush2.msra.mxu0 0.0
    %6673 = vmatprep.subr.mxu0 0.0
    %6674 = vmatpush2.msra.mxu0 0.0
    %6675 = vmatprep.subr.mxu0 0.0
    %6676 = vmatpush2.msra.mxu0 0.0
    %6677 = vmatprep.subr.mxu0 0.0
    %6678 = vmatpush2.msra.mxu0 0.0
    %6679 = vmatprep.subr.mxu0 0.0
    %6680 = vmatpush2.msra.mxu0 0.0
    %6681 = vmatprep.subr.mxu0 0.0
    %6682 = vmatpush2.msra.mxu0 0.0
    %6683 = vmatprep.subr.mxu0 0.0
    %6684 = vmatpush2.msra.mxu0 0.0
    %6685 = vmatprep.subr.mxu0 0.0
    %6686 = vmatpush2.msra.mxu0 0.0
    %6687 = vmatprep.subr.mxu0 0.0
    %6688 = vmatpush2.msra.mxu0 0.0
    %6689 = vmatprep.subr.mxu0 0.0
    %6690 = vmatpush2.msra.mxu0 0.0
    %6691 = vmatprep.subr.mxu0 0.0
    %6692 = vmatpush2.msra.mxu0 0.0
    %6693 = vmatprep.subr.mxu0 0.0
    %6694 = vmatpush2.msra.mxu0 0.0
    %6695 = vmatprep.subr.mxu0 0.0
    %6696 = vmatpush2.msra.mxu0 0.0
    %6697 = vmatprep.subr.mxu0 0.0
    %6698 = vmatpush2.msra.mxu0 0.0
    %6699 = vmatprep.mubr.f32.mxu0 0.0
    %6700 = vmatmul.mubr.f32.gmra.mxu0 %v6633
    %v6701 = vpop.f32.mrf.mxu0
    %v6702 = vadd.f32 %v6627, %v6701
    %v6703 = vpop.f32.mrf.mxu0
    %6704 = vdwg.mxu0
    %v6705 = vld [vmem:[#allocation3 + $0x2] sm:$0x1]
    %v6706 = vld [vmem:[#allocation3 + $0xe] sm:$0x1]
    %s6707 = scalar_lea.vmem %s5, 256
    %v6708 = vld [vmem:[%s6707] sm:$0xff]
    %v6709 = vld [vmem:[%s6707 + $0x8] sm:$0xff]
    %v6710 = vld [vmem:[%s6707 + $0x10] sm:$0xff]
    %v6711 = vld [vmem:[%s6707 + $0x18] sm:$0xff]
    %v6712 = vld [vmem:[%s6707 + $0x20] sm:$0xff]
    %v6713 = vld [vmem:[%s6707 + $0x28] sm:$0xff]
    %v6714 = vld [vmem:[%s6707 + $0x30] sm:$0xff]
    %v6715 = vld [vmem:[%s6707 + $0x38] sm:$0xff]
    %v6716 = vld [vmem:[%s6707 + $0x40] sm:$0xff]
    %v6717 = vld [vmem:[%s6707 + $0x48] sm:$0xff]
    %v6718 = vld [vmem:[%s6707 + $0x50] sm:$0xff]
    %v6719 = vld [vmem:[%s6707 + $0x58] sm:$0xff]
    %v6720 = vld [vmem:[%s6707 + $0x60] sm:$0xff]
    %v6721 = vld [vmem:[%s6707 + $0x68] sm:$0xff]
    %v6722 = vld [vmem:[%s6707 + $0x70] sm:$0xff]
    %v6723 = vld [vmem:[%s6707 + $0x78] sm:$0xff]
    %v6726 = vrot.slane %v6706, 7
    %v6727 = vsel %vm6557, %v6726, %v6705
    %6729 = vmatprep.subr.mxu0 0.0
    %6730 = vmatpush1.msra.mxu0 %v6723
    %6731 = vmatprep.subr.mxu0 0.0
    %6732 = vmatpush1.msra.mxu0 %v6722
    %6733 = vmatprep.subr.mxu0 0.0
    %6734 = vmatpush1.msra.mxu0 %v6721
    %6735 = vmatprep.subr.mxu0 0.0
    %6736 = vmatpush1.msra.mxu0 %v6720
    %6737 = vmatprep.subr.mxu0 0.0
    %6738 = vmatpush1.msra.mxu0 %v6719
    %6739 = vmatprep.subr.mxu0 0.0
    %6740 = vmatpush1.msra.mxu0 %v6718
    %6741 = vmatprep.subr.mxu0 0.0
    %6742 = vmatpush1.msra.mxu0 %v6717
    %6743 = vmatprep.subr.mxu0 0.0
    %6744 = vmatpush1.msra.mxu0 %v6716
    %6745 = vmatprep.subr.mxu0 0.0
    %6746 = vmatpush1.msra.mxu0 %v6715
    %6747 = vmatprep.subr.mxu0 0.0
    %6748 = vmatpush1.msra.mxu0 %v6714
    %6749 = vmatprep.subr.mxu0 0.0
    %6750 = vmatpush1.msra.mxu0 %v6713
    %6751 = vmatprep.subr.mxu0 0.0
    %6752 = vmatpush1.msra.mxu0 %v6712
    %6753 = vmatprep.subr.mxu0 0.0
    %6754 = vmatpush1.msra.mxu0 %v6711
    %6755 = vmatprep.subr.mxu0 0.0
    %6756 = vmatpush1.msra.mxu0 %v6710
    %6757 = vmatprep.subr.mxu0 0.0
    %6758 = vmatpush1.msra.mxu0 %v6709
    %6759 = vmatprep.subr.mxu0 0.0
    %6760 = vmatpush1.msra.mxu0 %v6708
    %6761 = vmatprep.subr.mxu0 0.0
    %6762 = vmatpush2.msra.mxu0 0.0
    %6763 = vmatprep.subr.mxu0 0.0
    %6764 = vmatpush2.msra.mxu0 0.0
    %6765 = vmatprep.subr.mxu0 0.0
    %6766 = vmatpush2.msra.mxu0 0.0
    %6767 = vmatprep.subr.mxu0 0.0
    %6768 = vmatpush2.msra.mxu0 0.0
    %6769 = vmatprep.subr.mxu0 0.0
    %6770 = vmatpush2.msra.mxu0 0.0
    %6771 = vmatprep.subr.mxu0 0.0
    %6772 = vmatpush2.msra.mxu0 0.0
    %6773 = vmatprep.subr.mxu0 0.0
    %6774 = vmatpush2.msra.mxu0 0.0
    %6775 = vmatprep.subr.mxu0 0.0
    %6776 = vmatpush2.msra.mxu0 0.0
    %6777 = vmatprep.subr.mxu0 0.0
    %6778 = vmatpush2.msra.mxu0 0.0
    %6779 = vmatprep.subr.mxu0 0.0
    %6780 = vmatpush2.msra.mxu0 0.0
    %6781 = vmatprep.subr.mxu0 0.0
    %6782 = vmatpush2.msra.mxu0 0.0
    %6783 = vmatprep.subr.mxu0 0.0
    %6784 = vmatpush2.msra.mxu0 0.0
    %6785 = vmatprep.subr.mxu0 0.0
    %6786 = vmatpush2.msra.mxu0 0.0
    %6787 = vmatprep.subr.mxu0 0.0
    %6788 = vmatpush2.msra.mxu0 0.0
    %6789 = vmatprep.subr.mxu0 0.0
    %6790 = vmatpush2.msra.mxu0 0.0
    %6791 = vmatprep.subr.mxu0 0.0
    %6792 = vmatpush2.msra.mxu0 0.0
    %6793 = vmatprep.mubr.f32.mxu0 0.0
    %6794 = vmatmul.mubr.f32.gmra.mxu0 %v6727
    %v6795 = vpop.f32.mrf.mxu0
    %v6796 = vadd.f32 0.0, %v6795
    %v6797 = vpop.f32.mrf.mxu0
    %6798 = vdwg.mxu0
    %v6799 = vadd.f32 %v6702, %v6796
    %s6800 = scalar_lea.vmem [#allocation3], 4
    %v6801 = vld [vmem:[%s6800] sm:$0x1]
    %v6802 = vld [vmem:[%s6800 + $0xc] sm:$0x1]
    %s6803 = scalar_lea.vmem %s5, 384
    %v6804 = vld [vmem:[%s6803] sm:$0xff]
    %v6805 = vld [vmem:[%s6803 + $0x8] sm:$0xff]
    %v6806 = vld [vmem:[%s6803 + $0x10] sm:$0xff]
    %v6807 = vld [vmem:[%s6803 + $0x18] sm:$0xff]
    %v6808 = vld [vmem:[%s6803 + $0x20] sm:$0xff]
    %v6809 = vld [vmem:[%s6803 + $0x28] sm:$0xff]
    %v6810 = vld [vmem:[%s6803 + $0x30] sm:$0xff]
    %v6811 = vld [vmem:[%s6803 + $0x38] sm:$0xff]
    %v6812 = vld [vmem:[%s6803 + $0x40] sm:$0xff]
    %v6813 = vld [vmem:[%s6803 + $0x48] sm:$0xff]
    %v6814 = vld [vmem:[%s6803 + $0x50] sm:$0xff]
    %v6815 = vld [vmem:[%s6803 + $0x58] sm:$0xff]
    %v6816 = vld [vmem:[%s6803 + $0x60] sm:$0xff]
    %v6817 = vld [vmem:[%s6803 + $0x68] sm:$0xff]
    %v6818 = vld [vmem:[%s6803 + $0x70] sm:$0xff]
    %v6819 = vld [vmem:[%s6803 + $0x78] sm:$0xff]
    %v6822 = vrot.slane %v6802, 7
    %v6823 = vsel %vm6557, %v6822, %v6801
    %6825 = vmatprep.subr.mxu0 0.0
    %6826 = vmatpush1.msra.mxu0 %v6819
    %6827 = vmatprep.subr.mxu0 0.0
    %6828 = vmatpush1.msra.mxu0 %v6818
    %6829 = vmatprep.subr.mxu0 0.0
    %6830 = vmatpush1.msra.mxu0 %v6817
    %6831 = vmatprep.subr.mxu0 0.0
    %6832 = vmatpush1.msra.mxu0 %v6816
    %6833 = vmatprep.subr.mxu0 0.0
    %6834 = vmatpush1.msra.mxu0 %v6815
    %6835 = vmatprep.subr.mxu0 0.0
    %6836 = vmatpush1.msra.mxu0 %v6814
    %6837 = vmatprep.subr.mxu0 0.0
    %6838 = vmatpush1.msra.mxu0 %v6813
    %6839 = vmatprep.subr.mxu0 0.0
    %6840 = vmatpush1.msra.mxu0 %v6812
    %6841 = vmatprep.subr.mxu0 0.0
    %6842 = vmatpush1.msra.mxu0 %v6811
    %6843 = vmatprep.subr.mxu0 0.0
    %6844 = vmatpush1.msra.mxu0 %v6810
    %6845 = vmatprep.subr.mxu0 0.0
    %6846 = vmatpush1.msra.mxu0 %v6809
    %6847 = vmatprep.subr.mxu0 0.0
    %6848 = vmatpush1.msra.mxu0 %v6808
    %6849 = vmatprep.subr.mxu0 0.0
    %6850 = vmatpush1.msra.mxu0 %v6807
    %6851 = vmatprep.subr.mxu0 0.0
    %6852 = vmatpush1.msra.mxu0 %v6806
    %6853 = vmatprep.subr.mxu0 0.0
    %6854 = vmatpush1.msra.mxu0 %v6805
    %6855 = vmatprep.subr.mxu0 0.0
    %6856 = vmatpush1.msra.mxu0 %v6804
    %6857 = vmatprep.subr.mxu0 0.0
    %6858 = vmatpush2.msra.mxu0 0.0
    %6859 = vmatprep.subr.mxu0 0.0
    %6860 = vmatpush2.msra.mxu0 0.0
    %6861 = vmatprep.subr.mxu0 0.0
    %6862 = vmatpush2.msra.mxu0 0.0
    %6863 = vmatprep.subr.mxu0 0.0
    %6864 = vmatpush2.msra.mxu0 0.0
    %6865 = vmatprep.subr.mxu0 0.0
    %6866 = vmatpush2.msra.mxu0 0.0
    %6867 = vmatprep.subr.mxu0 0.0
    %6868 = vmatpush2.msra.mxu0 0.0
    %6869 = vmatprep.subr.mxu0 0.0
    %6870 = vmatpush2.msra.mxu0 0.0
    %6871 = vmatprep.subr.mxu0 0.0
    %6872 = vmatpush2.msra.mxu0 0.0
    %6873 = vmatprep.subr.mxu0 0.0
    %6874 = vmatpush2.msra.mxu0 0.0
    %6875 = vmatprep.subr.mxu0 0.0
    %6876 = vmatpush2.msra.mxu0 0.0
    %6877 = vmatprep.subr.mxu0 0.0
    %6878 = vmatpush2.msra.mxu0 0.0
    %6879 = vmatprep.subr.mxu0 0.0
    %6880 = vmatpush2.msra.mxu0 0.0
    %6881 = vmatprep.subr.mxu0 0.0
    %6882 = vmatpush2.msra.mxu0 0.0
    %6883 = vmatprep.subr.mxu0 0.0
    %6884 = vmatpush2.msra.mxu0 0.0
    %6885 = vmatprep.subr.mxu0 0.0
    %6886 = vmatpush2.msra.mxu0 0.0
    %6887 = vmatprep.subr.mxu0 0.0
    %6888 = vmatpush2.msra.mxu0 0.0
    %6889 = vmatprep.mubr.f32.mxu0 0.0
    %6890 = vmatmul.mubr.f32.gmra.mxu0 %v6823
    %v6891 = vpop.f32.mrf.mxu0
    %v6892 = vadd.f32 0.0, %v6891
    %v6893 = vpop.f32.mrf.mxu0
    %6894 = vdwg.mxu0
    %v6895 = vadd.f32 %v6799, %v6892
    %v6896 = vld [vmem:[%s6800 + $0x1] sm:$0x1]
    %v6897 = vld [vmem:[%s6800 + $0xd] sm:$0x1]
    %s6898 = scalar_lea.vmem %s5, 512
    %v6899 = vld [vmem:[%s6898] sm:$0xff]
    %v6900 = vld [vmem:[%s6898 + $0x8] sm:$0xff]
    %v6901 = vld [vmem:[%s6898 + $0x10] sm:$0xff]
    %v6902 = vld [vmem:[%s6898 + $0x18] sm:$0xff]
    %v6903 = vld [vmem:[%s6898 + $0x20] sm:$0xff]
    %v6904 = vld [vmem:[%s6898 + $0x28] sm:$0xff]
    %v6905 = vld [vmem:[%s6898 + $0x30] sm:$0xff]
    %v6906 = vld [vmem:[%s6898 + $0x38] sm:$0xff]
    %v6907 = vld [vmem:[%s6898 + $0x40] sm:$0xff]
    %v6908 = vld [vmem:[%s6898 + $0x48] sm:$0xff]
    %v6909 = vld [vmem:[%s6898 + $0x50] sm:$0xff]
    %v6910 = vld [vmem:[%s6898 + $0x58] sm:$0xff]
    %v6911 = vld [vmem:[%s6898 + $0x60] sm:$0xff]
    %v6912 = vld [vmem:[%s6898 + $0x68] sm:$0xff]
    %v6913 = vld [vmem:[%s6898 + $0x70] sm:$0xff]
    %v6914 = vld [vmem:[%s6898 + $0x78] sm:$0xff]
    %v6917 = vrot.slane %v6897, 7
    %v6918 = vsel %vm6557, %v6917, %v6896
    %6920 = vmatprep.subr.mxu0 0.0
    %6921 = vmatpush1.msra.mxu0 %v6914
    %6922 = vmatprep.subr.mxu0 0.0
    %6923 = vmatpush1.msra.mxu0 %v6913
    %6924 = vmatprep.subr.mxu0 0.0
    %6925 = vmatpush1.msra.mxu0 %v6912
    %6926 = vmatprep.subr.mxu0 0.0
    %6927 = vmatpush1.msra.mxu0 %v6911
    %6928 = vmatprep.subr.mxu0 0.0
    %6929 = vmatpush1.msra.mxu0 %v6910
    %6930 = vmatprep.subr.mxu0 0.0
    %6931 = vmatpush1.msra.mxu0 %v6909
    %6932 = vmatprep.subr.mxu0 0.0
    %6933 = vmatpush1.msra.mxu0 %v6908
    %6934 = vmatprep.subr.mxu0 0.0
    %6935 = vmatpush1.msra.mxu0 %v6907
    %6936 = vmatprep.subr.mxu0 0.0
    %6937 = vmatpush1.msra.mxu0 %v6906
    %6938 = vmatprep.subr.mxu0 0.0
    %6939 = vmatpush1.msra.mxu0 %v6905
    %6940 = vmatprep.subr.mxu0 0.0
    %6941 = vmatpush1.msra.mxu0 %v6904
    %6942 = vmatprep.subr.mxu0 0.0
    %6943 = vmatpush1.msra.mxu0 %v6903
    %6944 = vmatprep.subr.mxu0 0.0
    %6945 = vmatpush1.msra.mxu0 %v6902
    %6946 = vmatprep.subr.mxu0 0.0
    %6947 = vmatpush1.msra.mxu0 %v6901
    %6948 = vmatprep.subr.mxu0 0.0
    %6949 = vmatpush1.msra.mxu0 %v6900
    %6950 = vmatprep.subr.mxu0 0.0
    %6951 = vmatpush1.msra.mxu0 %v6899
    %6952 = vmatprep.subr.mxu0 0.0
    %6953 = vmatpush2.msra.mxu0 0.0
    %6954 = vmatprep.subr.mxu0 0.0
    %6955 = vmatpush2.msra.mxu0 0.0
    %6956 = vmatprep.subr.mxu0 0.0
    %6957 = vmatpush2.msra.mxu0 0.0
    %6958 = vmatprep.subr.mxu0 0.0
    %6959 = vmatpush2.msra.mxu0 0.0
    %6960 = vmatprep.subr.mxu0 0.0
    %6961 = vmatpush2.msra.mxu0 0.0
    %6962 = vmatprep.subr.mxu0 0.0
    %6963 = vmatpush2.msra.mxu0 0.0
    %6964 = vmatprep.subr.mxu0 0.0
    %6965 = vmatpush2.msra.mxu0 0.0
    %6966 = vmatprep.subr.mxu0 0.0
    %6967 = vmatpush2.msra.mxu0 0.0
    %6968 = vmatprep.subr.mxu0 0.0
    %6969 = vmatpush2.msra.mxu0 0.0
    %6970 = vmatprep.subr.mxu0 0.0
    %6971 = vmatpush2.msra.mxu0 0.0
    %6972 = vmatprep.subr.mxu0 0.0
    %6973 = vmatpush2.msra.mxu0 0.0
    %6974 = vmatprep.subr.mxu0 0.0
    %6975 = vmatpush2.msra.mxu0 0.0
    %6976 = vmatprep.subr.mxu0 0.0
    %6977 = vmatpush2.msra.mxu0 0.0
    %6978 = vmatprep.subr.mxu0 0.0
    %6979 = vmatpush2.msra.mxu0 0.0
    %6980 = vmatprep.subr.mxu0 0.0
    %6981 = vmatpush2.msra.mxu0 0.0
    %6982 = vmatprep.subr.mxu0 0.0
    %6983 = vmatpush2.msra.mxu0 0.0
    %6984 = vmatprep.mubr.f32.mxu0 0.0
    %6985 = vmatmul.mubr.f32.gmra.mxu0 %v6918
    %v6986 = vpop.f32.mrf.mxu0
    %v6987 = vadd.f32 0.0, %v6986
    %v6988 = vpop.f32.mrf.mxu0
    %6989 = vdwg.mxu0
    %v6990 = vadd.f32 %v6895, %v6987
    %v6991 = vld [vmem:[%s6800 + $0x2] sm:$0x1]
    %v6992 = vld [vmem:[%s6800 + $0xe] sm:$0x1]
    %s6993 = scalar_lea.vmem %s5, 640
    %v6994 = vld [vmem:[%s6993] sm:$0xff]
    %v6995 = vld [vmem:[%s6993 + $0x8] sm:$0xff]
    %v6996 = vld [vmem:[%s6993 + $0x10] sm:$0xff]
    %v6997 = vld [vmem:[%s6993 + $0x18] sm:$0xff]
    %v6998 = vld [vmem:[%s6993 + $0x20] sm:$0xff]
    %v6999 = vld [vmem:[%s6993 + $0x28] sm:$0xff]
    %v7000 = vld [vmem:[%s6993 + $0x30] sm:$0xff]
    %v7001 = vld [vmem:[%s6993 + $0x38] sm:$0xff]
    %v7002 = vld [vmem:[%s6993 + $0x40] sm:$0xff]
    %v7003 = vld [vmem:[%s6993 + $0x48] sm:$0xff]
    %v7004 = vld [vmem:[%s6993 + $0x50] sm:$0xff]
    %v7005 = vld [vmem:[%s6993 + $0x58] sm:$0xff]
    %v7006 = vld [vmem:[%s6993 + $0x60] sm:$0xff]
    %v7007 = vld [vmem:[%s6993 + $0x68] sm:$0xff]
    %v7008 = vld [vmem:[%s6993 + $0x70] sm:$0xff]
    %v7009 = vld [vmem:[%s6993 + $0x78] sm:$0xff]
    %v7012 = vrot.slane %v6992, 7
    %v7013 = vsel %vm6557, %v7012, %v6991
    %7015 = vmatprep.subr.mxu0 0.0
    %7016 = vmatpush1.msra.mxu0 %v7009
    %7017 = vmatprep.subr.mxu0 0.0
    %7018 = vmatpush1.msra.mxu0 %v7008
    %7019 = vmatprep.subr.mxu0 0.0
    %7020 = vmatpush1.msra.mxu0 %v7007
    %7021 = vmatprep.subr.mxu0 0.0
    %7022 = vmatpush1.msra.mxu0 %v7006
    %7023 = vmatprep.subr.mxu0 0.0
    %7024 = vmatpush1.msra.mxu0 %v7005
    %7025 = vmatprep.subr.mxu0 0.0
    %7026 = vmatpush1.msra.mxu0 %v7004
    %7027 = vmatprep.subr.mxu0 0.0
    %7028 = vmatpush1.msra.mxu0 %v7003
    %7029 = vmatprep.subr.mxu0 0.0
    %7030 = vmatpush1.msra.mxu0 %v7002
    %7031 = vmatprep.subr.mxu0 0.0
    %7032 = vmatpush1.msra.mxu0 %v7001
    %7033 = vmatprep.subr.mxu0 0.0
    %7034 = vmatpush1.msra.mxu0 %v7000
    %7035 = vmatprep.subr.mxu0 0.0
    %7036 = vmatpush1.msra.mxu0 %v6999
    %7037 = vmatprep.subr.mxu0 0.0
    %7038 = vmatpush1.msra.mxu0 %v6998
    %7039 = vmatprep.subr.mxu0 0.0
    %7040 = vmatpush1.msra.mxu0 %v6997
    %7041 = vmatprep.subr.mxu0 0.0
    %7042 = vmatpush1.msra.mxu0 %v6996
    %7043 = vmatprep.subr.mxu0 0.0
    %7044 = vmatpush1.msra.mxu0 %v6995
    %7045 = vmatprep.subr.mxu0 0.0
    %7046 = vmatpush1.msra.mxu0 %v6994
    %7047 = vmatprep.subr.mxu0 0.0
    %7048 = vmatpush2.msra.mxu0 0.0
    %7049 = vmatprep.subr.mxu0 0.0
    %7050 = vmatpush2.msra.mxu0 0.0
    %7051 = vmatprep.subr.mxu0 0.0
    %7052 = vmatpush2.msra.mxu0 0.0
    %7053 = vmatprep.subr.mxu0 0.0
    %7054 = vmatpush2.msra.mxu0 0.0
    %7055 = vmatprep.subr.mxu0 0.0
    %7056 = vmatpush2.msra.mxu0 0.0
    %7057 = vmatprep.subr.mxu0 0.0
    %7058 = vmatpush2.msra.mxu0 0.0
    %7059 = vmatprep.subr.mxu0 0.0
    %7060 = vmatpush2.msra.mxu0 0.0
    %7061 = vmatprep.subr.mxu0 0.0
    %7062 = vmatpush2.msra.mxu0 0.0
    %7063 = vmatprep.subr.mxu0 0.0
    %7064 = vmatpush2.msra.mxu0 0.0
    %7065 = vmatprep.subr.mxu0 0.0
    %7066 = vmatpush2.msra.mxu0 0.0
    %7067 = vmatprep.subr.mxu0 0.0
    %7068 = vmatpush2.msra.mxu0 0.0
    %7069 = vmatprep.subr.mxu0 0.0
    %7070 = vmatpush2.msra.mxu0 0.0
    %7071 = vmatprep.subr.mxu0 0.0
    %7072 = vmatpush2.msra.mxu0 0.0
    %7073 = vmatprep.subr.mxu0 0.0
    %7074 = vmatpush2.msra.mxu0 0.0
    %7075 = vmatprep.subr.mxu0 0.0
    %7076 = vmatpush2.msra.mxu0 0.0
    %7077 = vmatprep.subr.mxu0 0.0
    %7078 = vmatpush2.msra.mxu0 0.0
    %7079 = vmatprep.mubr.f32.mxu0 0.0
    %7080 = vmatmul.mubr.f32.gmra.mxu0 %v7013
    %v7081 = vpop.f32.mrf.mxu0
    %v7082 = vadd.f32 0.0, %v7081
    %v7083 = vpop.f32.mrf.mxu0
    %7084 = vdwg.mxu0
    %v7085 = vadd.f32 %v6990, %v7082
    %s7086 = scalar_lea.vmem [#allocation3], 8
    %v7087 = vld [vmem:[%s7086] sm:$0x1]
    %v7088 = vld [vmem:[%s7086 + $0xc] sm:$0x1]
    %s7089 = scalar_lea.vmem %s5, 768
    %v7090 = vld [vmem:[%s7089] sm:$0xff]
    %v7091 = vld [vmem:[%s7089 + $0x8] sm:$0xff]
    %v7092 = vld [vmem:[%s7089 + $0x10] sm:$0xff]
    %v7093 = vld [vmem:[%s7089 + $0x18] sm:$0xff]
    %v7094 = vld [vmem:[%s7089 + $0x20] sm:$0xff]
    %v7095 = vld [vmem:[%s7089 + $0x28] sm:$0xff]
    %v7096 = vld [vmem:[%s7089 + $0x30] sm:$0xff]
    %v7097 = vld [vmem:[%s7089 + $0x38] sm:$0xff]
    %v7098 = vld [vmem:[%s7089 + $0x40] sm:$0xff]
    %v7099 = vld [vmem:[%s7089 + $0x48] sm:$0xff]
    %v7100 = vld [vmem:[%s7089 + $0x50] sm:$0xff]
    %v7101 = vld [vmem:[%s7089 + $0x58] sm:$0xff]
    %v7102 = vld [vmem:[%s7089 + $0x60] sm:$0xff]
    %v7103 = vld [vmem:[%s7089 + $0x68] sm:$0xff]
    %v7104 = vld [vmem:[%s7089 + $0x70] sm:$0xff]
    %v7105 = vld [vmem:[%s7089 + $0x78] sm:$0xff]
    %v7108 = vrot.slane %v7088, 7
    %v7109 = vsel %vm6557, %v7108, %v7087
    %7111 = vmatprep.subr.mxu0 0.0
    %7112 = vmatpush1.msra.mxu0 %v7105
    %7113 = vmatprep.subr.mxu0 0.0
    %7114 = vmatpush1.msra.mxu0 %v7104
    %7115 = vmatprep.subr.mxu0 0.0
    %7116 = vmatpush1.msra.mxu0 %v7103
    %7117 = vmatprep.subr.mxu0 0.0
    %7118 = vmatpush1.msra.mxu0 %v7102
    %7119 = vmatprep.subr.mxu0 0.0
    %7120 = vmatpush1.msra.mxu0 %v7101
    %7121 = vmatprep.subr.mxu0 0.0
    %7122 = vmatpush1.msra.mxu0 %v7100
    %7123 = vmatprep.subr.mxu0 0.0
    %7124 = vmatpush1.msra.mxu0 %v7099
    %7125 = vmatprep.subr.mxu0 0.0
    %7126 = vmatpush1.msra.mxu0 %v7098
    %7127 = vmatprep.subr.mxu0 0.0
    %7128 = vmatpush1.msra.mxu0 %v7097
    %7129 = vmatprep.subr.mxu0 0.0
    %7130 = vmatpush1.msra.mxu0 %v7096
    %7131 = vmatprep.subr.mxu0 0.0
    %7132 = vmatpush1.msra.mxu0 %v7095
    %7133 = vmatprep.subr.mxu0 0.0
    %7134 = vmatpush1.msra.mxu0 %v7094
    %7135 = vmatprep.subr.mxu0 0.0
    %7136 = vmatpush1.msra.mxu0 %v7093
    %7137 = vmatprep.subr.mxu0 0.0
    %7138 = vmatpush1.msra.mxu0 %v7092
    %7139 = vmatprep.subr.mxu0 0.0
    %7140 = vmatpush1.msra.mxu0 %v7091
    %7141 = vmatprep.subr.mxu0 0.0
    %7142 = vmatpush1.msra.mxu0 %v7090
    %7143 = vmatprep.subr.mxu0 0.0
    %7144 = vmatpush2.msra.mxu0 0.0
    %7145 = vmatprep.subr.mxu0 0.0
    %7146 = vmatpush2.msra.mxu0 0.0
    %7147 = vmatprep.subr.mxu0 0.0
    %7148 = vmatpush2.msra.mxu0 0.0
    %7149 = vmatprep.subr.mxu0 0.0
    %7150 = vmatpush2.msra.mxu0 0.0
    %7151 = vmatprep.subr.mxu0 0.0
    %7152 = vmatpush2.msra.mxu0 0.0
    %7153 = vmatprep.subr.mxu0 0.0
    %7154 = vmatpush2.msra.mxu0 0.0
    %7155 = vmatprep.subr.mxu0 0.0
    %7156 = vmatpush2.msra.mxu0 0.0
    %7157 = vmatprep.subr.mxu0 0.0
    %7158 = vmatpush2.msra.mxu0 0.0
    %7159 = vmatprep.subr.mxu0 0.0
    %7160 = vmatpush2.msra.mxu0 0.0
    %7161 = vmatprep.subr.mxu0 0.0
    %7162 = vmatpush2.msra.mxu0 0.0
    %7163 = vmatprep.subr.mxu0 0.0
    %7164 = vmatpush2.msra.mxu0 0.0
    %7165 = vmatprep.subr.mxu0 0.0
    %7166 = vmatpush2.msra.mxu0 0.0
    %7167 = vmatprep.subr.mxu0 0.0
    %7168 = vmatpush2.msra.mxu0 0.0
    %7169 = vmatprep.subr.mxu0 0.0
    %7170 = vmatpush2.msra.mxu0 0.0
    %7171 = vmatprep.subr.mxu0 0.0
    %7172 = vmatpush2.msra.mxu0 0.0
    %7173 = vmatprep.subr.mxu0 0.0
    %7174 = vmatpush2.msra.mxu0 0.0
    %7175 = vmatprep.mubr.f32.mxu0 0.0
    %7176 = vmatmul.mubr.f32.gmra.mxu0 %v7109
    %v7177 = vpop.f32.mrf.mxu0
    %v7178 = vadd.f32 0.0, %v7177
    %v7179 = vpop.f32.mrf.mxu0
    %7180 = vdwg.mxu0
    %v7181 = vadd.f32 %v7085, %v7178
    %v7182 = vld [vmem:[%s7086 + $0x1] sm:$0x1]
    %v7183 = vld [vmem:[%s7086 + $0xd] sm:$0x1]
    %s7184 = scalar_lea.vmem %s5, 896
    %v7185 = vld [vmem:[%s7184] sm:$0xff]
    %v7186 = vld [vmem:[%s7184 + $0x8] sm:$0xff]
    %v7187 = vld [vmem:[%s7184 + $0x10] sm:$0xff]
    %v7188 = vld [vmem:[%s7184 + $0x18] sm:$0xff]
    %v7189 = vld [vmem:[%s7184 + $0x20] sm:$0xff]
    %v7190 = vld [vmem:[%s7184 + $0x28] sm:$0xff]
    %v7191 = vld [vmem:[%s7184 + $0x30] sm:$0xff]
    %v7192 = vld [vmem:[%s7184 + $0x38] sm:$0xff]
    %v7193 = vld [vmem:[%s7184 + $0x40] sm:$0xff]
    %v7194 = vld [vmem:[%s7184 + $0x48] sm:$0xff]
    %v7195 = vld [vmem:[%s7184 + $0x50] sm:$0xff]
    %v7196 = vld [vmem:[%s7184 + $0x58] sm:$0xff]
    %v7197 = vld [vmem:[%s7184 + $0x60] sm:$0xff]
    %v7198 = vld [vmem:[%s7184 + $0x68] sm:$0xff]
    %v7199 = vld [vmem:[%s7184 + $0x70] sm:$0xff]
    %v7200 = vld [vmem:[%s7184 + $0x78] sm:$0xff]
    %v7203 = vrot.slane %v7183, 7
    %v7204 = vsel %vm6557, %v7203, %v7182
    %7206 = vmatprep.subr.mxu0 0.0
    %7207 = vmatpush1.msra.mxu0 %v7200
    %7208 = vmatprep.subr.mxu0 0.0
    %7209 = vmatpush1.msra.mxu0 %v7199
    %7210 = vmatprep.subr.mxu0 0.0
    %7211 = vmatpush1.msra.mxu0 %v7198
    %7212 = vmatprep.subr.mxu0 0.0
    %7213 = vmatpush1.msra.mxu0 %v7197
    %7214 = vmatprep.subr.mxu0 0.0
    %7215 = vmatpush1.msra.mxu0 %v7196
    %7216 = vmatprep.subr.mxu0 0.0
    %7217 = vmatpush1.msra.mxu0 %v7195
    %7218 = vmatprep.subr.mxu0 0.0
    %7219 = vmatpush1.msra.mxu0 %v7194
    %7220 = vmatprep.subr.mxu0 0.0
    %7221 = vmatpush1.msra.mxu0 %v7193
    %7222 = vmatprep.subr.mxu0 0.0
    %7223 = vmatpush1.msra.mxu0 %v7192
    %7224 = vmatprep.subr.mxu0 0.0
    %7225 = vmatpush1.msra.mxu0 %v7191
    %7226 = vmatprep.subr.mxu0 0.0
    %7227 = vmatpush1.msra.mxu0 %v7190
    %7228 = vmatprep.subr.mxu0 0.0
    %7229 = vmatpush1.msra.mxu0 %v7189
    %7230 = vmatprep.subr.mxu0 0.0
    %7231 = vmatpush1.msra.mxu0 %v7188
    %7232 = vmatprep.subr.mxu0 0.0
    %7233 = vmatpush1.msra.mxu0 %v7187
    %7234 = vmatprep.subr.mxu0 0.0
    %7235 = vmatpush1.msra.mxu0 %v7186
    %7236 = vmatprep.subr.mxu0 0.0
    %7237 = vmatpush1.msra.mxu0 %v7185
    %7238 = vmatprep.subr.mxu0 0.0
    %7239 = vmatpush2.msra.mxu0 0.0
    %7240 = vmatprep.subr.mxu0 0.0
    %7241 = vmatpush2.msra.mxu0 0.0
    %7242 = vmatprep.subr.mxu0 0.0
    %7243 = vmatpush2.msra.mxu0 0.0
    %7244 = vmatprep.subr.mxu0 0.0
    %7245 = vmatpush2.msra.mxu0 0.0
    %7246 = vmatprep.subr.mxu0 0.0
    %7247 = vmatpush2.msra.mxu0 0.0
    %7248 = vmatprep.subr.mxu0 0.0
    %7249 = vmatpush2.msra.mxu0 0.0
    %7250 = vmatprep.subr.mxu0 0.0
    %7251 = vmatpush2.msra.mxu0 0.0
    %7252 = vmatprep.subr.mxu0 0.0
    %7253 = vmatpush2.msra.mxu0 0.0
    %7254 = vmatprep.subr.mxu0 0.0
    %7255 = vmatpush2.msra.mxu0 0.0
    %7256 = vmatprep.subr.mxu0 0.0
    %7257 = vmatpush2.msra.mxu0 0.0
    %7258 = vmatprep.subr.mxu0 0.0
    %7259 = vmatpush2.msra.mxu0 0.0
    %7260 = vmatprep.subr.mxu0 0.0
    %7261 = vmatpush2.msra.mxu0 0.0
    %7262 = vmatprep.subr.mxu0 0.0
    %7263 = vmatpush2.msra.mxu0 0.0
    %7264 = vmatprep.subr.mxu0 0.0
    %7265 = vmatpush2.msra.mxu0 0.0
    %7266 = vmatprep.subr.mxu0 0.0
    %7267 = vmatpush2.msra.mxu0 0.0
    %7268 = vmatprep.subr.mxu0 0.0
    %7269 = vmatpush2.msra.mxu0 0.0
    %7270 = vmatprep.mubr.f32.mxu0 0.0
    %7271 = vmatmul.mubr.f32.gmra.mxu0 %v7204
    %v7272 = vpop.f32.mrf.mxu0
    %v7273 = vadd.f32 0.0, %v7272
    %v7274 = vpop.f32.mrf.mxu0
    %7275 = vdwg.mxu0
    %v7276 = vadd.f32 %v7181, %v7273
    %v7277 = vld [vmem:[%s7086 + $0x2] sm:$0x1]
    %v7278 = vld [vmem:[%s7086 + $0xe] sm:$0x1]
    %s7279 = scalar_lea.vmem %s5, 1024
    %v7280 = vld [vmem:[%s7279] sm:$0xff]
    %v7281 = vld [vmem:[%s7279 + $0x8] sm:$0xff]
    %v7282 = vld [vmem:[%s7279 + $0x10] sm:$0xff]
    %v7283 = vld [vmem:[%s7279 + $0x18] sm:$0xff]
    %v7284 = vld [vmem:[%s7279 + $0x20] sm:$0xff]
    %v7285 = vld [vmem:[%s7279 + $0x28] sm:$0xff]
    %v7286 = vld [vmem:[%s7279 + $0x30] sm:$0xff]
    %v7287 = vld [vmem:[%s7279 + $0x38] sm:$0xff]
    %v7288 = vld [vmem:[%s7279 + $0x40] sm:$0xff]
    %v7289 = vld [vmem:[%s7279 + $0x48] sm:$0xff]
    %v7290 = vld [vmem:[%s7279 + $0x50] sm:$0xff]
    %v7291 = vld [vmem:[%s7279 + $0x58] sm:$0xff]
    %v7292 = vld [vmem:[%s7279 + $0x60] sm:$0xff]
    %v7293 = vld [vmem:[%s7279 + $0x68] sm:$0xff]
    %v7294 = vld [vmem:[%s7279 + $0x70] sm:$0xff]
    %v7295 = vld [vmem:[%s7279 + $0x78] sm:$0xff]
    %v7298 = vrot.slane %v7278, 7
    %v7299 = vsel %vm6557, %v7298, %v7277
    %7301 = vmatprep.subr.mxu0 0.0
    %7302 = vmatpush1.msra.mxu0 %v7295
    %7303 = vmatprep.subr.mxu0 0.0
    %7304 = vmatpush1.msra.mxu0 %v7294
    %7305 = vmatprep.subr.mxu0 0.0
    %7306 = vmatpush1.msra.mxu0 %v7293
    %7307 = vmatprep.subr.mxu0 0.0
    %7308 = vmatpush1.msra.mxu0 %v7292
    %7309 = vmatprep.subr.mxu0 0.0
    %7310 = vmatpush1.msra.mxu0 %v7291
    %7311 = vmatprep.subr.mxu0 0.0
    %7312 = vmatpush1.msra.mxu0 %v7290
    %7313 = vmatprep.subr.mxu0 0.0
    %7314 = vmatpush1.msra.mxu0 %v7289
    %7315 = vmatprep.subr.mxu0 0.0
    %7316 = vmatpush1.msra.mxu0 %v7288
    %7317 = vmatprep.subr.mxu0 0.0
    %7318 = vmatpush1.msra.mxu0 %v7287
    %7319 = vmatprep.subr.mxu0 0.0
    %7320 = vmatpush1.msra.mxu0 %v7286
    %7321 = vmatprep.subr.mxu0 0.0
    %7322 = vmatpush1.msra.mxu0 %v7285
    %7323 = vmatprep.subr.mxu0 0.0
    %7324 = vmatpush1.msra.mxu0 %v7284
    %7325 = vmatprep.subr.mxu0 0.0
    %7326 = vmatpush1.msra.mxu0 %v7283
    %7327 = vmatprep.subr.mxu0 0.0
    %7328 = vmatpush1.msra.mxu0 %v7282
    %7329 = vmatprep.subr.mxu0 0.0
    %7330 = vmatpush1.msra.mxu0 %v7281
    %7331 = vmatprep.subr.mxu0 0.0
    %7332 = vmatpush1.msra.mxu0 %v7280
    %7333 = vmatprep.subr.mxu0 0.0
    %7334 = vmatpush2.msra.mxu0 0.0
    %7335 = vmatprep.subr.mxu0 0.0
    %7336 = vmatpush2.msra.mxu0 0.0
    %7337 = vmatprep.subr.mxu0 0.0
    %7338 = vmatpush2.msra.mxu0 0.0
    %7339 = vmatprep.subr.mxu0 0.0
    %7340 = vmatpush2.msra.mxu0 0.0
    %7341 = vmatprep.subr.mxu0 0.0
    %7342 = vmatpush2.msra.mxu0 0.0
    %7343 = vmatprep.subr.mxu0 0.0
    %7344 = vmatpush2.msra.mxu0 0.0
    %7345 = vmatprep.subr.mxu0 0.0
    %7346 = vmatpush2.msra.mxu0 0.0
    %7347 = vmatprep.subr.mxu0 0.0
    %7348 = vmatpush2.msra.mxu0 0.0
    %7349 = vmatprep.subr.mxu0 0.0
    %7350 = vmatpush2.msra.mxu0 0.0
    %7351 = vmatprep.subr.mxu0 0.0
    %7352 = vmatpush2.msra.mxu0 0.0
    %7353 = vmatprep.subr.mxu0 0.0
    %7354 = vmatpush2.msra.mxu0 0.0
    %7355 = vmatprep.subr.mxu0 0.0
    %7356 = vmatpush2.msra.mxu0 0.0
    %7357 = vmatprep.subr.mxu0 0.0
    %7358 = vmatpush2.msra.mxu0 0.0
    %7359 = vmatprep.subr.mxu0 0.0
    %7360 = vmatpush2.msra.mxu0 0.0
    %7361 = vmatprep.subr.mxu0 0.0
    %7362 = vmatpush2.msra.mxu0 0.0
    %7363 = vmatprep.subr.mxu0 0.0
    %7364 = vmatpush2.msra.mxu0 0.0
    %7365 = vmatprep.mubr.f32.mxu0 0.0
    %7366 = vmatmul.mubr.f32.gmra.mxu0 %v7299
    %v7367 = vpop.f32.mrf.mxu0
    %v7368 = vadd.f32 0.0, %v7367
    %v7369 = vpop.f32.mrf.mxu0
    %7370 = vdwg.mxu0
    %v7371 = vadd.f32 %v7276, %v7368
    %v7372 = vld [vmem:[%s6] sm:$0x1]
    %v7374 = vlaneseq
    %v7375 = vshrl.u32 %v7374, 7
    %v7376 = vsub.s32 0, %v7375
    %v7377 = vrot.slane %v7372, %v7376
    %v7379 = vadd.f32 %v7371, %v7377
    %v7380 = vmax.f32 %v7379, 0.0
    %v7381 = vld [vmem:[%s7] sm:$0xff]
    %v7382 = vld [vmem:[%s7 + $0x8] sm:$0xff]
    %v7383 = vld [vmem:[%s7 + $0x10] sm:$0xff]
    %v7384 = vld [vmem:[%s7 + $0x18] sm:$0xff]
    %v7385 = vld [vmem:[%s7 + $0x20] sm:$0xff]
    %v7386 = vld [vmem:[%s7 + $0x28] sm:$0xff]
    %v7387 = vld [vmem:[%s7 + $0x30] sm:$0xff]
    %v7388 = vld [vmem:[%s7 + $0x38] sm:$0xff]
    %v7389 = vld [vmem:[%s7 + $0x40] sm:$0xff]
    %v7390 = vld [vmem:[%s7 + $0x48] sm:$0xff]
    %v7391 = vld [vmem:[%s7 + $0x50] sm:$0xff]
    %v7392 = vld [vmem:[%s7 + $0x58] sm:$0xff]
    %v7393 = vld [vmem:[%s7 + $0x60] sm:$0xff]
    %v7394 = vld [vmem:[%s7 + $0x68] sm:$0xff]
    %v7395 = vld [vmem:[%s7 + $0x70] sm:$0xff]
    %v7396 = vld [vmem:[%s7 + $0x78] sm:$0xff]
    %v7397 = vld [vmem:[%s7 + $0x80] sm:$0xff]
    %v7398 = vld [vmem:[%s7 + $0x88] sm:$0xff]
    %v7399 = vld [vmem:[%s7 + $0x90] sm:$0xff]
    %v7400 = vld [vmem:[%s7 + $0x98] sm:$0xff]
    %v7401 = vld [vmem:[%s7 + $0xa0] sm:$0xff]
    %v7402 = vld [vmem:[%s7 + $0xa8] sm:$0xff]
    %v7403 = vld [vmem:[%s7 + $0xb0] sm:$0xff]
    %v7404 = vld [vmem:[%s7 + $0xb8] sm:$0xff]
    %v7405 = vld [vmem:[%s7 + $0xc0] sm:$0xff]
    %v7406 = vld [vmem:[%s7 + $0xc8] sm:$0xff]
    %v7407 = vld [vmem:[%s7 + $0xd0] sm:$0xff]
    %v7408 = vld [vmem:[%s7 + $0xd8] sm:$0xff]
    %v7409 = vld [vmem:[%s7 + $0xe0] sm:$0xff]
    %v7410 = vld [vmem:[%s7 + $0xe8] sm:$0xff]
    %v7411 = vld [vmem:[%s7 + $0xf0] sm:$0xff]
    %v7412 = vld [vmem:[%s7 + $0xf8] sm:$0xff]
    %v7413 = vld [vmem:[%s8] sm:$0x3]
    %v7415 = vlaneseq
    %v7416 = vshrl.u32 %v7415, 7
    %v7417 = vsub.s32 0, %v7416
    %v7418 = vrot.slane %v7413, %v7417
    %v7419 = vlaneseq
    %v7420 = vshrl.u32 %v7419, 7
    %v7421 = vsub.s32 1, %v7420
    %v7422 = vrot.slane %v7413, %v7421
    %7425 = vmatprep.subr.mxu0 %v7412
    %7426 = vmatpush1.msra.mxu0 %v7411
    %7427 = vmatprep.subr.mxu0 %v7410
    %7428 = vmatpush1.msra.mxu0 %v7409
    %7429 = vmatprep.subr.mxu0 %v7408
    %7430 = vmatpush1.msra.mxu0 %v7407
    %7431 = vmatprep.subr.mxu0 %v7406
    %7432 = vmatpush1.msra.mxu0 %v7405
    %7433 = vmatprep.subr.mxu0 %v7404
    %7434 = vmatpush1.msra.mxu0 %v7403
    %7435 = vmatprep.subr.mxu0 %v7402
    %7436 = vmatpush1.msra.mxu0 %v7401
    %7437 = vmatprep.subr.mxu0 %v7400
    %7438 = vmatpush1.msra.mxu0 %v7399
    %7439 = vmatprep.subr.mxu0 %v7398
    %7440 = vmatpush1.msra.mxu0 %v7397
    %7441 = vmatprep.subr.mxu0 %v7396
    %7442 = vmatpush1.msra.mxu0 %v7395
    %7443 = vmatprep.subr.mxu0 %v7394
    %7444 = vmatpush1.msra.mxu0 %v7393
    %7445 = vmatprep.subr.mxu0 %v7392
    %7446 = vmatpush1.msra.mxu0 %v7391
    %7447 = vmatprep.subr.mxu0 %v7390
    %7448 = vmatpush1.msra.mxu0 %v7389
    %7449 = vmatprep.subr.mxu0 %v7388
    %7450 = vmatpush1.msra.mxu0 %v7387
    %7451 = vmatprep.subr.mxu0 %v7386
    %7452 = vmatpush1.msra.mxu0 %v7385
    %7453 = vmatprep.subr.mxu0 %v7384
    %7454 = vmatpush1.msra.mxu0 %v7383
    %7455 = vmatprep.subr.mxu0 %v7382
    %7456 = vmatpush1.msra.mxu0 %v7381
    %7457 = vmatprep.subr.mxu0 0.0
    %7458 = vmatpush2.msra.mxu0 0.0
    %7459 = vmatprep.subr.mxu0 0.0
    %7460 = vmatpush2.msra.mxu0 0.0
    %7461 = vmatprep.subr.mxu0 0.0
    %7462 = vmatpush2.msra.mxu0 0.0
    %7463 = vmatprep.subr.mxu0 0.0
    %7464 = vmatpush2.msra.mxu0 0.0
    %7465 = vmatprep.subr.mxu0 0.0
    %7466 = vmatpush2.msra.mxu0 0.0
    %7467 = vmatprep.subr.mxu0 0.0
    %7468 = vmatpush2.msra.mxu0 0.0
    %7469 = vmatprep.subr.mxu0 0.0
    %7470 = vmatpush2.msra.mxu0 0.0
    %7471 = vmatprep.subr.mxu0 0.0
    %7472 = vmatpush2.msra.mxu0 0.0
    %7473 = vmatprep.subr.mxu0 0.0
    %7474 = vmatpush2.msra.mxu0 0.0
    %7475 = vmatprep.subr.mxu0 0.0
    %7476 = vmatpush2.msra.mxu0 0.0
    %7477 = vmatprep.subr.mxu0 0.0
    %7478 = vmatpush2.msra.mxu0 0.0
    %7479 = vmatprep.subr.mxu0 0.0
    %7480 = vmatpush2.msra.mxu0 0.0
    %7481 = vmatprep.subr.mxu0 0.0
    %7482 = vmatpush2.msra.mxu0 0.0
    %7483 = vmatprep.subr.mxu0 0.0
    %7484 = vmatpush2.msra.mxu0 0.0
    %7485 = vmatprep.subr.mxu0 0.0
    %7486 = vmatpush2.msra.mxu0 0.0
    %7487 = vmatprep.subr.mxu0 0.0
    %7488 = vmatpush2.msra.mxu0 0.0
    %7489 = vmatprep.mubr.f32.mxu0 0.0
    %7490 = vmatmul.mubr.f32.gmra.mxu0 %v7380
    %v7491 = vpop.f32.mrf.mxu0
    %v7492 = vadd.f32 %v7418, %v7491
    %v7493 = vpop.f32.mrf.mxu0
    %v7494 = vadd.f32 %v7422, %v7493
    %7495 = vdwg.mxu0
    %v7496 = vmax.f32 %v7492, 0.0
    %v7497 = vmax.f32 %v7494, 0.0
    %v7498 = vld [vmem:[%s9] sm:$0xff]
    %v7499 = vld [vmem:[%s9 + $0x8] sm:$0xff]
    %v7500 = vld [vmem:[%s9 + $0x10] sm:$0xff]
    %v7501 = vld [vmem:[%s9 + $0x18] sm:$0xff]
    %v7502 = vld [vmem:[%s9 + $0x20] sm:$0xff]
    %v7503 = vld [vmem:[%s9 + $0x28] sm:$0xff]
    %v7504 = vld [vmem:[%s9 + $0x30] sm:$0xff]
    %v7505 = vld [vmem:[%s9 + $0x38] sm:$0xff]
    %v7506 = vld [vmem:[%s9 + $0x40] sm:$0xff]
    %v7507 = vld [vmem:[%s9 + $0x48] sm:$0xff]
    %v7508 = vld [vmem:[%s9 + $0x50] sm:$0xff]
    %v7509 = vld [vmem:[%s9 + $0x58] sm:$0xff]
    %v7510 = vld [vmem:[%s9 + $0x60] sm:$0xff]
    %v7511 = vld [vmem:[%s9 + $0x68] sm:$0xff]
    %v7512 = vld [vmem:[%s9 + $0x70] sm:$0xff]
    %v7513 = vld [vmem:[%s9 + $0x78] sm:$0xff]
    %v7514 = vld [vmem:[%s9 + $0x80] sm:$0xff]
    %v7515 = vld [vmem:[%s9 + $0x88] sm:$0xff]
    %v7516 = vld [vmem:[%s9 + $0x90] sm:$0xff]
    %v7517 = vld [vmem:[%s9 + $0x98] sm:$0xff]
    %v7518 = vld [vmem:[%s9 + $0xa0] sm:$0xff]
    %v7519 = vld [vmem:[%s9 + $0xa8] sm:$0xff]
    %v7520 = vld [vmem:[%s9 + $0xb0] sm:$0xff]
    %v7521 = vld [vmem:[%s9 + $0xb8] sm:$0xff]
    %v7522 = vld [vmem:[%s9 + $0xc0] sm:$0xff]
    %v7523 = vld [vmem:[%s9 + $0xc8] sm:$0xff]
    %v7524 = vld [vmem:[%s9 + $0xd0] sm:$0xff]
    %v7525 = vld [vmem:[%s9 + $0xd8] sm:$0xff]
    %v7526 = vld [vmem:[%s9 + $0xe0] sm:$0xff]
    %v7527 = vld [vmem:[%s9 + $0xe8] sm:$0xff]
    %v7528 = vld [vmem:[%s9 + $0xf0] sm:$0xff]
    %v7529 = vld [vmem:[%s9 + $0xf8] sm:$0xff]
    %v7530 = vld [vmem:[%s10] sm:$0x1]
    %v7532 = vlaneseq
    %v7533 = vshrl.u32 %v7532, 7
    %v7534 = vsub.s32 0, %v7533
    %v7535 = vrot.slane %v7530, %v7534
    %7537 = vmatprep.subr.mxu0 0.0
    %7538 = vmatpush1.msra.mxu0 %v7513
    %7539 = vmatprep.subr.mxu0 0.0
    %7540 = vmatpush1.msra.mxu0 %v7512
    %7541 = vmatprep.subr.mxu0 0.0
    %7542 = vmatpush1.msra.mxu0 %v7511
    %7543 = vmatprep.subr.mxu0 0.0
    %7544 = vmatpush1.msra.mxu0 %v7510
    %7545 = vmatprep.subr.mxu0 0.0
    %7546 = vmatpush1.msra.mxu0 %v7509
    %7547 = vmatprep.subr.mxu0 0.0
    %7548 = vmatpush1.msra.mxu0 %v7508
    %7549 = vmatprep.subr.mxu0 0.0
    %7550 = vmatpush1.msra.mxu0 %v7507
    %7551 = vmatprep.subr.mxu0 0.0
    %7552 = vmatpush1.msra.mxu0 %v7506
    %7553 = vmatprep.subr.mxu0 0.0
    %7554 = vmatpush1.msra.mxu0 %v7505
    %7555 = vmatprep.subr.mxu0 0.0
    %7556 = vmatpush1.msra.mxu0 %v7504
    %7557 = vmatprep.subr.mxu0 0.0
    %7558 = vmatpush1.msra.mxu0 %v7503
    %7559 = vmatprep.subr.mxu0 0.0
    %7560 = vmatpush1.msra.mxu0 %v7502
    %7561 = vmatprep.subr.mxu0 0.0
    %7562 = vmatpush1.msra.mxu0 %v7501
    %7563 = vmatprep.subr.mxu0 0.0
    %7564 = vmatpush1.msra.mxu0 %v7500
    %7565 = vmatprep.subr.mxu0 0.0
    %7566 = vmatpush1.msra.mxu0 %v7499
    %7567 = vmatprep.subr.mxu0 0.0
    %7568 = vmatpush1.msra.mxu0 %v7498
    %7569 = vmatprep.subr.mxu0 0.0
    %7570 = vmatpush2.msra.mxu0 %v7529
    %7571 = vmatprep.subr.mxu0 0.0
    %7572 = vmatpush2.msra.mxu0 %v7528
    %7573 = vmatprep.subr.mxu0 0.0
    %7574 = vmatpush2.msra.mxu0 %v7527
    %7575 = vmatprep.subr.mxu0 0.0
    %7576 = vmatpush2.msra.mxu0 %v7526
    %7577 = vmatprep.subr.mxu0 0.0
    %7578 = vmatpush2.msra.mxu0 %v7525
    %7579 = vmatprep.subr.mxu0 0.0
    %7580 = vmatpush2.msra.mxu0 %v7524
    %7581 = vmatprep.subr.mxu0 0.0
    %7582 = vmatpush2.msra.mxu0 %v7523
    %7583 = vmatprep.subr.mxu0 0.0
    %7584 = vmatpush2.msra.mxu0 %v7522
    %7585 = vmatprep.subr.mxu0 0.0
    %7586 = vmatpush2.msra.mxu0 %v7521
    %7587 = vmatprep.subr.mxu0 0.0
    %7588 = vmatpush2.msra.mxu0 %v7520
    %7589 = vmatprep.subr.mxu0 0.0
    %7590 = vmatpush2.msra.mxu0 %v7519
    %7591 = vmatprep.subr.mxu0 0.0
    %7592 = vmatpush2.msra.mxu0 %v7518
    %7593 = vmatprep.subr.mxu0 0.0
    %7594 = vmatpush2.msra.mxu0 %v7517
    %7595 = vmatprep.subr.mxu0 0.0
    %7596 = vmatpush2.msra.mxu0 %v7516
    %7597 = vmatprep.subr.mxu0 0.0
    %7598 = vmatpush2.msra.mxu0 %v7515
    %7599 = vmatprep.subr.mxu0 0.0
    %7600 = vmatpush2.msra.mxu0 %v7514
    %7601 = vmatprep.mubr.f32.mxu0 %v7497
    %7602 = vmatmul.mubr.f32.gmra.mxu0 %v7496
    %v7603 = vpop.f32.mrf.mxu0
    %v7604 = vadd.f32 %v7535, %v7603
    %v7605 = vpop.f32.mrf.mxu0
    %7606 = vdwg.mxu0
    %vm7607 = vcmask 1041408
    %v7608 = vsel %vm7607, %v7604, 0.0
    %7609 = vadd.xlane.f32.xlu0 %v7608
    %v7610 = vpop.xlane.xlu0 %7609
    %v7611 = vrot.slane %v7610, 4
    %v7612 = vadd.f32 %v7610, %v7611
    %v7613 = vrot.slane %v7612, 2
    %v7614 = vadd.f32 %v7612, %v7613
    %v7615 = vrot.slane %v7614, 1
    %v7616 = vadd.f32 %v7614, %v7615
    %s7617 = vtos %v7616
    %7619 = vrot.lane.b32.xlu0 %v7604, 1
    %v7620 = vpop.permute.xlu0 %7619
    %vm7622 = vcmask 1024
    %v7623 = vsel %vm7622, %v7620, 0.0
    %7624 = vadd.xlane.f32.xlu0 %v7623
    %v7625 = vpop.xlane.xlu0 %7624
    %v7626 = vrot.slane %v7625, 4
    %v7627 = vadd.f32 %v7625, %v7626
    %v7628 = vrot.slane %v7627, 2
    %v7629 = vadd.f32 %v7627, %v7628
    %v7630 = vrot.slane %v7629, 1
    %v7631 = vadd.f32 %v7629, %v7630
    %s7632 = vtos %v7631
    %s7633 = ssub.f32 %s7617, %s7632
    %v7634 = vrcp.pop 16.0
    %s7635 = vtos %v7634
    %s7636 = smul.f32 %s7633, %s7635
    %7637 = vset.pattern.permute.xlu0 127
    %7638 = vperm.xlu0 %7637, %v7604
    %v7639 = vpop.permute.xlu0 %7638
    %v7641 = vadd.f32 %v7604, %v7639
    %v7642 = vstv %s7636
    %v7643 = vsub.f32 %v7641, %v7642
    %7644 = vst [vmem:[#allocation4] sm:$0x3] %v7643
    // Predicated region
    $region46: #{conv_dueling_dqn_forward.1} parent=1 // pred_check
      _
    $region47: #{conv_dueling_dqn_forward.1} parent=1 // pred_check_branch
      %7646 = sbr.rel (0) target = $region49
    $region48: #{conv_dueling_dqn_forward.1} parent=1 // pred_region
      %s7648 = ssub.s32 32, 32
      %7649 = vsyncadd [#allocation5], %s7648
      %s7651 = sshll.u32 [#allocation4], 4
      %s7652 = int_to_ptr.vmem [resolvable:$true] %s7651
      %7654 = dma.vmem_to_hbm [thread:$0]  %s7652, 32, %s11, [#allocation5]
    $region49: #{conv_dueling_dqn_forward.1} parent=1 // pred_fallthru
      _
    // Predicated region
    $region50: #{conv_dueling_dqn_forward.1} parent=1 // pred_check
      _
    $region51: #{conv_dueling_dqn_forward.1} parent=1 // pred_check_branch
      %7656 = sbr.rel (0) target = $region53
    $region52: #{conv_dueling_dqn_forward.1} parent=1 // pred_region
      %7657 = dma.done [#allocation5], 32
    $region53: #{conv_dueling_dqn_forward.1} parent=1 // pred_fallthru
      _
    %7658 = vsyncpa [#allocation5], 1

</llo_original>
